<compile_context>
chip_gen: v5e
topology: v5e:2x2
jax: 0.10.0
libtpu: 0.0.40
codegen_flags: <defaults>
</compile_context>

<pallas_src>
import functools

import numpy as np
import jax
import jax.numpy as jnp
from jax.experimental import pallas as pl
from jax.experimental.pallas import tpu as pltpu


_VMEM_LIMIT = 32 * 1024 * 1024   # explicit VMEM budget (fits v5e/v6e/v7x)


def _cdiv(a, b):
    return -(-a // b)


def _round_up(a, m):
    return ((a + m - 1) // m) * m


# ----------------------------------------------------------------------------
# Kernels
# ----------------------------------------------------------------------------
def _conv_rows_kernel(x_ref, t_ref, b_ref, o_ref, *, kh, stride):
    """Row-GEMM convolution (in-kernel tap accumulation, no im2col).

    x_ref: (bm, stride, G, W_in*C_in)   H-phase-major NHWC rows, bf16
    t_ref: (kh, W_in*C_in, W_out*C_out) per-tap block-banded weights, bf16
    b_ref: (1, W_out*C_out)             bias (channel value repeated per column), f32
    o_ref: (bm, OH, W_out*C_out)        bf16

    out_row(oh) = relu(b + sum_di in_row(stride*oh + di) @ T[di]),
    where in_row(stride*oh + di) = x[phase = di % stride, group = di//stride + oh].
    """
    bm = x_ref.shape[0]
    oh = o_ref.shape[1]
    lout = o_ref.shape[2]
    for b in range(bm):
        acc = jnp.zeros((oh, lout), jnp.float32)
        for p in range(stride):
            xp = x_ref[b, p]                                   # (G, W_in*C_in)
            for g in range(kh // stride):
                di = g * stride + p
                acc = acc + jnp.dot(xp[g:g + oh, :], t_ref[di],
                                    preferred_element_type=jnp.float32)
        acc = jnp.maximum(acc + b_ref[...], 0.0)
        o_ref[b] = acc.astype(o_ref.dtype)


def _tail_kernel(x_ref, w3_ref, b3_ref, w1_ref, b1_ref, w2_ref, b2_ref, q_ref):
    """conv3 (as exact dense matrix) + fused value/adv FCs + dueling combine."""
    h = jnp.dot(x_ref[...], w3_ref[...], preferred_element_type=jnp.float32)
    h = jnp.maximum(h + b3_ref[...], 0.0).astype(jnp.bfloat16)       # conv3 + relu
    h = jnp.dot(h, w1_ref[...], preferred_element_type=jnp.float32)
    h = jnp.maximum(h + b1_ref[...], 0.0).astype(jnp.bfloat16)       # [v_fc | adv_fc] + relu
    head = jnp.dot(h, w2_ref[...], preferred_element_type=jnp.float32) + b2_ref[...]
    v = head[:, 0:1]
    a = head[:, 1:]
    q_ref[...] = (v + (a - jnp.mean(a, axis=1, keepdims=True))).astype(q_ref.dtype)


# ----------------------------------------------------------------------------
# pallas_call wrappers
# ----------------------------------------------------------------------------
def _resident(shape):
    """Grid-invariant block: whole array, single-buffered (saves VMEM)."""
    nd = len(shape)
    return pl.BlockSpec(shape, lambda i: (0,) * nd, pipeline_mode=pl.Buffered(1))


def conv_rows(x, t, b, *, kh, stride, oh):
    """x: (N, stride, G, Lin) bf16; t: (kh, Lin, Lout) bf16; b: (1, Lout) f32."""
    N = x.shape[0]
    lout = t.shape[2]
    bm = 1 if N <= 8 else 8         # images per grid step (amortizes step overhead at large batch)
    grid = (_cdiv(N, bm),)
    kern = functools.partial(_conv_rows_kernel, kh=kh, stride=stride)
    return pl.pallas_call(
        kern,
        out_shape=jax.ShapeDtypeStruct((N, oh, lout), jnp.bfloat16),
        grid=grid,
        in_specs=[
            pl.BlockSpec((bm,) + x.shape[1:], lambda i: (i, 0, 0, 0)),
            _resident(t.shape),
            _resident(b.shape),
        ],
        out_specs=pl.BlockSpec((bm, oh, lout), lambda i: (i, 0, 0)),
        compiler_params=pltpu.CompilerParams(
            dimension_semantics=("parallel",),
            vmem_limit_bytes=_VMEM_LIMIT),
    )(x, t, b)


def _m_tiling(M, cap=512):
    if M <= 16:
        return M, 1
    tm = min(cap, _round_up(_cdiv(M, 2), 8))   # >= 2 blocks so both v7x TCs get work
    return tm, _cdiv(M, tm)


def tail_fused(x, w3, b3, w1, b1, w2, b2, n_actions):
    """Fused conv3-dense + value/advantage streams + heads + dueling combine."""
    M, F = x.shape
    tm, gm = _m_tiling(M)
    return pl.pallas_call(
        _tail_kernel,
        out_shape=jax.ShapeDtypeStruct((M, n_actions), jnp.float32),
        grid=(gm,),
        in_specs=[
            pl.BlockSpec((tm, F), lambda i: (i, 0)),
            _resident(w3.shape), _resident(b3.shape),
            _resident(w1.shape), _resident(b1.shape),
            _resident(w2.shape), _resident(b2.shape),
        ],
        out_specs=pl.BlockSpec((tm, n_actions), lambda i: (i, 0)),
        compiler_params=pltpu.CompilerParams(
            dimension_semantics=("parallel",),
            vmem_limit_bytes=_VMEM_LIMIT),
    )(x, w3, b3, w1, b1, w2, b2)


# ----------------------------------------------------------------------------
# Shapes / parameter init (torch layouts, f32)
# ----------------------------------------------------------------------------
def _conv_out(s, k, st):
    return (s - k) // st + 1


def conv_stack_hw(state_shape):
    H, W = state_shape
    h1, w1 = _conv_out(H, 8, 4), _conv_out(W, 8, 4)
    h2, w2 = _conv_out(h1, 4, 2), _conv_out(w1, 4, 2)
    h3, w3 = _conv_out(h2, 3, 2), _conv_out(w2, 3, 2)
    return (h1, w1), (h2, w2), (h3, w3)


def xavier_uniform(key, shape, fan_in, fan_out):
    bound = (6.0 / (fan_in + fan_out)) ** 0.5
    return jax.random.uniform(key, shape, jnp.float32, -bound, bound)


def bias_uniform(key, shape, fan_in):
    bound = 1.0 / (fan_in ** 0.5)
    return jax.random.uniform(key, shape, jnp.float32, -bound, bound)


def make_params(key, state_shape, n_actions):
    (_, _), (_, _), (h3, w3) = conv_stack_hw(state_shape)
    flatten_size = 64 * h3 * w3
    ks = jax.random.split(key, 14)
    p = {}
    p["c1_w"] = xavier_uniform(ks[0], (32, 4, 8, 8), 4 * 8 * 8, 32 * 8 * 8)
    p["c1_b"] = bias_uniform(ks[1], (32,), 4 * 8 * 8)
    p["c2_w"] = xavier_uniform(ks[2], (64, 32, 4, 4), 32 * 4 * 4, 64 * 4 * 4)
    p["c2_b"] = bias_uniform(ks[3], (64,), 32 * 4 * 4)
    p["c3_w"] = xavier_uniform(ks[4], (64, 64, 3, 3), 64 * 3 * 3, 64 * 3 * 3)
    p["c3_b"] = bias_uniform(ks[5], (64,), 64 * 3 * 3)
    # linear weights stored as (in, out); rows follow torch's NCHW flatten order
    p["vfc_w"] = xavier_uniform(ks[6], (flatten_size, 512), flatten_size, 512)
    p["vfc_b"] = bias_uniform(ks[7], (512,), flatten_size)
    p["vst_w"] = xavier_uniform(ks[8], (512, 1), 512, 1)
    p["vst_b"] = bias_uniform(ks[9], (1,), 512)
    p["afc_w"] = xavier_uniform(ks[10], (flatten_size, 512), flatten_size, 512)
    p["afc_b"] = bias_uniform(ks[11], (512,), flatten_size)
    p["ast_w"] = xavier_uniform(ks[12], (512, n_actions), 512, n_actions)
    p["ast_b"] = bias_uniform(ks[13], (n_actions,), 512)
    return p


# ----------------------------------------------------------------------------
# One-time inference-layout prep: banded row-GEMM conv weights, fused FC/head
# ----------------------------------------------------------------------------
def _toeplitz(w_np, w_in, w_out, stride):
    """w_np: (OC, IC, KH, KW) -> (KH, w_in*IC, w_out*OC) block-banded matrices."""
    oc, ic, kh, kw = w_np.shape
    t = np.zeros((kh, w_in * ic, w_out * oc), np.float32)
    for di in range(kh):
        blk = w_np[:, :, di, :].transpose(2, 1, 0).reshape(kw * ic, oc)  # rows = (kw, ic)
        for ow in range(w_out):
            r0 = stride * ow * ic
            t[di, r0:r0 + kw * ic, ow * oc:(ow + 1) * oc] = blk
    return t


def _conv3_dense(w_np, h_in, w_in, h_out, w_out):
    """Exact dense matrix for conv3 (stride 2) on NHWC-flattened features."""
    oc, ic, kh, kw = w_np.shape
    m = np.zeros((h_in * w_in * ic, h_out * w_out * oc), np.float32)
    for oh in range(h_out):
        for ow in range(w_out):
            c0 = (oh * w_out + ow) * oc
            for dh in range(kh):
                for dw in range(kw):
                    r0 = ((2 * oh + dh) * w_in + (2 * ow + dw)) * ic
                    m[r0:r0 + ic, c0:c0 + oc] = w_np[:, :, dh, dw].T
    return m


def prepare_inference_params(p, state_shape, n_actions):
    (h1, w1), (h2, w2), (h3, w3) = conv_stack_hw(state_shape)
    W = state_shape[1]
    pn = {k: np.asarray(v, np.float32) for k, v in p.items()}

    ip = {}
    # conv1: 1/255 folded into the weights; lanes = (w, c), taps over H (stride 4)
    ip["t1"] = jnp.asarray(_toeplitz(pn["c1_w"] / 255.0, W, w1, 4)).astype(jnp.bfloat16)
    ip["b1"] = jnp.asarray(np.tile(pn["c1_b"], w1)[None, :])
    # conv2
    ip["t2"] = jnp.asarray(_toeplitz(pn["c2_w"], w1, w2, 2)).astype(jnp.bfloat16)
    ip["b2"] = jnp.asarray(np.tile(pn["c2_b"], w2)[None, :])
    # conv3 as an exact dense matrix (extra entries are zeros), NHWC in/out order
    ip["w3"] = jnp.asarray(_conv3_dense(pn["c3_w"], h2, w2, h3, w3)).astype(jnp.bfloat16)
    ip["b3"] = jnp.asarray(np.tile(pn["c3_b"], h3 * w3)[None, :])

    # FC rows: torch flattens NCHW; the conv3-dense output is NHWC -> permute rows once
    def permute_rows(w):
        return (w.reshape(64, h3, w3, -1).transpose(1, 2, 0, 3)
                 .reshape(64 * h3 * w3, -1))

    fc1 = np.concatenate([permute_rows(pn["vfc_w"]), permute_rows(pn["afc_w"])], axis=1)
    ip["wfc"] = jnp.asarray(fc1).astype(jnp.bfloat16)                         # (F3, 1024)
    ip["bfc"] = jnp.asarray(np.concatenate([pn["vfc_b"], pn["afc_b"]])[None, :])

    # block-diagonal head: col 0 = value, cols 1.. = advantage
    wh = np.zeros((1024, 1 + n_actions), np.float32)
    wh[:512, 0:1] = pn["vst_w"]
    wh[512:, 1:] = pn["ast_w"]
    ip["wh"] = jnp.asarray(wh).astype(jnp.bfloat16)
    ip["bh"] = jnp.asarray(np.concatenate([pn["vst_b"], pn["ast_b"]])[None, :])
    return ip


# ----------------------------------------------------------------------------
# Forward pass (Pallas) and pure-JAX f32 reference
# ----------------------------------------------------------------------------
def dqn_forward_pallas(state, ip, *, state_shape, n_actions):
    N = state.shape[0]
    H, W = state_shape
    (h1, w1), (h2, w2), (h3, w3) = conv_stack_hw(state_shape)
    assert H % 4 == 0, "conv1 phase split assumes H divisible by 4"

    # TODO(synk): the two tiny phase-split relayouts below (input, conv1->conv2)
    # are XLA glue; folding them into the kernels needs strided in-kernel reads.
    # NCHW uint8 -> H-phase-major NHWC rows (N, 4, H//4, W*4); one input relayout.
    x = state.transpose(0, 2, 3, 1).astype(jnp.bfloat16)             # (N, H, W, 4)
    x = x.reshape(N, H // 4, 4, W * 4).transpose(0, 2, 1, 3)          # (N, 4, H//4, W*4)
    a1 = conv_rows(x, ip["t1"], ip["b1"], kh=8, stride=4, oh=h1)      # (N, h1, w1*32)

    # conv1 -> conv2: pad H to even length, split the two H-phases (~14 KB/img).
    g2 = (h1 + 1) // 2
    a1 = jnp.pad(a1, ((0, 0), (0, 2 * g2 - h1), (0, 0)))
    a1 = a1.reshape(N, g2, 2, w1 * 32).transpose(0, 2, 1, 3)          # (N, 2, g2, w1*32)
    a2 = conv_rows(a1, ip["t2"], ip["b2"], kh=4, stride=2, oh=h2)     # (N, h2, w2*64)

    flat = a2.reshape(N, h2 * w2 * 64)          # contiguous NHWC flatten, no relayout
    return tail_fused(flat, ip["w3"], ip["b3"], ip["wfc"], ip["bfc"],
                      ip["wh"], ip["bh"], n_actions)


def dqn_forward_ref(state, p):
    x = state.astype(jnp.float32) / 255.0

    def conv(x, w, b, stride):
        y = jax.lax.conv_general_dilated(
            x, w, (stride, stride), "VALID",
            dimension_numbers=("NCHW", "OIHW", "NCHW"))
        return jax.nn.relu(y + b[None, :, None, None])

    a2 = conv(x, p["c1_w"], p["c1_b"], 4)
    a3 = conv(a2, p["c2_w"], p["c2_b"], 2)
    a4 = conv(a3, p["c3_w"], p["c3_b"], 2)
    a4_flat = a4.reshape(a4.shape[0], -1)
    a5_v = jax.nn.relu(a4_flat @ p["vfc_w"] + p["vfc_b"])
    value = a5_v @ p["vst_w"] + p["vst_b"]
    a5_a = jax.nn.relu(a4_flat @ p["afc_w"] + p["afc_b"])
    advantage = a5_a @ p["ast_w"] + p["ast_b"]
    return value + (advantage - advantage.mean(axis=1, keepdims=True))


if __name__ == "__main__":
    key = jax.random.PRNGKey(0)
    k_state, k_param = jax.random.split(key)

    batch, n_actions = 2, 6
    state_shape = (64, 64)   # small Atari-style frame; conv stack -> 2x2 spatial
    state = jax.random.randint(
        k_state, (batch, 4, state_shape[0], state_shape[1]), 0, 256, jnp.uint8)

    params = make_params(k_param, state_shape, n_actions)
    inf_params = prepare_inference_params(params, state_shape, n_actions)

    fwd = jax.jit(functools.partial(
        dqn_forward_pallas, state_shape=state_shape, n_actions=n_actions))
    q = jax.block_until_ready(fwd(state, inf_params))
    q_ref = jax.block_until_ready(dqn_forward_ref(state, params))

    assert q.shape == (batch, n_actions)
    # bf16 MXU inputs vs. the f32 reference -> loosened tolerance.
    assert jnp.allclose(q, q_ref.astype(jnp.float32), atol=5e-2, rtol=5e-2), \
        "mismatch vs reference"
    print("KERNEL_OK")
</pallas_src>

<mosaic_0001>
module attributes {stable_mosaic.version = 11 : i64} {
  func.func @_conv_rows_kernel(%arg0: i32, %arg1: memref<1x4x16x256xbf16, #tpu.memory_space<vmem>>, %arg2: memref<8x256x480xbf16, #tpu.memory_space<vmem>>, %arg3: memref<1x480xf32, #tpu.memory_space<vmem>>, %arg4: memref<1x15x480xbf16, #tpu.memory_space<vmem>>) attributes {dimension_semantics = [#tpu.dimension_semantics<parallel>], iteration_bounds = array<i64: 2>, scalar_prefetch = 0 : i64, scratch_operands = 0 : i64, tpu.core_type = #tpu.core_type<tc>, window_params = [{transform_indices = @transform_0, window_bounds = array<i64: 1, 4, 16, 256>}, {pipeline_mode = #tpu.pipeline_mode<synchronous>, transform_indices = @transform_1, window_bounds = array<i64: 8, 256, 480>}, {pipeline_mode = #tpu.pipeline_mode<synchronous>, transform_indices = @transform_2, window_bounds = array<i64: 1, 480>}, {transform_indices = @transform_3, window_bounds = array<i64: 1, 15, 480>}]} {
    %cst = arith.constant 0.000000e+00 : f32
    %0 = vector.broadcast %cst : f32 to vector<15x480xf32>
    %c0 = arith.constant 0 : index
    %c0_0 = arith.constant 0 : index
    %c0_1 = arith.constant 0 : index
    %c0_2 = arith.constant 0 : index
    %1 = vector.load %arg1[%c0, %c0_0, %c0_1, %c0_2] : memref<1x4x16x256xbf16, #tpu.memory_space<vmem>>, vector<1x1x16x256xbf16>
    %2 = vector.shape_cast %1 : vector<1x1x16x256xbf16> to vector<16x256xbf16>
    %3 = vector.extract_strided_slice %2 {offsets = [0, 0], sizes = [15, 256], strides = [1, 1]} : vector<16x256xbf16> to vector<15x256xbf16>
    %c0_3 = arith.constant 0 : index
    %c0_4 = arith.constant 0 : index
    %c0_5 = arith.constant 0 : index
    %4 = vector.load %arg2[%c0_3, %c0_4, %c0_5] : memref<8x256x480xbf16, #tpu.memory_space<vmem>>, vector<1x256x480xbf16>
    %5 = vector.shape_cast %4 : vector<1x256x480xbf16> to vector<256x480xbf16>
    %cst_6 = arith.constant dense<0.000000e+00> : vector<15x480xf32>
    %6 = tpu.matmul %3, %5, %cst_6 {dimension_numbers = #tpu.dot_dimension_numbers<[1], [0], [0], [1], [0, 0, 1, 1], [], []>} : vector<15x256xbf16>, vector<256x480xbf16>, vector<15x480xf32> -> vector<15x480xf32>
    %7 = arith.addf %0, %6 : vector<15x480xf32>
    %8 = vector.extract_strided_slice %2 {offsets = [1, 0], sizes = [15, 256], strides = [1, 1]} : vector<16x256xbf16> to vector<15x256xbf16>
    %c4 = arith.constant 4 : index
    %c0_7 = arith.constant 0 : index
    %c0_8 = arith.constant 0 : index
    %9 = vector.load %arg2[%c4, %c0_7, %c0_8] : memref<8x256x480xbf16, #tpu.memory_space<vmem>>, vector<1x256x480xbf16>
    %10 = vector.shape_cast %9 : vector<1x256x480xbf16> to vector<256x480xbf16>
    %cst_9 = arith.constant dense<0.000000e+00> : vector<15x480xf32>
    %11 = tpu.matmul %8, %10, %cst_9 {dimension_numbers = #tpu.dot_dimension_numbers<[1], [0], [0], [1], [0, 0, 1, 1], [], []>} : vector<15x256xbf16>, vector<256x480xbf16>, vector<15x480xf32> -> vector<15x480xf32>
    %12 = arith.addf %7, %11 : vector<15x480xf32>
    %c0_10 = arith.constant 0 : index
    %c1 = arith.constant 1 : index
    %c0_11 = arith.constant 0 : index
    %c0_12 = arith.constant 0 : index
    %13 = vector.load %arg1[%c0_10, %c1, %c0_11, %c0_12] : memref<1x4x16x256xbf16, #tpu.memory_space<vmem>>, vector<1x1x16x256xbf16>
    %14 = vector.shape_cast %13 : vector<1x1x16x256xbf16> to vector<16x256xbf16>
    %15 = vector.extract_strided_slice %14 {offsets = [0, 0], sizes = [15, 256], strides = [1, 1]} : vector<16x256xbf16> to vector<15x256xbf16>
    %c1_13 = arith.constant 1 : index
    %c0_14 = arith.constant 0 : index
    %c0_15 = arith.constant 0 : index
    %16 = vector.load %arg2[%c1_13, %c0_14, %c0_15] : memref<8x256x480xbf16, #tpu.memory_space<vmem>>, vector<1x256x480xbf16>
    %17 = vector.shape_cast %16 : vector<1x256x480xbf16> to vector<256x480xbf16>
    %cst_16 = arith.constant dense<0.000000e+00> : vector<15x480xf32>
    %18 = tpu.matmul %15, %17, %cst_16 {dimension_numbers = #tpu.dot_dimension_numbers<[1], [0], [0], [1], [0, 0, 1, 1], [], []>} : vector<15x256xbf16>, vector<256x480xbf16>, vector<15x480xf32> -> vector<15x480xf32>
    %19 = arith.addf %12, %18 : vector<15x480xf32>
    %20 = vector.extract_strided_slice %14 {offsets = [1, 0], sizes = [15, 256], strides = [1, 1]} : vector<16x256xbf16> to vector<15x256xbf16>
    %c5 = arith.constant 5 : index
    %c0_17 = arith.constant 0 : index
    %c0_18 = arith.constant 0 : index
    %21 = vector.load %arg2[%c5, %c0_17, %c0_18] : memref<8x256x480xbf16, #tpu.memory_space<vmem>>, vector<1x256x480xbf16>
    %22 = vector.shape_cast %21 : vector<1x256x480xbf16> to vector<256x480xbf16>
    %cst_19 = arith.constant dense<0.000000e+00> : vector<15x480xf32>
    %23 = tpu.matmul %20, %22, %cst_19 {dimension_numbers = #tpu.dot_dimension_numbers<[1], [0], [0], [1], [0, 0, 1, 1], [], []>} : vector<15x256xbf16>, vector<256x480xbf16>, vector<15x480xf32> -> vector<15x480xf32>
    %24 = arith.addf %19, %23 : vector<15x480xf32>
    %c0_20 = arith.constant 0 : index
    %c2 = arith.constant 2 : index
    %c0_21 = arith.constant 0 : index
    %c0_22 = arith.constant 0 : index
    %25 = vector.load %arg1[%c0_20, %c2, %c0_21, %c0_22] : memref<1x4x16x256xbf16, #tpu.memory_space<vmem>>, vector<1x1x16x256xbf16>
    %26 = vector.shape_cast %25 : vector<1x1x16x256xbf16> to vector<16x256xbf16>
    %27 = vector.extract_strided_slice %26 {offsets = [0, 0], sizes = [15, 256], strides = [1, 1]} : vector<16x256xbf16> to vector<15x256xbf16>
    %c2_23 = arith.constant 2 : index
    %c0_24 = arith.constant 0 : index
    %c0_25 = arith.constant 0 : index
    %28 = vector.load %arg2[%c2_23, %c0_24, %c0_25] : memref<8x256x480xbf16, #tpu.memory_space<vmem>>, vector<1x256x480xbf16>
    %29 = vector.shape_cast %28 : vector<1x256x480xbf16> to vector<256x480xbf16>
    %cst_26 = arith.constant dense<0.000000e+00> : vector<15x480xf32>
    %30 = tpu.matmul %27, %29, %cst_26 {dimension_numbers = #tpu.dot_dimension_numbers<[1], [0], [0], [1], [0, 0, 1, 1], [], []>} : vector<15x256xbf16>, vector<256x480xbf16>, vector<15x480xf32> -> vector<15x480xf32>
    %31 = arith.addf %24, %30 : vector<15x480xf32>
    %32 = vector.extract_strided_slice %26 {offsets = [1, 0], sizes = [15, 256], strides = [1, 1]} : vector<16x256xbf16> to vector<15x256xbf16>
    %c6 = arith.constant 6 : index
    %c0_27 = arith.constant 0 : index
    %c0_28 = arith.constant 0 : index
    %33 = vector.load %arg2[%c6, %c0_27, %c0_28] : memref<8x256x480xbf16, #tpu.memory_space<vmem>>, vector<1x256x480xbf16>
    %34 = vector.shape_cast %33 : vector<1x256x480xbf16> to vector<256x480xbf16>
    %cst_29 = arith.constant dense<0.000000e+00> : vector<15x480xf32>
    %35 = tpu.matmul %32, %34, %cst_29 {dimension_numbers = #tpu.dot_dimension_numbers<[1], [0], [0], [1], [0, 0, 1, 1], [], []>} : vector<15x256xbf16>, vector<256x480xbf16>, vector<15x480xf32> -> vector<15x480xf32>
    %36 = arith.addf %31, %35 : vector<15x480xf32>
    %c0_30 = arith.constant 0 : index
    %c3 = arith.constant 3 : index
    %c0_31 = arith.constant 0 : index
    %c0_32 = arith.constant 0 : index
    %37 = vector.load %arg1[%c0_30, %c3, %c0_31, %c0_32] : memref<1x4x16x256xbf16, #tpu.memory_space<vmem>>, vector<1x1x16x256xbf16>
    %38 = vector.shape_cast %37 : vector<1x1x16x256xbf16> to vector<16x256xbf16>
    %39 = vector.extract_strided_slice %38 {offsets = [0, 0], sizes = [15, 256], strides = [1, 1]} : vector<16x256xbf16> to vector<15x256xbf16>
    %c3_33 = arith.constant 3 : index
    %c0_34 = arith.constant 0 : index
    %c0_35 = arith.constant 0 : index
    %40 = vector.load %arg2[%c3_33, %c0_34, %c0_35] : memref<8x256x480xbf16, #tpu.memory_space<vmem>>, vector<1x256x480xbf16>
    %41 = vector.shape_cast %40 : vector<1x256x480xbf16> to vector<256x480xbf16>
    %cst_36 = arith.constant dense<0.000000e+00> : vector<15x480xf32>
    %42 = tpu.matmul %39, %41, %cst_36 {dimension_numbers = #tpu.dot_dimension_numbers<[1], [0], [0], [1], [0, 0, 1, 1], [], []>} : vector<15x256xbf16>, vector<256x480xbf16>, vector<15x480xf32> -> vector<15x480xf32>
    %43 = arith.addf %36, %42 : vector<15x480xf32>
    %44 = vector.extract_strided_slice %38 {offsets = [1, 0], sizes = [15, 256], strides = [1, 1]} : vector<16x256xbf16> to vector<15x256xbf16>
    %c7 = arith.constant 7 : index
    %c0_37 = arith.constant 0 : index
    %c0_38 = arith.constant 0 : index
    %45 = vector.load %arg2[%c7, %c0_37, %c0_38] : memref<8x256x480xbf16, #tpu.memory_space<vmem>>, vector<1x256x480xbf16>
    %46 = vector.shape_cast %45 : vector<1x256x480xbf16> to vector<256x480xbf16>
    %cst_39 = arith.constant dense<0.000000e+00> : vector<15x480xf32>
    %47 = tpu.matmul %44, %46, %cst_39 {dimension_numbers = #tpu.dot_dimension_numbers<[1], [0], [0], [1], [0, 0, 1, 1], [], []>} : vector<15x256xbf16>, vector<256x480xbf16>, vector<15x480xf32> -> vector<15x480xf32>
    %48 = arith.addf %43, %47 : vector<15x480xf32>
    %c0_40 = arith.constant 0 : index
    %c0_41 = arith.constant 0 : index
    %49 = vector.load %arg3[%c0_40, %c0_41] : memref<1x480xf32, #tpu.memory_space<vmem>>, vector<1x480xf32>
    %50 = vector.broadcast %49 : vector<1x480xf32> to vector<15x480xf32>
    %51 = arith.addf %48, %50 : vector<15x480xf32>
    %cst_42 = arith.constant 0.000000e+00 : f32
    %52 = vector.broadcast %cst_42 : f32 to vector<15x480xf32>
    %53 = arith.maximumf %51, %52 : vector<15x480xf32>
    %54 = arith.truncf %53 : vector<15x480xf32> to vector<15x480xbf16>
    %c0_43 = arith.constant 0 : index
    %c0_44 = arith.constant 0 : index
    %c0_45 = arith.constant 0 : index
    %55 = vector.load %arg4[%c0_43, %c0_44, %c0_45] : memref<1x15x480xbf16, #tpu.memory_space<vmem>>, vector<1x15x480xbf16>
    %56 = vector.shape_cast %55 : vector<1x15x480xbf16> to vector<15x480xbf16>
    %57 = vector.shape_cast %54 : vector<15x480xbf16> to vector<1x15x480xbf16>
    tpu.vector_store %arg4[%c0_43, %c0_44, %c0_45], %57 {strides = array<i32>} : memref<1x15x480xbf16, #tpu.memory_space<vmem>>, vector<1x15x480xbf16>,
    return
  }
  func.func @transform_0(%arg0: i32) -> (i32, i32, i32, i32) {
    %c0_i32 = arith.constant 0 : i32
    %c0_i32_0 = arith.constant 0 : i32
    %c0_i32_1 = arith.constant 0 : i32
    %c0_i32_2 = arith.constant 0 : i32
    return %arg0, %c0_i32, %c0_i32_0, %c0_i32_1 : i32, i32, i32, i32
  }
  func.func @transform_1(%arg0: i32) -> (i32, i32, i32) {
    %c0_i32 = arith.constant 0 : i32
    %c0_i32_0 = arith.constant 0 : i32
    %c0_i32_1 = arith.constant 0 : i32
    %c0_i32_2 = arith.constant 0 : i32
    return %c0_i32, %c0_i32_0, %c0_i32_1 : i32, i32, i32
  }
  func.func @transform_2(%arg0: i32) -> (i32, i32) {
    %c0_i32 = arith.constant 0 : i32
    %c0_i32_0 = arith.constant 0 : i32
    %c0_i32_1 = arith.constant 0 : i32
    return %c0_i32, %c0_i32_0 : i32, i32
  }
  func.func @transform_3(%arg0: i32) -> (i32, i32, i32) {
    %c0_i32 = arith.constant 0 : i32
    %c0_i32_0 = arith.constant 0 : i32
    %c0_i32_1 = arith.constant 0 : i32
    return %arg0, %c0_i32, %c0_i32_0 : i32, i32, i32
  }
}

module attributes {stable_mosaic.version = 11 : i64} {
  func.func @_conv_rows_kernel(%arg0: i32, %arg1: memref<1x2x8x480xbf16, #tpu.memory_space<vmem>>, %arg2: memref<4x480x384xbf16, #tpu.memory_space<vmem>>, %arg3: memref<1x384xf32, #tpu.memory_space<vmem>>, %arg4: memref<1x6x384xbf16, #tpu.memory_space<vmem>>) attributes {dimension_semantics = [#tpu.dimension_semantics<parallel>], iteration_bounds = array<i64: 2>, scalar_prefetch = 0 : i64, scratch_operands = 0 : i64, tpu.core_type = #tpu.core_type<tc>, window_params = [{transform_indices = @transform_0, window_bounds = array<i64: 1, 2, 8, 480>}, {pipeline_mode = #tpu.pipeline_mode<synchronous>, transform_indices = @transform_1, window_bounds = array<i64: 4, 480, 384>}, {pipeline_mode = #tpu.pipeline_mode<synchronous>, transform_indices = @transform_2, window_bounds = array<i64: 1, 384>}, {transform_indices = @transform_3, window_bounds = array<i64: 1, 6, 384>}]} {
    %cst = arith.constant 0.000000e+00 : f32
    %0 = vector.broadcast %cst : f32 to vector<6x384xf32>
    %c0 = arith.constant 0 : index
    %c0_0 = arith.constant 0 : index
    %c0_1 = arith.constant 0 : index
    %c0_2 = arith.constant 0 : index
    %1 = vector.load %arg1[%c0, %c0_0, %c0_1, %c0_2] : memref<1x2x8x480xbf16, #tpu.memory_space<vmem>>, vector<1x1x8x480xbf16>
    %2 = vector.shape_cast %1 : vector<1x1x8x480xbf16> to vector<8x480xbf16>
    %3 = vector.extract_strided_slice %2 {offsets = [0, 0], sizes = [6, 480], strides = [1, 1]} : vector<8x480xbf16> to vector<6x480xbf16>
    %c0_3 = arith.constant 0 : index
    %c0_4 = arith.constant 0 : index
    %c0_5 = arith.constant 0 : index
    %4 = vector.load %arg2[%c0_3, %c0_4, %c0_5] : memref<4x480x384xbf16, #tpu.memory_space<vmem>>, vector<1x480x384xbf16>
    %5 = vector.shape_cast %4 : vector<1x480x384xbf16> to vector<480x384xbf16>
    %cst_6 = arith.constant dense<0.000000e+00> : vector<6x384xf32>
    %6 = tpu.matmul %3, %5, %cst_6 {dimension_numbers = #tpu.dot_dimension_numbers<[1], [0], [0], [1], [0, 0, 1, 1], [], []>} : vector<6x480xbf16>, vector<480x384xbf16>, vector<6x384xf32> -> vector<6x384xf32>
    %7 = arith.addf %0, %6 : vector<6x384xf32>
    %8 = vector.extract_strided_slice %2 {offsets = [1, 0], sizes = [6, 480], strides = [1, 1]} : vector<8x480xbf16> to vector<6x480xbf16>
    %c2 = arith.constant 2 : index
    %c0_7 = arith.constant 0 : index
    %c0_8 = arith.constant 0 : index
    %9 = vector.load %arg2[%c2, %c0_7, %c0_8] : memref<4x480x384xbf16, #tpu.memory_space<vmem>>, vector<1x480x384xbf16>
    %10 = vector.shape_cast %9 : vector<1x480x384xbf16> to vector<480x384xbf16>
    %cst_9 = arith.constant dense<0.000000e+00> : vector<6x384xf32>
    %11 = tpu.matmul %8, %10, %cst_9 {dimension_numbers = #tpu.dot_dimension_numbers<[1], [0], [0], [1], [0, 0, 1, 1], [], []>} : vector<6x480xbf16>, vector<480x384xbf16>, vector<6x384xf32> -> vector<6x384xf32>
    %12 = arith.addf %7, %11 : vector<6x384xf32>
    %c0_10 = arith.constant 0 : index
    %c1 = arith.constant 1 : index
    %c0_11 = arith.constant 0 : index
    %c0_12 = arith.constant 0 : index
    %13 = vector.load %arg1[%c0_10, %c1, %c0_11, %c0_12] : memref<1x2x8x480xbf16, #tpu.memory_space<vmem>>, vector<1x1x8x480xbf16>
    %14 = vector.shape_cast %13 : vector<1x1x8x480xbf16> to vector<8x480xbf16>
    %15 = vector.extract_strided_slice %14 {offsets = [0, 0], sizes = [6, 480], strides = [1, 1]} : vector<8x480xbf16> to vector<6x480xbf16>
    %c1_13 = arith.constant 1 : index
    %c0_14 = arith.constant 0 : index
    %c0_15 = arith.constant 0 : index
    %16 = vector.load %arg2[%c1_13, %c0_14, %c0_15] : memref<4x480x384xbf16, #tpu.memory_space<vmem>>, vector<1x480x384xbf16>
    %17 = vector.shape_cast %16 : vector<1x480x384xbf16> to vector<480x384xbf16>
    %cst_16 = arith.constant dense<0.000000e+00> : vector<6x384xf32>
    %18 = tpu.matmul %15, %17, %cst_16 {dimension_numbers = #tpu.dot_dimension_numbers<[1], [0], [0], [1], [0, 0, 1, 1], [], []>} : vector<6x480xbf16>, vector<480x384xbf16>, vector<6x384xf32> -> vector<6x384xf32>
    %19 = arith.addf %12, %18 : vector<6x384xf32>
    %20 = vector.extract_strided_slice %14 {offsets = [1, 0], sizes = [6, 480], strides = [1, 1]} : vector<8x480xbf16> to vector<6x480xbf16>
    %c3 = arith.constant 3 : index
    %c0_17 = arith.constant 0 : index
    %c0_18 = arith.constant 0 : index
    %21 = vector.load %arg2[%c3, %c0_17, %c0_18] : memref<4x480x384xbf16, #tpu.memory_space<vmem>>, vector<1x480x384xbf16>
    %22 = vector.shape_cast %21 : vector<1x480x384xbf16> to vector<480x384xbf16>
    %cst_19 = arith.constant dense<0.000000e+00> : vector<6x384xf32>
    %23 = tpu.matmul %20, %22, %cst_19 {dimension_numbers = #tpu.dot_dimension_numbers<[1], [0], [0], [1], [0, 0, 1, 1], [], []>} : vector<6x480xbf16>, vector<480x384xbf16>, vector<6x384xf32> -> vector<6x384xf32>
    %24 = arith.addf %19, %23 : vector<6x384xf32>
    %c0_20 = arith.constant 0 : index
    %c0_21 = arith.constant 0 : index
    %25 = vector.load %arg3[%c0_20, %c0_21] : memref<1x384xf32, #tpu.memory_space<vmem>>, vector<1x384xf32>
    %26 = vector.broadcast %25 : vector<1x384xf32> to vector<6x384xf32>
    %27 = arith.addf %24, %26 : vector<6x384xf32>
    %cst_22 = arith.constant 0.000000e+00 : f32
    %28 = vector.broadcast %cst_22 : f32 to vector<6x384xf32>
    %29 = arith.maximumf %27, %28 : vector<6x384xf32>
    %30 = arith.truncf %29 : vector<6x384xf32> to vector<6x384xbf16>
    %c0_23 = arith.constant 0 : index
    %c0_24 = arith.constant 0 : index
    %c0_25 = arith.constant 0 : index
    %31 = vector.load %arg4[%c0_23, %c0_24, %c0_25] : memref<1x6x384xbf16, #tpu.memory_space<vmem>>, vector<1x6x384xbf16>
    %32 = vector.shape_cast %31 : vector<1x6x384xbf16> to vector<6x384xbf16>
    %33 = vector.shape_cast %30 : vector<6x384xbf16> to vector<1x6x384xbf16>
    tpu.vector_store %arg4[%c0_23, %c0_24, %c0_25], %33 {strides = array<i32>} : memref<1x6x384xbf16, #tpu.memory_space<vmem>>, vector<1x6x384xbf16>,
    return
  }
  func.func @transform_0(%arg0: i32) -> (i32, i32, i32, i32) {
    %c0_i32 = arith.constant 0 : i32
    %c0_i32_0 = arith.constant 0 : i32
    %c0_i32_1 = arith.constant 0 : i32
    %c0_i32_2 = arith.constant 0 : i32
    return %arg0, %c0_i32, %c0_i32_0, %c0_i32_1 : i32, i32, i32, i32
  }
  func.func @transform_1(%arg0: i32) -> (i32, i32, i32) {
    %c0_i32 = arith.constant 0 : i32
    %c0_i32_0 = arith.constant 0 : i32
    %c0_i32_1 = arith.constant 0 : i32
    %c0_i32_2 = arith.constant 0 : i32
    return %c0_i32, %c0_i32_0, %c0_i32_1 : i32, i32, i32
  }
  func.func @transform_2(%arg0: i32) -> (i32, i32) {
    %c0_i32 = arith.constant 0 : i32
    %c0_i32_0 = arith.constant 0 : i32
    %c0_i32_1 = arith.constant 0 : i32
    return %c0_i32, %c0_i32_0 : i32, i32
  }
  func.func @transform_3(%arg0: i32) -> (i32, i32, i32) {
    %c0_i32 = arith.constant 0 : i32
    %c0_i32_0 = arith.constant 0 : i32
    %c0_i32_1 = arith.constant 0 : i32
    return %arg0, %c0_i32, %c0_i32_0 : i32, i32, i32
  }
}

module attributes {stable_mosaic.version = 11 : i64} {
  func.func @_tail_kernel(%arg0: i32, %arg1: memref<2x2304xbf16, #tpu.memory_space<vmem>>, %arg2: memref<2304x256xbf16, #tpu.memory_space<vmem>>, %arg3: memref<1x256xf32, #tpu.memory_space<vmem>>, %arg4: memref<256x1024xbf16, #tpu.memory_space<vmem>>, %arg5: memref<1x1024xf32, #tpu.memory_space<vmem>>, %arg6: memref<1024x7xbf16, #tpu.memory_space<vmem>>, %arg7: memref<1x7xf32, #tpu.memory_space<vmem>>, %arg8: memref<2x6xf32, #tpu.memory_space<vmem>>) attributes {dimension_semantics = [#tpu.dimension_semantics<parallel>], iteration_bounds = array<i64: 1>, scalar_prefetch = 0 : i64, scratch_operands = 0 : i64, tpu.core_type = #tpu.core_type<tc>, window_params = [{transform_indices = @transform_0, window_bounds = array<i64: 2, 2304>}, {pipeline_mode = #tpu.pipeline_mode<synchronous>, transform_indices = @transform_1, window_bounds = array<i64: 2304, 256>}, {pipeline_mode = #tpu.pipeline_mode<synchronous>, transform_indices = @transform_2, window_bounds = array<i64: 1, 256>}, {pipeline_mode = #tpu.pipeline_mode<synchronous>, transform_indices = @transform_3, window_bounds = array<i64: 256, 1024>}, {pipeline_mode = #tpu.pipeline_mode<synchronous>, transform_indices = @transform_4, window_bounds = array<i64: 1, 1024>}, {pipeline_mode = #tpu.pipeline_mode<synchronous>, transform_indices = @transform_5, window_bounds = array<i64: 1024, 7>}, {pipeline_mode = #tpu.pipeline_mode<synchronous>, transform_indices = @transform_6, window_bounds = array<i64: 1, 7>}, {transform_indices = @transform_7, window_bounds = array<i64: 2, 6>}]} {
    %c0 = arith.constant 0 : index
    %c0_0 = arith.constant 0 : index
    %0 = vector.load %arg1[%c0, %c0_0] : memref<2x2304xbf16, #tpu.memory_space<vmem>>, vector<2x2304xbf16>
    %c0_1 = arith.constant 0 : index
    %c0_2 = arith.constant 0 : index
    %1 = vector.load %arg2[%c0_1, %c0_2] : memref<2304x256xbf16, #tpu.memory_space<vmem>>, vector<2304x256xbf16>
    %cst = arith.constant dense<0.000000e+00> : vector<2x256xf32>
    %2 = tpu.matmul %0, %1, %cst {dimension_numbers = #tpu.dot_dimension_numbers<[1], [0], [0], [1], [0, 0, 1, 1], [], []>} : vector<2x2304xbf16>, vector<2304x256xbf16>, vector<2x256xf32> -> vector<2x256xf32>
    %c0_3 = arith.constant 0 : index
    %c0_4 = arith.constant 0 : index
    %3 = vector.load %arg3[%c0_3, %c0_4] : memref<1x256xf32, #tpu.memory_space<vmem>>, vector<1x256xf32>
    %4 = vector.broadcast %3 : vector<1x256xf32> to vector<2x256xf32>
    %5 = arith.addf %2, %4 : vector<2x256xf32>
    %cst_5 = arith.constant 0.000000e+00 : f32
    %6 = vector.broadcast %cst_5 : f32 to vector<2x256xf32>
    %7 = arith.maximumf %5, %6 : vector<2x256xf32>
    %8 = arith.truncf %7 : vector<2x256xf32> to vector<2x256xbf16>
    %c0_6 = arith.constant 0 : index
    %c0_7 = arith.constant 0 : index
    %9 = vector.load %arg4[%c0_6, %c0_7] : memref<256x1024xbf16, #tpu.memory_space<vmem>>, vector<256x1024xbf16>
    %cst_8 = arith.constant dense<0.000000e+00> : vector<2x1024xf32>
    %10 = tpu.matmul %8, %9, %cst_8 {dimension_numbers = #tpu.dot_dimension_numbers<[1], [0], [0], [1], [0, 0, 1, 1], [], []>} : vector<2x256xbf16>, vector<256x1024xbf16>, vector<2x1024xf32> -> vector<2x1024xf32>
    %c0_9 = arith.constant 0 : index
    %c0_10 = arith.constant 0 : index
    %11 = vector.load %arg5[%c0_9, %c0_10] : memref<1x1024xf32, #tpu.memory_space<vmem>>, vector<1x1024xf32>
    %12 = vector.broadcast %11 : vector<1x1024xf32> to vector<2x1024xf32>
    %13 = arith.addf %10, %12 : vector<2x1024xf32>
    %cst_11 = arith.constant 0.000000e+00 : f32
    %14 = vector.broadcast %cst_11 : f32 to vector<2x1024xf32>
    %15 = arith.maximumf %13, %14 : vector<2x1024xf32>
    %16 = arith.truncf %15 : vector<2x1024xf32> to vector<2x1024xbf16>
    %c0_12 = arith.constant 0 : index
    %c0_13 = arith.constant 0 : index
    %17 = vector.load %arg6[%c0_12, %c0_13] : memref<1024x7xbf16, #tpu.memory_space<vmem>>, vector<1024x7xbf16>
    %cst_14 = arith.constant dense<0.000000e+00> : vector<2x7xf32>
    %18 = tpu.matmul %16, %17, %cst_14 {dimension_numbers = #tpu.dot_dimension_numbers<[1], [0], [0], [1], [0, 0, 1, 1], [], []>} : vector<2x1024xbf16>, vector<1024x7xbf16>, vector<2x7xf32> -> vector<2x7xf32>
    %c0_15 = arith.constant 0 : index
    %c0_16 = arith.constant 0 : index
    %19 = vector.load %arg7[%c0_15, %c0_16] : memref<1x7xf32, #tpu.memory_space<vmem>>, vector<1x7xf32>
    %20 = vector.broadcast %19 : vector<1x7xf32> to vector<2x7xf32>
    %21 = arith.addf %18, %20 : vector<2x7xf32>
    %22 = vector.extract_strided_slice %21 {offsets = [0, 0], sizes = [2, 1], strides = [1, 1]} : vector<2x7xf32> to vector<2x1xf32>
    %23 = vector.extract_strided_slice %21 {offsets = [0, 1], sizes = [2, 6], strides = [1, 1]} : vector<2x7xf32> to vector<2x6xf32>
    %cst_17 = arith.constant dense<0.000000e+00> : vector<2xf32>
    %24 = vector.multi_reduction <add>, %23, %cst_17 [1] : vector<2x6xf32> to vector<2xf32>
    %25 = vector.shape_cast %24 : vector<2xf32> to vector<2x1xf32>
    %cst_18 = arith.constant 6.000000e+00 : f32
    %26 = vector.broadcast %cst_18 : f32 to vector<2x1xf32>
    %27 = arith.divf %25, %26 : vector<2x1xf32>
    %28 = vector.broadcast %27 : vector<2x1xf32> to vector<2x6xf32>
    %29 = arith.subf %23, %28 : vector<2x6xf32>
    %30 = vector.broadcast %22 : vector<2x1xf32> to vector<2x6xf32>
    %31 = arith.addf %30, %29 : vector<2x6xf32>
    %c0_19 = arith.constant 0 : index
    %c0_20 = arith.constant 0 : index
    %32 = vector.load %arg8[%c0_19, %c0_20] : memref<2x6xf32, #tpu.memory_space<vmem>>, vector<2x6xf32>
    tpu.vector_store %arg8[%c0_19, %c0_20], %31 {strides = array<i32>} : memref<2x6xf32, #tpu.memory_space<vmem>>, vector<2x6xf32>,
    return
  }
  func.func @transform_0(%arg0: i32) -> (i32, i32) {
    %c0_i32 = arith.constant 0 : i32
    %c0_i32_0 = arith.constant 0 : i32
    return %arg0, %c0_i32 : i32, i32
  }
  func.func @transform_1(%arg0: i32) -> (i32, i32) {
    %c0_i32 = arith.constant 0 : i32
    %c0_i32_0 = arith.constant 0 : i32
    %c0_i32_1 = arith.constant 0 : i32
    return %c0_i32, %c0_i32_0 : i32, i32
  }
  func.func @transform_2(%arg0: i32) -> (i32, i32) {
    %c0_i32 = arith.constant 0 : i32
    %c0_i32_0 = arith.constant 0 : i32
    %c0_i32_1 = arith.constant 0 : i32
    return %c0_i32, %c0_i32_0 : i32, i32
  }
  func.func @transform_3(%arg0: i32) -> (i32, i32) {
    %c0_i32 = arith.constant 0 : i32
    %c0_i32_0 = arith.constant 0 : i32
    %c0_i32_1 = arith.constant 0 : i32
    return %c0_i32, %c0_i32_0 : i32, i32
  }
  func.func @transform_4(%arg0: i32) -> (i32, i32) {
    %c0_i32 = arith.constant 0 : i32
    %c0_i32_0 = arith.constant 0 : i32
    %c0_i32_1 = arith.constant 0 : i32
    return %c0_i32, %c0_i32_0 : i32, i32
  }
  func.func @transform_5(%arg0: i32) -> (i32, i32) {
    %c0_i32 = arith.constant 0 : i32
    %c0_i32_0 = arith.constant 0 : i32
    %c0_i32_1 = arith.constant 0 : i32
    return %c0_i32, %c0_i32_0 : i32, i32
  }
  func.func @transform_6(%arg0: i32) -> (i32, i32) {
    %c0_i32 = arith.constant 0 : i32
    %c0_i32_0 = arith.constant 0 : i32
    %c0_i32_1 = arith.constant 0 : i32
    return %c0_i32, %c0_i32_0 : i32, i32
  }
  func.func @transform_7(%arg0: i32) -> (i32, i32) {
    %c0_i32 = arith.constant 0 : i32
    %c0_i32_0 = arith.constant 0 : i32
    return %arg0, %c0_i32 : i32, i32
  }
}

</mosaic_0001>

<llo_original>
// kernel: dqn_forward_pallas.3
$region0: #{dqn_forward_pallas.3}
  #allocation0 [shape = 'u32[]', space=smem, size = 0x4, offset = 0x4, fixed_abs, tag = 'smem constant byte address 0x4 - core index']
  #allocation1 [shape = 'u32[72,128]{1,0:T(1,128)}', space=vmem, size = 0x9000, scoped, tag = 'internal scratch']
  %s0 = inlined_call_operand.vmem [shape: bf16[2,4,16,256], index: 0, kind: input, shape index: {}]
  %s1 = inlined_call_operand.vmem [shape: bf16[8,256,480], index: 1, kind: input, shape index: {}]
  %s2 = inlined_call_operand.vmem [shape: f32[1,480], index: 2, kind: input, shape index: {}]
  %s3 = inlined_call_operand.vmem [shape: bf16[2,15,480], index: 3, kind: output, shape index: {}]
  %s4 = sld [smem:[#allocation0]]
  $region45: #{dqn_forward_pallas.3} parent=0
    _
  %s6 = ssub.s32 1, %s4
  %s7 = scalar_select 0, %s6, %s4
  loop: start=0, step=1, limit=4
  $region2: #{dqn_forward_pallas.3} parent=0 // loop_pre_header
    _
  $region3: #{dqn_forward_pallas.3} parent=0 // loop_header
    %s9 = sphi 0, %s13
    %p10 = scmp.ge.s32.totalorder %s9, 4
    %s19 = sphi 0, %s21
    %s22 = sphi 0, %s19
    %s23 = sphi 0, %s22
    %s39 = sphi 0, %s23
    %s43 = sphi 0, %s43
    %s45 = sphi 0, %s43
    %s46 = sphi 0, %s45
    %s60 = sphi 0, %s46
    %s64 = sphi 0, %s64
    %s66 = sphi 0, %s64
    %s67 = sphi 0, %s66
    %s81 = sphi 0, %s67
    %s87 = sphi 0, %s89
    %s90 = sphi 0, %s87
    %s91 = sphi 0, %s90
    %s107 = sphi 0, %s91
  $region4: #{dqn_forward_pallas.3} parent=0 // loop_header_branch
    %12 = sbr.rel (%p10) target = $region8
  $region5: #{dqn_forward_pallas.3} parent=0 // loop_body
    %s14 = ssub.s32 %s9, 1
    %s15 = ssub.s32 %s9, 2
    %s16 = sadd.s32 %s9, 1
    %s17 = ssub.s32 %s9, %s16
    %p18 = scmp.eq.s32.totalorder %s17, 0
    %s20 = sadd.s32 %s19, 1
    %s21 = scalar_select %p18, %s19, %s20
    %p24 = pneg %p18
    %p25 = scmp.eq.s32.totalorder %s9, 1
    %p26 = por %p24, %p25
    %p27 = scmp.ne.s32.totalorder %s19, %s22
    %p28 = scmp.eq.s32.totalorder %s9, 0
    %p29 = por %p27, %p28
    %p30 = scmp.ne.s32.totalorder %s19, %s22
    %p31 = scmp.eq.s32.totalorder %s14, 1
    %p32 = por %p30, %p31
    %p33 = scmp.ne.s32.totalorder %s22, %s23
    %p34 = scmp.eq.s32.totalorder %s14, 0
    %p35 = por %p33, %p34
    %p36 = scmp.ne.s32.totalorder %s22, %s23
    %p37 = scmp.eq.s32.totalorder %s15, 1
    %p38 = por %p36, %p37
    %p40 = scmp.ne.s32.totalorder %s23, %s39
    %p41 = scmp.eq.s32.totalorder %s15, 0
    %p42 = por %p40, %p41
    %s44 = sadd.s32 %s43, 1
    %p47 = scmp.eq.s32.totalorder %s9, 1
    %p48 = scmp.ne.s32.totalorder %s43, %s45
    %p49 = scmp.eq.s32.totalorder %s9, 0
    %p50 = por %p48, %p49
    %p51 = scmp.ne.s32.totalorder %s43, %s45
    %p52 = scmp.eq.s32.totalorder %s14, 1
    %p53 = por %p51, %p52
    %p54 = scmp.ne.s32.totalorder %s45, %s46
    %p55 = scmp.eq.s32.totalorder %s14, 0
    %p56 = por %p54, %p55
    %p57 = scmp.ne.s32.totalorder %s45, %s46
    %p58 = scmp.eq.s32.totalorder %s15, 1
    %p59 = por %p57, %p58
    %p61 = scmp.ne.s32.totalorder %s46, %s60
    %p62 = scmp.eq.s32.totalorder %s15, 0
    %p63 = por %p61, %p62
    %s65 = sadd.s32 %s64, 1
    %p68 = scmp.eq.s32.totalorder %s9, 1
    %p69 = scmp.ne.s32.totalorder %s64, %s66
    %p70 = scmp.eq.s32.totalorder %s9, 0
    %p71 = por %p69, %p70
    %p72 = scmp.ne.s32.totalorder %s64, %s66
    %p73 = scmp.eq.s32.totalorder %s14, 1
    %p74 = por %p72, %p73
    %p75 = scmp.ne.s32.totalorder %s66, %s67
    %p76 = scmp.eq.s32.totalorder %s14, 0
    %p77 = por %p75, %p76
    %p78 = scmp.ne.s32.totalorder %s66, %s67
    %p79 = scmp.eq.s32.totalorder %s15, 1
    %p80 = por %p78, %p79
    %p82 = scmp.ne.s32.totalorder %s67, %s81
    %p83 = scmp.eq.s32.totalorder %s15, 0
    %p84 = por %p82, %p83
    %s85 = ssub.s32 %s9, %s16
    %p86 = scmp.eq.s32.totalorder %s85, 0
    %s88 = sadd.s32 %s87, 1
    %s89 = scalar_select %p86, %s87, %s88
    %p92 = pneg %p86
    %p93 = scmp.eq.s32.totalorder %s9, 1
    %p94 = por %p92, %p93
    %p95 = scmp.ne.s32.totalorder %s87, %s90
    %p96 = scmp.eq.s32.totalorder %s9, 0
    %p97 = por %p95, %p96
    %p98 = scmp.ne.s32.totalorder %s87, %s90
    %p99 = scmp.eq.s32.totalorder %s14, 1
    %p100 = por %p98, %p99
    %p101 = scmp.ne.s32.totalorder %s90, %s91
    %p102 = scmp.eq.s32.totalorder %s14, 0
    %p103 = por %p101, %p102
    %p104 = scmp.ne.s32.totalorder %s90, %s91
    %p105 = scmp.eq.s32.totalorder %s15, 1
    %p106 = por %p104, %p105
    %p108 = scmp.ne.s32.totalorder %s91, %s107
    %p109 = scmp.eq.s32.totalorder %s15, 0
    %p110 = por %p108, %p109
    %p111 = scmp.le.s32.totalorder 1, %s9
    %p112 = scmp.lt.s32.totalorder %s9, 3
    %p113 = pnand %p111, %p112
    %p114 = pneg %p113
    // Predicated region
    $region9: #{dqn_forward_pallas.3} parent=5 // pred_check
      _
    $region10: #{dqn_forward_pallas.3} parent=5 // pred_check_branch
      %116 = sbr.rel (%p113) target = $region12
    $region11: #{dqn_forward_pallas.3} parent=5 // pred_region
      %s117 = ssub.s32 %s9, 1
      // Predicated region
      $region13: #{dqn_forward_pallas.3} parent=11 // pred_check
        %p118 = pneg %p56
      $region14: #{dqn_forward_pallas.3} parent=11 // pred_check_branch
        %120 = sbr.rel (%p118) target = $region16
      $region15: #{dqn_forward_pallas.3} parent=11 // pred_region
        _
      $region16: #{dqn_forward_pallas.3} parent=11 // pred_fallthru
        _
      // Predicated region
      $region17: #{dqn_forward_pallas.3} parent=11 // pred_check
        %p121 = pneg %p77
      $region18: #{dqn_forward_pallas.3} parent=11 // pred_check_branch
        %123 = sbr.rel (%p121) target = $region20
      $region19: #{dqn_forward_pallas.3} parent=11 // pred_region
        _
      $region20: #{dqn_forward_pallas.3} parent=11 // pred_fallthru
        _
    $region12: #{dqn_forward_pallas.3} parent=5 // pred_fallthru
      _
    %p124 = scmp.lt.s32.totalorder %s9, 2
    // Predicated region
    $region21: #{dqn_forward_pallas.3} parent=5 // pred_check
      %p125 = pneg %p124
    $region22: #{dqn_forward_pallas.3} parent=5 // pred_check_branch
      %127 = sbr.rel (%p125) target = $region24
    $region23: #{dqn_forward_pallas.3} parent=5 // pred_region
      // Predicated region
      $region25: #{dqn_forward_pallas.3} parent=23 // pred_check
        %p128 = pneg %p29
      $region26: #{dqn_forward_pallas.3} parent=23 // pred_check_branch
        %130 = sbr.rel (%p128) target = $region28
      $region27: #{dqn_forward_pallas.3} parent=23 // pred_region
        %p131 = scmp.lt.s32.totalorder %s9, 1
        %s132 = scalar_select %p131, %s9, 1
        %s133 = smul.addr %s132, 16
        %s134 = smul.addr %s133, 4
        %s135 = scalar_lea.vmem %s0, %s134
      $region28: #{dqn_forward_pallas.3} parent=23 // pred_fallthru
        _
    $region24: #{dqn_forward_pallas.3} parent=5 // pred_fallthru
      _
    %p136 = scmp.le.s32.totalorder 1, %s9
    %p137 = scmp.lt.s32.totalorder %s9, 3
    %p138 = pnand %p136, %p137
    %p139 = pneg %p138
    // Predicated region
    $region29: #{dqn_forward_pallas.3} parent=5 // pred_check
      _
    $region30: #{dqn_forward_pallas.3} parent=5 // pred_check_branch
      %141 = sbr.rel (%p138) target = $region32
    $region31: #{dqn_forward_pallas.3} parent=5 // pred_region
      %s142 = ssub.s32 %s9, 1
      %p143 = scmp.lt.s32.totalorder %s14, 1
      %s144 = scalar_select %p143, %s14, 1
      %s145 = smul.addr %s144, 16
      %s146 = smul.addr %s145, 4
      %s147 = scalar_lea.vmem %s0, %s146
      %p148 = pneg %p35
      %p149 = pneg %p32
      %p150 = pneg %p56
      %p151 = pneg %p53
      %p152 = pneg %p77
      %p153 = pneg %p74
      %p154 = pneg %p103
      %p155 = pneg %p100
      %p156 = scmp.lt.s32.totalorder %s14, 1
      %s157 = scalar_select %p156, %s14, 1
      %s158 = smul.addr %s157, 8
      %s159 = smul.addr %s158, 4
      %s160 = scalar_lea.vmem %s3, %s159
      %p161 = scmp.lt.s32.totalorder %s14, 1
      %s162 = scalar_select %p161, %s14, 1
      %s163 = smul.addr %s162, 16
      %s164 = smul.addr %s163, 4
      %s165 = scalar_lea.vmem %s0, %s164
      %p166 = scmp.lt.s32.totalorder %s14, 1
      %s167 = scalar_select %p166, %s14, 1
      %s168 = smul.addr %s167, 8
      %s169 = smul.addr %s168, 4
      %s170 = scalar_lea.vmem %s3, %s169
      %v171 = vld [vmem:[%s165] sm:$0xff]
      %v172 = vld [vmem:[%s165 + $0x8] sm:$0xff]
      %v173 = vld [vmem:[%s1] sm:$0xff]
      %v174 = vld [vmem:[%s1 + $0x8] sm:$0xff]
      %v175 = vld [vmem:[%s1 + $0x10] sm:$0xff]
      %v176 = vld [vmem:[%s1 + $0x18] sm:$0xff]
      %v177 = vld [vmem:[%s1 + $0x20] sm:$0xff]
      %v178 = vld [vmem:[%s1 + $0x28] sm:$0xff]
      %v179 = vld [vmem:[%s1 + $0x30] sm:$0xff]
      %v180 = vld [vmem:[%s1 + $0x38] sm:$0xff]
      %v181 = vld [vmem:[%s1 + $0x40] sm:$0xff]
      %v182 = vld [vmem:[%s1 + $0x48] sm:$0xff]
      %v183 = vld [vmem:[%s1 + $0x50] sm:$0xff]
      %v184 = vld [vmem:[%s1 + $0x58] sm:$0xff]
      %v185 = vld [vmem:[%s1 + $0x60] sm:$0xff]
      %v186 = vld [vmem:[%s1 + $0x68] sm:$0xff]
      %v187 = vld [vmem:[%s1 + $0x70] sm:$0xff]
      %v188 = vld [vmem:[%s1 + $0x78] sm:$0xff]
      %v189 = vld [vmem:[%s1 + $0x80] sm:$0xff]
      %v190 = vld [vmem:[%s1 + $0x88] sm:$0xff]
      %v191 = vld [vmem:[%s1 + $0x90] sm:$0xff]
      %v192 = vld [vmem:[%s1 + $0x98] sm:$0xff]
      %v193 = vld [vmem:[%s1 + $0xa0] sm:$0xff]
      %v194 = vld [vmem:[%s1 + $0xa8] sm:$0xff]
      %v195 = vld [vmem:[%s1 + $0xb0] sm:$0xff]
      %v196 = vld [vmem:[%s1 + $0xb8] sm:$0xff]
      %v197 = vld [vmem:[%s1 + $0xc0] sm:$0xff]
      %v198 = vld [vmem:[%s1 + $0xc8] sm:$0xff]
      %v199 = vld [vmem:[%s1 + $0xd0] sm:$0xff]
      %v200 = vld [vmem:[%s1 + $0xd8] sm:$0xff]
      %v201 = vld [vmem:[%s1 + $0xe0] sm:$0xff]
      %v202 = vld [vmem:[%s1 + $0xe8] sm:$0xff]
      %v203 = vld [vmem:[%s1 + $0xf0] sm:$0xff]
      %v204 = vld [vmem:[%s1 + $0xf8] sm:$0xff]
      %v205 = vld [vmem:[%s1 + $0x100] sm:$0xff]
      %v206 = vld [vmem:[%s1 + $0x108] sm:$0xff]
      %v207 = vld [vmem:[%s1 + $0x110] sm:$0xff]
      %v208 = vld [vmem:[%s1 + $0x118] sm:$0xff]
      %v209 = vld [vmem:[%s1 + $0x120] sm:$0xff]
      %v210 = vld [vmem:[%s1 + $0x128] sm:$0xff]
      %v211 = vld [vmem:[%s1 + $0x130] sm:$0xff]
      %v212 = vld [vmem:[%s1 + $0x138] sm:$0xff]
      %v213 = vld [vmem:[%s1 + $0x140] sm:$0xff]
      %v214 = vld [vmem:[%s1 + $0x148] sm:$0xff]
      %v215 = vld [vmem:[%s1 + $0x150] sm:$0xff]
      %v216 = vld [vmem:[%s1 + $0x158] sm:$0xff]
      %v217 = vld [vmem:[%s1 + $0x160] sm:$0xff]
      %v218 = vld [vmem:[%s1 + $0x168] sm:$0xff]
      %v219 = vld [vmem:[%s1 + $0x170] sm:$0xff]
      %v220 = vld [vmem:[%s1 + $0x178] sm:$0xff]
      %v221 = vld [vmem:[%s1 + $0x180] sm:$0xff]
      %v222 = vld [vmem:[%s1 + $0x188] sm:$0xff]
      %v223 = vld [vmem:[%s1 + $0x190] sm:$0xff]
      %v224 = vld [vmem:[%s1 + $0x198] sm:$0xff]
      %v225 = vld [vmem:[%s1 + $0x1a0] sm:$0xff]
      %v226 = vld [vmem:[%s1 + $0x1a8] sm:$0xff]
      %v227 = vld [vmem:[%s1 + $0x1b0] sm:$0xff]
      %v228 = vld [vmem:[%s1 + $0x1b8] sm:$0xff]
      %v229 = vld [vmem:[%s1 + $0x1c0] sm:$0xff]
      %v230 = vld [vmem:[%s1 + $0x1c8] sm:$0xff]
      %v231 = vld [vmem:[%s1 + $0x1d0] sm:$0xff]
      %v232 = vld [vmem:[%s1 + $0x1d8] sm:$0xff]
      %v233 = vld [vmem:[%s1 + $0x1e0] sm:$0xff]
      %v234 = vld [vmem:[%s1 + $0x1e8] sm:$0xff]
      %v235 = vld [vmem:[%s1 + $0x1f0] sm:$0xff]
      %v236 = vld [vmem:[%s1 + $0x1f8] sm:$0xff]
      %s237 = scalar_lea.vmem %s1, 2048
      %v238 = vld [vmem:[%s237] sm:$0xff]
      %v239 = vld [vmem:[%s237 + $0x8] sm:$0xff]
      %v240 = vld [vmem:[%s237 + $0x10] sm:$0xff]
      %v241 = vld [vmem:[%s237 + $0x18] sm:$0xff]
      %v242 = vld [vmem:[%s237 + $0x20] sm:$0xff]
      %v243 = vld [vmem:[%s237 + $0x28] sm:$0xff]
      %v244 = vld [vmem:[%s237 + $0x30] sm:$0xff]
      %v245 = vld [vmem:[%s237 + $0x38] sm:$0xff]
      %v246 = vld [vmem:[%s237 + $0x40] sm:$0xff]
      %v247 = vld [vmem:[%s237 + $0x48] sm:$0xff]
      %v248 = vld [vmem:[%s237 + $0x50] sm:$0xff]
      %v249 = vld [vmem:[%s237 + $0x58] sm:$0xff]
      %v250 = vld [vmem:[%s237 + $0x60] sm:$0xff]
      %v251 = vld [vmem:[%s237 + $0x68] sm:$0xff]
      %v252 = vld [vmem:[%s237 + $0x70] sm:$0xff]
      %v253 = vld [vmem:[%s237 + $0x78] sm:$0xff]
      %v254 = vld [vmem:[%s237 + $0x80] sm:$0xff]
      %v255 = vld [vmem:[%s237 + $0x88] sm:$0xff]
      %v256 = vld [vmem:[%s237 + $0x90] sm:$0xff]
      %v257 = vld [vmem:[%s237 + $0x98] sm:$0xff]
      %v258 = vld [vmem:[%s237 + $0xa0] sm:$0xff]
      %v259 = vld [vmem:[%s237 + $0xa8] sm:$0xff]
      %v260 = vld [vmem:[%s237 + $0xb0] sm:$0xff]
      %v261 = vld [vmem:[%s237 + $0xb8] sm:$0xff]
      %v262 = vld [vmem:[%s237 + $0xc0] sm:$0xff]
      %v263 = vld [vmem:[%s237 + $0xc8] sm:$0xff]
      %v264 = vld [vmem:[%s237 + $0xd0] sm:$0xff]
      %v265 = vld [vmem:[%s237 + $0xd8] sm:$0xff]
      %v266 = vld [vmem:[%s237 + $0xe0] sm:$0xff]
      %v267 = vld [vmem:[%s237 + $0xe8] sm:$0xff]
      %v268 = vld [vmem:[%s237 + $0xf0] sm:$0xff]
      %v269 = vld [vmem:[%s237 + $0xf8] sm:$0xff]
      %v270 = vld [vmem:[%s237 + $0x100] sm:$0xff]
      %v271 = vld [vmem:[%s237 + $0x108] sm:$0xff]
      %v272 = vld [vmem:[%s237 + $0x110] sm:$0xff]
      %v273 = vld [vmem:[%s237 + $0x118] sm:$0xff]
      %v274 = vld [vmem:[%s237 + $0x120] sm:$0xff]
      %v275 = vld [vmem:[%s237 + $0x128] sm:$0xff]
      %v276 = vld [vmem:[%s237 + $0x130] sm:$0xff]
      %v277 = vld [vmem:[%s237 + $0x138] sm:$0xff]
      %v278 = vld [vmem:[%s237 + $0x140] sm:$0xff]
      %v279 = vld [vmem:[%s237 + $0x148] sm:$0xff]
      %v280 = vld [vmem:[%s237 + $0x150] sm:$0xff]
      %v281 = vld [vmem:[%s237 + $0x158] sm:$0xff]
      %v282 = vld [vmem:[%s237 + $0x160] sm:$0xff]
      %v283 = vld [vmem:[%s237 + $0x168] sm:$0xff]
      %v284 = vld [vmem:[%s237 + $0x170] sm:$0xff]
      %v285 = vld [vmem:[%s237 + $0x178] sm:$0xff]
      %v286 = vld [vmem:[%s237 + $0x180] sm:$0xff]
      %v287 = vld [vmem:[%s237 + $0x188] sm:$0xff]
      %v288 = vld [vmem:[%s237 + $0x190] sm:$0xff]
      %v289 = vld [vmem:[%s237 + $0x198] sm:$0xff]
      %v290 = vld [vmem:[%s237 + $0x1a0] sm:$0xff]
      %v291 = vld [vmem:[%s237 + $0x1a8] sm:$0xff]
      %v292 = vld [vmem:[%s237 + $0x1b0] sm:$0xff]
      %v293 = vld [vmem:[%s237 + $0x1b8] sm:$0xff]
      %v294 = vld [vmem:[%s237 + $0x1c0] sm:$0xff]
      %v295 = vld [vmem:[%s237 + $0x1c8] sm:$0xff]
      %v296 = vld [vmem:[%s237 + $0x1d0] sm:$0xff]
      %v297 = vld [vmem:[%s237 + $0x1d8] sm:$0xff]
      %v298 = vld [vmem:[%s237 + $0x1e0] sm:$0xff]
      %v299 = vld [vmem:[%s237 + $0x1e8] sm:$0xff]
      %v300 = vld [vmem:[%s237 + $0x1f0] sm:$0xff]
      %v301 = vld [vmem:[%s237 + $0x1f8] sm:$0xff]
      %v304 = vunpack.c.l.b16 %v171
      %v305 = vunpack.c.h.b16 %v171
      %v306 = vunpack.c.l.b16 %v172
      %v307 = vunpack.c.h.b16 %v172
      %v308 = vpack.c.b16 %v306, %v304
      %v309 = vpack.c.b16 %v307, %v305
      %v311 = vshrl.u32 %v308, 16
      %v313 = vshll.u32 %v308, 16
      %v315 = vrot.slane %v313, 1
      %v316 = vor.u32 %v311, %v315
      %v318 = vshrl.u32 %v309, 16
      %v320 = vshll.u32 %v309, 16
      %v322 = vrot.slane %v320, 1
      %v323 = vor.u32 %v318, %v322
      %v390 = vunpack.c.l.b16 %v238
      %v391 = vunpack.c.h.b16 %v238
      %v392 = vunpack.c.l.b16 %v239
      %v393 = vunpack.c.h.b16 %v239
      %v394 = vunpack.c.l.b16 %v240
      %v395 = vunpack.c.h.b16 %v240
      %v396 = vunpack.c.l.b16 %v241
      %v397 = vunpack.c.h.b16 %v241
      %v398 = vunpack.c.l.b16 %v242
      %v399 = vunpack.c.h.b16 %v242
      %v400 = vunpack.c.l.b16 %v243
      %v401 = vunpack.c.h.b16 %v243
      %v402 = vunpack.c.l.b16 %v244
      %v403 = vunpack.c.h.b16 %v244
      %v404 = vunpack.c.l.b16 %v245
      %v405 = vunpack.c.h.b16 %v245
      %v406 = vunpack.c.l.b16 %v246
      %v407 = vunpack.c.h.b16 %v246
      %v408 = vunpack.c.l.b16 %v247
      %v409 = vunpack.c.h.b16 %v247
      %v410 = vunpack.c.l.b16 %v248
      %v411 = vunpack.c.h.b16 %v248
      %v412 = vunpack.c.l.b16 %v249
      %v413 = vunpack.c.h.b16 %v249
      %v414 = vunpack.c.l.b16 %v250
      %v415 = vunpack.c.h.b16 %v250
      %v416 = vunpack.c.l.b16 %v251
      %v417 = vunpack.c.h.b16 %v251
      %v418 = vunpack.c.l.b16 %v252
      %v419 = vunpack.c.h.b16 %v252
      %v420 = vunpack.c.l.b16 %v253
      %v421 = vunpack.c.h.b16 %v253
      %v422 = vunpack.c.l.b16 %v254
      %v423 = vunpack.c.h.b16 %v254
      %v424 = vunpack.c.l.b16 %v255
      %v425 = vunpack.c.h.b16 %v255
      %v426 = vunpack.c.l.b16 %v256
      %v427 = vunpack.c.h.b16 %v256
      %v428 = vunpack.c.l.b16 %v257
      %v429 = vunpack.c.h.b16 %v257
      %v430 = vunpack.c.l.b16 %v258
      %v431 = vunpack.c.h.b16 %v258
      %v432 = vunpack.c.l.b16 %v259
      %v433 = vunpack.c.h.b16 %v259
      %v434 = vunpack.c.l.b16 %v260
      %v435 = vunpack.c.h.b16 %v260
      %v436 = vunpack.c.l.b16 %v261
      %v437 = vunpack.c.h.b16 %v261
      %v438 = vunpack.c.l.b16 %v262
      %v439 = vunpack.c.h.b16 %v262
      %v440 = vunpack.c.l.b16 %v263
      %v441 = vunpack.c.h.b16 %v263
      %v442 = vunpack.c.l.b16 %v264
      %v443 = vunpack.c.h.b16 %v264
      %v444 = vunpack.c.l.b16 %v265
      %v445 = vunpack.c.h.b16 %v265
      %v446 = vunpack.c.l.b16 %v266
      %v447 = vunpack.c.h.b16 %v266
      %v448 = vunpack.c.l.b16 %v267
      %v449 = vunpack.c.h.b16 %v267
      %v450 = vunpack.c.l.b16 %v268
      %v451 = vunpack.c.h.b16 %v268
      %v452 = vunpack.c.l.b16 %v269
      %v453 = vunpack.c.h.b16 %v269
      %v454 = vunpack.c.l.b16 %v270
      %v455 = vunpack.c.h.b16 %v270
      %v456 = vunpack.c.l.b16 %v271
      %v457 = vunpack.c.h.b16 %v271
      %v458 = vunpack.c.l.b16 %v272
      %v459 = vunpack.c.h.b16 %v272
      %v460 = vunpack.c.l.b16 %v273
      %v461 = vunpack.c.h.b16 %v273
      %v462 = vunpack.c.l.b16 %v274
      %v463 = vunpack.c.h.b16 %v274
      %v464 = vunpack.c.l.b16 %v275
      %v465 = vunpack.c.h.b16 %v275
      %v466 = vunpack.c.l.b16 %v276
      %v467 = vunpack.c.h.b16 %v276
      %v468 = vunpack.c.l.b16 %v277
      %v469 = vunpack.c.h.b16 %v277
      %v470 = vunpack.c.l.b16 %v278
      %v471 = vunpack.c.h.b16 %v278
      %v472 = vunpack.c.l.b16 %v279
      %v473 = vunpack.c.h.b16 %v279
      %v474 = vunpack.c.l.b16 %v280
      %v475 = vunpack.c.h.b16 %v280
      %v476 = vunpack.c.l.b16 %v281
      %v477 = vunpack.c.h.b16 %v281
      %v478 = vunpack.c.l.b16 %v282
      %v479 = vunpack.c.h.b16 %v282
      %v480 = vunpack.c.l.b16 %v283
      %v481 = vunpack.c.h.b16 %v283
      %v482 = vunpack.c.l.b16 %v284
      %v483 = vunpack.c.h.b16 %v284
      %v484 = vunpack.c.l.b16 %v285
      %v485 = vunpack.c.h.b16 %v285
      %v486 = vunpack.c.l.b16 %v286
      %v487 = vunpack.c.h.b16 %v286
      %v488 = vunpack.c.l.b16 %v287
      %v489 = vunpack.c.h.b16 %v287
      %v490 = vunpack.c.l.b16 %v288
      %v491 = vunpack.c.h.b16 %v288
      %v492 = vunpack.c.l.b16 %v289
      %v493 = vunpack.c.h.b16 %v289
      %v494 = vunpack.c.l.b16 %v290
      %v495 = vunpack.c.h.b16 %v290
      %v496 = vunpack.c.l.b16 %v291
      %v497 = vunpack.c.h.b16 %v291
      %v498 = vunpack.c.l.b16 %v292
      %v499 = vunpack.c.h.b16 %v292
      %v500 = vunpack.c.l.b16 %v293
      %v501 = vunpack.c.h.b16 %v293
      %v502 = vunpack.c.l.b16 %v294
      %v503 = vunpack.c.h.b16 %v294
      %v504 = vunpack.c.l.b16 %v295
      %v505 = vunpack.c.h.b16 %v295
      %v506 = vunpack.c.l.b16 %v296
      %v507 = vunpack.c.h.b16 %v296
      %v508 = vunpack.c.l.b16 %v297
      %v509 = vunpack.c.h.b16 %v297
      %v510 = vunpack.c.l.b16 %v298
      %v511 = vunpack.c.h.b16 %v298
      %v512 = vunpack.c.l.b16 %v299
      %v513 = vunpack.c.h.b16 %v299
      %v514 = vunpack.c.l.b16 %v300
      %v515 = vunpack.c.h.b16 %v300
      %v516 = vunpack.c.l.b16 %v301
      %v517 = vunpack.c.h.b16 %v301
      %v518 = vpack.c.b16 %v394, %v390
      %v519 = vpack.c.b16 %v395, %v391
      %v520 = vpack.c.b16 %v396, %v392
      %v521 = vpack.c.b16 %v397, %v393
      %v522 = vpack.c.b16 %v402, %v398
      %v523 = vpack.c.b16 %v403, %v399
      %v524 = vpack.c.b16 %v404, %v400
      %v525 = vpack.c.b16 %v405, %v401
      %v526 = vpack.c.b16 %v410, %v406
      %v527 = vpack.c.b16 %v411, %v407
      %v528 = vpack.c.b16 %v412, %v408
      %v529 = vpack.c.b16 %v413, %v409
      %v530 = vpack.c.b16 %v418, %v414
      %v531 = vpack.c.b16 %v419, %v415
      %v532 = vpack.c.b16 %v420, %v416
      %v533 = vpack.c.b16 %v421, %v417
      %v534 = vpack.c.b16 %v426, %v422
      %v535 = vpack.c.b16 %v427, %v423
      %v536 = vpack.c.b16 %v428, %v424
      %v537 = vpack.c.b16 %v429, %v425
      %v538 = vpack.c.b16 %v434, %v430
      %v539 = vpack.c.b16 %v435, %v431
      %v540 = vpack.c.b16 %v436, %v432
      %v541 = vpack.c.b16 %v437, %v433
      %v542 = vpack.c.b16 %v442, %v438
      %v543 = vpack.c.b16 %v443, %v439
      %v544 = vpack.c.b16 %v444, %v440
      %v545 = vpack.c.b16 %v445, %v441
      %v546 = vpack.c.b16 %v450, %v446
      %v547 = vpack.c.b16 %v451, %v447
      %v548 = vpack.c.b16 %v452, %v448
      %v549 = vpack.c.b16 %v453, %v449
      %v550 = vpack.c.b16 %v458, %v454
      %v551 = vpack.c.b16 %v459, %v455
      %v552 = vpack.c.b16 %v460, %v456
      %v553 = vpack.c.b16 %v461, %v457
      %v554 = vpack.c.b16 %v466, %v462
      %v555 = vpack.c.b16 %v467, %v463
      %v556 = vpack.c.b16 %v468, %v464
      %v557 = vpack.c.b16 %v469, %v465
      %v558 = vpack.c.b16 %v474, %v470
      %v559 = vpack.c.b16 %v475, %v471
      %v560 = vpack.c.b16 %v476, %v472
      %v561 = vpack.c.b16 %v477, %v473
      %v562 = vpack.c.b16 %v482, %v478
      %v563 = vpack.c.b16 %v483, %v479
      %v564 = vpack.c.b16 %v484, %v480
      %v565 = vpack.c.b16 %v485, %v481
      %v566 = vpack.c.b16 %v490, %v486
      %v567 = vpack.c.b16 %v491, %v487
      %v568 = vpack.c.b16 %v492, %v488
      %v569 = vpack.c.b16 %v493, %v489
      %v570 = vpack.c.b16 %v498, %v494
      %v571 = vpack.c.b16 %v499, %v495
      %v572 = vpack.c.b16 %v500, %v496
      %v573 = vpack.c.b16 %v501, %v497
      %v574 = vpack.c.b16 %v506, %v502
      %v575 = vpack.c.b16 %v507, %v503
      %v576 = vpack.c.b16 %v508, %v504
      %v577 = vpack.c.b16 %v509, %v505
      %v578 = vpack.c.b16 %v514, %v510
      %v579 = vpack.c.b16 %v515, %v511
      %v580 = vpack.c.b16 %v516, %v512
      %v581 = vpack.c.b16 %v517, %v513
      %646 = vmatpush.bf16.msra.mxu0 %v546
      %647 = vmatpush.bf16.msra.mxu0 %v542
      %648 = vmatpush.bf16.msra.mxu0 %v538
      %649 = vmatpush.bf16.msra.mxu0 %v534
      %650 = vmatpush.bf16.msra.mxu0 %v530
      %651 = vmatpush.bf16.msra.mxu0 %v526
      %652 = vmatpush.bf16.msra.mxu0 %v522
      %653 = vmatpush.bf16.msra.mxu0 %v518
      %654 = vmatmul.bf16.gmra.mxu0 %v316
      %v655 = vpop.f32.mrf.mxu0
      %v656 = vadd.f32 0.0, %v655
      %v657 = vpop.f32.mrf.mxu0
      %v658 = vadd.f32 0.0, %v657
      %659 = vdwg.mxu0
      %660 = vmatpush.bf16.msra.mxu0 %v578
      %661 = vmatpush.bf16.msra.mxu0 %v574
      %662 = vmatpush.bf16.msra.mxu0 %v570
      %663 = vmatpush.bf16.msra.mxu0 %v566
      %664 = vmatpush.bf16.msra.mxu0 %v562
      %665 = vmatpush.bf16.msra.mxu0 %v558
      %666 = vmatpush.bf16.msra.mxu0 %v554
      %667 = vmatpush.bf16.msra.mxu0 %v550
      %668 = vmatmul.bf16.gmra.mxu0 %v323
      %v669 = vpop.f32.mrf.mxu0
      %v670 = vadd.f32 %v656, %v669
      %v671 = vpop.f32.mrf.mxu0
      %v672 = vadd.f32 %v658, %v671
      %673 = vdwg.mxu0
      %674 = vmatpush.bf16.msra.mxu0 %v547
      %675 = vmatpush.bf16.msra.mxu0 %v543
      %676 = vmatpush.bf16.msra.mxu0 %v539
      %677 = vmatpush.bf16.msra.mxu0 %v535
      %678 = vmatpush.bf16.msra.mxu0 %v531
      %679 = vmatpush.bf16.msra.mxu0 %v527
      %680 = vmatpush.bf16.msra.mxu0 %v523
      %681 = vmatpush.bf16.msra.mxu0 %v519
      %682 = vmatmul.bf16.gmra.mxu0 %v316
      %v683 = vpop.f32.mrf.mxu0
      %v684 = vadd.f32 0.0, %v683
      %v685 = vpop.f32.mrf.mxu0
      %v686 = vadd.f32 0.0, %v685
      %687 = vdwg.mxu0
      %688 = vmatpush.bf16.msra.mxu0 %v579
      %689 = vmatpush.bf16.msra.mxu0 %v575
      %690 = vmatpush.bf16.msra.mxu0 %v571
      %691 = vmatpush.bf16.msra.mxu0 %v567
      %692 = vmatpush.bf16.msra.mxu0 %v563
      %693 = vmatpush.bf16.msra.mxu0 %v559
      %694 = vmatpush.bf16.msra.mxu0 %v555
      %695 = vmatpush.bf16.msra.mxu0 %v551
      %696 = vmatmul.bf16.gmra.mxu0 %v323
      %v697 = vpop.f32.mrf.mxu0
      %v698 = vadd.f32 %v684, %v697
      %v699 = vpop.f32.mrf.mxu0
      %v700 = vadd.f32 %v686, %v699
      %701 = vdwg.mxu0
      %702 = vmatpush.bf16.msra.mxu0 %v548
      %703 = vmatpush.bf16.msra.mxu0 %v544
      %704 = vmatpush.bf16.msra.mxu0 %v540
      %705 = vmatpush.bf16.msra.mxu0 %v536
      %706 = vmatpush.bf16.msra.mxu0 %v532
      %707 = vmatpush.bf16.msra.mxu0 %v528
      %708 = vmatpush.bf16.msra.mxu0 %v524
      %709 = vmatpush.bf16.msra.mxu0 %v520
      %710 = vmatmul.bf16.gmra.mxu0 %v316
      %v711 = vpop.f32.mrf.mxu0
      %v712 = vadd.f32 0.0, %v711
      %v713 = vpop.f32.mrf.mxu0
      %v714 = vadd.f32 0.0, %v713
      %715 = vdwg.mxu0
      %716 = vmatpush.bf16.msra.mxu0 %v580
      %717 = vmatpush.bf16.msra.mxu0 %v576
      %718 = vmatpush.bf16.msra.mxu0 %v572
      %719 = vmatpush.bf16.msra.mxu0 %v568
      %720 = vmatpush.bf16.msra.mxu0 %v564
      %721 = vmatpush.bf16.msra.mxu0 %v560
      %722 = vmatpush.bf16.msra.mxu0 %v556
      %723 = vmatpush.bf16.msra.mxu0 %v552
      %724 = vmatmul.bf16.gmra.mxu0 %v323
      %v725 = vpop.f32.mrf.mxu0
      %v726 = vadd.f32 %v712, %v725
      %v727 = vpop.f32.mrf.mxu0
      %v728 = vadd.f32 %v714, %v727
      %729 = vdwg.mxu0
      %730 = vmatpush.bf16.msra.mxu0 %v549
      %731 = vmatpush.bf16.msra.mxu0 %v545
      %732 = vmatpush.bf16.msra.mxu0 %v541
      %733 = vmatpush.bf16.msra.mxu0 %v537
      %734 = vmatpush.bf16.msra.mxu0 %v533
      %735 = vmatpush.bf16.msra.mxu0 %v529
      %736 = vmatpush.bf16.msra.mxu0 %v525
      %737 = vmatpush.bf16.msra.mxu0 %v521
      %738 = vmatmul.bf16.gmra.mxu0 %v316
      %v739 = vpop.f32.mrf.mxu0
      %v740 = vadd.f32 0.0, %v739
      %v741 = vpop.f32.mrf.mxu0
      %v742 = vadd.f32 0.0, %v741
      %743 = vdwg.mxu0
      %744 = vmatpush.bf16.msra.mxu0 %v581
      %745 = vmatpush.bf16.msra.mxu0 %v577
      %746 = vmatpush.bf16.msra.mxu0 %v573
      %747 = vmatpush.bf16.msra.mxu0 %v569
      %748 = vmatpush.bf16.msra.mxu0 %v565
      %749 = vmatpush.bf16.msra.mxu0 %v561
      %750 = vmatpush.bf16.msra.mxu0 %v557
      %751 = vmatpush.bf16.msra.mxu0 %v553
      %752 = vmatmul.bf16.gmra.mxu0 %v323
      %v753 = vpop.f32.mrf.mxu0
      %v754 = vadd.f32 %v740, %v753
      %v755 = vpop.f32.mrf.mxu0
      %v756 = vadd.f32 %v742, %v755
      %757 = vdwg.mxu0
      %v824 = vunpack.c.l.b16 %v173
      %v825 = vunpack.c.h.b16 %v173
      %v826 = vunpack.c.l.b16 %v174
      %v827 = vunpack.c.h.b16 %v174
      %v828 = vunpack.c.l.b16 %v175
      %v829 = vunpack.c.h.b16 %v175
      %v830 = vunpack.c.l.b16 %v176
      %v831 = vunpack.c.h.b16 %v176
      %v832 = vunpack.c.l.b16 %v177
      %v833 = vunpack.c.h.b16 %v177
      %v834 = vunpack.c.l.b16 %v178
      %v835 = vunpack.c.h.b16 %v178
      %v836 = vunpack.c.l.b16 %v179
      %v837 = vunpack.c.h.b16 %v179
      %v838 = vunpack.c.l.b16 %v180
      %v839 = vunpack.c.h.b16 %v180
      %v840 = vunpack.c.l.b16 %v181
      %v841 = vunpack.c.h.b16 %v181
      %v842 = vunpack.c.l.b16 %v182
      %v843 = vunpack.c.h.b16 %v182
      %v844 = vunpack.c.l.b16 %v183
      %v845 = vunpack.c.h.b16 %v183
      %v846 = vunpack.c.l.b16 %v184
      %v847 = vunpack.c.h.b16 %v184
      %v848 = vunpack.c.l.b16 %v185
      %v849 = vunpack.c.h.b16 %v185
      %v850 = vunpack.c.l.b16 %v186
      %v851 = vunpack.c.h.b16 %v186
      %v852 = vunpack.c.l.b16 %v187
      %v853 = vunpack.c.h.b16 %v187
      %v854 = vunpack.c.l.b16 %v188
      %v855 = vunpack.c.h.b16 %v188
      %v856 = vunpack.c.l.b16 %v189
      %v857 = vunpack.c.h.b16 %v189
      %v858 = vunpack.c.l.b16 %v190
      %v859 = vunpack.c.h.b16 %v190
      %v860 = vunpack.c.l.b16 %v191
      %v861 = vunpack.c.h.b16 %v191
      %v862 = vunpack.c.l.b16 %v192
      %v863 = vunpack.c.h.b16 %v192
      %v864 = vunpack.c.l.b16 %v193
      %v865 = vunpack.c.h.b16 %v193
      %v866 = vunpack.c.l.b16 %v194
      %v867 = vunpack.c.h.b16 %v194
      %v868 = vunpack.c.l.b16 %v195
      %v869 = vunpack.c.h.b16 %v195
      %v870 = vunpack.c.l.b16 %v196
      %v871 = vunpack.c.h.b16 %v196
      %v872 = vunpack.c.l.b16 %v197
      %v873 = vunpack.c.h.b16 %v197
      %v874 = vunpack.c.l.b16 %v198
      %v875 = vunpack.c.h.b16 %v198
      %v876 = vunpack.c.l.b16 %v199
      %v877 = vunpack.c.h.b16 %v199
      %v878 = vunpack.c.l.b16 %v200
      %v879 = vunpack.c.h.b16 %v200
      %v880 = vunpack.c.l.b16 %v201
      %v881 = vunpack.c.h.b16 %v201
      %v882 = vunpack.c.l.b16 %v202
      %v883 = vunpack.c.h.b16 %v202
      %v884 = vunpack.c.l.b16 %v203
      %v885 = vunpack.c.h.b16 %v203
      %v886 = vunpack.c.l.b16 %v204
      %v887 = vunpack.c.h.b16 %v204
      %v888 = vunpack.c.l.b16 %v205
      %v889 = vunpack.c.h.b16 %v205
      %v890 = vunpack.c.l.b16 %v206
      %v891 = vunpack.c.h.b16 %v206
      %v892 = vunpack.c.l.b16 %v207
      %v893 = vunpack.c.h.b16 %v207
      %v894 = vunpack.c.l.b16 %v208
      %v895 = vunpack.c.h.b16 %v208
      %v896 = vunpack.c.l.b16 %v209
      %v897 = vunpack.c.h.b16 %v209
      %v898 = vunpack.c.l.b16 %v210
      %v899 = vunpack.c.h.b16 %v210
      %v900 = vunpack.c.l.b16 %v211
      %v901 = vunpack.c.h.b16 %v211
      %v902 = vunpack.c.l.b16 %v212
      %v903 = vunpack.c.h.b16 %v212
      %v904 = vunpack.c.l.b16 %v213
      %v905 = vunpack.c.h.b16 %v213
      %v906 = vunpack.c.l.b16 %v214
      %v907 = vunpack.c.h.b16 %v214
      %v908 = vunpack.c.l.b16 %v215
      %v909 = vunpack.c.h.b16 %v215
      %v910 = vunpack.c.l.b16 %v216
      %v911 = vunpack.c.h.b16 %v216
      %v912 = vunpack.c.l.b16 %v217
      %v913 = vunpack.c.h.b16 %v217
      %v914 = vunpack.c.l.b16 %v218
      %v915 = vunpack.c.h.b16 %v218
      %v916 = vunpack.c.l.b16 %v219
      %v917 = vunpack.c.h.b16 %v219
      %v918 = vunpack.c.l.b16 %v220
      %v919 = vunpack.c.h.b16 %v220
      %v920 = vunpack.c.l.b16 %v221
      %v921 = vunpack.c.h.b16 %v221
      %v922 = vunpack.c.l.b16 %v222
      %v923 = vunpack.c.h.b16 %v222
      %v924 = vunpack.c.l.b16 %v223
      %v925 = vunpack.c.h.b16 %v223
      %v926 = vunpack.c.l.b16 %v224
      %v927 = vunpack.c.h.b16 %v224
      %v928 = vunpack.c.l.b16 %v225
      %v929 = vunpack.c.h.b16 %v225
      %v930 = vunpack.c.l.b16 %v226
      %v931 = vunpack.c.h.b16 %v226
      %v932 = vunpack.c.l.b16 %v227
      %v933 = vunpack.c.h.b16 %v227
      %v934 = vunpack.c.l.b16 %v228
      %v935 = vunpack.c.h.b16 %v228
      %v936 = vunpack.c.l.b16 %v229
      %v937 = vunpack.c.h.b16 %v229
      %v938 = vunpack.c.l.b16 %v230
      %v939 = vunpack.c.h.b16 %v230
      %v940 = vunpack.c.l.b16 %v231
      %v941 = vunpack.c.h.b16 %v231
      %v942 = vunpack.c.l.b16 %v232
      %v943 = vunpack.c.h.b16 %v232
      %v944 = vunpack.c.l.b16 %v233
      %v945 = vunpack.c.h.b16 %v233
      %v946 = vunpack.c.l.b16 %v234
      %v947 = vunpack.c.h.b16 %v234
      %v948 = vunpack.c.l.b16 %v235
      %v949 = vunpack.c.h.b16 %v235
      %v950 = vunpack.c.l.b16 %v236
      %v951 = vunpack.c.h.b16 %v236
      %v952 = vpack.c.b16 %v828, %v824
      %v953 = vpack.c.b16 %v829, %v825
      %v954 = vpack.c.b16 %v830, %v826
      %v955 = vpack.c.b16 %v831, %v827
      %v956 = vpack.c.b16 %v836, %v832
      %v957 = vpack.c.b16 %v837, %v833
      %v958 = vpack.c.b16 %v838, %v834
      %v959 = vpack.c.b16 %v839, %v835
      %v960 = vpack.c.b16 %v844, %v840
      %v961 = vpack.c.b16 %v845, %v841
      %v962 = vpack.c.b16 %v846, %v842
      %v963 = vpack.c.b16 %v847, %v843
      %v964 = vpack.c.b16 %v852, %v848
      %v965 = vpack.c.b16 %v853, %v849
      %v966 = vpack.c.b16 %v854, %v850
      %v967 = vpack.c.b16 %v855, %v851
      %v968 = vpack.c.b16 %v860, %v856
      %v969 = vpack.c.b16 %v861, %v857
      %v970 = vpack.c.b16 %v862, %v858
      %v971 = vpack.c.b16 %v863, %v859
      %v972 = vpack.c.b16 %v868, %v864
      %v973 = vpack.c.b16 %v869, %v865
      %v974 = vpack.c.b16 %v870, %v866
      %v975 = vpack.c.b16 %v871, %v867
      %v976 = vpack.c.b16 %v876, %v872
      %v977 = vpack.c.b16 %v877, %v873
      %v978 = vpack.c.b16 %v878, %v874
      %v979 = vpack.c.b16 %v879, %v875
      %v980 = vpack.c.b16 %v884, %v880
      %v981 = vpack.c.b16 %v885, %v881
      %v982 = vpack.c.b16 %v886, %v882
      %v983 = vpack.c.b16 %v887, %v883
      %v984 = vpack.c.b16 %v892, %v888
      %v985 = vpack.c.b16 %v893, %v889
      %v986 = vpack.c.b16 %v894, %v890
      %v987 = vpack.c.b16 %v895, %v891
      %v988 = vpack.c.b16 %v900, %v896
      %v989 = vpack.c.b16 %v901, %v897
      %v990 = vpack.c.b16 %v902, %v898
      %v991 = vpack.c.b16 %v903, %v899
      %v992 = vpack.c.b16 %v908, %v904
      %v993 = vpack.c.b16 %v909, %v905
      %v994 = vpack.c.b16 %v910, %v906
      %v995 = vpack.c.b16 %v911, %v907
      %v996 = vpack.c.b16 %v916, %v912
      %v997 = vpack.c.b16 %v917, %v913
      %v998 = vpack.c.b16 %v918, %v914
      %v999 = vpack.c.b16 %v919, %v915
      %v1000 = vpack.c.b16 %v924, %v920
      %v1001 = vpack.c.b16 %v925, %v921
      %v1002 = vpack.c.b16 %v926, %v922
      %v1003 = vpack.c.b16 %v927, %v923
      %v1004 = vpack.c.b16 %v932, %v928
      %v1005 = vpack.c.b16 %v933, %v929
      %v1006 = vpack.c.b16 %v934, %v930
      %v1007 = vpack.c.b16 %v935, %v931
      %v1008 = vpack.c.b16 %v940, %v936
      %v1009 = vpack.c.b16 %v941, %v937
      %v1010 = vpack.c.b16 %v942, %v938
      %v1011 = vpack.c.b16 %v943, %v939
      %v1012 = vpack.c.b16 %v948, %v944
      %v1013 = vpack.c.b16 %v949, %v945
      %v1014 = vpack.c.b16 %v950, %v946
      %v1015 = vpack.c.b16 %v951, %v947
      %1080 = vmatpush.bf16.msra.mxu0 %v980
      %1081 = vmatpush.bf16.msra.mxu0 %v976
      %1082 = vmatpush.bf16.msra.mxu0 %v972
      %1083 = vmatpush.bf16.msra.mxu0 %v968
      %1084 = vmatpush.bf16.msra.mxu0 %v964
      %1085 = vmatpush.bf16.msra.mxu0 %v960
      %1086 = vmatpush.bf16.msra.mxu0 %v956
      %1087 = vmatpush.bf16.msra.mxu0 %v952
      %1088 = vmatmul.bf16.gmra.mxu0 %v308
      %v1089 = vpop.f32.mrf.mxu0
      %v1090 = vadd.f32 %v670, %v1089
      %v1091 = vpop.f32.mrf.mxu0
      %v1092 = vadd.f32 %v672, %v1091
      %1093 = vdwg.mxu0
      %1094 = vmatpush.bf16.msra.mxu0 %v1012
      %1095 = vmatpush.bf16.msra.mxu0 %v1008
      %1096 = vmatpush.bf16.msra.mxu0 %v1004
      %1097 = vmatpush.bf16.msra.mxu0 %v1000
      %1098 = vmatpush.bf16.msra.mxu0 %v996
      %1099 = vmatpush.bf16.msra.mxu0 %v992
      %1100 = vmatpush.bf16.msra.mxu0 %v988
      %1101 = vmatpush.bf16.msra.mxu0 %v984
      %1102 = vmatmul.bf16.gmra.mxu0 %v309
      %v1103 = vpop.f32.mrf.mxu0
      %v1104 = vadd.f32 %v1090, %v1103
      %v1105 = vpop.f32.mrf.mxu0
      %v1106 = vadd.f32 %v1092, %v1105
      %1107 = vdwg.mxu0
      %1108 = vmatpush.bf16.msra.mxu0 %v981
      %1109 = vmatpush.bf16.msra.mxu0 %v977
      %1110 = vmatpush.bf16.msra.mxu0 %v973
      %1111 = vmatpush.bf16.msra.mxu0 %v969
      %1112 = vmatpush.bf16.msra.mxu0 %v965
      %1113 = vmatpush.bf16.msra.mxu0 %v961
      %1114 = vmatpush.bf16.msra.mxu0 %v957
      %1115 = vmatpush.bf16.msra.mxu0 %v953
      %1116 = vmatmul.bf16.gmra.mxu0 %v308
      %v1117 = vpop.f32.mrf.mxu0
      %v1118 = vadd.f32 %v698, %v1117
      %v1119 = vpop.f32.mrf.mxu0
      %v1120 = vadd.f32 %v700, %v1119
      %1121 = vdwg.mxu0
      %1122 = vmatpush.bf16.msra.mxu0 %v1013
      %1123 = vmatpush.bf16.msra.mxu0 %v1009
      %1124 = vmatpush.bf16.msra.mxu0 %v1005
      %1125 = vmatpush.bf16.msra.mxu0 %v1001
      %1126 = vmatpush.bf16.msra.mxu0 %v997
      %1127 = vmatpush.bf16.msra.mxu0 %v993
      %1128 = vmatpush.bf16.msra.mxu0 %v989
      %1129 = vmatpush.bf16.msra.mxu0 %v985
      %1130 = vmatmul.bf16.gmra.mxu0 %v309
      %v1131 = vpop.f32.mrf.mxu0
      %v1132 = vadd.f32 %v1118, %v1131
      %v1133 = vpop.f32.mrf.mxu0
      %v1134 = vadd.f32 %v1120, %v1133
      %1135 = vdwg.mxu0
      %1136 = vmatpush.bf16.msra.mxu0 %v982
      %1137 = vmatpush.bf16.msra.mxu0 %v978
      %1138 = vmatpush.bf16.msra.mxu0 %v974
      %1139 = vmatpush.bf16.msra.mxu0 %v970
      %1140 = vmatpush.bf16.msra.mxu0 %v966
      %1141 = vmatpush.bf16.msra.mxu0 %v962
      %1142 = vmatpush.bf16.msra.mxu0 %v958
      %1143 = vmatpush.bf16.msra.mxu0 %v954
      %1144 = vmatmul.bf16.gmra.mxu0 %v308
      %v1145 = vpop.f32.mrf.mxu0
      %v1146 = vadd.f32 %v726, %v1145
      %v1147 = vpop.f32.mrf.mxu0
      %v1148 = vadd.f32 %v728, %v1147
      %1149 = vdwg.mxu0
      %1150 = vmatpush.bf16.msra.mxu0 %v1014
      %1151 = vmatpush.bf16.msra.mxu0 %v1010
      %1152 = vmatpush.bf16.msra.mxu0 %v1006
      %1153 = vmatpush.bf16.msra.mxu0 %v1002
      %1154 = vmatpush.bf16.msra.mxu0 %v998
      %1155 = vmatpush.bf16.msra.mxu0 %v994
      %1156 = vmatpush.bf16.msra.mxu0 %v990
      %1157 = vmatpush.bf16.msra.mxu0 %v986
      %1158 = vmatmul.bf16.gmra.mxu0 %v309
      %v1159 = vpop.f32.mrf.mxu0
      %v1160 = vadd.f32 %v1146, %v1159
      %v1161 = vpop.f32.mrf.mxu0
      %v1162 = vadd.f32 %v1148, %v1161
      %1163 = vdwg.mxu0
      %1164 = vmatpush.bf16.msra.mxu0 %v983
      %1165 = vmatpush.bf16.msra.mxu0 %v979
      %1166 = vmatpush.bf16.msra.mxu0 %v975
      %1167 = vmatpush.bf16.msra.mxu0 %v971
      %1168 = vmatpush.bf16.msra.mxu0 %v967
      %1169 = vmatpush.bf16.msra.mxu0 %v963
      %1170 = vmatpush.bf16.msra.mxu0 %v959
      %1171 = vmatpush.bf16.msra.mxu0 %v955
      %1172 = vmatmul.bf16.gmra.mxu0 %v308
      %v1173 = vpop.f32.mrf.mxu0
      %v1174 = vadd.f32 %v754, %v1173
      %v1175 = vpop.f32.mrf.mxu0
      %v1176 = vadd.f32 %v756, %v1175
      %1177 = vdwg.mxu0
      %1178 = vmatpush.bf16.msra.mxu0 %v1015
      %1179 = vmatpush.bf16.msra.mxu0 %v1011
      %1180 = vmatpush.bf16.msra.mxu0 %v1007
      %1181 = vmatpush.bf16.msra.mxu0 %v1003
      %1182 = vmatpush.bf16.msra.mxu0 %v999
      %1183 = vmatpush.bf16.msra.mxu0 %v995
      %1184 = vmatpush.bf16.msra.mxu0 %v991
      %1185 = vmatpush.bf16.msra.mxu0 %v987
      %1186 = vmatmul.bf16.gmra.mxu0 %v309
      %v1187 = vpop.f32.mrf.mxu0
      %v1188 = vadd.f32 %v1174, %v1187
      %v1189 = vpop.f32.mrf.mxu0
      %v1190 = vadd.f32 %v1176, %v1189
      %1191 = vdwg.mxu0
      %s1192 = scalar_lea.vmem %s165, 16
      %v1193 = vld [vmem:[%s1192] sm:$0xff]
      %v1194 = vld [vmem:[%s1192 + $0x8] sm:$0xff]
      %s1195 = scalar_lea.vmem %s1, 512
      %v1196 = vld [vmem:[%s1195] sm:$0xff]
      %v1197 = vld [vmem:[%s1195 + $0x8] sm:$0xff]
      %v1198 = vld [vmem:[%s1195 + $0x10] sm:$0xff]
      %v1199 = vld [vmem:[%s1195 + $0x18] sm:$0xff]
      %v1200 = vld [vmem:[%s1195 + $0x20] sm:$0xff]
      %v1201 = vld [vmem:[%s1195 + $0x28] sm:$0xff]
      %v1202 = vld [vmem:[%s1195 + $0x30] sm:$0xff]
      %v1203 = vld [vmem:[%s1195 + $0x38] sm:$0xff]
      %v1204 = vld [vmem:[%s1195 + $0x40] sm:$0xff]
      %v1205 = vld [vmem:[%s1195 + $0x48] sm:$0xff]
      %v1206 = vld [vmem:[%s1195 + $0x50] sm:$0xff]
      %v1207 = vld [vmem:[%s1195 + $0x58] sm:$0xff]
      %v1208 = vld [vmem:[%s1195 + $0x60] sm:$0xff]
      %v1209 = vld [vmem:[%s1195 + $0x68] sm:$0xff]
      %v1210 = vld [vmem:[%s1195 + $0x70] sm:$0xff]
      %v1211 = vld [vmem:[%s1195 + $0x78] sm:$0xff]
      %v1212 = vld [vmem:[%s1195 + $0x80] sm:$0xff]
      %v1213 = vld [vmem:[%s1195 + $0x88] sm:$0xff]
      %v1214 = vld [vmem:[%s1195 + $0x90] sm:$0xff]
      %v1215 = vld [vmem:[%s1195 + $0x98] sm:$0xff]
      %v1216 = vld [vmem:[%s1195 + $0xa0] sm:$0xff]
      %v1217 = vld [vmem:[%s1195 + $0xa8] sm:$0xff]
      %v1218 = vld [vmem:[%s1195 + $0xb0] sm:$0xff]
      %v1219 = vld [vmem:[%s1195 + $0xb8] sm:$0xff]
      %v1220 = vld [vmem:[%s1195 + $0xc0] sm:$0xff]
      %v1221 = vld [vmem:[%s1195 + $0xc8] sm:$0xff]
      %v1222 = vld [vmem:[%s1195 + $0xd0] sm:$0xff]
      %v1223 = vld [vmem:[%s1195 + $0xd8] sm:$0xff]
      %v1224 = vld [vmem:[%s1195 + $0xe0] sm:$0xff]
      %v1225 = vld [vmem:[%s1195 + $0xe8] sm:$0xff]
      %v1226 = vld [vmem:[%s1195 + $0xf0] sm:$0xff]
      %v1227 = vld [vmem:[%s1195 + $0xf8] sm:$0xff]
      %v1228 = vld [vmem:[%s1195 + $0x100] sm:$0xff]
      %v1229 = vld [vmem:[%s1195 + $0x108] sm:$0xff]
      %v1230 = vld [vmem:[%s1195 + $0x110] sm:$0xff]
      %v1231 = vld [vmem:[%s1195 + $0x118] sm:$0xff]
      %v1232 = vld [vmem:[%s1195 + $0x120] sm:$0xff]
      %v1233 = vld [vmem:[%s1195 + $0x128] sm:$0xff]
      %v1234 = vld [vmem:[%s1195 + $0x130] sm:$0xff]
      %v1235 = vld [vmem:[%s1195 + $0x138] sm:$0xff]
      %v1236 = vld [vmem:[%s1195 + $0x140] sm:$0xff]
      %v1237 = vld [vmem:[%s1195 + $0x148] sm:$0xff]
      %v1238 = vld [vmem:[%s1195 + $0x150] sm:$0xff]
      %v1239 = vld [vmem:[%s1195 + $0x158] sm:$0xff]
      %v1240 = vld [vmem:[%s1195 + $0x160] sm:$0xff]
      %v1241 = vld [vmem:[%s1195 + $0x168] sm:$0xff]
      %v1242 = vld [vmem:[%s1195 + $0x170] sm:$0xff]
      %v1243 = vld [vmem:[%s1195 + $0x178] sm:$0xff]
      %v1244 = vld [vmem:[%s1195 + $0x180] sm:$0xff]
      %v1245 = vld [vmem:[%s1195 + $0x188] sm:$0xff]
      %v1246 = vld [vmem:[%s1195 + $0x190] sm:$0xff]
      %v1247 = vld [vmem:[%s1195 + $0x198] sm:$0xff]
      %v1248 = vld [vmem:[%s1195 + $0x1a0] sm:$0xff]
      %v1249 = vld [vmem:[%s1195 + $0x1a8] sm:$0xff]
      %v1250 = vld [vmem:[%s1195 + $0x1b0] sm:$0xff]
      %v1251 = vld [vmem:[%s1195 + $0x1b8] sm:$0xff]
      %v1252 = vld [vmem:[%s1195 + $0x1c0] sm:$0xff]
      %v1253 = vld [vmem:[%s1195 + $0x1c8] sm:$0xff]
      %v1254 = vld [vmem:[%s1195 + $0x1d0] sm:$0xff]
      %v1255 = vld [vmem:[%s1195 + $0x1d8] sm:$0xff]
      %v1256 = vld [vmem:[%s1195 + $0x1e0] sm:$0xff]
      %v1257 = vld [vmem:[%s1195 + $0x1e8] sm:$0xff]
      %v1258 = vld [vmem:[%s1195 + $0x1f0] sm:$0xff]
      %v1259 = vld [vmem:[%s1195 + $0x1f8] sm:$0xff]
      %v1262 = vunpack.c.l.b16 %v1193
      %v1263 = vunpack.c.h.b16 %v1193
      %v1264 = vunpack.c.l.b16 %v1194
      %v1265 = vunpack.c.h.b16 %v1194
      %v1266 = vpack.c.b16 %v1264, %v1262
      %v1267 = vpack.c.b16 %v1265, %v1263
      %v1334 = vunpack.c.l.b16 %v1196
      %v1335 = vunpack.c.h.b16 %v1196
      %v1336 = vunpack.c.l.b16 %v1197
      %v1337 = vunpack.c.h.b16 %v1197
      %v1338 = vunpack.c.l.b16 %v1198
      %v1339 = vunpack.c.h.b16 %v1198
      %v1340 = vunpack.c.l.b16 %v1199
      %v1341 = vunpack.c.h.b16 %v1199
      %v1342 = vunpack.c.l.b16 %v1200
      %v1343 = vunpack.c.h.b16 %v1200
      %v1344 = vunpack.c.l.b16 %v1201
      %v1345 = vunpack.c.h.b16 %v1201
      %v1346 = vunpack.c.l.b16 %v1202
      %v1347 = vunpack.c.h.b16 %v1202
      %v1348 = vunpack.c.l.b16 %v1203
      %v1349 = vunpack.c.h.b16 %v1203
      %v1350 = vunpack.c.l.b16 %v1204
      %v1351 = vunpack.c.h.b16 %v1204
      %v1352 = vunpack.c.l.b16 %v1205
      %v1353 = vunpack.c.h.b16 %v1205
      %v1354 = vunpack.c.l.b16 %v1206
      %v1355 = vunpack.c.h.b16 %v1206
      %v1356 = vunpack.c.l.b16 %v1207
      %v1357 = vunpack.c.h.b16 %v1207
      %v1358 = vunpack.c.l.b16 %v1208
      %v1359 = vunpack.c.h.b16 %v1208
      %v1360 = vunpack.c.l.b16 %v1209
      %v1361 = vunpack.c.h.b16 %v1209
      %v1362 = vunpack.c.l.b16 %v1210
      %v1363 = vunpack.c.h.b16 %v1210
      %v1364 = vunpack.c.l.b16 %v1211
      %v1365 = vunpack.c.h.b16 %v1211
      %v1366 = vunpack.c.l.b16 %v1212
      %v1367 = vunpack.c.h.b16 %v1212
      %v1368 = vunpack.c.l.b16 %v1213
      %v1369 = vunpack.c.h.b16 %v1213
      %v1370 = vunpack.c.l.b16 %v1214
      %v1371 = vunpack.c.h.b16 %v1214
      %v1372 = vunpack.c.l.b16 %v1215
      %v1373 = vunpack.c.h.b16 %v1215
      %v1374 = vunpack.c.l.b16 %v1216
      %v1375 = vunpack.c.h.b16 %v1216
      %v1376 = vunpack.c.l.b16 %v1217
      %v1377 = vunpack.c.h.b16 %v1217
      %v1378 = vunpack.c.l.b16 %v1218
      %v1379 = vunpack.c.h.b16 %v1218
      %v1380 = vunpack.c.l.b16 %v1219
      %v1381 = vunpack.c.h.b16 %v1219
      %v1382 = vunpack.c.l.b16 %v1220
      %v1383 = vunpack.c.h.b16 %v1220
      %v1384 = vunpack.c.l.b16 %v1221
      %v1385 = vunpack.c.h.b16 %v1221
      %v1386 = vunpack.c.l.b16 %v1222
      %v1387 = vunpack.c.h.b16 %v1222
      %v1388 = vunpack.c.l.b16 %v1223
      %v1389 = vunpack.c.h.b16 %v1223
      %v1390 = vunpack.c.l.b16 %v1224
      %v1391 = vunpack.c.h.b16 %v1224
      %v1392 = vunpack.c.l.b16 %v1225
      %v1393 = vunpack.c.h.b16 %v1225
      %v1394 = vunpack.c.l.b16 %v1226
      %v1395 = vunpack.c.h.b16 %v1226
      %v1396 = vunpack.c.l.b16 %v1227
      %v1397 = vunpack.c.h.b16 %v1227
      %v1398 = vunpack.c.l.b16 %v1228
      %v1399 = vunpack.c.h.b16 %v1228
      %v1400 = vunpack.c.l.b16 %v1229
      %v1401 = vunpack.c.h.b16 %v1229
      %v1402 = vunpack.c.l.b16 %v1230
      %v1403 = vunpack.c.h.b16 %v1230
      %v1404 = vunpack.c.l.b16 %v1231
      %v1405 = vunpack.c.h.b16 %v1231
      %v1406 = vunpack.c.l.b16 %v1232
      %v1407 = vunpack.c.h.b16 %v1232
      %v1408 = vunpack.c.l.b16 %v1233
      %v1409 = vunpack.c.h.b16 %v1233
      %v1410 = vunpack.c.l.b16 %v1234
      %v1411 = vunpack.c.h.b16 %v1234
      %v1412 = vunpack.c.l.b16 %v1235
      %v1413 = vunpack.c.h.b16 %v1235
      %v1414 = vunpack.c.l.b16 %v1236
      %v1415 = vunpack.c.h.b16 %v1236
      %v1416 = vunpack.c.l.b16 %v1237
      %v1417 = vunpack.c.h.b16 %v1237
      %v1418 = vunpack.c.l.b16 %v1238
      %v1419 = vunpack.c.h.b16 %v1238
      %v1420 = vunpack.c.l.b16 %v1239
      %v1421 = vunpack.c.h.b16 %v1239
      %v1422 = vunpack.c.l.b16 %v1240
      %v1423 = vunpack.c.h.b16 %v1240
      %v1424 = vunpack.c.l.b16 %v1241
      %v1425 = vunpack.c.h.b16 %v1241
      %v1426 = vunpack.c.l.b16 %v1242
      %v1427 = vunpack.c.h.b16 %v1242
      %v1428 = vunpack.c.l.b16 %v1243
      %v1429 = vunpack.c.h.b16 %v1243
      %v1430 = vunpack.c.l.b16 %v1244
      %v1431 = vunpack.c.h.b16 %v1244
      %v1432 = vunpack.c.l.b16 %v1245
      %v1433 = vunpack.c.h.b16 %v1245
      %v1434 = vunpack.c.l.b16 %v1246
      %v1435 = vunpack.c.h.b16 %v1246
      %v1436 = vunpack.c.l.b16 %v1247
      %v1437 = vunpack.c.h.b16 %v1247
      %v1438 = vunpack.c.l.b16 %v1248
      %v1439 = vunpack.c.h.b16 %v1248
      %v1440 = vunpack.c.l.b16 %v1249
      %v1441 = vunpack.c.h.b16 %v1249
      %v1442 = vunpack.c.l.b16 %v1250
      %v1443 = vunpack.c.h.b16 %v1250
      %v1444 = vunpack.c.l.b16 %v1251
      %v1445 = vunpack.c.h.b16 %v1251
      %v1446 = vunpack.c.l.b16 %v1252
      %v1447 = vunpack.c.h.b16 %v1252
      %v1448 = vunpack.c.l.b16 %v1253
      %v1449 = vunpack.c.h.b16 %v1253
      %v1450 = vunpack.c.l.b16 %v1254
      %v1451 = vunpack.c.h.b16 %v1254
      %v1452 = vunpack.c.l.b16 %v1255
      %v1453 = vunpack.c.h.b16 %v1255
      %v1454 = vunpack.c.l.b16 %v1256
      %v1455 = vunpack.c.h.b16 %v1256
      %v1456 = vunpack.c.l.b16 %v1257
      %v1457 = vunpack.c.h.b16 %v1257
      %v1458 = vunpack.c.l.b16 %v1258
      %v1459 = vunpack.c.h.b16 %v1258
      %v1460 = vunpack.c.l.b16 %v1259
      %v1461 = vunpack.c.h.b16 %v1259
      %v1462 = vpack.c.b16 %v1338, %v1334
      %v1463 = vpack.c.b16 %v1339, %v1335
      %v1464 = vpack.c.b16 %v1340, %v1336
      %v1465 = vpack.c.b16 %v1341, %v1337
      %v1466 = vpack.c.b16 %v1346, %v1342
      %v1467 = vpack.c.b16 %v1347, %v1343
      %v1468 = vpack.c.b16 %v1348, %v1344
      %v1469 = vpack.c.b16 %v1349, %v1345
      %v1470 = vpack.c.b16 %v1354, %v1350
      %v1471 = vpack.c.b16 %v1355, %v1351
      %v1472 = vpack.c.b16 %v1356, %v1352
      %v1473 = vpack.c.b16 %v1357, %v1353
      %v1474 = vpack.c.b16 %v1362, %v1358
      %v1475 = vpack.c.b16 %v1363, %v1359
      %v1476 = vpack.c.b16 %v1364, %v1360
      %v1477 = vpack.c.b16 %v1365, %v1361
      %v1478 = vpack.c.b16 %v1370, %v1366
      %v1479 = vpack.c.b16 %v1371, %v1367
      %v1480 = vpack.c.b16 %v1372, %v1368
      %v1481 = vpack.c.b16 %v1373, %v1369
      %v1482 = vpack.c.b16 %v1378, %v1374
      %v1483 = vpack.c.b16 %v1379, %v1375
      %v1484 = vpack.c.b16 %v1380, %v1376
      %v1485 = vpack.c.b16 %v1381, %v1377
      %v1486 = vpack.c.b16 %v1386, %v1382
      %v1487 = vpack.c.b16 %v1387, %v1383
      %v1488 = vpack.c.b16 %v1388, %v1384
      %v1489 = vpack.c.b16 %v1389, %v1385
      %v1490 = vpack.c.b16 %v1394, %v1390
      %v1491 = vpack.c.b16 %v1395, %v1391
      %v1492 = vpack.c.b16 %v1396, %v1392
      %v1493 = vpack.c.b16 %v1397, %v1393
      %v1494 = vpack.c.b16 %v1402, %v1398
      %v1495 = vpack.c.b16 %v1403, %v1399
      %v1496 = vpack.c.b16 %v1404, %v1400
      %v1497 = vpack.c.b16 %v1405, %v1401
      %v1498 = vpack.c.b16 %v1410, %v1406
      %v1499 = vpack.c.b16 %v1411, %v1407
      %v1500 = vpack.c.b16 %v1412, %v1408
      %v1501 = vpack.c.b16 %v1413, %v1409
      %v1502 = vpack.c.b16 %v1418, %v1414
      %v1503 = vpack.c.b16 %v1419, %v1415
      %v1504 = vpack.c.b16 %v1420, %v1416
      %v1505 = vpack.c.b16 %v1421, %v1417
      %v1506 = vpack.c.b16 %v1426, %v1422
      %v1507 = vpack.c.b16 %v1427, %v1423
      %v1508 = vpack.c.b16 %v1428, %v1424
      %v1509 = vpack.c.b16 %v1429, %v1425
      %v1510 = vpack.c.b16 %v1434, %v1430
      %v1511 = vpack.c.b16 %v1435, %v1431
      %v1512 = vpack.c.b16 %v1436, %v1432
      %v1513 = vpack.c.b16 %v1437, %v1433
      %v1514 = vpack.c.b16 %v1442, %v1438
      %v1515 = vpack.c.b16 %v1443, %v1439
      %v1516 = vpack.c.b16 %v1444, %v1440
      %v1517 = vpack.c.b16 %v1445, %v1441
      %v1518 = vpack.c.b16 %v1450, %v1446
      %v1519 = vpack.c.b16 %v1451, %v1447
      %v1520 = vpack.c.b16 %v1452, %v1448
      %v1521 = vpack.c.b16 %v1453, %v1449
      %v1522 = vpack.c.b16 %v1458, %v1454
      %v1523 = vpack.c.b16 %v1459, %v1455
      %v1524 = vpack.c.b16 %v1460, %v1456
      %v1525 = vpack.c.b16 %v1461, %v1457
      %1590 = vmatpush.bf16.msra.mxu0 %v1490
      %1591 = vmatpush.bf16.msra.mxu0 %v1486
      %1592 = vmatpush.bf16.msra.mxu0 %v1482
      %1593 = vmatpush.bf16.msra.mxu0 %v1478
      %1594 = vmatpush.bf16.msra.mxu0 %v1474
      %1595 = vmatpush.bf16.msra.mxu0 %v1470
      %1596 = vmatpush.bf16.msra.mxu0 %v1466
      %1597 = vmatpush.bf16.msra.mxu0 %v1462
      %1598 = vmatmul.bf16.gmra.mxu0 %v1266
      %v1599 = vpop.f32.mrf.mxu0
      %v1600 = vadd.f32 0.0, %v1599
      %v1601 = vpop.f32.mrf.mxu0
      %v1602 = vadd.f32 0.0, %v1601
      %1603 = vdwg.mxu0
      %1604 = vmatpush.bf16.msra.mxu0 %v1522
      %1605 = vmatpush.bf16.msra.mxu0 %v1518
      %1606 = vmatpush.bf16.msra.mxu0 %v1514
      %1607 = vmatpush.bf16.msra.mxu0 %v1510
      %1608 = vmatpush.bf16.msra.mxu0 %v1506
      %1609 = vmatpush.bf16.msra.mxu0 %v1502
      %1610 = vmatpush.bf16.msra.mxu0 %v1498
      %1611 = vmatpush.bf16.msra.mxu0 %v1494
      %1612 = vmatmul.bf16.gmra.mxu0 %v1267
      %v1613 = vpop.f32.mrf.mxu0
      %v1614 = vadd.f32 %v1600, %v1613
      %v1615 = vpop.f32.mrf.mxu0
      %v1616 = vadd.f32 %v1602, %v1615
      %1617 = vdwg.mxu0
      %1618 = vmatpush.bf16.msra.mxu0 %v1491
      %1619 = vmatpush.bf16.msra.mxu0 %v1487
      %1620 = vmatpush.bf16.msra.mxu0 %v1483
      %1621 = vmatpush.bf16.msra.mxu0 %v1479
      %1622 = vmatpush.bf16.msra.mxu0 %v1475
      %1623 = vmatpush.bf16.msra.mxu0 %v1471
      %1624 = vmatpush.bf16.msra.mxu0 %v1467
      %1625 = vmatpush.bf16.msra.mxu0 %v1463
      %1626 = vmatmul.bf16.gmra.mxu0 %v1266
      %v1627 = vpop.f32.mrf.mxu0
      %v1628 = vadd.f32 0.0, %v1627
      %v1629 = vpop.f32.mrf.mxu0
      %v1630 = vadd.f32 0.0, %v1629
      %1631 = vdwg.mxu0
      %1632 = vmatpush.bf16.msra.mxu0 %v1523
      %1633 = vmatpush.bf16.msra.mxu0 %v1519
      %1634 = vmatpush.bf16.msra.mxu0 %v1515
      %1635 = vmatpush.bf16.msra.mxu0 %v1511
      %1636 = vmatpush.bf16.msra.mxu0 %v1507
      %1637 = vmatpush.bf16.msra.mxu0 %v1503
      %1638 = vmatpush.bf16.msra.mxu0 %v1499
      %1639 = vmatpush.bf16.msra.mxu0 %v1495
      %1640 = vmatmul.bf16.gmra.mxu0 %v1267
      %v1641 = vpop.f32.mrf.mxu0
      %v1642 = vadd.f32 %v1628, %v1641
      %v1643 = vpop.f32.mrf.mxu0
      %v1644 = vadd.f32 %v1630, %v1643
      %1645 = vdwg.mxu0
      %1646 = vmatpush.bf16.msra.mxu0 %v1492
      %1647 = vmatpush.bf16.msra.mxu0 %v1488
      %1648 = vmatpush.bf16.msra.mxu0 %v1484
      %1649 = vmatpush.bf16.msra.mxu0 %v1480
      %1650 = vmatpush.bf16.msra.mxu0 %v1476
      %1651 = vmatpush.bf16.msra.mxu0 %v1472
      %1652 = vmatpush.bf16.msra.mxu0 %v1468
      %1653 = vmatpush.bf16.msra.mxu0 %v1464
      %1654 = vmatmul.bf16.gmra.mxu0 %v1266
      %v1655 = vpop.f32.mrf.mxu0
      %v1656 = vadd.f32 0.0, %v1655
      %v1657 = vpop.f32.mrf.mxu0
      %v1658 = vadd.f32 0.0, %v1657
      %1659 = vdwg.mxu0
      %1660 = vmatpush.bf16.msra.mxu0 %v1524
      %1661 = vmatpush.bf16.msra.mxu0 %v1520
      %1662 = vmatpush.bf16.msra.mxu0 %v1516
      %1663 = vmatpush.bf16.msra.mxu0 %v1512
      %1664 = vmatpush.bf16.msra.mxu0 %v1508
      %1665 = vmatpush.bf16.msra.mxu0 %v1504
      %1666 = vmatpush.bf16.msra.mxu0 %v1500
      %1667 = vmatpush.bf16.msra.mxu0 %v1496
      %1668 = vmatmul.bf16.gmra.mxu0 %v1267
      %v1669 = vpop.f32.mrf.mxu0
      %v1670 = vadd.f32 %v1656, %v1669
      %v1671 = vpop.f32.mrf.mxu0
      %v1672 = vadd.f32 %v1658, %v1671
      %1673 = vdwg.mxu0
      %1674 = vmatpush.bf16.msra.mxu0 %v1493
      %1675 = vmatpush.bf16.msra.mxu0 %v1489
      %1676 = vmatpush.bf16.msra.mxu0 %v1485
      %1677 = vmatpush.bf16.msra.mxu0 %v1481
      %1678 = vmatpush.bf16.msra.mxu0 %v1477
      %1679 = vmatpush.bf16.msra.mxu0 %v1473
      %1680 = vmatpush.bf16.msra.mxu0 %v1469
      %1681 = vmatpush.bf16.msra.mxu0 %v1465
      %1682 = vmatmul.bf16.gmra.mxu0 %v1266
      %v1683 = vpop.f32.mrf.mxu0
      %v1684 = vadd.f32 0.0, %v1683
      %v1685 = vpop.f32.mrf.mxu0
      %v1686 = vadd.f32 0.0, %v1685
      %1687 = vdwg.mxu0
      %1688 = vmatpush.bf16.msra.mxu0 %v1525
      %1689 = vmatpush.bf16.msra.mxu0 %v1521
      %1690 = vmatpush.bf16.msra.mxu0 %v1517
      %1691 = vmatpush.bf16.msra.mxu0 %v1513
      %1692 = vmatpush.bf16.msra.mxu0 %v1509
      %1693 = vmatpush.bf16.msra.mxu0 %v1505
      %1694 = vmatpush.bf16.msra.mxu0 %v1501
      %1695 = vmatpush.bf16.msra.mxu0 %v1497
      %1696 = vmatmul.bf16.gmra.mxu0 %v1267
      %v1697 = vpop.f32.mrf.mxu0
      %v1698 = vadd.f32 %v1684, %v1697
      %v1699 = vpop.f32.mrf.mxu0
      %v1700 = vadd.f32 %v1686, %v1699
      %1701 = vdwg.mxu0
      %v1702 = vadd.f32 %v1104, %v1614
      %v1703 = vadd.f32 %v1132, %v1642
      %v1704 = vadd.f32 %v1160, %v1670
      %v1705 = vadd.f32 %v1188, %v1698
      %v1706 = vadd.f32 %v1106, %v1616
      %v1707 = vadd.f32 %v1134, %v1644
      %v1708 = vadd.f32 %v1162, %v1672
      %v1709 = vadd.f32 %v1190, %v1700
      %s1710 = scalar_lea.vmem %s1, 2560
      %v1711 = vld [vmem:[%s1710] sm:$0xff]
      %v1712 = vld [vmem:[%s1710 + $0x8] sm:$0xff]
      %v1713 = vld [vmem:[%s1710 + $0x10] sm:$0xff]
      %v1714 = vld [vmem:[%s1710 + $0x18] sm:$0xff]
      %v1715 = vld [vmem:[%s1710 + $0x20] sm:$0xff]
      %v1716 = vld [vmem:[%s1710 + $0x28] sm:$0xff]
      %v1717 = vld [vmem:[%s1710 + $0x30] sm:$0xff]
      %v1718 = vld [vmem:[%s1710 + $0x38] sm:$0xff]
      %v1719 = vld [vmem:[%s1710 + $0x40] sm:$0xff]
      %v1720 = vld [vmem:[%s1710 + $0x48] sm:$0xff]
      %v1721 = vld [vmem:[%s1710 + $0x50] sm:$0xff]
      %v1722 = vld [vmem:[%s1710 + $0x58] sm:$0xff]
      %v1723 = vld [vmem:[%s1710 + $0x60] sm:$0xff]
      %v1724 = vld [vmem:[%s1710 + $0x68] sm:$0xff]
      %v1725 = vld [vmem:[%s1710 + $0x70] sm:$0xff]
      %v1726 = vld [vmem:[%s1710 + $0x78] sm:$0xff]
      %v1727 = vld [vmem:[%s1710 + $0x80] sm:$0xff]
      %v1728 = vld [vmem:[%s1710 + $0x88] sm:$0xff]
      %v1729 = vld [vmem:[%s1710 + $0x90] sm:$0xff]
      %v1730 = vld [vmem:[%s1710 + $0x98] sm:$0xff]
      %v1731 = vld [vmem:[%s1710 + $0xa0] sm:$0xff]
      %v1732 = vld [vmem:[%s1710 + $0xa8] sm:$0xff]
      %v1733 = vld [vmem:[%s1710 + $0xb0] sm:$0xff]
      %v1734 = vld [vmem:[%s1710 + $0xb8] sm:$0xff]
      %v1735 = vld [vmem:[%s1710 + $0xc0] sm:$0xff]
      %v1736 = vld [vmem:[%s1710 + $0xc8] sm:$0xff]
      %v1737 = vld [vmem:[%s1710 + $0xd0] sm:$0xff]
      %v1738 = vld [vmem:[%s1710 + $0xd8] sm:$0xff]
      %v1739 = vld [vmem:[%s1710 + $0xe0] sm:$0xff]
      %v1740 = vld [vmem:[%s1710 + $0xe8] sm:$0xff]
      %v1741 = vld [vmem:[%s1710 + $0xf0] sm:$0xff]
      %v1742 = vld [vmem:[%s1710 + $0xf8] sm:$0xff]
      %v1743 = vld [vmem:[%s1710 + $0x100] sm:$0xff]
      %v1744 = vld [vmem:[%s1710 + $0x108] sm:$0xff]
      %v1745 = vld [vmem:[%s1710 + $0x110] sm:$0xff]
      %v1746 = vld [vmem:[%s1710 + $0x118] sm:$0xff]
      %v1747 = vld [vmem:[%s1710 + $0x120] sm:$0xff]
      %v1748 = vld [vmem:[%s1710 + $0x128] sm:$0xff]
      %v1749 = vld [vmem:[%s1710 + $0x130] sm:$0xff]
      %v1750 = vld [vmem:[%s1710 + $0x138] sm:$0xff]
      %v1751 = vld [vmem:[%s1710 + $0x140] sm:$0xff]
      %v1752 = vld [vmem:[%s1710 + $0x148] sm:$0xff]
      %v1753 = vld [vmem:[%s1710 + $0x150] sm:$0xff]
      %v1754 = vld [vmem:[%s1710 + $0x158] sm:$0xff]
      %v1755 = vld [vmem:[%s1710 + $0x160] sm:$0xff]
      %v1756 = vld [vmem:[%s1710 + $0x168] sm:$0xff]
      %v1757 = vld [vmem:[%s1710 + $0x170] sm:$0xff]
      %v1758 = vld [vmem:[%s1710 + $0x178] sm:$0xff]
      %v1759 = vld [vmem:[%s1710 + $0x180] sm:$0xff]
      %v1760 = vld [vmem:[%s1710 + $0x188] sm:$0xff]
      %v1761 = vld [vmem:[%s1710 + $0x190] sm:$0xff]
      %v1762 = vld [vmem:[%s1710 + $0x198] sm:$0xff]
      %v1763 = vld [vmem:[%s1710 + $0x1a0] sm:$0xff]
      %v1764 = vld [vmem:[%s1710 + $0x1a8] sm:$0xff]
      %v1765 = vld [vmem:[%s1710 + $0x1b0] sm:$0xff]
      %v1766 = vld [vmem:[%s1710 + $0x1b8] sm:$0xff]
      %v1767 = vld [vmem:[%s1710 + $0x1c0] sm:$0xff]
      %v1768 = vld [vmem:[%s1710 + $0x1c8] sm:$0xff]
      %v1769 = vld [vmem:[%s1710 + $0x1d0] sm:$0xff]
      %v1770 = vld [vmem:[%s1710 + $0x1d8] sm:$0xff]
      %v1771 = vld [vmem:[%s1710 + $0x1e0] sm:$0xff]
      %v1772 = vld [vmem:[%s1710 + $0x1e8] sm:$0xff]
      %v1773 = vld [vmem:[%s1710 + $0x1f0] sm:$0xff]
      %v1774 = vld [vmem:[%s1710 + $0x1f8] sm:$0xff]
      %v1776 = vshrl.u32 %v1266, 16
      %v1778 = vshll.u32 %v1266, 16
      %v1780 = vrot.slane %v1778, 1
      %v1781 = vor.u32 %v1776, %v1780
      %v1783 = vshrl.u32 %v1267, 16
      %v1785 = vshll.u32 %v1267, 16
      %v1787 = vrot.slane %v1785, 1
      %v1788 = vor.u32 %v1783, %v1787
      %v1855 = vunpack.c.l.b16 %v1711
      %v1856 = vunpack.c.h.b16 %v1711
      %v1857 = vunpack.c.l.b16 %v1712
      %v1858 = vunpack.c.h.b16 %v1712
      %v1859 = vunpack.c.l.b16 %v1713
      %v1860 = vunpack.c.h.b16 %v1713
      %v1861 = vunpack.c.l.b16 %v1714
      %v1862 = vunpack.c.h.b16 %v1714
      %v1863 = vunpack.c.l.b16 %v1715
      %v1864 = vunpack.c.h.b16 %v1715
      %v1865 = vunpack.c.l.b16 %v1716
      %v1866 = vunpack.c.h.b16 %v1716
      %v1867 = vunpack.c.l.b16 %v1717
      %v1868 = vunpack.c.h.b16 %v1717
      %v1869 = vunpack.c.l.b16 %v1718
      %v1870 = vunpack.c.h.b16 %v1718
      %v1871 = vunpack.c.l.b16 %v1719
      %v1872 = vunpack.c.h.b16 %v1719
      %v1873 = vunpack.c.l.b16 %v1720
      %v1874 = vunpack.c.h.b16 %v1720
      %v1875 = vunpack.c.l.b16 %v1721
      %v1876 = vunpack.c.h.b16 %v1721
      %v1877 = vunpack.c.l.b16 %v1722
      %v1878 = vunpack.c.h.b16 %v1722
      %v1879 = vunpack.c.l.b16 %v1723
      %v1880 = vunpack.c.h.b16 %v1723
      %v1881 = vunpack.c.l.b16 %v1724
      %v1882 = vunpack.c.h.b16 %v1724
      %v1883 = vunpack.c.l.b16 %v1725
      %v1884 = vunpack.c.h.b16 %v1725
      %v1885 = vunpack.c.l.b16 %v1726
      %v1886 = vunpack.c.h.b16 %v1726
      %v1887 = vunpack.c.l.b16 %v1727
      %v1888 = vunpack.c.h.b16 %v1727
      %v1889 = vunpack.c.l.b16 %v1728
      %v1890 = vunpack.c.h.b16 %v1728
      %v1891 = vunpack.c.l.b16 %v1729
      %v1892 = vunpack.c.h.b16 %v1729
      %v1893 = vunpack.c.l.b16 %v1730
      %v1894 = vunpack.c.h.b16 %v1730
      %v1895 = vunpack.c.l.b16 %v1731
      %v1896 = vunpack.c.h.b16 %v1731
      %v1897 = vunpack.c.l.b16 %v1732
      %v1898 = vunpack.c.h.b16 %v1732
      %v1899 = vunpack.c.l.b16 %v1733
      %v1900 = vunpack.c.h.b16 %v1733
      %v1901 = vunpack.c.l.b16 %v1734
      %v1902 = vunpack.c.h.b16 %v1734
      %v1903 = vunpack.c.l.b16 %v1735
      %v1904 = vunpack.c.h.b16 %v1735
      %v1905 = vunpack.c.l.b16 %v1736
      %v1906 = vunpack.c.h.b16 %v1736
      %v1907 = vunpack.c.l.b16 %v1737
      %v1908 = vunpack.c.h.b16 %v1737
      %v1909 = vunpack.c.l.b16 %v1738
      %v1910 = vunpack.c.h.b16 %v1738
      %v1911 = vunpack.c.l.b16 %v1739
      %v1912 = vunpack.c.h.b16 %v1739
      %v1913 = vunpack.c.l.b16 %v1740
      %v1914 = vunpack.c.h.b16 %v1740
      %v1915 = vunpack.c.l.b16 %v1741
      %v1916 = vunpack.c.h.b16 %v1741
      %v1917 = vunpack.c.l.b16 %v1742
      %v1918 = vunpack.c.h.b16 %v1742
      %v1919 = vunpack.c.l.b16 %v1743
      %v1920 = vunpack.c.h.b16 %v1743
      %v1921 = vunpack.c.l.b16 %v1744
      %v1922 = vunpack.c.h.b16 %v1744
      %v1923 = vunpack.c.l.b16 %v1745
      %v1924 = vunpack.c.h.b16 %v1745
      %v1925 = vunpack.c.l.b16 %v1746
      %v1926 = vunpack.c.h.b16 %v1746
      %v1927 = vunpack.c.l.b16 %v1747
      %v1928 = vunpack.c.h.b16 %v1747
      %v1929 = vunpack.c.l.b16 %v1748
      %v1930 = vunpack.c.h.b16 %v1748
      %v1931 = vunpack.c.l.b16 %v1749
      %v1932 = vunpack.c.h.b16 %v1749
      %v1933 = vunpack.c.l.b16 %v1750
      %v1934 = vunpack.c.h.b16 %v1750
      %v1935 = vunpack.c.l.b16 %v1751
      %v1936 = vunpack.c.h.b16 %v1751
      %v1937 = vunpack.c.l.b16 %v1752
      %v1938 = vunpack.c.h.b16 %v1752
      %v1939 = vunpack.c.l.b16 %v1753
      %v1940 = vunpack.c.h.b16 %v1753
      %v1941 = vunpack.c.l.b16 %v1754
      %v1942 = vunpack.c.h.b16 %v1754
      %v1943 = vunpack.c.l.b16 %v1755
      %v1944 = vunpack.c.h.b16 %v1755
      %v1945 = vunpack.c.l.b16 %v1756
      %v1946 = vunpack.c.h.b16 %v1756
      %v1947 = vunpack.c.l.b16 %v1757
      %v1948 = vunpack.c.h.b16 %v1757
      %v1949 = vunpack.c.l.b16 %v1758
      %v1950 = vunpack.c.h.b16 %v1758
      %v1951 = vunpack.c.l.b16 %v1759
      %v1952 = vunpack.c.h.b16 %v1759
      %v1953 = vunpack.c.l.b16 %v1760
      %v1954 = vunpack.c.h.b16 %v1760
      %v1955 = vunpack.c.l.b16 %v1761
      %v1956 = vunpack.c.h.b16 %v1761
      %v1957 = vunpack.c.l.b16 %v1762
      %v1958 = vunpack.c.h.b16 %v1762
      %v1959 = vunpack.c.l.b16 %v1763
      %v1960 = vunpack.c.h.b16 %v1763
      %v1961 = vunpack.c.l.b16 %v1764
      %v1962 = vunpack.c.h.b16 %v1764
      %v1963 = vunpack.c.l.b16 %v1765
      %v1964 = vunpack.c.h.b16 %v1765
      %v1965 = vunpack.c.l.b16 %v1766
      %v1966 = vunpack.c.h.b16 %v1766
      %v1967 = vunpack.c.l.b16 %v1767
      %v1968 = vunpack.c.h.b16 %v1767
      %v1969 = vunpack.c.l.b16 %v1768
      %v1970 = vunpack.c.h.b16 %v1768
      %v1971 = vunpack.c.l.b16 %v1769
      %v1972 = vunpack.c.h.b16 %v1769
      %v1973 = vunpack.c.l.b16 %v1770
      %v1974 = vunpack.c.h.b16 %v1770
      %v1975 = vunpack.c.l.b16 %v1771
      %v1976 = vunpack.c.h.b16 %v1771
      %v1977 = vunpack.c.l.b16 %v1772
      %v1978 = vunpack.c.h.b16 %v1772
      %v1979 = vunpack.c.l.b16 %v1773
      %v1980 = vunpack.c.h.b16 %v1773
      %v1981 = vunpack.c.l.b16 %v1774
      %v1982 = vunpack.c.h.b16 %v1774
      %v1983 = vpack.c.b16 %v1859, %v1855
      %v1984 = vpack.c.b16 %v1860, %v1856
      %v1985 = vpack.c.b16 %v1861, %v1857
      %v1986 = vpack.c.b16 %v1862, %v1858
      %v1987 = vpack.c.b16 %v1867, %v1863
      %v1988 = vpack.c.b16 %v1868, %v1864
      %v1989 = vpack.c.b16 %v1869, %v1865
      %v1990 = vpack.c.b16 %v1870, %v1866
      %v1991 = vpack.c.b16 %v1875, %v1871
      %v1992 = vpack.c.b16 %v1876, %v1872
      %v1993 = vpack.c.b16 %v1877, %v1873
      %v1994 = vpack.c.b16 %v1878, %v1874
      %v1995 = vpack.c.b16 %v1883, %v1879
      %v1996 = vpack.c.b16 %v1884, %v1880
      %v1997 = vpack.c.b16 %v1885, %v1881
      %v1998 = vpack.c.b16 %v1886, %v1882
      %v1999 = vpack.c.b16 %v1891, %v1887
      %v2000 = vpack.c.b16 %v1892, %v1888
      %v2001 = vpack.c.b16 %v1893, %v1889
      %v2002 = vpack.c.b16 %v1894, %v1890
      %v2003 = vpack.c.b16 %v1899, %v1895
      %v2004 = vpack.c.b16 %v1900, %v1896
      %v2005 = vpack.c.b16 %v1901, %v1897
      %v2006 = vpack.c.b16 %v1902, %v1898
      %v2007 = vpack.c.b16 %v1907, %v1903
      %v2008 = vpack.c.b16 %v1908, %v1904
      %v2009 = vpack.c.b16 %v1909, %v1905
      %v2010 = vpack.c.b16 %v1910, %v1906
      %v2011 = vpack.c.b16 %v1915, %v1911
      %v2012 = vpack.c.b16 %v1916, %v1912
      %v2013 = vpack.c.b16 %v1917, %v1913
      %v2014 = vpack.c.b16 %v1918, %v1914
      %v2015 = vpack.c.b16 %v1923, %v1919
      %v2016 = vpack.c.b16 %v1924, %v1920
      %v2017 = vpack.c.b16 %v1925, %v1921
      %v2018 = vpack.c.b16 %v1926, %v1922
      %v2019 = vpack.c.b16 %v1931, %v1927
      %v2020 = vpack.c.b16 %v1932, %v1928
      %v2021 = vpack.c.b16 %v1933, %v1929
      %v2022 = vpack.c.b16 %v1934, %v1930
      %v2023 = vpack.c.b16 %v1939, %v1935
      %v2024 = vpack.c.b16 %v1940, %v1936
      %v2025 = vpack.c.b16 %v1941, %v1937
      %v2026 = vpack.c.b16 %v1942, %v1938
      %v2027 = vpack.c.b16 %v1947, %v1943
      %v2028 = vpack.c.b16 %v1948, %v1944
      %v2029 = vpack.c.b16 %v1949, %v1945
      %v2030 = vpack.c.b16 %v1950, %v1946
      %v2031 = vpack.c.b16 %v1955, %v1951
      %v2032 = vpack.c.b16 %v1956, %v1952
      %v2033 = vpack.c.b16 %v1957, %v1953
      %v2034 = vpack.c.b16 %v1958, %v1954
      %v2035 = vpack.c.b16 %v1963, %v1959
      %v2036 = vpack.c.b16 %v1964, %v1960
      %v2037 = vpack.c.b16 %v1965, %v1961
      %v2038 = vpack.c.b16 %v1966, %v1962
      %v2039 = vpack.c.b16 %v1971, %v1967
      %v2040 = vpack.c.b16 %v1972, %v1968
      %v2041 = vpack.c.b16 %v1973, %v1969
      %v2042 = vpack.c.b16 %v1974, %v1970
      %v2043 = vpack.c.b16 %v1979, %v1975
      %v2044 = vpack.c.b16 %v1980, %v1976
      %v2045 = vpack.c.b16 %v1981, %v1977
      %v2046 = vpack.c.b16 %v1982, %v1978
      %2111 = vmatpush.bf16.msra.mxu0 %v2011
      %2112 = vmatpush.bf16.msra.mxu0 %v2007
      %2113 = vmatpush.bf16.msra.mxu0 %v2003
      %2114 = vmatpush.bf16.msra.mxu0 %v1999
      %2115 = vmatpush.bf16.msra.mxu0 %v1995
      %2116 = vmatpush.bf16.msra.mxu0 %v1991
      %2117 = vmatpush.bf16.msra.mxu0 %v1987
      %2118 = vmatpush.bf16.msra.mxu0 %v1983
      %2119 = vmatmul.bf16.gmra.mxu0 %v1781
      %v2120 = vpop.f32.mrf.mxu0
      %v2121 = vadd.f32 0.0, %v2120
      %v2122 = vpop.f32.mrf.mxu0
      %v2123 = vadd.f32 0.0, %v2122
      %2124 = vdwg.mxu0
      %2125 = vmatpush.bf16.msra.mxu0 %v2043
      %2126 = vmatpush.bf16.msra.mxu0 %v2039
      %2127 = vmatpush.bf16.msra.mxu0 %v2035
      %2128 = vmatpush.bf16.msra.mxu0 %v2031
      %2129 = vmatpush.bf16.msra.mxu0 %v2027
      %2130 = vmatpush.bf16.msra.mxu0 %v2023
      %2131 = vmatpush.bf16.msra.mxu0 %v2019
      %2132 = vmatpush.bf16.msra.mxu0 %v2015
      %2133 = vmatmul.bf16.gmra.mxu0 %v1788
      %v2134 = vpop.f32.mrf.mxu0
      %v2135 = vadd.f32 %v2121, %v2134
      %v2136 = vpop.f32.mrf.mxu0
      %v2137 = vadd.f32 %v2123, %v2136
      %2138 = vdwg.mxu0
      %2139 = vmatpush.bf16.msra.mxu0 %v2012
      %2140 = vmatpush.bf16.msra.mxu0 %v2008
      %2141 = vmatpush.bf16.msra.mxu0 %v2004
      %2142 = vmatpush.bf16.msra.mxu0 %v2000
      %2143 = vmatpush.bf16.msra.mxu0 %v1996
      %2144 = vmatpush.bf16.msra.mxu0 %v1992
      %2145 = vmatpush.bf16.msra.mxu0 %v1988
      %2146 = vmatpush.bf16.msra.mxu0 %v1984
      %2147 = vmatmul.bf16.gmra.mxu0 %v1781
      %v2148 = vpop.f32.mrf.mxu0
      %v2149 = vadd.f32 0.0, %v2148
      %v2150 = vpop.f32.mrf.mxu0
      %v2151 = vadd.f32 0.0, %v2150
      %2152 = vdwg.mxu0
      %2153 = vmatpush.bf16.msra.mxu0 %v2044
      %2154 = vmatpush.bf16.msra.mxu0 %v2040
      %2155 = vmatpush.bf16.msra.mxu0 %v2036
      %2156 = vmatpush.bf16.msra.mxu0 %v2032
      %2157 = vmatpush.bf16.msra.mxu0 %v2028
      %2158 = vmatpush.bf16.msra.mxu0 %v2024
      %2159 = vmatpush.bf16.msra.mxu0 %v2020
      %2160 = vmatpush.bf16.msra.mxu0 %v2016
      %2161 = vmatmul.bf16.gmra.mxu0 %v1788
      %v2162 = vpop.f32.mrf.mxu0
      %v2163 = vadd.f32 %v2149, %v2162
      %v2164 = vpop.f32.mrf.mxu0
      %v2165 = vadd.f32 %v2151, %v2164
      %2166 = vdwg.mxu0
      %2167 = vmatpush.bf16.msra.mxu0 %v2013
      %2168 = vmatpush.bf16.msra.mxu0 %v2009
      %2169 = vmatpush.bf16.msra.mxu0 %v2005
      %2170 = vmatpush.bf16.msra.mxu0 %v2001
      %2171 = vmatpush.bf16.msra.mxu0 %v1997
      %2172 = vmatpush.bf16.msra.mxu0 %v1993
      %2173 = vmatpush.bf16.msra.mxu0 %v1989
      %2174 = vmatpush.bf16.msra.mxu0 %v1985
      %2175 = vmatmul.bf16.gmra.mxu0 %v1781
      %v2176 = vpop.f32.mrf.mxu0
      %v2177 = vadd.f32 0.0, %v2176
      %v2178 = vpop.f32.mrf.mxu0
      %v2179 = vadd.f32 0.0, %v2178
      %2180 = vdwg.mxu0
      %2181 = vmatpush.bf16.msra.mxu0 %v2045
      %2182 = vmatpush.bf16.msra.mxu0 %v2041
      %2183 = vmatpush.bf16.msra.mxu0 %v2037
      %2184 = vmatpush.bf16.msra.mxu0 %v2033
      %2185 = vmatpush.bf16.msra.mxu0 %v2029
      %2186 = vmatpush.bf16.msra.mxu0 %v2025
      %2187 = vmatpush.bf16.msra.mxu0 %v2021
      %2188 = vmatpush.bf16.msra.mxu0 %v2017
      %2189 = vmatmul.bf16.gmra.mxu0 %v1788
      %v2190 = vpop.f32.mrf.mxu0
      %v2191 = vadd.f32 %v2177, %v2190
      %v2192 = vpop.f32.mrf.mxu0
      %v2193 = vadd.f32 %v2179, %v2192
      %2194 = vdwg.mxu0
      %2195 = vmatpush.bf16.msra.mxu0 %v2014
      %2196 = vmatpush.bf16.msra.mxu0 %v2010
      %2197 = vmatpush.bf16.msra.mxu0 %v2006
      %2198 = vmatpush.bf16.msra.mxu0 %v2002
      %2199 = vmatpush.bf16.msra.mxu0 %v1998
      %2200 = vmatpush.bf16.msra.mxu0 %v1994
      %2201 = vmatpush.bf16.msra.mxu0 %v1990
      %2202 = vmatpush.bf16.msra.mxu0 %v1986
      %2203 = vmatmul.bf16.gmra.mxu0 %v1781
      %v2204 = vpop.f32.mrf.mxu0
      %v2205 = vadd.f32 0.0, %v2204
      %v2206 = vpop.f32.mrf.mxu0
      %v2207 = vadd.f32 0.0, %v2206
      %2208 = vdwg.mxu0
      %2209 = vmatpush.bf16.msra.mxu0 %v2046
      %2210 = vmatpush.bf16.msra.mxu0 %v2042
      %2211 = vmatpush.bf16.msra.mxu0 %v2038
      %2212 = vmatpush.bf16.msra.mxu0 %v2034
      %2213 = vmatpush.bf16.msra.mxu0 %v2030
      %2214 = vmatpush.bf16.msra.mxu0 %v2026
      %2215 = vmatpush.bf16.msra.mxu0 %v2022
      %2216 = vmatpush.bf16.msra.mxu0 %v2018
      %2217 = vmatmul.bf16.gmra.mxu0 %v1788
      %v2218 = vpop.f32.mrf.mxu0
      %v2219 = vadd.f32 %v2205, %v2218
      %v2220 = vpop.f32.mrf.mxu0
      %v2221 = vadd.f32 %v2207, %v2220
      %2222 = vdwg.mxu0
      %v2223 = vadd.f32 %v1702, %v2135
      %v2224 = vadd.f32 %v1703, %v2163
      %v2225 = vadd.f32 %v1704, %v2191
      %v2226 = vadd.f32 %v1705, %v2219
      %v2227 = vadd.f32 %v1706, %v2137
      %v2228 = vadd.f32 %v1707, %v2165
      %v2229 = vadd.f32 %v1708, %v2193
      %v2230 = vadd.f32 %v1709, %v2221
      %s2231 = scalar_lea.vmem %s165, 32
      %v2232 = vld [vmem:[%s2231] sm:$0xff]
      %v2233 = vld [vmem:[%s2231 + $0x8] sm:$0xff]
      %s2234 = scalar_lea.vmem %s1, 1024
      %v2235 = vld [vmem:[%s2234] sm:$0xff]
      %v2236 = vld [vmem:[%s2234 + $0x8] sm:$0xff]
      %v2237 = vld [vmem:[%s2234 + $0x10] sm:$0xff]
      %v2238 = vld [vmem:[%s2234 + $0x18] sm:$0xff]
      %v2239 = vld [vmem:[%s2234 + $0x20] sm:$0xff]
      %v2240 = vld [vmem:[%s2234 + $0x28] sm:$0xff]
      %v2241 = vld [vmem:[%s2234 + $0x30] sm:$0xff]
      %v2242 = vld [vmem:[%s2234 + $0x38] sm:$0xff]
      %v2243 = vld [vmem:[%s2234 + $0x40] sm:$0xff]
      %v2244 = vld [vmem:[%s2234 + $0x48] sm:$0xff]
      %v2245 = vld [vmem:[%s2234 + $0x50] sm:$0xff]
      %v2246 = vld [vmem:[%s2234 + $0x58] sm:$0xff]
      %v2247 = vld [vmem:[%s2234 + $0x60] sm:$0xff]
      %v2248 = vld [vmem:[%s2234 + $0x68] sm:$0xff]
      %v2249 = vld [vmem:[%s2234 + $0x70] sm:$0xff]
      %v2250 = vld [vmem:[%s2234 + $0x78] sm:$0xff]
      %v2251 = vld [vmem:[%s2234 + $0x80] sm:$0xff]
      %v2252 = vld [vmem:[%s2234 + $0x88] sm:$0xff]
      %v2253 = vld [vmem:[%s2234 + $0x90] sm:$0xff]
      %v2254 = vld [vmem:[%s2234 + $0x98] sm:$0xff]
      %v2255 = vld [vmem:[%s2234 + $0xa0] sm:$0xff]
      %v2256 = vld [vmem:[%s2234 + $0xa8] sm:$0xff]
      %v2257 = vld [vmem:[%s2234 + $0xb0] sm:$0xff]
      %v2258 = vld [vmem:[%s2234 + $0xb8] sm:$0xff]
      %v2259 = vld [vmem:[%s2234 + $0xc0] sm:$0xff]
      %v2260 = vld [vmem:[%s2234 + $0xc8] sm:$0xff]
      %v2261 = vld [vmem:[%s2234 + $0xd0] sm:$0xff]
      %v2262 = vld [vmem:[%s2234 + $0xd8] sm:$0xff]
      %v2263 = vld [vmem:[%s2234 + $0xe0] sm:$0xff]
      %v2264 = vld [vmem:[%s2234 + $0xe8] sm:$0xff]
      %v2265 = vld [vmem:[%s2234 + $0xf0] sm:$0xff]
      %v2266 = vld [vmem:[%s2234 + $0xf8] sm:$0xff]
      %v2267 = vld [vmem:[%s2234 + $0x100] sm:$0xff]
      %v2268 = vld [vmem:[%s2234 + $0x108] sm:$0xff]
      %v2269 = vld [vmem:[%s2234 + $0x110] sm:$0xff]
      %v2270 = vld [vmem:[%s2234 + $0x118] sm:$0xff]
      %v2271 = vld [vmem:[%s2234 + $0x120] sm:$0xff]
      %v2272 = vld [vmem:[%s2234 + $0x128] sm:$0xff]
      %v2273 = vld [vmem:[%s2234 + $0x130] sm:$0xff]
      %v2274 = vld [vmem:[%s2234 + $0x138] sm:$0xff]
      %v2275 = vld [vmem:[%s2234 + $0x140] sm:$0xff]
      %v2276 = vld [vmem:[%s2234 + $0x148] sm:$0xff]
      %v2277 = vld [vmem:[%s2234 + $0x150] sm:$0xff]
      %v2278 = vld [vmem:[%s2234 + $0x158] sm:$0xff]
      %v2279 = vld [vmem:[%s2234 + $0x160] sm:$0xff]
      %v2280 = vld [vmem:[%s2234 + $0x168] sm:$0xff]
      %v2281 = vld [vmem:[%s2234 + $0x170] sm:$0xff]
      %v2282 = vld [vmem:[%s2234 + $0x178] sm:$0xff]
      %v2283 = vld [vmem:[%s2234 + $0x180] sm:$0xff]
      %v2284 = vld [vmem:[%s2234 + $0x188] sm:$0xff]
      %v2285 = vld [vmem:[%s2234 + $0x190] sm:$0xff]
      %v2286 = vld [vmem:[%s2234 + $0x198] sm:$0xff]
      %v2287 = vld [vmem:[%s2234 + $0x1a0] sm:$0xff]
      %v2288 = vld [vmem:[%s2234 + $0x1a8] sm:$0xff]
      %v2289 = vld [vmem:[%s2234 + $0x1b0] sm:$0xff]
      %v2290 = vld [vmem:[%s2234 + $0x1b8] sm:$0xff]
      %v2291 = vld [vmem:[%s2234 + $0x1c0] sm:$0xff]
      %v2292 = vld [vmem:[%s2234 + $0x1c8] sm:$0xff]
      %v2293 = vld [vmem:[%s2234 + $0x1d0] sm:$0xff]
      %v2294 = vld [vmem:[%s2234 + $0x1d8] sm:$0xff]
      %v2295 = vld [vmem:[%s2234 + $0x1e0] sm:$0xff]
      %v2296 = vld [vmem:[%s2234 + $0x1e8] sm:$0xff]
      %v2297 = vld [vmem:[%s2234 + $0x1f0] sm:$0xff]
      %v2298 = vld [vmem:[%s2234 + $0x1f8] sm:$0xff]
      %v2301 = vunpack.c.l.b16 %v2232
      %v2302 = vunpack.c.h.b16 %v2232
      %v2303 = vunpack.c.l.b16 %v2233
      %v2304 = vunpack.c.h.b16 %v2233
      %v2305 = vpack.c.b16 %v2303, %v2301
      %v2306 = vpack.c.b16 %v2304, %v2302
      %v2373 = vunpack.c.l.b16 %v2235
      %v2374 = vunpack.c.h.b16 %v2235
      %v2375 = vunpack.c.l.b16 %v2236
      %v2376 = vunpack.c.h.b16 %v2236
      %v2377 = vunpack.c.l.b16 %v2237
      %v2378 = vunpack.c.h.b16 %v2237
      %v2379 = vunpack.c.l.b16 %v2238
      %v2380 = vunpack.c.h.b16 %v2238
      %v2381 = vunpack.c.l.b16 %v2239
      %v2382 = vunpack.c.h.b16 %v2239
      %v2383 = vunpack.c.l.b16 %v2240
      %v2384 = vunpack.c.h.b16 %v2240
      %v2385 = vunpack.c.l.b16 %v2241
      %v2386 = vunpack.c.h.b16 %v2241
      %v2387 = vunpack.c.l.b16 %v2242
      %v2388 = vunpack.c.h.b16 %v2242
      %v2389 = vunpack.c.l.b16 %v2243
      %v2390 = vunpack.c.h.b16 %v2243
      %v2391 = vunpack.c.l.b16 %v2244
      %v2392 = vunpack.c.h.b16 %v2244
      %v2393 = vunpack.c.l.b16 %v2245
      %v2394 = vunpack.c.h.b16 %v2245
      %v2395 = vunpack.c.l.b16 %v2246
      %v2396 = vunpack.c.h.b16 %v2246
      %v2397 = vunpack.c.l.b16 %v2247
      %v2398 = vunpack.c.h.b16 %v2247
      %v2399 = vunpack.c.l.b16 %v2248
      %v2400 = vunpack.c.h.b16 %v2248
      %v2401 = vunpack.c.l.b16 %v2249
      %v2402 = vunpack.c.h.b16 %v2249
      %v2403 = vunpack.c.l.b16 %v2250
      %v2404 = vunpack.c.h.b16 %v2250
      %v2405 = vunpack.c.l.b16 %v2251
      %v2406 = vunpack.c.h.b16 %v2251
      %v2407 = vunpack.c.l.b16 %v2252
      %v2408 = vunpack.c.h.b16 %v2252
      %v2409 = vunpack.c.l.b16 %v2253
      %v2410 = vunpack.c.h.b16 %v2253
      %v2411 = vunpack.c.l.b16 %v2254
      %v2412 = vunpack.c.h.b16 %v2254
      %v2413 = vunpack.c.l.b16 %v2255
      %v2414 = vunpack.c.h.b16 %v2255
      %v2415 = vunpack.c.l.b16 %v2256
      %v2416 = vunpack.c.h.b16 %v2256
      %v2417 = vunpack.c.l.b16 %v2257
      %v2418 = vunpack.c.h.b16 %v2257
      %v2419 = vunpack.c.l.b16 %v2258
      %v2420 = vunpack.c.h.b16 %v2258
      %v2421 = vunpack.c.l.b16 %v2259
      %v2422 = vunpack.c.h.b16 %v2259
      %v2423 = vunpack.c.l.b16 %v2260
      %v2424 = vunpack.c.h.b16 %v2260
      %v2425 = vunpack.c.l.b16 %v2261
      %v2426 = vunpack.c.h.b16 %v2261
      %v2427 = vunpack.c.l.b16 %v2262
      %v2428 = vunpack.c.h.b16 %v2262
      %v2429 = vunpack.c.l.b16 %v2263
      %v2430 = vunpack.c.h.b16 %v2263
      %v2431 = vunpack.c.l.b16 %v2264
      %v2432 = vunpack.c.h.b16 %v2264
      %v2433 = vunpack.c.l.b16 %v2265
      %v2434 = vunpack.c.h.b16 %v2265
      %v2435 = vunpack.c.l.b16 %v2266
      %v2436 = vunpack.c.h.b16 %v2266
      %v2437 = vunpack.c.l.b16 %v2267
      %v2438 = vunpack.c.h.b16 %v2267
      %v2439 = vunpack.c.l.b16 %v2268
      %v2440 = vunpack.c.h.b16 %v2268
      %v2441 = vunpack.c.l.b16 %v2269
      %v2442 = vunpack.c.h.b16 %v2269
      %v2443 = vunpack.c.l.b16 %v2270
      %v2444 = vunpack.c.h.b16 %v2270
      %v2445 = vunpack.c.l.b16 %v2271
      %v2446 = vunpack.c.h.b16 %v2271
      %v2447 = vunpack.c.l.b16 %v2272
      %v2448 = vunpack.c.h.b16 %v2272
      %v2449 = vunpack.c.l.b16 %v2273
      %v2450 = vunpack.c.h.b16 %v2273
      %v2451 = vunpack.c.l.b16 %v2274
      %v2452 = vunpack.c.h.b16 %v2274
      %v2453 = vunpack.c.l.b16 %v2275
      %v2454 = vunpack.c.h.b16 %v2275
      %v2455 = vunpack.c.l.b16 %v2276
      %v2456 = vunpack.c.h.b16 %v2276
      %v2457 = vunpack.c.l.b16 %v2277
      %v2458 = vunpack.c.h.b16 %v2277
      %v2459 = vunpack.c.l.b16 %v2278
      %v2460 = vunpack.c.h.b16 %v2278
      %v2461 = vunpack.c.l.b16 %v2279
      %v2462 = vunpack.c.h.b16 %v2279
      %v2463 = vunpack.c.l.b16 %v2280
      %v2464 = vunpack.c.h.b16 %v2280
      %v2465 = vunpack.c.l.b16 %v2281
      %v2466 = vunpack.c.h.b16 %v2281
      %v2467 = vunpack.c.l.b16 %v2282
      %v2468 = vunpack.c.h.b16 %v2282
      %v2469 = vunpack.c.l.b16 %v2283
      %v2470 = vunpack.c.h.b16 %v2283
      %v2471 = vunpack.c.l.b16 %v2284
      %v2472 = vunpack.c.h.b16 %v2284
      %v2473 = vunpack.c.l.b16 %v2285
      %v2474 = vunpack.c.h.b16 %v2285
      %v2475 = vunpack.c.l.b16 %v2286
      %v2476 = vunpack.c.h.b16 %v2286
      %v2477 = vunpack.c.l.b16 %v2287
      %v2478 = vunpack.c.h.b16 %v2287
      %v2479 = vunpack.c.l.b16 %v2288
      %v2480 = vunpack.c.h.b16 %v2288
      %v2481 = vunpack.c.l.b16 %v2289
      %v2482 = vunpack.c.h.b16 %v2289
      %v2483 = vunpack.c.l.b16 %v2290
      %v2484 = vunpack.c.h.b16 %v2290
      %v2485 = vunpack.c.l.b16 %v2291
      %v2486 = vunpack.c.h.b16 %v2291
      %v2487 = vunpack.c.l.b16 %v2292
      %v2488 = vunpack.c.h.b16 %v2292
      %v2489 = vunpack.c.l.b16 %v2293
      %v2490 = vunpack.c.h.b16 %v2293
      %v2491 = vunpack.c.l.b16 %v2294
      %v2492 = vunpack.c.h.b16 %v2294
      %v2493 = vunpack.c.l.b16 %v2295
      %v2494 = vunpack.c.h.b16 %v2295
      %v2495 = vunpack.c.l.b16 %v2296
      %v2496 = vunpack.c.h.b16 %v2296
      %v2497 = vunpack.c.l.b16 %v2297
      %v2498 = vunpack.c.h.b16 %v2297
      %v2499 = vunpack.c.l.b16 %v2298
      %v2500 = vunpack.c.h.b16 %v2298
      %v2501 = vpack.c.b16 %v2377, %v2373
      %v2502 = vpack.c.b16 %v2378, %v2374
      %v2503 = vpack.c.b16 %v2379, %v2375
      %v2504 = vpack.c.b16 %v2380, %v2376
      %v2505 = vpack.c.b16 %v2385, %v2381
      %v2506 = vpack.c.b16 %v2386, %v2382
      %v2507 = vpack.c.b16 %v2387, %v2383
      %v2508 = vpack.c.b16 %v2388, %v2384
      %v2509 = vpack.c.b16 %v2393, %v2389
      %v2510 = vpack.c.b16 %v2394, %v2390
      %v2511 = vpack.c.b16 %v2395, %v2391
      %v2512 = vpack.c.b16 %v2396, %v2392
      %v2513 = vpack.c.b16 %v2401, %v2397
      %v2514 = vpack.c.b16 %v2402, %v2398
      %v2515 = vpack.c.b16 %v2403, %v2399
      %v2516 = vpack.c.b16 %v2404, %v2400
      %v2517 = vpack.c.b16 %v2409, %v2405
      %v2518 = vpack.c.b16 %v2410, %v2406
      %v2519 = vpack.c.b16 %v2411, %v2407
      %v2520 = vpack.c.b16 %v2412, %v2408
      %v2521 = vpack.c.b16 %v2417, %v2413
      %v2522 = vpack.c.b16 %v2418, %v2414
      %v2523 = vpack.c.b16 %v2419, %v2415
      %v2524 = vpack.c.b16 %v2420, %v2416
      %v2525 = vpack.c.b16 %v2425, %v2421
      %v2526 = vpack.c.b16 %v2426, %v2422
      %v2527 = vpack.c.b16 %v2427, %v2423
      %v2528 = vpack.c.b16 %v2428, %v2424
      %v2529 = vpack.c.b16 %v2433, %v2429
      %v2530 = vpack.c.b16 %v2434, %v2430
      %v2531 = vpack.c.b16 %v2435, %v2431
      %v2532 = vpack.c.b16 %v2436, %v2432
      %v2533 = vpack.c.b16 %v2441, %v2437
      %v2534 = vpack.c.b16 %v2442, %v2438
      %v2535 = vpack.c.b16 %v2443, %v2439
      %v2536 = vpack.c.b16 %v2444, %v2440
      %v2537 = vpack.c.b16 %v2449, %v2445
      %v2538 = vpack.c.b16 %v2450, %v2446
      %v2539 = vpack.c.b16 %v2451, %v2447
      %v2540 = vpack.c.b16 %v2452, %v2448
      %v2541 = vpack.c.b16 %v2457, %v2453
      %v2542 = vpack.c.b16 %v2458, %v2454
      %v2543 = vpack.c.b16 %v2459, %v2455
      %v2544 = vpack.c.b16 %v2460, %v2456
      %v2545 = vpack.c.b16 %v2465, %v2461
      %v2546 = vpack.c.b16 %v2466, %v2462
      %v2547 = vpack.c.b16 %v2467, %v2463
      %v2548 = vpack.c.b16 %v2468, %v2464
      %v2549 = vpack.c.b16 %v2473, %v2469
      %v2550 = vpack.c.b16 %v2474, %v2470
      %v2551 = vpack.c.b16 %v2475, %v2471
      %v2552 = vpack.c.b16 %v2476, %v2472
      %v2553 = vpack.c.b16 %v2481, %v2477
      %v2554 = vpack.c.b16 %v2482, %v2478
      %v2555 = vpack.c.b16 %v2483, %v2479
      %v2556 = vpack.c.b16 %v2484, %v2480
      %v2557 = vpack.c.b16 %v2489, %v2485
      %v2558 = vpack.c.b16 %v2490, %v2486
      %v2559 = vpack.c.b16 %v2491, %v2487
      %v2560 = vpack.c.b16 %v2492, %v2488
      %v2561 = vpack.c.b16 %v2497, %v2493
      %v2562 = vpack.c.b16 %v2498, %v2494
      %v2563 = vpack.c.b16 %v2499, %v2495
      %v2564 = vpack.c.b16 %v2500, %v2496
      %2629 = vmatpush.bf16.msra.mxu0 %v2529
      %2630 = vmatpush.bf16.msra.mxu0 %v2525
      %2631 = vmatpush.bf16.msra.mxu0 %v2521
      %2632 = vmatpush.bf16.msra.mxu0 %v2517
      %2633 = vmatpush.bf16.msra.mxu0 %v2513
      %2634 = vmatpush.bf16.msra.mxu0 %v2509
      %2635 = vmatpush.bf16.msra.mxu0 %v2505
      %2636 = vmatpush.bf16.msra.mxu0 %v2501
      %2637 = vmatmul.bf16.gmra.mxu0 %v2305
      %v2638 = vpop.f32.mrf.mxu0
      %v2639 = vadd.f32 0.0, %v2638
      %v2640 = vpop.f32.mrf.mxu0
      %v2641 = vadd.f32 0.0, %v2640
      %2642 = vdwg.mxu0
      %2643 = vmatpush.bf16.msra.mxu0 %v2561
      %2644 = vmatpush.bf16.msra.mxu0 %v2557
      %2645 = vmatpush.bf16.msra.mxu0 %v2553
      %2646 = vmatpush.bf16.msra.mxu0 %v2549
      %2647 = vmatpush.bf16.msra.mxu0 %v2545
      %2648 = vmatpush.bf16.msra.mxu0 %v2541
      %2649 = vmatpush.bf16.msra.mxu0 %v2537
      %2650 = vmatpush.bf16.msra.mxu0 %v2533
      %2651 = vmatmul.bf16.gmra.mxu0 %v2306
      %v2652 = vpop.f32.mrf.mxu0
      %v2653 = vadd.f32 %v2639, %v2652
      %v2654 = vpop.f32.mrf.mxu0
      %v2655 = vadd.f32 %v2641, %v2654
      %2656 = vdwg.mxu0
      %2657 = vmatpush.bf16.msra.mxu0 %v2530
      %2658 = vmatpush.bf16.msra.mxu0 %v2526
      %2659 = vmatpush.bf16.msra.mxu0 %v2522
      %2660 = vmatpush.bf16.msra.mxu0 %v2518
      %2661 = vmatpush.bf16.msra.mxu0 %v2514
      %2662 = vmatpush.bf16.msra.mxu0 %v2510
      %2663 = vmatpush.bf16.msra.mxu0 %v2506
      %2664 = vmatpush.bf16.msra.mxu0 %v2502
      %2665 = vmatmul.bf16.gmra.mxu0 %v2305
      %v2666 = vpop.f32.mrf.mxu0
      %v2667 = vadd.f32 0.0, %v2666
      %v2668 = vpop.f32.mrf.mxu0
      %v2669 = vadd.f32 0.0, %v2668
      %2670 = vdwg.mxu0
      %2671 = vmatpush.bf16.msra.mxu0 %v2562
      %2672 = vmatpush.bf16.msra.mxu0 %v2558
      %2673 = vmatpush.bf16.msra.mxu0 %v2554
      %2674 = vmatpush.bf16.msra.mxu0 %v2550
      %2675 = vmatpush.bf16.msra.mxu0 %v2546
      %2676 = vmatpush.bf16.msra.mxu0 %v2542
      %2677 = vmatpush.bf16.msra.mxu0 %v2538
      %2678 = vmatpush.bf16.msra.mxu0 %v2534
      %2679 = vmatmul.bf16.gmra.mxu0 %v2306
      %v2680 = vpop.f32.mrf.mxu0
      %v2681 = vadd.f32 %v2667, %v2680
      %v2682 = vpop.f32.mrf.mxu0
      %v2683 = vadd.f32 %v2669, %v2682
      %2684 = vdwg.mxu0
      %2685 = vmatpush.bf16.msra.mxu0 %v2531
      %2686 = vmatpush.bf16.msra.mxu0 %v2527
      %2687 = vmatpush.bf16.msra.mxu0 %v2523
      %2688 = vmatpush.bf16.msra.mxu0 %v2519
      %2689 = vmatpush.bf16.msra.mxu0 %v2515
      %2690 = vmatpush.bf16.msra.mxu0 %v2511
      %2691 = vmatpush.bf16.msra.mxu0 %v2507
      %2692 = vmatpush.bf16.msra.mxu0 %v2503
      %2693 = vmatmul.bf16.gmra.mxu0 %v2305
      %v2694 = vpop.f32.mrf.mxu0
      %v2695 = vadd.f32 0.0, %v2694
      %v2696 = vpop.f32.mrf.mxu0
      %v2697 = vadd.f32 0.0, %v2696
      %2698 = vdwg.mxu0
      %2699 = vmatpush.bf16.msra.mxu0 %v2563
      %2700 = vmatpush.bf16.msra.mxu0 %v2559
      %2701 = vmatpush.bf16.msra.mxu0 %v2555
      %2702 = vmatpush.bf16.msra.mxu0 %v2551
      %2703 = vmatpush.bf16.msra.mxu0 %v2547
      %2704 = vmatpush.bf16.msra.mxu0 %v2543
      %2705 = vmatpush.bf16.msra.mxu0 %v2539
      %2706 = vmatpush.bf16.msra.mxu0 %v2535
      %2707 = vmatmul.bf16.gmra.mxu0 %v2306
      %v2708 = vpop.f32.mrf.mxu0
      %v2709 = vadd.f32 %v2695, %v2708
      %v2710 = vpop.f32.mrf.mxu0
      %v2711 = vadd.f32 %v2697, %v2710
      %2712 = vdwg.mxu0
      %2713 = vmatpush.bf16.msra.mxu0 %v2532
      %2714 = vmatpush.bf16.msra.mxu0 %v2528
      %2715 = vmatpush.bf16.msra.mxu0 %v2524
      %2716 = vmatpush.bf16.msra.mxu0 %v2520
      %2717 = vmatpush.bf16.msra.mxu0 %v2516
      %2718 = vmatpush.bf16.msra.mxu0 %v2512
      %2719 = vmatpush.bf16.msra.mxu0 %v2508
      %2720 = vmatpush.bf16.msra.mxu0 %v2504
      %2721 = vmatmul.bf16.gmra.mxu0 %v2305
      %v2722 = vpop.f32.mrf.mxu0
      %v2723 = vadd.f32 0.0, %v2722
      %v2724 = vpop.f32.mrf.mxu0
      %v2725 = vadd.f32 0.0, %v2724
      %2726 = vdwg.mxu0
      %2727 = vmatpush.bf16.msra.mxu0 %v2564
      %2728 = vmatpush.bf16.msra.mxu0 %v2560
      %2729 = vmatpush.bf16.msra.mxu0 %v2556
      %2730 = vmatpush.bf16.msra.mxu0 %v2552
      %2731 = vmatpush.bf16.msra.mxu0 %v2548
      %2732 = vmatpush.bf16.msra.mxu0 %v2544
      %2733 = vmatpush.bf16.msra.mxu0 %v2540
      %2734 = vmatpush.bf16.msra.mxu0 %v2536
      %2735 = vmatmul.bf16.gmra.mxu0 %v2306
      %v2736 = vpop.f32.mrf.mxu0
      %v2737 = vadd.f32 %v2723, %v2736
      %v2738 = vpop.f32.mrf.mxu0
      %v2739 = vadd.f32 %v2725, %v2738
      %2740 = vdwg.mxu0
      %v2741 = vadd.f32 %v2223, %v2653
      %v2742 = vadd.f32 %v2224, %v2681
      %v2743 = vadd.f32 %v2225, %v2709
      %v2744 = vadd.f32 %v2226, %v2737
      %v2745 = vadd.f32 %v2227, %v2655
      %v2746 = vadd.f32 %v2228, %v2683
      %v2747 = vadd.f32 %v2229, %v2711
      %v2748 = vadd.f32 %v2230, %v2739
      %s2749 = scalar_lea.vmem %s1, 3072
      %v2750 = vld [vmem:[%s2749] sm:$0xff]
      %v2751 = vld [vmem:[%s2749 + $0x8] sm:$0xff]
      %v2752 = vld [vmem:[%s2749 + $0x10] sm:$0xff]
      %v2753 = vld [vmem:[%s2749 + $0x18] sm:$0xff]
      %v2754 = vld [vmem:[%s2749 + $0x20] sm:$0xff]
      %v2755 = vld [vmem:[%s2749 + $0x28] sm:$0xff]
      %v2756 = vld [vmem:[%s2749 + $0x30] sm:$0xff]
      %v2757 = vld [vmem:[%s2749 + $0x38] sm:$0xff]
      %v2758 = vld [vmem:[%s2749 + $0x40] sm:$0xff]
      %v2759 = vld [vmem:[%s2749 + $0x48] sm:$0xff]
      %v2760 = vld [vmem:[%s2749 + $0x50] sm:$0xff]
      %v2761 = vld [vmem:[%s2749 + $0x58] sm:$0xff]
      %v2762 = vld [vmem:[%s2749 + $0x60] sm:$0xff]
      %v2763 = vld [vmem:[%s2749 + $0x68] sm:$0xff]
      %v2764 = vld [vmem:[%s2749 + $0x70] sm:$0xff]
      %v2765 = vld [vmem:[%s2749 + $0x78] sm:$0xff]
      %v2766 = vld [vmem:[%s2749 + $0x80] sm:$0xff]
      %v2767 = vld [vmem:[%s2749 + $0x88] sm:$0xff]
      %v2768 = vld [vmem:[%s2749 + $0x90] sm:$0xff]
      %v2769 = vld [vmem:[%s2749 + $0x98] sm:$0xff]
      %v2770 = vld [vmem:[%s2749 + $0xa0] sm:$0xff]
      %v2771 = vld [vmem:[%s2749 + $0xa8] sm:$0xff]
      %v2772 = vld [vmem:[%s2749 + $0xb0] sm:$0xff]
      %v2773 = vld [vmem:[%s2749 + $0xb8] sm:$0xff]
      %v2774 = vld [vmem:[%s2749 + $0xc0] sm:$0xff]
      %v2775 = vld [vmem:[%s2749 + $0xc8] sm:$0xff]
      %v2776 = vld [vmem:[%s2749 + $0xd0] sm:$0xff]
      %v2777 = vld [vmem:[%s2749 + $0xd8] sm:$0xff]
      %v2778 = vld [vmem:[%s2749 + $0xe0] sm:$0xff]
      %v2779 = vld [vmem:[%s2749 + $0xe8] sm:$0xff]
      %v2780 = vld [vmem:[%s2749 + $0xf0] sm:$0xff]
      %v2781 = vld [vmem:[%s2749 + $0xf8] sm:$0xff]
      %v2782 = vld [vmem:[%s2749 + $0x100] sm:$0xff]
      %v2783 = vld [vmem:[%s2749 + $0x108] sm:$0xff]
      %v2784 = vld [vmem:[%s2749 + $0x110] sm:$0xff]
      %v2785 = vld [vmem:[%s2749 + $0x118] sm:$0xff]
      %v2786 = vld [vmem:[%s2749 + $0x120] sm:$0xff]
      %v2787 = vld [vmem:[%s2749 + $0x128] sm:$0xff]
      %v2788 = vld [vmem:[%s2749 + $0x130] sm:$0xff]
      %v2789 = vld [vmem:[%s2749 + $0x138] sm:$0xff]
      %v2790 = vld [vmem:[%s2749 + $0x140] sm:$0xff]
      %v2791 = vld [vmem:[%s2749 + $0x148] sm:$0xff]
      %v2792 = vld [vmem:[%s2749 + $0x150] sm:$0xff]
      %v2793 = vld [vmem:[%s2749 + $0x158] sm:$0xff]
      %v2794 = vld [vmem:[%s2749 + $0x160] sm:$0xff]
      %v2795 = vld [vmem:[%s2749 + $0x168] sm:$0xff]
      %v2796 = vld [vmem:[%s2749 + $0x170] sm:$0xff]
      %v2797 = vld [vmem:[%s2749 + $0x178] sm:$0xff]
      %v2798 = vld [vmem:[%s2749 + $0x180] sm:$0xff]
      %v2799 = vld [vmem:[%s2749 + $0x188] sm:$0xff]
      %v2800 = vld [vmem:[%s2749 + $0x190] sm:$0xff]
      %v2801 = vld [vmem:[%s2749 + $0x198] sm:$0xff]
      %v2802 = vld [vmem:[%s2749 + $0x1a0] sm:$0xff]
      %v2803 = vld [vmem:[%s2749 + $0x1a8] sm:$0xff]
      %v2804 = vld [vmem:[%s2749 + $0x1b0] sm:$0xff]
      %v2805 = vld [vmem:[%s2749 + $0x1b8] sm:$0xff]
      %v2806 = vld [vmem:[%s2749 + $0x1c0] sm:$0xff]
      %v2807 = vld [vmem:[%s2749 + $0x1c8] sm:$0xff]
      %v2808 = vld [vmem:[%s2749 + $0x1d0] sm:$0xff]
      %v2809 = vld [vmem:[%s2749 + $0x1d8] sm:$0xff]
      %v2810 = vld [vmem:[%s2749 + $0x1e0] sm:$0xff]
      %v2811 = vld [vmem:[%s2749 + $0x1e8] sm:$0xff]
      %v2812 = vld [vmem:[%s2749 + $0x1f0] sm:$0xff]
      %v2813 = vld [vmem:[%s2749 + $0x1f8] sm:$0xff]
      %v2815 = vshrl.u32 %v2305, 16
      %v2817 = vshll.u32 %v2305, 16
      %v2819 = vrot.slane %v2817, 1
      %v2820 = vor.u32 %v2815, %v2819
      %v2822 = vshrl.u32 %v2306, 16
      %v2824 = vshll.u32 %v2306, 16
      %v2826 = vrot.slane %v2824, 1
      %v2827 = vor.u32 %v2822, %v2826
      %v2894 = vunpack.c.l.b16 %v2750
      %v2895 = vunpack.c.h.b16 %v2750
      %v2896 = vunpack.c.l.b16 %v2751
      %v2897 = vunpack.c.h.b16 %v2751
      %v2898 = vunpack.c.l.b16 %v2752
      %v2899 = vunpack.c.h.b16 %v2752
      %v2900 = vunpack.c.l.b16 %v2753
      %v2901 = vunpack.c.h.b16 %v2753
      %v2902 = vunpack.c.l.b16 %v2754
      %v2903 = vunpack.c.h.b16 %v2754
      %v2904 = vunpack.c.l.b16 %v2755
      %v2905 = vunpack.c.h.b16 %v2755
      %v2906 = vunpack.c.l.b16 %v2756
      %v2907 = vunpack.c.h.b16 %v2756
      %v2908 = vunpack.c.l.b16 %v2757
      %v2909 = vunpack.c.h.b16 %v2757
      %v2910 = vunpack.c.l.b16 %v2758
      %v2911 = vunpack.c.h.b16 %v2758
      %v2912 = vunpack.c.l.b16 %v2759
      %v2913 = vunpack.c.h.b16 %v2759
      %v2914 = vunpack.c.l.b16 %v2760
      %v2915 = vunpack.c.h.b16 %v2760
      %v2916 = vunpack.c.l.b16 %v2761
      %v2917 = vunpack.c.h.b16 %v2761
      %v2918 = vunpack.c.l.b16 %v2762
      %v2919 = vunpack.c.h.b16 %v2762
      %v2920 = vunpack.c.l.b16 %v2763
      %v2921 = vunpack.c.h.b16 %v2763
      %v2922 = vunpack.c.l.b16 %v2764
      %v2923 = vunpack.c.h.b16 %v2764
      %v2924 = vunpack.c.l.b16 %v2765
      %v2925 = vunpack.c.h.b16 %v2765
      %v2926 = vunpack.c.l.b16 %v2766
      %v2927 = vunpack.c.h.b16 %v2766
      %v2928 = vunpack.c.l.b16 %v2767
      %v2929 = vunpack.c.h.b16 %v2767
      %v2930 = vunpack.c.l.b16 %v2768
      %v2931 = vunpack.c.h.b16 %v2768
      %v2932 = vunpack.c.l.b16 %v2769
      %v2933 = vunpack.c.h.b16 %v2769
      %v2934 = vunpack.c.l.b16 %v2770
      %v2935 = vunpack.c.h.b16 %v2770
      %v2936 = vunpack.c.l.b16 %v2771
      %v2937 = vunpack.c.h.b16 %v2771
      %v2938 = vunpack.c.l.b16 %v2772
      %v2939 = vunpack.c.h.b16 %v2772
      %v2940 = vunpack.c.l.b16 %v2773
      %v2941 = vunpack.c.h.b16 %v2773
      %v2942 = vunpack.c.l.b16 %v2774
      %v2943 = vunpack.c.h.b16 %v2774
      %v2944 = vunpack.c.l.b16 %v2775
      %v2945 = vunpack.c.h.b16 %v2775
      %v2946 = vunpack.c.l.b16 %v2776
      %v2947 = vunpack.c.h.b16 %v2776
      %v2948 = vunpack.c.l.b16 %v2777
      %v2949 = vunpack.c.h.b16 %v2777
      %v2950 = vunpack.c.l.b16 %v2778
      %v2951 = vunpack.c.h.b16 %v2778
      %v2952 = vunpack.c.l.b16 %v2779
      %v2953 = vunpack.c.h.b16 %v2779
      %v2954 = vunpack.c.l.b16 %v2780
      %v2955 = vunpack.c.h.b16 %v2780
      %v2956 = vunpack.c.l.b16 %v2781
      %v2957 = vunpack.c.h.b16 %v2781
      %v2958 = vunpack.c.l.b16 %v2782
      %v2959 = vunpack.c.h.b16 %v2782
      %v2960 = vunpack.c.l.b16 %v2783
      %v2961 = vunpack.c.h.b16 %v2783
      %v2962 = vunpack.c.l.b16 %v2784
      %v2963 = vunpack.c.h.b16 %v2784
      %v2964 = vunpack.c.l.b16 %v2785
      %v2965 = vunpack.c.h.b16 %v2785
      %v2966 = vunpack.c.l.b16 %v2786
      %v2967 = vunpack.c.h.b16 %v2786
      %v2968 = vunpack.c.l.b16 %v2787
      %v2969 = vunpack.c.h.b16 %v2787
      %v2970 = vunpack.c.l.b16 %v2788
      %v2971 = vunpack.c.h.b16 %v2788
      %v2972 = vunpack.c.l.b16 %v2789
      %v2973 = vunpack.c.h.b16 %v2789
      %v2974 = vunpack.c.l.b16 %v2790
      %v2975 = vunpack.c.h.b16 %v2790
      %v2976 = vunpack.c.l.b16 %v2791
      %v2977 = vunpack.c.h.b16 %v2791
      %v2978 = vunpack.c.l.b16 %v2792
      %v2979 = vunpack.c.h.b16 %v2792
      %v2980 = vunpack.c.l.b16 %v2793
      %v2981 = vunpack.c.h.b16 %v2793
      %v2982 = vunpack.c.l.b16 %v2794
      %v2983 = vunpack.c.h.b16 %v2794
      %v2984 = vunpack.c.l.b16 %v2795
      %v2985 = vunpack.c.h.b16 %v2795
      %v2986 = vunpack.c.l.b16 %v2796
      %v2987 = vunpack.c.h.b16 %v2796
      %v2988 = vunpack.c.l.b16 %v2797
      %v2989 = vunpack.c.h.b16 %v2797
      %v2990 = vunpack.c.l.b16 %v2798
      %v2991 = vunpack.c.h.b16 %v2798
      %v2992 = vunpack.c.l.b16 %v2799
      %v2993 = vunpack.c.h.b16 %v2799
      %v2994 = vunpack.c.l.b16 %v2800
      %v2995 = vunpack.c.h.b16 %v2800
      %v2996 = vunpack.c.l.b16 %v2801
      %v2997 = vunpack.c.h.b16 %v2801
      %v2998 = vunpack.c.l.b16 %v2802
      %v2999 = vunpack.c.h.b16 %v2802
      %v3000 = vunpack.c.l.b16 %v2803
      %v3001 = vunpack.c.h.b16 %v2803
      %v3002 = vunpack.c.l.b16 %v2804
      %v3003 = vunpack.c.h.b16 %v2804
      %v3004 = vunpack.c.l.b16 %v2805
      %v3005 = vunpack.c.h.b16 %v2805
      %v3006 = vunpack.c.l.b16 %v2806
      %v3007 = vunpack.c.h.b16 %v2806
      %v3008 = vunpack.c.l.b16 %v2807
      %v3009 = vunpack.c.h.b16 %v2807
      %v3010 = vunpack.c.l.b16 %v2808
      %v3011 = vunpack.c.h.b16 %v2808
      %v3012 = vunpack.c.l.b16 %v2809
      %v3013 = vunpack.c.h.b16 %v2809
      %v3014 = vunpack.c.l.b16 %v2810
      %v3015 = vunpack.c.h.b16 %v2810
      %v3016 = vunpack.c.l.b16 %v2811
      %v3017 = vunpack.c.h.b16 %v2811
      %v3018 = vunpack.c.l.b16 %v2812
      %v3019 = vunpack.c.h.b16 %v2812
      %v3020 = vunpack.c.l.b16 %v2813
      %v3021 = vunpack.c.h.b16 %v2813
      %v3022 = vpack.c.b16 %v2898, %v2894
      %v3023 = vpack.c.b16 %v2899, %v2895
      %v3024 = vpack.c.b16 %v2900, %v2896
      %v3025 = vpack.c.b16 %v2901, %v2897
      %v3026 = vpack.c.b16 %v2906, %v2902
      %v3027 = vpack.c.b16 %v2907, %v2903
      %v3028 = vpack.c.b16 %v2908, %v2904
      %v3029 = vpack.c.b16 %v2909, %v2905
      %v3030 = vpack.c.b16 %v2914, %v2910
      %v3031 = vpack.c.b16 %v2915, %v2911
      %v3032 = vpack.c.b16 %v2916, %v2912
      %v3033 = vpack.c.b16 %v2917, %v2913
      %v3034 = vpack.c.b16 %v2922, %v2918
      %v3035 = vpack.c.b16 %v2923, %v2919
      %v3036 = vpack.c.b16 %v2924, %v2920
      %v3037 = vpack.c.b16 %v2925, %v2921
      %v3038 = vpack.c.b16 %v2930, %v2926
      %v3039 = vpack.c.b16 %v2931, %v2927
      %v3040 = vpack.c.b16 %v2932, %v2928
      %v3041 = vpack.c.b16 %v2933, %v2929
      %v3042 = vpack.c.b16 %v2938, %v2934
      %v3043 = vpack.c.b16 %v2939, %v2935
      %v3044 = vpack.c.b16 %v2940, %v2936
      %v3045 = vpack.c.b16 %v2941, %v2937
      %v3046 = vpack.c.b16 %v2946, %v2942
      %v3047 = vpack.c.b16 %v2947, %v2943
      %v3048 = vpack.c.b16 %v2948, %v2944
      %v3049 = vpack.c.b16 %v2949, %v2945
      %v3050 = vpack.c.b16 %v2954, %v2950
      %v3051 = vpack.c.b16 %v2955, %v2951
      %v3052 = vpack.c.b16 %v2956, %v2952
      %v3053 = vpack.c.b16 %v2957, %v2953
      %v3054 = vpack.c.b16 %v2962, %v2958
      %v3055 = vpack.c.b16 %v2963, %v2959
      %v3056 = vpack.c.b16 %v2964, %v2960
      %v3057 = vpack.c.b16 %v2965, %v2961
      %v3058 = vpack.c.b16 %v2970, %v2966
      %v3059 = vpack.c.b16 %v2971, %v2967
      %v3060 = vpack.c.b16 %v2972, %v2968
      %v3061 = vpack.c.b16 %v2973, %v2969
      %v3062 = vpack.c.b16 %v2978, %v2974
      %v3063 = vpack.c.b16 %v2979, %v2975
      %v3064 = vpack.c.b16 %v2980, %v2976
      %v3065 = vpack.c.b16 %v2981, %v2977
      %v3066 = vpack.c.b16 %v2986, %v2982
      %v3067 = vpack.c.b16 %v2987, %v2983
      %v3068 = vpack.c.b16 %v2988, %v2984
      %v3069 = vpack.c.b16 %v2989, %v2985
      %v3070 = vpack.c.b16 %v2994, %v2990
      %v3071 = vpack.c.b16 %v2995, %v2991
      %v3072 = vpack.c.b16 %v2996, %v2992
      %v3073 = vpack.c.b16 %v2997, %v2993
      %v3074 = vpack.c.b16 %v3002, %v2998
      %v3075 = vpack.c.b16 %v3003, %v2999
      %v3076 = vpack.c.b16 %v3004, %v3000
      %v3077 = vpack.c.b16 %v3005, %v3001
      %v3078 = vpack.c.b16 %v3010, %v3006
      %v3079 = vpack.c.b16 %v3011, %v3007
      %v3080 = vpack.c.b16 %v3012, %v3008
      %v3081 = vpack.c.b16 %v3013, %v3009
      %v3082 = vpack.c.b16 %v3018, %v3014
      %v3083 = vpack.c.b16 %v3019, %v3015
      %v3084 = vpack.c.b16 %v3020, %v3016
      %v3085 = vpack.c.b16 %v3021, %v3017
      %3150 = vmatpush.bf16.msra.mxu0 %v3050
      %3151 = vmatpush.bf16.msra.mxu0 %v3046
      %3152 = vmatpush.bf16.msra.mxu0 %v3042
      %3153 = vmatpush.bf16.msra.mxu0 %v3038
      %3154 = vmatpush.bf16.msra.mxu0 %v3034
      %3155 = vmatpush.bf16.msra.mxu0 %v3030
      %3156 = vmatpush.bf16.msra.mxu0 %v3026
      %3157 = vmatpush.bf16.msra.mxu0 %v3022
      %3158 = vmatmul.bf16.gmra.mxu0 %v2820
      %v3159 = vpop.f32.mrf.mxu0
      %v3160 = vadd.f32 0.0, %v3159
      %v3161 = vpop.f32.mrf.mxu0
      %v3162 = vadd.f32 0.0, %v3161
      %3163 = vdwg.mxu0
      %3164 = vmatpush.bf16.msra.mxu0 %v3082
      %3165 = vmatpush.bf16.msra.mxu0 %v3078
      %3166 = vmatpush.bf16.msra.mxu0 %v3074
      %3167 = vmatpush.bf16.msra.mxu0 %v3070
      %3168 = vmatpush.bf16.msra.mxu0 %v3066
      %3169 = vmatpush.bf16.msra.mxu0 %v3062
      %3170 = vmatpush.bf16.msra.mxu0 %v3058
      %3171 = vmatpush.bf16.msra.mxu0 %v3054
      %3172 = vmatmul.bf16.gmra.mxu0 %v2827
      %v3173 = vpop.f32.mrf.mxu0
      %v3174 = vadd.f32 %v3160, %v3173
      %v3175 = vpop.f32.mrf.mxu0
      %v3176 = vadd.f32 %v3162, %v3175
      %3177 = vdwg.mxu0
      %3178 = vmatpush.bf16.msra.mxu0 %v3051
      %3179 = vmatpush.bf16.msra.mxu0 %v3047
      %3180 = vmatpush.bf16.msra.mxu0 %v3043
      %3181 = vmatpush.bf16.msra.mxu0 %v3039
      %3182 = vmatpush.bf16.msra.mxu0 %v3035
      %3183 = vmatpush.bf16.msra.mxu0 %v3031
      %3184 = vmatpush.bf16.msra.mxu0 %v3027
      %3185 = vmatpush.bf16.msra.mxu0 %v3023
      %3186 = vmatmul.bf16.gmra.mxu0 %v2820
      %v3187 = vpop.f32.mrf.mxu0
      %v3188 = vadd.f32 0.0, %v3187
      %v3189 = vpop.f32.mrf.mxu0
      %v3190 = vadd.f32 0.0, %v3189
      %3191 = vdwg.mxu0
      %3192 = vmatpush.bf16.msra.mxu0 %v3083
      %3193 = vmatpush.bf16.msra.mxu0 %v3079
      %3194 = vmatpush.bf16.msra.mxu0 %v3075
      %3195 = vmatpush.bf16.msra.mxu0 %v3071
      %3196 = vmatpush.bf16.msra.mxu0 %v3067
      %3197 = vmatpush.bf16.msra.mxu0 %v3063
      %3198 = vmatpush.bf16.msra.mxu0 %v3059
      %3199 = vmatpush.bf16.msra.mxu0 %v3055
      %3200 = vmatmul.bf16.gmra.mxu0 %v2827
      %v3201 = vpop.f32.mrf.mxu0
      %v3202 = vadd.f32 %v3188, %v3201
      %v3203 = vpop.f32.mrf.mxu0
      %v3204 = vadd.f32 %v3190, %v3203
      %3205 = vdwg.mxu0
      %3206 = vmatpush.bf16.msra.mxu0 %v3052
      %3207 = vmatpush.bf16.msra.mxu0 %v3048
      %3208 = vmatpush.bf16.msra.mxu0 %v3044
      %3209 = vmatpush.bf16.msra.mxu0 %v3040
      %3210 = vmatpush.bf16.msra.mxu0 %v3036
      %3211 = vmatpush.bf16.msra.mxu0 %v3032
      %3212 = vmatpush.bf16.msra.mxu0 %v3028
      %3213 = vmatpush.bf16.msra.mxu0 %v3024
      %3214 = vmatmul.bf16.gmra.mxu0 %v2820
      %v3215 = vpop.f32.mrf.mxu0
      %v3216 = vadd.f32 0.0, %v3215
      %v3217 = vpop.f32.mrf.mxu0
      %v3218 = vadd.f32 0.0, %v3217
      %3219 = vdwg.mxu0
      %3220 = vmatpush.bf16.msra.mxu0 %v3084
      %3221 = vmatpush.bf16.msra.mxu0 %v3080
      %3222 = vmatpush.bf16.msra.mxu0 %v3076
      %3223 = vmatpush.bf16.msra.mxu0 %v3072
      %3224 = vmatpush.bf16.msra.mxu0 %v3068
      %3225 = vmatpush.bf16.msra.mxu0 %v3064
      %3226 = vmatpush.bf16.msra.mxu0 %v3060
      %3227 = vmatpush.bf16.msra.mxu0 %v3056
      %3228 = vmatmul.bf16.gmra.mxu0 %v2827
      %v3229 = vpop.f32.mrf.mxu0
      %v3230 = vadd.f32 %v3216, %v3229
      %v3231 = vpop.f32.mrf.mxu0
      %v3232 = vadd.f32 %v3218, %v3231
      %3233 = vdwg.mxu0
      %3234 = vmatpush.bf16.msra.mxu0 %v3053
      %3235 = vmatpush.bf16.msra.mxu0 %v3049
      %3236 = vmatpush.bf16.msra.mxu0 %v3045
      %3237 = vmatpush.bf16.msra.mxu0 %v3041
      %3238 = vmatpush.bf16.msra.mxu0 %v3037
      %3239 = vmatpush.bf16.msra.mxu0 %v3033
      %3240 = vmatpush.bf16.msra.mxu0 %v3029
      %3241 = vmatpush.bf16.msra.mxu0 %v3025
      %3242 = vmatmul.bf16.gmra.mxu0 %v2820
      %v3243 = vpop.f32.mrf.mxu0
      %v3244 = vadd.f32 0.0, %v3243
      %v3245 = vpop.f32.mrf.mxu0
      %v3246 = vadd.f32 0.0, %v3245
      %3247 = vdwg.mxu0
      %3248 = vmatpush.bf16.msra.mxu0 %v3085
      %3249 = vmatpush.bf16.msra.mxu0 %v3081
      %3250 = vmatpush.bf16.msra.mxu0 %v3077
      %3251 = vmatpush.bf16.msra.mxu0 %v3073
      %3252 = vmatpush.bf16.msra.mxu0 %v3069
      %3253 = vmatpush.bf16.msra.mxu0 %v3065
      %3254 = vmatpush.bf16.msra.mxu0 %v3061
      %3255 = vmatpush.bf16.msra.mxu0 %v3057
      %3256 = vmatmul.bf16.gmra.mxu0 %v2827
      %v3257 = vpop.f32.mrf.mxu0
      %v3258 = vadd.f32 %v3244, %v3257
      %v3259 = vpop.f32.mrf.mxu0
      %v3260 = vadd.f32 %v3246, %v3259
      %3261 = vdwg.mxu0
      %v3262 = vadd.f32 %v2741, %v3174
      %v3263 = vadd.f32 %v2742, %v3202
      %v3264 = vadd.f32 %v2743, %v3230
      %v3265 = vadd.f32 %v2744, %v3258
      %v3266 = vadd.f32 %v2745, %v3176
      %v3267 = vadd.f32 %v2746, %v3204
      %v3268 = vadd.f32 %v2747, %v3232
      %v3269 = vadd.f32 %v2748, %v3260
      %s3270 = scalar_lea.vmem %s165, 48
      %v3271 = vld [vmem:[%s3270] sm:$0xff]
      %v3272 = vld [vmem:[%s3270 + $0x8] sm:$0xff]
      %s3273 = scalar_lea.vmem %s1, 1536
      %v3274 = vld [vmem:[%s3273] sm:$0xff]
      %v3275 = vld [vmem:[%s3273 + $0x8] sm:$0xff]
      %v3276 = vld [vmem:[%s3273 + $0x10] sm:$0xff]
      %v3277 = vld [vmem:[%s3273 + $0x18] sm:$0xff]
      %v3278 = vld [vmem:[%s3273 + $0x20] sm:$0xff]
      %v3279 = vld [vmem:[%s3273 + $0x28] sm:$0xff]
      %v3280 = vld [vmem:[%s3273 + $0x30] sm:$0xff]
      %v3281 = vld [vmem:[%s3273 + $0x38] sm:$0xff]
      %v3282 = vld [vmem:[%s3273 + $0x40] sm:$0xff]
      %v3283 = vld [vmem:[%s3273 + $0x48] sm:$0xff]
      %v3284 = vld [vmem:[%s3273 + $0x50] sm:$0xff]
      %v3285 = vld [vmem:[%s3273 + $0x58] sm:$0xff]
      %v3286 = vld [vmem:[%s3273 + $0x60] sm:$0xff]
      %v3287 = vld [vmem:[%s3273 + $0x68] sm:$0xff]
      %v3288 = vld [vmem:[%s3273 + $0x70] sm:$0xff]
      %v3289 = vld [vmem:[%s3273 + $0x78] sm:$0xff]
      %v3290 = vld [vmem:[%s3273 + $0x80] sm:$0xff]
      %v3291 = vld [vmem:[%s3273 + $0x88] sm:$0xff]
      %v3292 = vld [vmem:[%s3273 + $0x90] sm:$0xff]
      %v3293 = vld [vmem:[%s3273 + $0x98] sm:$0xff]
      %v3294 = vld [vmem:[%s3273 + $0xa0] sm:$0xff]
      %v3295 = vld [vmem:[%s3273 + $0xa8] sm:$0xff]
      %v3296 = vld [vmem:[%s3273 + $0xb0] sm:$0xff]
      %v3297 = vld [vmem:[%s3273 + $0xb8] sm:$0xff]
      %v3298 = vld [vmem:[%s3273 + $0xc0] sm:$0xff]
      %v3299 = vld [vmem:[%s3273 + $0xc8] sm:$0xff]
      %v3300 = vld [vmem:[%s3273 + $0xd0] sm:$0xff]
      %v3301 = vld [vmem:[%s3273 + $0xd8] sm:$0xff]
      %v3302 = vld [vmem:[%s3273 + $0xe0] sm:$0xff]
      %v3303 = vld [vmem:[%s3273 + $0xe8] sm:$0xff]
      %v3304 = vld [vmem:[%s3273 + $0xf0] sm:$0xff]
      %v3305 = vld [vmem:[%s3273 + $0xf8] sm:$0xff]
      %v3306 = vld [vmem:[%s3273 + $0x100] sm:$0xff]
      %v3307 = vld [vmem:[%s3273 + $0x108] sm:$0xff]
      %v3308 = vld [vmem:[%s3273 + $0x110] sm:$0xff]
      %v3309 = vld [vmem:[%s3273 + $0x118] sm:$0xff]
      %v3310 = vld [vmem:[%s3273 + $0x120] sm:$0xff]
      %v3311 = vld [vmem:[%s3273 + $0x128] sm:$0xff]
      %v3312 = vld [vmem:[%s3273 + $0x130] sm:$0xff]
      %v3313 = vld [vmem:[%s3273 + $0x138] sm:$0xff]
      %v3314 = vld [vmem:[%s3273 + $0x140] sm:$0xff]
      %v3315 = vld [vmem:[%s3273 + $0x148] sm:$0xff]
      %v3316 = vld [vmem:[%s3273 + $0x150] sm:$0xff]
      %v3317 = vld [vmem:[%s3273 + $0x158] sm:$0xff]
      %v3318 = vld [vmem:[%s3273 + $0x160] sm:$0xff]
      %v3319 = vld [vmem:[%s3273 + $0x168] sm:$0xff]
      %v3320 = vld [vmem:[%s3273 + $0x170] sm:$0xff]
      %v3321 = vld [vmem:[%s3273 + $0x178] sm:$0xff]
      %v3322 = vld [vmem:[%s3273 + $0x180] sm:$0xff]
      %v3323 = vld [vmem:[%s3273 + $0x188] sm:$0xff]
      %v3324 = vld [vmem:[%s3273 + $0x190] sm:$0xff]
      %v3325 = vld [vmem:[%s3273 + $0x198] sm:$0xff]
      %v3326 = vld [vmem:[%s3273 + $0x1a0] sm:$0xff]
      %v3327 = vld [vmem:[%s3273 + $0x1a8] sm:$0xff]
      %v3328 = vld [vmem:[%s3273 + $0x1b0] sm:$0xff]
      %v3329 = vld [vmem:[%s3273 + $0x1b8] sm:$0xff]
      %v3330 = vld [vmem:[%s3273 + $0x1c0] sm:$0xff]
      %v3331 = vld [vmem:[%s3273 + $0x1c8] sm:$0xff]
      %v3332 = vld [vmem:[%s3273 + $0x1d0] sm:$0xff]
      %v3333 = vld [vmem:[%s3273 + $0x1d8] sm:$0xff]
      %v3334 = vld [vmem:[%s3273 + $0x1e0] sm:$0xff]
      %v3335 = vld [vmem:[%s3273 + $0x1e8] sm:$0xff]
      %v3336 = vld [vmem:[%s3273 + $0x1f0] sm:$0xff]
      %v3337 = vld [vmem:[%s3273 + $0x1f8] sm:$0xff]
      %v3340 = vunpack.c.l.b16 %v3271
      %v3341 = vunpack.c.h.b16 %v3271
      %v3342 = vunpack.c.l.b16 %v3272
      %v3343 = vunpack.c.h.b16 %v3272
      %v3344 = vpack.c.b16 %v3342, %v3340
      %v3345 = vpack.c.b16 %v3343, %v3341
      %v3412 = vunpack.c.l.b16 %v3274
      %v3413 = vunpack.c.h.b16 %v3274
      %v3414 = vunpack.c.l.b16 %v3275
      %v3415 = vunpack.c.h.b16 %v3275
      %v3416 = vunpack.c.l.b16 %v3276
      %v3417 = vunpack.c.h.b16 %v3276
      %v3418 = vunpack.c.l.b16 %v3277
      %v3419 = vunpack.c.h.b16 %v3277
      %v3420 = vunpack.c.l.b16 %v3278
      %v3421 = vunpack.c.h.b16 %v3278
      %v3422 = vunpack.c.l.b16 %v3279
      %v3423 = vunpack.c.h.b16 %v3279
      %v3424 = vunpack.c.l.b16 %v3280
      %v3425 = vunpack.c.h.b16 %v3280
      %v3426 = vunpack.c.l.b16 %v3281
      %v3427 = vunpack.c.h.b16 %v3281
      %v3428 = vunpack.c.l.b16 %v3282
      %v3429 = vunpack.c.h.b16 %v3282
      %v3430 = vunpack.c.l.b16 %v3283
      %v3431 = vunpack.c.h.b16 %v3283
      %v3432 = vunpack.c.l.b16 %v3284
      %v3433 = vunpack.c.h.b16 %v3284
      %v3434 = vunpack.c.l.b16 %v3285
      %v3435 = vunpack.c.h.b16 %v3285
      %v3436 = vunpack.c.l.b16 %v3286
      %v3437 = vunpack.c.h.b16 %v3286
      %v3438 = vunpack.c.l.b16 %v3287
      %v3439 = vunpack.c.h.b16 %v3287
      %v3440 = vunpack.c.l.b16 %v3288
      %v3441 = vunpack.c.h.b16 %v3288
      %v3442 = vunpack.c.l.b16 %v3289
      %v3443 = vunpack.c.h.b16 %v3289
      %v3444 = vunpack.c.l.b16 %v3290
      %v3445 = vunpack.c.h.b16 %v3290
      %v3446 = vunpack.c.l.b16 %v3291
      %v3447 = vunpack.c.h.b16 %v3291
      %v3448 = vunpack.c.l.b16 %v3292
      %v3449 = vunpack.c.h.b16 %v3292
      %v3450 = vunpack.c.l.b16 %v3293
      %v3451 = vunpack.c.h.b16 %v3293
      %v3452 = vunpack.c.l.b16 %v3294
      %v3453 = vunpack.c.h.b16 %v3294
      %v3454 = vunpack.c.l.b16 %v3295
      %v3455 = vunpack.c.h.b16 %v3295
      %v3456 = vunpack.c.l.b16 %v3296
      %v3457 = vunpack.c.h.b16 %v3296
      %v3458 = vunpack.c.l.b16 %v3297
      %v3459 = vunpack.c.h.b16 %v3297
      %v3460 = vunpack.c.l.b16 %v3298
      %v3461 = vunpack.c.h.b16 %v3298
      %v3462 = vunpack.c.l.b16 %v3299
      %v3463 = vunpack.c.h.b16 %v3299
      %v3464 = vunpack.c.l.b16 %v3300
      %v3465 = vunpack.c.h.b16 %v3300
      %v3466 = vunpack.c.l.b16 %v3301
      %v3467 = vunpack.c.h.b16 %v3301
      %v3468 = vunpack.c.l.b16 %v3302
      %v3469 = vunpack.c.h.b16 %v3302
      %v3470 = vunpack.c.l.b16 %v3303
      %v3471 = vunpack.c.h.b16 %v3303
      %v3472 = vunpack.c.l.b16 %v3304
      %v3473 = vunpack.c.h.b16 %v3304
      %v3474 = vunpack.c.l.b16 %v3305
      %v3475 = vunpack.c.h.b16 %v3305
      %v3476 = vunpack.c.l.b16 %v3306
      %v3477 = vunpack.c.h.b16 %v3306
      %v3478 = vunpack.c.l.b16 %v3307
      %v3479 = vunpack.c.h.b16 %v3307
      %v3480 = vunpack.c.l.b16 %v3308
      %v3481 = vunpack.c.h.b16 %v3308
      %v3482 = vunpack.c.l.b16 %v3309
      %v3483 = vunpack.c.h.b16 %v3309
      %v3484 = vunpack.c.l.b16 %v3310
      %v3485 = vunpack.c.h.b16 %v3310
      %v3486 = vunpack.c.l.b16 %v3311
      %v3487 = vunpack.c.h.b16 %v3311
      %v3488 = vunpack.c.l.b16 %v3312
      %v3489 = vunpack.c.h.b16 %v3312
      %v3490 = vunpack.c.l.b16 %v3313
      %v3491 = vunpack.c.h.b16 %v3313
      %v3492 = vunpack.c.l.b16 %v3314
      %v3493 = vunpack.c.h.b16 %v3314
      %v3494 = vunpack.c.l.b16 %v3315
      %v3495 = vunpack.c.h.b16 %v3315
      %v3496 = vunpack.c.l.b16 %v3316
      %v3497 = vunpack.c.h.b16 %v3316
      %v3498 = vunpack.c.l.b16 %v3317
      %v3499 = vunpack.c.h.b16 %v3317
      %v3500 = vunpack.c.l.b16 %v3318
      %v3501 = vunpack.c.h.b16 %v3318
      %v3502 = vunpack.c.l.b16 %v3319
      %v3503 = vunpack.c.h.b16 %v3319
      %v3504 = vunpack.c.l.b16 %v3320
      %v3505 = vunpack.c.h.b16 %v3320
      %v3506 = vunpack.c.l.b16 %v3321
      %v3507 = vunpack.c.h.b16 %v3321
      %v3508 = vunpack.c.l.b16 %v3322
      %v3509 = vunpack.c.h.b16 %v3322
      %v3510 = vunpack.c.l.b16 %v3323
      %v3511 = vunpack.c.h.b16 %v3323
      %v3512 = vunpack.c.l.b16 %v3324
      %v3513 = vunpack.c.h.b16 %v3324
      %v3514 = vunpack.c.l.b16 %v3325
      %v3515 = vunpack.c.h.b16 %v3325
      %v3516 = vunpack.c.l.b16 %v3326
      %v3517 = vunpack.c.h.b16 %v3326
      %v3518 = vunpack.c.l.b16 %v3327
      %v3519 = vunpack.c.h.b16 %v3327
      %v3520 = vunpack.c.l.b16 %v3328
      %v3521 = vunpack.c.h.b16 %v3328
      %v3522 = vunpack.c.l.b16 %v3329
      %v3523 = vunpack.c.h.b16 %v3329
      %v3524 = vunpack.c.l.b16 %v3330
      %v3525 = vunpack.c.h.b16 %v3330
      %v3526 = vunpack.c.l.b16 %v3331
      %v3527 = vunpack.c.h.b16 %v3331
      %v3528 = vunpack.c.l.b16 %v3332
      %v3529 = vunpack.c.h.b16 %v3332
      %v3530 = vunpack.c.l.b16 %v3333
      %v3531 = vunpack.c.h.b16 %v3333
      %v3532 = vunpack.c.l.b16 %v3334
      %v3533 = vunpack.c.h.b16 %v3334
      %v3534 = vunpack.c.l.b16 %v3335
      %v3535 = vunpack.c.h.b16 %v3335
      %v3536 = vunpack.c.l.b16 %v3336
      %v3537 = vunpack.c.h.b16 %v3336
      %v3538 = vunpack.c.l.b16 %v3337
      %v3539 = vunpack.c.h.b16 %v3337
      %v3540 = vpack.c.b16 %v3416, %v3412
      %v3541 = vpack.c.b16 %v3417, %v3413
      %v3542 = vpack.c.b16 %v3418, %v3414
      %v3543 = vpack.c.b16 %v3419, %v3415
      %v3544 = vpack.c.b16 %v3424, %v3420
      %v3545 = vpack.c.b16 %v3425, %v3421
      %v3546 = vpack.c.b16 %v3426, %v3422
      %v3547 = vpack.c.b16 %v3427, %v3423
      %v3548 = vpack.c.b16 %v3432, %v3428
      %v3549 = vpack.c.b16 %v3433, %v3429
      %v3550 = vpack.c.b16 %v3434, %v3430
      %v3551 = vpack.c.b16 %v3435, %v3431
      %v3552 = vpack.c.b16 %v3440, %v3436
      %v3553 = vpack.c.b16 %v3441, %v3437
      %v3554 = vpack.c.b16 %v3442, %v3438
      %v3555 = vpack.c.b16 %v3443, %v3439
      %v3556 = vpack.c.b16 %v3448, %v3444
      %v3557 = vpack.c.b16 %v3449, %v3445
      %v3558 = vpack.c.b16 %v3450, %v3446
      %v3559 = vpack.c.b16 %v3451, %v3447
      %v3560 = vpack.c.b16 %v3456, %v3452
      %v3561 = vpack.c.b16 %v3457, %v3453
      %v3562 = vpack.c.b16 %v3458, %v3454
      %v3563 = vpack.c.b16 %v3459, %v3455
      %v3564 = vpack.c.b16 %v3464, %v3460
      %v3565 = vpack.c.b16 %v3465, %v3461
      %v3566 = vpack.c.b16 %v3466, %v3462
      %v3567 = vpack.c.b16 %v3467, %v3463
      %v3568 = vpack.c.b16 %v3472, %v3468
      %v3569 = vpack.c.b16 %v3473, %v3469
      %v3570 = vpack.c.b16 %v3474, %v3470
      %v3571 = vpack.c.b16 %v3475, %v3471
      %v3572 = vpack.c.b16 %v3480, %v3476
      %v3573 = vpack.c.b16 %v3481, %v3477
      %v3574 = vpack.c.b16 %v3482, %v3478
      %v3575 = vpack.c.b16 %v3483, %v3479
      %v3576 = vpack.c.b16 %v3488, %v3484
      %v3577 = vpack.c.b16 %v3489, %v3485
      %v3578 = vpack.c.b16 %v3490, %v3486
      %v3579 = vpack.c.b16 %v3491, %v3487
      %v3580 = vpack.c.b16 %v3496, %v3492
      %v3581 = vpack.c.b16 %v3497, %v3493
      %v3582 = vpack.c.b16 %v3498, %v3494
      %v3583 = vpack.c.b16 %v3499, %v3495
      %v3584 = vpack.c.b16 %v3504, %v3500
      %v3585 = vpack.c.b16 %v3505, %v3501
      %v3586 = vpack.c.b16 %v3506, %v3502
      %v3587 = vpack.c.b16 %v3507, %v3503
      %v3588 = vpack.c.b16 %v3512, %v3508
      %v3589 = vpack.c.b16 %v3513, %v3509
      %v3590 = vpack.c.b16 %v3514, %v3510
      %v3591 = vpack.c.b16 %v3515, %v3511
      %v3592 = vpack.c.b16 %v3520, %v3516
      %v3593 = vpack.c.b16 %v3521, %v3517
      %v3594 = vpack.c.b16 %v3522, %v3518
      %v3595 = vpack.c.b16 %v3523, %v3519
      %v3596 = vpack.c.b16 %v3528, %v3524
      %v3597 = vpack.c.b16 %v3529, %v3525
      %v3598 = vpack.c.b16 %v3530, %v3526
      %v3599 = vpack.c.b16 %v3531, %v3527
      %v3600 = vpack.c.b16 %v3536, %v3532
      %v3601 = vpack.c.b16 %v3537, %v3533
      %v3602 = vpack.c.b16 %v3538, %v3534
      %v3603 = vpack.c.b16 %v3539, %v3535
      %3668 = vmatpush.bf16.msra.mxu0 %v3568
      %3669 = vmatpush.bf16.msra.mxu0 %v3564
      %3670 = vmatpush.bf16.msra.mxu0 %v3560
      %3671 = vmatpush.bf16.msra.mxu0 %v3556
      %3672 = vmatpush.bf16.msra.mxu0 %v3552
      %3673 = vmatpush.bf16.msra.mxu0 %v3548
      %3674 = vmatpush.bf16.msra.mxu0 %v3544
      %3675 = vmatpush.bf16.msra.mxu0 %v3540
      %3676 = vmatmul.bf16.gmra.mxu0 %v3344
      %v3677 = vpop.f32.mrf.mxu0
      %v3678 = vadd.f32 0.0, %v3677
      %v3679 = vpop.f32.mrf.mxu0
      %v3680 = vadd.f32 0.0, %v3679
      %3681 = vdwg.mxu0
      %3682 = vmatpush.bf16.msra.mxu0 %v3600
      %3683 = vmatpush.bf16.msra.mxu0 %v3596
      %3684 = vmatpush.bf16.msra.mxu0 %v3592
      %3685 = vmatpush.bf16.msra.mxu0 %v3588
      %3686 = vmatpush.bf16.msra.mxu0 %v3584
      %3687 = vmatpush.bf16.msra.mxu0 %v3580
      %3688 = vmatpush.bf16.msra.mxu0 %v3576
      %3689 = vmatpush.bf16.msra.mxu0 %v3572
      %3690 = vmatmul.bf16.gmra.mxu0 %v3345
      %v3691 = vpop.f32.mrf.mxu0
      %v3692 = vadd.f32 %v3678, %v3691
      %v3693 = vpop.f32.mrf.mxu0
      %v3694 = vadd.f32 %v3680, %v3693
      %3695 = vdwg.mxu0
      %3696 = vmatpush.bf16.msra.mxu0 %v3569
      %3697 = vmatpush.bf16.msra.mxu0 %v3565
      %3698 = vmatpush.bf16.msra.mxu0 %v3561
      %3699 = vmatpush.bf16.msra.mxu0 %v3557
      %3700 = vmatpush.bf16.msra.mxu0 %v3553
      %3701 = vmatpush.bf16.msra.mxu0 %v3549
      %3702 = vmatpush.bf16.msra.mxu0 %v3545
      %3703 = vmatpush.bf16.msra.mxu0 %v3541
      %3704 = vmatmul.bf16.gmra.mxu0 %v3344
      %v3705 = vpop.f32.mrf.mxu0
      %v3706 = vadd.f32 0.0, %v3705
      %v3707 = vpop.f32.mrf.mxu0
      %v3708 = vadd.f32 0.0, %v3707
      %3709 = vdwg.mxu0
      %3710 = vmatpush.bf16.msra.mxu0 %v3601
      %3711 = vmatpush.bf16.msra.mxu0 %v3597
      %3712 = vmatpush.bf16.msra.mxu0 %v3593
      %3713 = vmatpush.bf16.msra.mxu0 %v3589
      %3714 = vmatpush.bf16.msra.mxu0 %v3585
      %3715 = vmatpush.bf16.msra.mxu0 %v3581
      %3716 = vmatpush.bf16.msra.mxu0 %v3577
      %3717 = vmatpush.bf16.msra.mxu0 %v3573
      %3718 = vmatmul.bf16.gmra.mxu0 %v3345
      %v3719 = vpop.f32.mrf.mxu0
      %v3720 = vadd.f32 %v3706, %v3719
      %v3721 = vpop.f32.mrf.mxu0
      %v3722 = vadd.f32 %v3708, %v3721
      %3723 = vdwg.mxu0
      %3724 = vmatpush.bf16.msra.mxu0 %v3570
      %3725 = vmatpush.bf16.msra.mxu0 %v3566
      %3726 = vmatpush.bf16.msra.mxu0 %v3562
      %3727 = vmatpush.bf16.msra.mxu0 %v3558
      %3728 = vmatpush.bf16.msra.mxu0 %v3554
      %3729 = vmatpush.bf16.msra.mxu0 %v3550
      %3730 = vmatpush.bf16.msra.mxu0 %v3546
      %3731 = vmatpush.bf16.msra.mxu0 %v3542
      %3732 = vmatmul.bf16.gmra.mxu0 %v3344
      %v3733 = vpop.f32.mrf.mxu0
      %v3734 = vadd.f32 0.0, %v3733
      %v3735 = vpop.f32.mrf.mxu0
      %v3736 = vadd.f32 0.0, %v3735
      %3737 = vdwg.mxu0
      %3738 = vmatpush.bf16.msra.mxu0 %v3602
      %3739 = vmatpush.bf16.msra.mxu0 %v3598
      %3740 = vmatpush.bf16.msra.mxu0 %v3594
      %3741 = vmatpush.bf16.msra.mxu0 %v3590
      %3742 = vmatpush.bf16.msra.mxu0 %v3586
      %3743 = vmatpush.bf16.msra.mxu0 %v3582
      %3744 = vmatpush.bf16.msra.mxu0 %v3578
      %3745 = vmatpush.bf16.msra.mxu0 %v3574
      %3746 = vmatmul.bf16.gmra.mxu0 %v3345
      %v3747 = vpop.f32.mrf.mxu0
      %v3748 = vadd.f32 %v3734, %v3747
      %v3749 = vpop.f32.mrf.mxu0
      %v3750 = vadd.f32 %v3736, %v3749
      %3751 = vdwg.mxu0
      %3752 = vmatpush.bf16.msra.mxu0 %v3571
      %3753 = vmatpush.bf16.msra.mxu0 %v3567
      %3754 = vmatpush.bf16.msra.mxu0 %v3563
      %3755 = vmatpush.bf16.msra.mxu0 %v3559
      %3756 = vmatpush.bf16.msra.mxu0 %v3555
      %3757 = vmatpush.bf16.msra.mxu0 %v3551
      %3758 = vmatpush.bf16.msra.mxu0 %v3547
      %3759 = vmatpush.bf16.msra.mxu0 %v3543
      %3760 = vmatmul.bf16.gmra.mxu0 %v3344
      %v3761 = vpop.f32.mrf.mxu0
      %v3762 = vadd.f32 0.0, %v3761
      %v3763 = vpop.f32.mrf.mxu0
      %v3764 = vadd.f32 0.0, %v3763
      %3765 = vdwg.mxu0
      %3766 = vmatpush.bf16.msra.mxu0 %v3603
      %3767 = vmatpush.bf16.msra.mxu0 %v3599
      %3768 = vmatpush.bf16.msra.mxu0 %v3595
      %3769 = vmatpush.bf16.msra.mxu0 %v3591
      %3770 = vmatpush.bf16.msra.mxu0 %v3587
      %3771 = vmatpush.bf16.msra.mxu0 %v3583
      %3772 = vmatpush.bf16.msra.mxu0 %v3579
      %3773 = vmatpush.bf16.msra.mxu0 %v3575
      %3774 = vmatmul.bf16.gmra.mxu0 %v3345
      %v3775 = vpop.f32.mrf.mxu0
      %v3776 = vadd.f32 %v3762, %v3775
      %v3777 = vpop.f32.mrf.mxu0
      %v3778 = vadd.f32 %v3764, %v3777
      %3779 = vdwg.mxu0
      %v3780 = vadd.f32 %v3262, %v3692
      %v3781 = vadd.f32 %v3263, %v3720
      %v3782 = vadd.f32 %v3264, %v3748
      %v3783 = vadd.f32 %v3265, %v3776
      %v3784 = vadd.f32 %v3266, %v3694
      %v3785 = vadd.f32 %v3267, %v3722
      %v3786 = vadd.f32 %v3268, %v3750
      %v3787 = vadd.f32 %v3269, %v3778
      %s3788 = scalar_lea.vmem %s1, 3584
      %v3789 = vld [vmem:[%s3788] sm:$0xff]
      %v3790 = vld [vmem:[%s3788 + $0x8] sm:$0xff]
      %v3791 = vld [vmem:[%s3788 + $0x10] sm:$0xff]
      %v3792 = vld [vmem:[%s3788 + $0x18] sm:$0xff]
      %v3793 = vld [vmem:[%s3788 + $0x20] sm:$0xff]
      %v3794 = vld [vmem:[%s3788 + $0x28] sm:$0xff]
      %v3795 = vld [vmem:[%s3788 + $0x30] sm:$0xff]
      %v3796 = vld [vmem:[%s3788 + $0x38] sm:$0xff]
      %v3797 = vld [vmem:[%s3788 + $0x40] sm:$0xff]
      %v3798 = vld [vmem:[%s3788 + $0x48] sm:$0xff]
      %v3799 = vld [vmem:[%s3788 + $0x50] sm:$0xff]
      %v3800 = vld [vmem:[%s3788 + $0x58] sm:$0xff]
      %v3801 = vld [vmem:[%s3788 + $0x60] sm:$0xff]
      %v3802 = vld [vmem:[%s3788 + $0x68] sm:$0xff]
      %v3803 = vld [vmem:[%s3788 + $0x70] sm:$0xff]
      %v3804 = vld [vmem:[%s3788 + $0x78] sm:$0xff]
      %v3805 = vld [vmem:[%s3788 + $0x80] sm:$0xff]
      %v3806 = vld [vmem:[%s3788 + $0x88] sm:$0xff]
      %v3807 = vld [vmem:[%s3788 + $0x90] sm:$0xff]
      %v3808 = vld [vmem:[%s3788 + $0x98] sm:$0xff]
      %v3809 = vld [vmem:[%s3788 + $0xa0] sm:$0xff]
      %v3810 = vld [vmem:[%s3788 + $0xa8] sm:$0xff]
      %v3811 = vld [vmem:[%s3788 + $0xb0] sm:$0xff]
      %v3812 = vld [vmem:[%s3788 + $0xb8] sm:$0xff]
      %v3813 = vld [vmem:[%s3788 + $0xc0] sm:$0xff]
      %v3814 = vld [vmem:[%s3788 + $0xc8] sm:$0xff]
      %v3815 = vld [vmem:[%s3788 + $0xd0] sm:$0xff]
      %v3816 = vld [vmem:[%s3788 + $0xd8] sm:$0xff]
      %v3817 = vld [vmem:[%s3788 + $0xe0] sm:$0xff]
      %v3818 = vld [vmem:[%s3788 + $0xe8] sm:$0xff]
      %v3819 = vld [vmem:[%s3788 + $0xf0] sm:$0xff]
      %v3820 = vld [vmem:[%s3788 + $0xf8] sm:$0xff]
      %v3821 = vld [vmem:[%s3788 + $0x100] sm:$0xff]
      %v3822 = vld [vmem:[%s3788 + $0x108] sm:$0xff]
      %v3823 = vld [vmem:[%s3788 + $0x110] sm:$0xff]
      %v3824 = vld [vmem:[%s3788 + $0x118] sm:$0xff]
      %v3825 = vld [vmem:[%s3788 + $0x120] sm:$0xff]
      %v3826 = vld [vmem:[%s3788 + $0x128] sm:$0xff]
      %v3827 = vld [vmem:[%s3788 + $0x130] sm:$0xff]
      %v3828 = vld [vmem:[%s3788 + $0x138] sm:$0xff]
      %v3829 = vld [vmem:[%s3788 + $0x140] sm:$0xff]
      %v3830 = vld [vmem:[%s3788 + $0x148] sm:$0xff]
      %v3831 = vld [vmem:[%s3788 + $0x150] sm:$0xff]
      %v3832 = vld [vmem:[%s3788 + $0x158] sm:$0xff]
      %v3833 = vld [vmem:[%s3788 + $0x160] sm:$0xff]
      %v3834 = vld [vmem:[%s3788 + $0x168] sm:$0xff]
      %v3835 = vld [vmem:[%s3788 + $0x170] sm:$0xff]
      %v3836 = vld [vmem:[%s3788 + $0x178] sm:$0xff]
      %v3837 = vld [vmem:[%s3788 + $0x180] sm:$0xff]
      %v3838 = vld [vmem:[%s3788 + $0x188] sm:$0xff]
      %v3839 = vld [vmem:[%s3788 + $0x190] sm:$0xff]
      %v3840 = vld [vmem:[%s3788 + $0x198] sm:$0xff]
      %v3841 = vld [vmem:[%s3788 + $0x1a0] sm:$0xff]
      %v3842 = vld [vmem:[%s3788 + $0x1a8] sm:$0xff]
      %v3843 = vld [vmem:[%s3788 + $0x1b0] sm:$0xff]
      %v3844 = vld [vmem:[%s3788 + $0x1b8] sm:$0xff]
      %v3845 = vld [vmem:[%s3788 + $0x1c0] sm:$0xff]
      %v3846 = vld [vmem:[%s3788 + $0x1c8] sm:$0xff]
      %v3847 = vld [vmem:[%s3788 + $0x1d0] sm:$0xff]
      %v3848 = vld [vmem:[%s3788 + $0x1d8] sm:$0xff]
      %v3849 = vld [vmem:[%s3788 + $0x1e0] sm:$0xff]
      %v3850 = vld [vmem:[%s3788 + $0x1e8] sm:$0xff]
      %v3851 = vld [vmem:[%s3788 + $0x1f0] sm:$0xff]
      %v3852 = vld [vmem:[%s3788 + $0x1f8] sm:$0xff]
      %v3854 = vshrl.u32 %v3344, 16
      %v3856 = vshll.u32 %v3344, 16
      %v3858 = vrot.slane %v3856, 1
      %v3859 = vor.u32 %v3854, %v3858
      %v3861 = vshrl.u32 %v3345, 16
      %v3863 = vshll.u32 %v3345, 16
      %v3865 = vrot.slane %v3863, 1
      %v3866 = vor.u32 %v3861, %v3865
      %v3933 = vunpack.c.l.b16 %v3789
      %v3934 = vunpack.c.h.b16 %v3789
      %v3935 = vunpack.c.l.b16 %v3790
      %v3936 = vunpack.c.h.b16 %v3790
      %v3937 = vunpack.c.l.b16 %v3791
      %v3938 = vunpack.c.h.b16 %v3791
      %v3939 = vunpack.c.l.b16 %v3792
      %v3940 = vunpack.c.h.b16 %v3792
      %v3941 = vunpack.c.l.b16 %v3793
      %v3942 = vunpack.c.h.b16 %v3793
      %v3943 = vunpack.c.l.b16 %v3794
      %v3944 = vunpack.c.h.b16 %v3794
      %v3945 = vunpack.c.l.b16 %v3795
      %v3946 = vunpack.c.h.b16 %v3795
      %v3947 = vunpack.c.l.b16 %v3796
      %v3948 = vunpack.c.h.b16 %v3796
      %v3949 = vunpack.c.l.b16 %v3797
      %v3950 = vunpack.c.h.b16 %v3797
      %v3951 = vunpack.c.l.b16 %v3798
      %v3952 = vunpack.c.h.b16 %v3798
      %v3953 = vunpack.c.l.b16 %v3799
      %v3954 = vunpack.c.h.b16 %v3799
      %v3955 = vunpack.c.l.b16 %v3800
      %v3956 = vunpack.c.h.b16 %v3800
      %v3957 = vunpack.c.l.b16 %v3801
      %v3958 = vunpack.c.h.b16 %v3801
      %v3959 = vunpack.c.l.b16 %v3802
      %v3960 = vunpack.c.h.b16 %v3802
      %v3961 = vunpack.c.l.b16 %v3803
      %v3962 = vunpack.c.h.b16 %v3803
      %v3963 = vunpack.c.l.b16 %v3804
      %v3964 = vunpack.c.h.b16 %v3804
      %v3965 = vunpack.c.l.b16 %v3805
      %v3966 = vunpack.c.h.b16 %v3805
      %v3967 = vunpack.c.l.b16 %v3806
      %v3968 = vunpack.c.h.b16 %v3806
      %v3969 = vunpack.c.l.b16 %v3807
      %v3970 = vunpack.c.h.b16 %v3807
      %v3971 = vunpack.c.l.b16 %v3808
      %v3972 = vunpack.c.h.b16 %v3808
      %v3973 = vunpack.c.l.b16 %v3809
      %v3974 = vunpack.c.h.b16 %v3809
      %v3975 = vunpack.c.l.b16 %v3810
      %v3976 = vunpack.c.h.b16 %v3810
      %v3977 = vunpack.c.l.b16 %v3811
      %v3978 = vunpack.c.h.b16 %v3811
      %v3979 = vunpack.c.l.b16 %v3812
      %v3980 = vunpack.c.h.b16 %v3812
      %v3981 = vunpack.c.l.b16 %v3813
      %v3982 = vunpack.c.h.b16 %v3813
      %v3983 = vunpack.c.l.b16 %v3814
      %v3984 = vunpack.c.h.b16 %v3814
      %v3985 = vunpack.c.l.b16 %v3815
      %v3986 = vunpack.c.h.b16 %v3815
      %v3987 = vunpack.c.l.b16 %v3816
      %v3988 = vunpack.c.h.b16 %v3816
      %v3989 = vunpack.c.l.b16 %v3817
      %v3990 = vunpack.c.h.b16 %v3817
      %v3991 = vunpack.c.l.b16 %v3818
      %v3992 = vunpack.c.h.b16 %v3818
      %v3993 = vunpack.c.l.b16 %v3819
      %v3994 = vunpack.c.h.b16 %v3819
      %v3995 = vunpack.c.l.b16 %v3820
      %v3996 = vunpack.c.h.b16 %v3820
      %v3997 = vunpack.c.l.b16 %v3821
      %v3998 = vunpack.c.h.b16 %v3821
      %v3999 = vunpack.c.l.b16 %v3822
      %v4000 = vunpack.c.h.b16 %v3822
      %v4001 = vunpack.c.l.b16 %v3823
      %v4002 = vunpack.c.h.b16 %v3823
      %v4003 = vunpack.c.l.b16 %v3824
      %v4004 = vunpack.c.h.b16 %v3824
      %v4005 = vunpack.c.l.b16 %v3825
      %v4006 = vunpack.c.h.b16 %v3825
      %v4007 = vunpack.c.l.b16 %v3826
      %v4008 = vunpack.c.h.b16 %v3826
      %v4009 = vunpack.c.l.b16 %v3827
      %v4010 = vunpack.c.h.b16 %v3827
      %v4011 = vunpack.c.l.b16 %v3828
      %v4012 = vunpack.c.h.b16 %v3828
      %v4013 = vunpack.c.l.b16 %v3829
      %v4014 = vunpack.c.h.b16 %v3829
      %v4015 = vunpack.c.l.b16 %v3830
      %v4016 = vunpack.c.h.b16 %v3830
      %v4017 = vunpack.c.l.b16 %v3831
      %v4018 = vunpack.c.h.b16 %v3831
      %v4019 = vunpack.c.l.b16 %v3832
      %v4020 = vunpack.c.h.b16 %v3832
      %v4021 = vunpack.c.l.b16 %v3833
      %v4022 = vunpack.c.h.b16 %v3833
      %v4023 = vunpack.c.l.b16 %v3834
      %v4024 = vunpack.c.h.b16 %v3834
      %v4025 = vunpack.c.l.b16 %v3835
      %v4026 = vunpack.c.h.b16 %v3835
      %v4027 = vunpack.c.l.b16 %v3836
      %v4028 = vunpack.c.h.b16 %v3836
      %v4029 = vunpack.c.l.b16 %v3837
      %v4030 = vunpack.c.h.b16 %v3837
      %v4031 = vunpack.c.l.b16 %v3838
      %v4032 = vunpack.c.h.b16 %v3838
      %v4033 = vunpack.c.l.b16 %v3839
      %v4034 = vunpack.c.h.b16 %v3839
      %v4035 = vunpack.c.l.b16 %v3840
      %v4036 = vunpack.c.h.b16 %v3840
      %v4037 = vunpack.c.l.b16 %v3841
      %v4038 = vunpack.c.h.b16 %v3841
      %v4039 = vunpack.c.l.b16 %v3842
      %v4040 = vunpack.c.h.b16 %v3842
      %v4041 = vunpack.c.l.b16 %v3843
      %v4042 = vunpack.c.h.b16 %v3843
      %v4043 = vunpack.c.l.b16 %v3844
      %v4044 = vunpack.c.h.b16 %v3844
      %v4045 = vunpack.c.l.b16 %v3845
      %v4046 = vunpack.c.h.b16 %v3845
      %v4047 = vunpack.c.l.b16 %v3846
      %v4048 = vunpack.c.h.b16 %v3846
      %v4049 = vunpack.c.l.b16 %v3847
      %v4050 = vunpack.c.h.b16 %v3847
      %v4051 = vunpack.c.l.b16 %v3848
      %v4052 = vunpack.c.h.b16 %v3848
      %v4053 = vunpack.c.l.b16 %v3849
      %v4054 = vunpack.c.h.b16 %v3849
      %v4055 = vunpack.c.l.b16 %v3850
      %v4056 = vunpack.c.h.b16 %v3850
      %v4057 = vunpack.c.l.b16 %v3851
      %v4058 = vunpack.c.h.b16 %v3851
      %v4059 = vunpack.c.l.b16 %v3852
      %v4060 = vunpack.c.h.b16 %v3852
      %v4061 = vpack.c.b16 %v3937, %v3933
      %v4062 = vpack.c.b16 %v3938, %v3934
      %v4063 = vpack.c.b16 %v3939, %v3935
      %v4064 = vpack.c.b16 %v3940, %v3936
      %v4065 = vpack.c.b16 %v3945, %v3941
      %v4066 = vpack.c.b16 %v3946, %v3942
      %v4067 = vpack.c.b16 %v3947, %v3943
      %v4068 = vpack.c.b16 %v3948, %v3944
      %v4069 = vpack.c.b16 %v3953, %v3949
      %v4070 = vpack.c.b16 %v3954, %v3950
      %v4071 = vpack.c.b16 %v3955, %v3951
      %v4072 = vpack.c.b16 %v3956, %v3952
      %v4073 = vpack.c.b16 %v3961, %v3957
      %v4074 = vpack.c.b16 %v3962, %v3958
      %v4075 = vpack.c.b16 %v3963, %v3959
      %v4076 = vpack.c.b16 %v3964, %v3960
      %v4077 = vpack.c.b16 %v3969, %v3965
      %v4078 = vpack.c.b16 %v3970, %v3966
      %v4079 = vpack.c.b16 %v3971, %v3967
      %v4080 = vpack.c.b16 %v3972, %v3968
      %v4081 = vpack.c.b16 %v3977, %v3973
      %v4082 = vpack.c.b16 %v3978, %v3974
      %v4083 = vpack.c.b16 %v3979, %v3975
      %v4084 = vpack.c.b16 %v3980, %v3976
      %v4085 = vpack.c.b16 %v3985, %v3981
      %v4086 = vpack.c.b16 %v3986, %v3982
      %v4087 = vpack.c.b16 %v3987, %v3983
      %v4088 = vpack.c.b16 %v3988, %v3984
      %v4089 = vpack.c.b16 %v3993, %v3989
      %v4090 = vpack.c.b16 %v3994, %v3990
      %v4091 = vpack.c.b16 %v3995, %v3991
      %v4092 = vpack.c.b16 %v3996, %v3992
      %v4093 = vpack.c.b16 %v4001, %v3997
      %v4094 = vpack.c.b16 %v4002, %v3998
      %v4095 = vpack.c.b16 %v4003, %v3999
      %v4096 = vpack.c.b16 %v4004, %v4000
      %v4097 = vpack.c.b16 %v4009, %v4005
      %v4098 = vpack.c.b16 %v4010, %v4006
      %v4099 = vpack.c.b16 %v4011, %v4007
      %v4100 = vpack.c.b16 %v4012, %v4008
      %v4101 = vpack.c.b16 %v4017, %v4013
      %v4102 = vpack.c.b16 %v4018, %v4014
      %v4103 = vpack.c.b16 %v4019, %v4015
      %v4104 = vpack.c.b16 %v4020, %v4016
      %v4105 = vpack.c.b16 %v4025, %v4021
      %v4106 = vpack.c.b16 %v4026, %v4022
      %v4107 = vpack.c.b16 %v4027, %v4023
      %v4108 = vpack.c.b16 %v4028, %v4024
      %v4109 = vpack.c.b16 %v4033, %v4029
      %v4110 = vpack.c.b16 %v4034, %v4030
      %v4111 = vpack.c.b16 %v4035, %v4031
      %v4112 = vpack.c.b16 %v4036, %v4032
      %v4113 = vpack.c.b16 %v4041, %v4037
      %v4114 = vpack.c.b16 %v4042, %v4038
      %v4115 = vpack.c.b16 %v4043, %v4039
      %v4116 = vpack.c.b16 %v4044, %v4040
      %v4117 = vpack.c.b16 %v4049, %v4045
      %v4118 = vpack.c.b16 %v4050, %v4046
      %v4119 = vpack.c.b16 %v4051, %v4047
      %v4120 = vpack.c.b16 %v4052, %v4048
      %v4121 = vpack.c.b16 %v4057, %v4053
      %v4122 = vpack.c.b16 %v4058, %v4054
      %v4123 = vpack.c.b16 %v4059, %v4055
      %v4124 = vpack.c.b16 %v4060, %v4056
      %4189 = vmatpush.bf16.msra.mxu0 %v4089
      %4190 = vmatpush.bf16.msra.mxu0 %v4085
      %4191 = vmatpush.bf16.msra.mxu0 %v4081
      %4192 = vmatpush.bf16.msra.mxu0 %v4077
      %4193 = vmatpush.bf16.msra.mxu0 %v4073
      %4194 = vmatpush.bf16.msra.mxu0 %v4069
      %4195 = vmatpush.bf16.msra.mxu0 %v4065
      %4196 = vmatpush.bf16.msra.mxu0 %v4061
      %4197 = vmatmul.bf16.gmra.mxu0 %v3859
      %v4198 = vpop.f32.mrf.mxu0
      %v4199 = vadd.f32 0.0, %v4198
      %v4200 = vpop.f32.mrf.mxu0
      %v4201 = vadd.f32 0.0, %v4200
      %4202 = vdwg.mxu0
      %4203 = vmatpush.bf16.msra.mxu0 %v4121
      %4204 = vmatpush.bf16.msra.mxu0 %v4117
      %4205 = vmatpush.bf16.msra.mxu0 %v4113
      %4206 = vmatpush.bf16.msra.mxu0 %v4109
      %4207 = vmatpush.bf16.msra.mxu0 %v4105
      %4208 = vmatpush.bf16.msra.mxu0 %v4101
      %4209 = vmatpush.bf16.msra.mxu0 %v4097
      %4210 = vmatpush.bf16.msra.mxu0 %v4093
      %4211 = vmatmul.bf16.gmra.mxu0 %v3866
      %v4212 = vpop.f32.mrf.mxu0
      %v4213 = vadd.f32 %v4199, %v4212
      %v4214 = vpop.f32.mrf.mxu0
      %v4215 = vadd.f32 %v4201, %v4214
      %4216 = vdwg.mxu0
      %4217 = vmatpush.bf16.msra.mxu0 %v4090
      %4218 = vmatpush.bf16.msra.mxu0 %v4086
      %4219 = vmatpush.bf16.msra.mxu0 %v4082
      %4220 = vmatpush.bf16.msra.mxu0 %v4078
      %4221 = vmatpush.bf16.msra.mxu0 %v4074
      %4222 = vmatpush.bf16.msra.mxu0 %v4070
      %4223 = vmatpush.bf16.msra.mxu0 %v4066
      %4224 = vmatpush.bf16.msra.mxu0 %v4062
      %4225 = vmatmul.bf16.gmra.mxu0 %v3859
      %v4226 = vpop.f32.mrf.mxu0
      %v4227 = vadd.f32 0.0, %v4226
      %v4228 = vpop.f32.mrf.mxu0
      %v4229 = vadd.f32 0.0, %v4228
      %4230 = vdwg.mxu0
      %4231 = vmatpush.bf16.msra.mxu0 %v4122
      %4232 = vmatpush.bf16.msra.mxu0 %v4118
      %4233 = vmatpush.bf16.msra.mxu0 %v4114
      %4234 = vmatpush.bf16.msra.mxu0 %v4110
      %4235 = vmatpush.bf16.msra.mxu0 %v4106
      %4236 = vmatpush.bf16.msra.mxu0 %v4102
      %4237 = vmatpush.bf16.msra.mxu0 %v4098
      %4238 = vmatpush.bf16.msra.mxu0 %v4094
      %4239 = vmatmul.bf16.gmra.mxu0 %v3866
      %v4240 = vpop.f32.mrf.mxu0
      %v4241 = vadd.f32 %v4227, %v4240
      %v4242 = vpop.f32.mrf.mxu0
      %v4243 = vadd.f32 %v4229, %v4242
      %4244 = vdwg.mxu0
      %4245 = vmatpush.bf16.msra.mxu0 %v4091
      %4246 = vmatpush.bf16.msra.mxu0 %v4087
      %4247 = vmatpush.bf16.msra.mxu0 %v4083
      %4248 = vmatpush.bf16.msra.mxu0 %v4079
      %4249 = vmatpush.bf16.msra.mxu0 %v4075
      %4250 = vmatpush.bf16.msra.mxu0 %v4071
      %4251 = vmatpush.bf16.msra.mxu0 %v4067
      %4252 = vmatpush.bf16.msra.mxu0 %v4063
      %4253 = vmatmul.bf16.gmra.mxu0 %v3859
      %v4254 = vpop.f32.mrf.mxu0
      %v4255 = vadd.f32 0.0, %v4254
      %v4256 = vpop.f32.mrf.mxu0
      %v4257 = vadd.f32 0.0, %v4256
      %4258 = vdwg.mxu0
      %4259 = vmatpush.bf16.msra.mxu0 %v4123
      %4260 = vmatpush.bf16.msra.mxu0 %v4119
      %4261 = vmatpush.bf16.msra.mxu0 %v4115
      %4262 = vmatpush.bf16.msra.mxu0 %v4111
      %4263 = vmatpush.bf16.msra.mxu0 %v4107
      %4264 = vmatpush.bf16.msra.mxu0 %v4103
      %4265 = vmatpush.bf16.msra.mxu0 %v4099
      %4266 = vmatpush.bf16.msra.mxu0 %v4095
      %4267 = vmatmul.bf16.gmra.mxu0 %v3866
      %v4268 = vpop.f32.mrf.mxu0
      %v4269 = vadd.f32 %v4255, %v4268
      %v4270 = vpop.f32.mrf.mxu0
      %v4271 = vadd.f32 %v4257, %v4270
      %4272 = vdwg.mxu0
      %4273 = vmatpush.bf16.msra.mxu0 %v4092
      %4274 = vmatpush.bf16.msra.mxu0 %v4088
      %4275 = vmatpush.bf16.msra.mxu0 %v4084
      %4276 = vmatpush.bf16.msra.mxu0 %v4080
      %4277 = vmatpush.bf16.msra.mxu0 %v4076
      %4278 = vmatpush.bf16.msra.mxu0 %v4072
      %4279 = vmatpush.bf16.msra.mxu0 %v4068
      %4280 = vmatpush.bf16.msra.mxu0 %v4064
      %4281 = vmatmul.bf16.gmra.mxu0 %v3859
      %v4282 = vpop.f32.mrf.mxu0
      %v4283 = vadd.f32 0.0, %v4282
      %v4284 = vpop.f32.mrf.mxu0
      %v4285 = vadd.f32 0.0, %v4284
      %4286 = vdwg.mxu0
      %4287 = vmatpush.bf16.msra.mxu0 %v4124
      %4288 = vmatpush.bf16.msra.mxu0 %v4120
      %4289 = vmatpush.bf16.msra.mxu0 %v4116
      %4290 = vmatpush.bf16.msra.mxu0 %v4112
      %4291 = vmatpush.bf16.msra.mxu0 %v4108
      %4292 = vmatpush.bf16.msra.mxu0 %v4104
      %4293 = vmatpush.bf16.msra.mxu0 %v4100
      %4294 = vmatpush.bf16.msra.mxu0 %v4096
      %4295 = vmatmul.bf16.gmra.mxu0 %v3866
      %v4296 = vpop.f32.mrf.mxu0
      %v4297 = vadd.f32 %v4283, %v4296
      %v4298 = vpop.f32.mrf.mxu0
      %v4299 = vadd.f32 %v4285, %v4298
      %4300 = vdwg.mxu0
      %v4301 = vadd.f32 %v3780, %v4213
      %v4302 = vadd.f32 %v3781, %v4241
      %v4303 = vadd.f32 %v3782, %v4269
      %v4304 = vadd.f32 %v3783, %v4297
      %v4305 = vadd.f32 %v3784, %v4215
      %v4306 = vadd.f32 %v3785, %v4243
      %v4307 = vadd.f32 %v3786, %v4271
      %v4308 = vadd.f32 %v3787, %v4299
      %v4309 = vld [vmem:[%s2] sm:$0xf]
      %v4311 = vperm.slane %v4309, 0
      %v4312 = vperm.slane %v4309, 1
      %v4313 = vperm.slane %v4309, 2
      %v4314 = vperm.slane %v4309, 3
      %v4319 = vadd.f32 %v4301, %v4311
      %v4320 = vadd.f32 %v4302, %v4312
      %v4321 = vadd.f32 %v4303, %v4313
      %v4322 = vadd.f32 %v4304, %v4314
      %v4323 = vadd.f32 %v4305, %v4311
      %v4324 = vadd.f32 %v4306, %v4312
      %v4325 = vadd.f32 %v4307, %v4313
      %v4326 = vadd.f32 %v4308, %v4314
      %v4327 = vmax.f32 %v4319, 0.0
      %v4328 = vmax.f32 %v4320, 0.0
      %v4329 = vmax.f32 %v4321, 0.0
      %v4330 = vmax.f32 %v4322, 0.0
      %v4331 = vmax.f32 %v4323, 0.0
      %v4332 = vmax.f32 %v4324, 0.0
      %v4333 = vmax.f32 %v4325, 0.0
      %v4334 = vmax.f32 %v4326, 0.0
      %v4335 = vpack.c.bf16 %v4328, %v4327
      %v4336 = vpack.c.bf16 %v4330, %v4329
      %v4337 = vpack.c.bf16 %v4332, %v4331
      %v4338 = vpack.c.bf16 %v4334, %v4333
      %4339 = vst [vmem:[%s170] sm:$0xff] %v4335
      %vm4340 = vcmask 1043456
      %vm4341 = vcmask 785412
      %vm4342 = vmor %vm4341, %vm4340
      %4343 = vst.msk [vmem:[%s170 + $0x8] sm:$0xff] %vm4342, %v4336
      %vm4344 = vcmask 1043456
      %vm4345 = vsmask.f32 3328
      %vm4346 = vmand %vm4344, %vm4345
      %vm4347 = vcmask 1047556
      %vm4348 = vsmask.f32 7424
      %vm4349 = vmand %vm4347, %vm4348
      %vm4350 = vmor %vm4349, %vm4346
      %v4351 = vld [vmem:[%s170 + $0x10] sm:$0xff]
      %v4352 = vsel %vm4350, %v4337, %v4351
      %4353 = vst [vmem:[%s170 + $0x10] sm:$0xff] %v4352
      %vm4354 = vcmask 785412
      %vm4355 = vmand %vm4354, %vm4348
      %vm4356 = vmor %vm4355, %vm4346
      %v4357 = vld [vmem:[%s170 + $0x18] sm:$0xff]
      %v4358 = vsel %vm4356, %v4338, %v4357
      %4359 = vst [vmem:[%s170 + $0x18] sm:$0xff] %v4358
      %p4360 = scmp.lt.s32.totalorder %s14, 1
      %s4361 = scalar_select %p4360, %s14, 1
      %s4362 = smul.addr %s4361, 8
      %s4363 = smul.addr %s4362, 4
      %s4364 = scalar_lea.vmem %s3, %s4363
      // Predicated region
      $region33: #{dqn_forward_pallas.3} parent=31 // pred_check
        %p4365 = pneg %p100
      $region34: #{dqn_forward_pallas.3} parent=31 // pred_check_branch
        %4367 = sbr.rel (%p4365) target = $region36
      $region35: #{dqn_forward_pallas.3} parent=31 // pred_region
        _
      $region36: #{dqn_forward_pallas.3} parent=31 // pred_fallthru
        _
    $region32: #{dqn_forward_pallas.3} parent=5 // pred_fallthru
      _
    %p4368 = scmp.le.s32.totalorder 2, %s9
    // Predicated region
    $region37: #{dqn_forward_pallas.3} parent=5 // pred_check
      %p4369 = pneg %p4368
    $region38: #{dqn_forward_pallas.3} parent=5 // pred_check_branch
      %4371 = sbr.rel (%p4369) target = $region40
    $region39: #{dqn_forward_pallas.3} parent=5 // pred_region
      %s4372 = ssub.s32 %s9, 2
      // Predicated region
      $region41: #{dqn_forward_pallas.3} parent=39 // pred_check
        %p4373 = pneg %p106
      $region42: #{dqn_forward_pallas.3} parent=39 // pred_check_branch
        %4375 = sbr.rel (%p4373) target = $region44
      $region43: #{dqn_forward_pallas.3} parent=39 // pred_region
        %p4376 = scmp.lt.s32.totalorder %s15, 1
        %s4377 = scalar_select %p4376, %s15, 1
        %s4378 = smul.addr %s4377, 8
        %s4379 = smul.addr %s4378, 4
        %s4380 = scalar_lea.vmem %s3, %s4379
      $region44: #{dqn_forward_pallas.3} parent=39 // pred_fallthru
        _
    $region40: #{dqn_forward_pallas.3} parent=5 // pred_fallthru
      _
  $region6: #{dqn_forward_pallas.3} parent=0 // loop_footer
    %s13 = sadd.s32 1, %s9
  $region7: #{dqn_forward_pallas.3} parent=0 // loop_footer_branch
    %8 = sbr.rel target = $region3
  $region8: #{dqn_forward_pallas.3} parent=0 // loop_exit
    _

// kernel: dqn_forward_pallas.4
$region0: #{dqn_forward_pallas.4}
  #allocation0 [shape = 'u32[]', space=smem, size = 0x4, offset = 0x4, fixed_abs, tag = 'smem constant byte address 0x4 - core index']
  #allocation1 [shape = 'u32[72,128]{1,0:T(1,128)}', space=vmem, size = 0x9000, scoped, tag = 'internal scratch']
  %s0 = inlined_call_operand.vmem [shape: bf16[2,2,8,480], index: 0, kind: input, shape index: {}]
  %s1 = inlined_call_operand.vmem [shape: bf16[4,480,384], index: 1, kind: input, shape index: {}]
  %s2 = inlined_call_operand.vmem [shape: f32[1,384], index: 2, kind: input, shape index: {}]
  %s3 = inlined_call_operand.vmem [shape: bf16[2,6,384], index: 3, kind: output, shape index: {}]
  %s4 = sld [smem:[#allocation0]]
  $region45: #{dqn_forward_pallas.4} parent=0
    _
  %s6 = ssub.s32 1, %s4
  %s7 = scalar_select 0, %s6, %s4
  loop: start=0, step=1, limit=4
  $region2: #{dqn_forward_pallas.4} parent=0 // loop_pre_header
    _
  $region3: #{dqn_forward_pallas.4} parent=0 // loop_header
    %s9 = sphi 0, %s13
    %p10 = scmp.ge.s32.totalorder %s9, 4
    %s19 = sphi 0, %s21
    %s22 = sphi 0, %s19
    %s23 = sphi 0, %s22
    %s39 = sphi 0, %s23
    %s43 = sphi 0, %s43
    %s45 = sphi 0, %s43
    %s46 = sphi 0, %s45
    %s60 = sphi 0, %s46
    %s64 = sphi 0, %s64
    %s66 = sphi 0, %s64
    %s67 = sphi 0, %s66
    %s81 = sphi 0, %s67
    %s87 = sphi 0, %s89
    %s90 = sphi 0, %s87
    %s91 = sphi 0, %s90
    %s107 = sphi 0, %s91
  $region4: #{dqn_forward_pallas.4} parent=0 // loop_header_branch
    %12 = sbr.rel (%p10) target = $region8
  $region5: #{dqn_forward_pallas.4} parent=0 // loop_body
    %s14 = ssub.s32 %s9, 1
    %s15 = ssub.s32 %s9, 2
    %s16 = sadd.s32 %s9, 1
    %s17 = ssub.s32 %s9, %s16
    %p18 = scmp.eq.s32.totalorder %s17, 0
    %s20 = sadd.s32 %s19, 1
    %s21 = scalar_select %p18, %s19, %s20
    %p24 = pneg %p18
    %p25 = scmp.eq.s32.totalorder %s9, 1
    %p26 = por %p24, %p25
    %p27 = scmp.ne.s32.totalorder %s19, %s22
    %p28 = scmp.eq.s32.totalorder %s9, 0
    %p29 = por %p27, %p28
    %p30 = scmp.ne.s32.totalorder %s19, %s22
    %p31 = scmp.eq.s32.totalorder %s14, 1
    %p32 = por %p30, %p31
    %p33 = scmp.ne.s32.totalorder %s22, %s23
    %p34 = scmp.eq.s32.totalorder %s14, 0
    %p35 = por %p33, %p34
    %p36 = scmp.ne.s32.totalorder %s22, %s23
    %p37 = scmp.eq.s32.totalorder %s15, 1
    %p38 = por %p36, %p37
    %p40 = scmp.ne.s32.totalorder %s23, %s39
    %p41 = scmp.eq.s32.totalorder %s15, 0
    %p42 = por %p40, %p41
    %s44 = sadd.s32 %s43, 1
    %p47 = scmp.eq.s32.totalorder %s9, 1
    %p48 = scmp.ne.s32.totalorder %s43, %s45
    %p49 = scmp.eq.s32.totalorder %s9, 0
    %p50 = por %p48, %p49
    %p51 = scmp.ne.s32.totalorder %s43, %s45
    %p52 = scmp.eq.s32.totalorder %s14, 1
    %p53 = por %p51, %p52
    %p54 = scmp.ne.s32.totalorder %s45, %s46
    %p55 = scmp.eq.s32.totalorder %s14, 0
    %p56 = por %p54, %p55
    %p57 = scmp.ne.s32.totalorder %s45, %s46
    %p58 = scmp.eq.s32.totalorder %s15, 1
    %p59 = por %p57, %p58
    %p61 = scmp.ne.s32.totalorder %s46, %s60
    %p62 = scmp.eq.s32.totalorder %s15, 0
    %p63 = por %p61, %p62
    %s65 = sadd.s32 %s64, 1
    %p68 = scmp.eq.s32.totalorder %s9, 1
    %p69 = scmp.ne.s32.totalorder %s64, %s66
    %p70 = scmp.eq.s32.totalorder %s9, 0
    %p71 = por %p69, %p70
    %p72 = scmp.ne.s32.totalorder %s64, %s66
    %p73 = scmp.eq.s32.totalorder %s14, 1
    %p74 = por %p72, %p73
    %p75 = scmp.ne.s32.totalorder %s66, %s67
    %p76 = scmp.eq.s32.totalorder %s14, 0
    %p77 = por %p75, %p76
    %p78 = scmp.ne.s32.totalorder %s66, %s67
    %p79 = scmp.eq.s32.totalorder %s15, 1
    %p80 = por %p78, %p79
    %p82 = scmp.ne.s32.totalorder %s67, %s81
    %p83 = scmp.eq.s32.totalorder %s15, 0
    %p84 = por %p82, %p83
    %s85 = ssub.s32 %s9, %s16
    %p86 = scmp.eq.s32.totalorder %s85, 0
    %s88 = sadd.s32 %s87, 1
    %s89 = scalar_select %p86, %s87, %s88
    %p92 = pneg %p86
    %p93 = scmp.eq.s32.totalorder %s9, 1
    %p94 = por %p92, %p93
    %p95 = scmp.ne.s32.totalorder %s87, %s90
    %p96 = scmp.eq.s32.totalorder %s9, 0
    %p97 = por %p95, %p96
    %p98 = scmp.ne.s32.totalorder %s87, %s90
    %p99 = scmp.eq.s32.totalorder %s14, 1
    %p100 = por %p98, %p99
    %p101 = scmp.ne.s32.totalorder %s90, %s91
    %p102 = scmp.eq.s32.totalorder %s14, 0
    %p103 = por %p101, %p102
    %p104 = scmp.ne.s32.totalorder %s90, %s91
    %p105 = scmp.eq.s32.totalorder %s15, 1
    %p106 = por %p104, %p105
    %p108 = scmp.ne.s32.totalorder %s91, %s107
    %p109 = scmp.eq.s32.totalorder %s15, 0
    %p110 = por %p108, %p109
    %p111 = scmp.le.s32.totalorder 1, %s9
    %p112 = scmp.lt.s32.totalorder %s9, 3
    %p113 = pnand %p111, %p112
    %p114 = pneg %p113
    // Predicated region
    $region9: #{dqn_forward_pallas.4} parent=5 // pred_check
      _
    $region10: #{dqn_forward_pallas.4} parent=5 // pred_check_branch
      %116 = sbr.rel (%p113) target = $region12
    $region11: #{dqn_forward_pallas.4} parent=5 // pred_region
      %s117 = ssub.s32 %s9, 1
      // Predicated region
      $region13: #{dqn_forward_pallas.4} parent=11 // pred_check
        %p118 = pneg %p56
      $region14: #{dqn_forward_pallas.4} parent=11 // pred_check_branch
        %120 = sbr.rel (%p118) target = $region16
      $region15: #{dqn_forward_pallas.4} parent=11 // pred_region
        _
      $region16: #{dqn_forward_pallas.4} parent=11 // pred_fallthru
        _
      // Predicated region
      $region17: #{dqn_forward_pallas.4} parent=11 // pred_check
        %p121 = pneg %p77
      $region18: #{dqn_forward_pallas.4} parent=11 // pred_check_branch
        %123 = sbr.rel (%p121) target = $region20
      $region19: #{dqn_forward_pallas.4} parent=11 // pred_region
        _
      $region20: #{dqn_forward_pallas.4} parent=11 // pred_fallthru
        _
    $region12: #{dqn_forward_pallas.4} parent=5 // pred_fallthru
      _
    %p124 = scmp.lt.s32.totalorder %s9, 2
    // Predicated region
    $region21: #{dqn_forward_pallas.4} parent=5 // pred_check
      %p125 = pneg %p124
    $region22: #{dqn_forward_pallas.4} parent=5 // pred_check_branch
      %127 = sbr.rel (%p125) target = $region24
    $region23: #{dqn_forward_pallas.4} parent=5 // pred_region
      // Predicated region
      $region25: #{dqn_forward_pallas.4} parent=23 // pred_check
        %p128 = pneg %p29
      $region26: #{dqn_forward_pallas.4} parent=23 // pred_check_branch
        %130 = sbr.rel (%p128) target = $region28
      $region27: #{dqn_forward_pallas.4} parent=23 // pred_region
        %p131 = scmp.lt.s32.totalorder %s9, 1
        %s132 = scalar_select %p131, %s9, 1
        %s133 = smul.addr %s132, 8
        %s134 = smul.addr %s133, 4
        %s135 = scalar_lea.vmem %s0, %s134
      $region28: #{dqn_forward_pallas.4} parent=23 // pred_fallthru
        _
    $region24: #{dqn_forward_pallas.4} parent=5 // pred_fallthru
      _
    %p136 = scmp.le.s32.totalorder 1, %s9
    %p137 = scmp.lt.s32.totalorder %s9, 3
    %p138 = pnand %p136, %p137
    %p139 = pneg %p138
    // Predicated region
    $region29: #{dqn_forward_pallas.4} parent=5 // pred_check
      _
    $region30: #{dqn_forward_pallas.4} parent=5 // pred_check_branch
      %141 = sbr.rel (%p138) target = $region32
    $region31: #{dqn_forward_pallas.4} parent=5 // pred_region
      %s142 = ssub.s32 %s9, 1
      %p143 = scmp.lt.s32.totalorder %s14, 1
      %s144 = scalar_select %p143, %s14, 1
      %s145 = smul.addr %s144, 8
      %s146 = smul.addr %s145, 4
      %s147 = scalar_lea.vmem %s0, %s146
      %p148 = pneg %p35
      %p149 = pneg %p32
      %p150 = pneg %p56
      %p151 = pneg %p53
      %p152 = pneg %p77
      %p153 = pneg %p74
      %p154 = pneg %p103
      %p155 = pneg %p100
      %p156 = scmp.lt.s32.totalorder %s14, 1
      %s157 = scalar_select %p156, %s14, 1
      %s158 = smul.addr %s157, 3
      %s159 = smul.addr %s158, 4
      %s160 = scalar_lea.vmem %s3, %s159
      %p161 = scmp.lt.s32.totalorder %s14, 1
      %s162 = scalar_select %p161, %s14, 1
      %s163 = smul.addr %s162, 8
      %s164 = smul.addr %s163, 4
      %s165 = scalar_lea.vmem %s0, %s164
      %p166 = scmp.lt.s32.totalorder %s14, 1
      %s167 = scalar_select %p166, %s14, 1
      %s168 = smul.addr %s167, 3
      %s169 = smul.addr %s168, 4
      %s170 = scalar_lea.vmem %s3, %s169
      %v172 = vld [vmem:[%s165] sm:$0xff]
      %v173 = vld [vmem:[%s165 + $0x8] sm:$0xff]
      %v174 = vld [vmem:[%s1] sm:$0xff]
      %v175 = vld [vmem:[%s1 + $0x8] sm:$0xf]
      %v176 = vld [vmem:[%s1 + $0xc] sm:$0xff]
      %v177 = vld [vmem:[%s1 + $0x14] sm:$0xf]
      %v178 = vld [vmem:[%s1 + $0x18] sm:$0xff]
      %v179 = vld [vmem:[%s1 + $0x20] sm:$0xf]
      %v180 = vld [vmem:[%s1 + $0x24] sm:$0xff]
      %v181 = vld [vmem:[%s1 + $0x2c] sm:$0xf]
      %v182 = vld [vmem:[%s1 + $0x30] sm:$0xff]
      %v183 = vld [vmem:[%s1 + $0x38] sm:$0xf]
      %v184 = vld [vmem:[%s1 + $0x3c] sm:$0xff]
      %v185 = vld [vmem:[%s1 + $0x44] sm:$0xf]
      %v186 = vld [vmem:[%s1 + $0x48] sm:$0xff]
      %v187 = vld [vmem:[%s1 + $0x50] sm:$0xf]
      %v188 = vld [vmem:[%s1 + $0x54] sm:$0xff]
      %v189 = vld [vmem:[%s1 + $0x5c] sm:$0xf]
      %v190 = vld [vmem:[%s1 + $0x60] sm:$0xff]
      %v191 = vld [vmem:[%s1 + $0x68] sm:$0xf]
      %v192 = vld [vmem:[%s1 + $0x6c] sm:$0xff]
      %v193 = vld [vmem:[%s1 + $0x74] sm:$0xf]
      %v194 = vld [vmem:[%s1 + $0x78] sm:$0xff]
      %v195 = vld [vmem:[%s1 + $0x80] sm:$0xf]
      %v196 = vld [vmem:[%s1 + $0x84] sm:$0xff]
      %v197 = vld [vmem:[%s1 + $0x8c] sm:$0xf]
      %v198 = vld [vmem:[%s1 + $0x90] sm:$0xff]
      %v199 = vld [vmem:[%s1 + $0x98] sm:$0xf]
      %v200 = vld [vmem:[%s1 + $0x9c] sm:$0xff]
      %v201 = vld [vmem:[%s1 + $0xa4] sm:$0xf]
      %v202 = vld [vmem:[%s1 + $0xa8] sm:$0xff]
      %v203 = vld [vmem:[%s1 + $0xb0] sm:$0xf]
      %v204 = vld [vmem:[%s1 + $0xb4] sm:$0xff]
      %v205 = vld [vmem:[%s1 + $0xbc] sm:$0xf]
      %v206 = vld [vmem:[%s1 + $0xc0] sm:$0xff]
      %v207 = vld [vmem:[%s1 + $0xc8] sm:$0xf]
      %v208 = vld [vmem:[%s1 + $0xcc] sm:$0xff]
      %v209 = vld [vmem:[%s1 + $0xd4] sm:$0xf]
      %v210 = vld [vmem:[%s1 + $0xd8] sm:$0xff]
      %v211 = vld [vmem:[%s1 + $0xe0] sm:$0xf]
      %v212 = vld [vmem:[%s1 + $0xe4] sm:$0xff]
      %v213 = vld [vmem:[%s1 + $0xec] sm:$0xf]
      %v214 = vld [vmem:[%s1 + $0xf0] sm:$0xff]
      %v215 = vld [vmem:[%s1 + $0xf8] sm:$0xf]
      %v216 = vld [vmem:[%s1 + $0xfc] sm:$0xff]
      %v217 = vld [vmem:[%s1 + $0x104] sm:$0xf]
      %v218 = vld [vmem:[%s1 + $0x108] sm:$0xff]
      %v219 = vld [vmem:[%s1 + $0x110] sm:$0xf]
      %v220 = vld [vmem:[%s1 + $0x114] sm:$0xff]
      %v221 = vld [vmem:[%s1 + $0x11c] sm:$0xf]
      %v222 = vld [vmem:[%s1 + $0x120] sm:$0xff]
      %v223 = vld [vmem:[%s1 + $0x128] sm:$0xf]
      %v224 = vld [vmem:[%s1 + $0x12c] sm:$0xff]
      %v225 = vld [vmem:[%s1 + $0x134] sm:$0xf]
      %v226 = vld [vmem:[%s1 + $0x138] sm:$0xff]
      %v227 = vld [vmem:[%s1 + $0x140] sm:$0xf]
      %v228 = vld [vmem:[%s1 + $0x144] sm:$0xff]
      %v229 = vld [vmem:[%s1 + $0x14c] sm:$0xf]
      %v230 = vld [vmem:[%s1 + $0x150] sm:$0xff]
      %v231 = vld [vmem:[%s1 + $0x158] sm:$0xf]
      %v232 = vld [vmem:[%s1 + $0x15c] sm:$0xff]
      %v233 = vld [vmem:[%s1 + $0x164] sm:$0xf]
      %v234 = vld [vmem:[%s1 + $0x168] sm:$0xff]
      %v235 = vld [vmem:[%s1 + $0x170] sm:$0xf]
      %v236 = vld [vmem:[%s1 + $0x174] sm:$0xff]
      %v237 = vld [vmem:[%s1 + $0x17c] sm:$0xf]
      %v238 = vld [vmem:[%s1 + $0x180] sm:$0xff]
      %v239 = vld [vmem:[%s1 + $0x188] sm:$0xf]
      %v240 = vld [vmem:[%s1 + $0x18c] sm:$0xff]
      %v241 = vld [vmem:[%s1 + $0x194] sm:$0xf]
      %v242 = vld [vmem:[%s1 + $0x198] sm:$0xff]
      %v243 = vld [vmem:[%s1 + $0x1a0] sm:$0xf]
      %v244 = vld [vmem:[%s1 + $0x1a4] sm:$0xff]
      %v245 = vld [vmem:[%s1 + $0x1ac] sm:$0xf]
      %v246 = vld [vmem:[%s1 + $0x1b0] sm:$0xff]
      %v247 = vld [vmem:[%s1 + $0x1b8] sm:$0xf]
      %v248 = vld [vmem:[%s1 + $0x1bc] sm:$0xff]
      %v249 = vld [vmem:[%s1 + $0x1c4] sm:$0xf]
      %v250 = vld [vmem:[%s1 + $0x1c8] sm:$0xff]
      %v251 = vld [vmem:[%s1 + $0x1d0] sm:$0xf]
      %v252 = vld [vmem:[%s1 + $0x1d4] sm:$0xff]
      %v253 = vld [vmem:[%s1 + $0x1dc] sm:$0xf]
      %v254 = vld [vmem:[%s1 + $0x1e0] sm:$0xff]
      %v255 = vld [vmem:[%s1 + $0x1e8] sm:$0xf]
      %v256 = vld [vmem:[%s1 + $0x1ec] sm:$0xff]
      %v257 = vld [vmem:[%s1 + $0x1f4] sm:$0xf]
      %v258 = vld [vmem:[%s1 + $0x1f8] sm:$0xff]
      %v259 = vld [vmem:[%s1 + $0x200] sm:$0xf]
      %v260 = vld [vmem:[%s1 + $0x204] sm:$0xff]
      %v261 = vld [vmem:[%s1 + $0x20c] sm:$0xf]
      %v262 = vld [vmem:[%s1 + $0x210] sm:$0xff]
      %v263 = vld [vmem:[%s1 + $0x218] sm:$0xf]
      %v264 = vld [vmem:[%s1 + $0x21c] sm:$0xff]
      %v265 = vld [vmem:[%s1 + $0x224] sm:$0xf]
      %v266 = vld [vmem:[%s1 + $0x228] sm:$0xff]
      %v267 = vld [vmem:[%s1 + $0x230] sm:$0xf]
      %v268 = vld [vmem:[%s1 + $0x234] sm:$0xff]
      %v269 = vld [vmem:[%s1 + $0x23c] sm:$0xf]
      %v270 = vld [vmem:[%s1 + $0x240] sm:$0xff]
      %v271 = vld [vmem:[%s1 + $0x248] sm:$0xf]
      %v272 = vld [vmem:[%s1 + $0x24c] sm:$0xff]
      %v273 = vld [vmem:[%s1 + $0x254] sm:$0xf]
      %v274 = vld [vmem:[%s1 + $0x258] sm:$0xff]
      %v275 = vld [vmem:[%s1 + $0x260] sm:$0xf]
      %v276 = vld [vmem:[%s1 + $0x264] sm:$0xff]
      %v277 = vld [vmem:[%s1 + $0x26c] sm:$0xf]
      %v278 = vld [vmem:[%s1 + $0x270] sm:$0xff]
      %v279 = vld [vmem:[%s1 + $0x278] sm:$0xf]
      %v280 = vld [vmem:[%s1 + $0x27c] sm:$0xff]
      %v281 = vld [vmem:[%s1 + $0x284] sm:$0xf]
      %v282 = vld [vmem:[%s1 + $0x288] sm:$0xff]
      %v283 = vld [vmem:[%s1 + $0x290] sm:$0xf]
      %v284 = vld [vmem:[%s1 + $0x294] sm:$0xff]
      %v285 = vld [vmem:[%s1 + $0x29c] sm:$0xf]
      %v286 = vld [vmem:[%s1 + $0x2a0] sm:$0xff]
      %v287 = vld [vmem:[%s1 + $0x2a8] sm:$0xf]
      %v288 = vld [vmem:[%s1 + $0x2ac] sm:$0xff]
      %v289 = vld [vmem:[%s1 + $0x2b4] sm:$0xf]
      %v290 = vld [vmem:[%s1 + $0x2b8] sm:$0xff]
      %v291 = vld [vmem:[%s1 + $0x2c0] sm:$0xf]
      %v292 = vld [vmem:[%s1 + $0x2c4] sm:$0xff]
      %v293 = vld [vmem:[%s1 + $0x2cc] sm:$0xf]
      %s294 = scalar_lea.vmem %s1, 1440
      %v295 = vld [vmem:[%s294] sm:$0xff]
      %v296 = vld [vmem:[%s294 + $0x8] sm:$0xf]
      %v297 = vld [vmem:[%s294 + $0xc] sm:$0xff]
      %v298 = vld [vmem:[%s294 + $0x14] sm:$0xf]
      %v299 = vld [vmem:[%s294 + $0x18] sm:$0xff]
      %v300 = vld [vmem:[%s294 + $0x20] sm:$0xf]
      %v301 = vld [vmem:[%s294 + $0x24] sm:$0xff]
      %v302 = vld [vmem:[%s294 + $0x2c] sm:$0xf]
      %v303 = vld [vmem:[%s294 + $0x30] sm:$0xff]
      %v304 = vld [vmem:[%s294 + $0x38] sm:$0xf]
      %v305 = vld [vmem:[%s294 + $0x3c] sm:$0xff]
      %v306 = vld [vmem:[%s294 + $0x44] sm:$0xf]
      %v307 = vld [vmem:[%s294 + $0x48] sm:$0xff]
      %v308 = vld [vmem:[%s294 + $0x50] sm:$0xf]
      %v309 = vld [vmem:[%s294 + $0x54] sm:$0xff]
      %v310 = vld [vmem:[%s294 + $0x5c] sm:$0xf]
      %v311 = vld [vmem:[%s294 + $0x60] sm:$0xff]
      %v312 = vld [vmem:[%s294 + $0x68] sm:$0xf]
      %v313 = vld [vmem:[%s294 + $0x6c] sm:$0xff]
      %v314 = vld [vmem:[%s294 + $0x74] sm:$0xf]
      %v315 = vld [vmem:[%s294 + $0x78] sm:$0xff]
      %v316 = vld [vmem:[%s294 + $0x80] sm:$0xf]
      %v317 = vld [vmem:[%s294 + $0x84] sm:$0xff]
      %v318 = vld [vmem:[%s294 + $0x8c] sm:$0xf]
      %v319 = vld [vmem:[%s294 + $0x90] sm:$0xff]
      %v320 = vld [vmem:[%s294 + $0x98] sm:$0xf]
      %v321 = vld [vmem:[%s294 + $0x9c] sm:$0xff]
      %v322 = vld [vmem:[%s294 + $0xa4] sm:$0xf]
      %v323 = vld [vmem:[%s294 + $0xa8] sm:$0xff]
      %v324 = vld [vmem:[%s294 + $0xb0] sm:$0xf]
      %v325 = vld [vmem:[%s294 + $0xb4] sm:$0xff]
      %v326 = vld [vmem:[%s294 + $0xbc] sm:$0xf]
      %v327 = vld [vmem:[%s294 + $0xc0] sm:$0xff]
      %v328 = vld [vmem:[%s294 + $0xc8] sm:$0xf]
      %v329 = vld [vmem:[%s294 + $0xcc] sm:$0xff]
      %v330 = vld [vmem:[%s294 + $0xd4] sm:$0xf]
      %v331 = vld [vmem:[%s294 + $0xd8] sm:$0xff]
      %v332 = vld [vmem:[%s294 + $0xe0] sm:$0xf]
      %v333 = vld [vmem:[%s294 + $0xe4] sm:$0xff]
      %v334 = vld [vmem:[%s294 + $0xec] sm:$0xf]
      %v335 = vld [vmem:[%s294 + $0xf0] sm:$0xff]
      %v336 = vld [vmem:[%s294 + $0xf8] sm:$0xf]
      %v337 = vld [vmem:[%s294 + $0xfc] sm:$0xff]
      %v338 = vld [vmem:[%s294 + $0x104] sm:$0xf]
      %v339 = vld [vmem:[%s294 + $0x108] sm:$0xff]
      %v340 = vld [vmem:[%s294 + $0x110] sm:$0xf]
      %v341 = vld [vmem:[%s294 + $0x114] sm:$0xff]
      %v342 = vld [vmem:[%s294 + $0x11c] sm:$0xf]
      %v343 = vld [vmem:[%s294 + $0x120] sm:$0xff]
      %v344 = vld [vmem:[%s294 + $0x128] sm:$0xf]
      %v345 = vld [vmem:[%s294 + $0x12c] sm:$0xff]
      %v346 = vld [vmem:[%s294 + $0x134] sm:$0xf]
      %v347 = vld [vmem:[%s294 + $0x138] sm:$0xff]
      %v348 = vld [vmem:[%s294 + $0x140] sm:$0xf]
      %v349 = vld [vmem:[%s294 + $0x144] sm:$0xff]
      %v350 = vld [vmem:[%s294 + $0x14c] sm:$0xf]
      %v351 = vld [vmem:[%s294 + $0x150] sm:$0xff]
      %v352 = vld [vmem:[%s294 + $0x158] sm:$0xf]
      %v353 = vld [vmem:[%s294 + $0x15c] sm:$0xff]
      %v354 = vld [vmem:[%s294 + $0x164] sm:$0xf]
      %v355 = vld [vmem:[%s294 + $0x168] sm:$0xff]
      %v356 = vld [vmem:[%s294 + $0x170] sm:$0xf]
      %v357 = vld [vmem:[%s294 + $0x174] sm:$0xff]
      %v358 = vld [vmem:[%s294 + $0x17c] sm:$0xf]
      %v359 = vld [vmem:[%s294 + $0x180] sm:$0xff]
      %v360 = vld [vmem:[%s294 + $0x188] sm:$0xf]
      %v361 = vld [vmem:[%s294 + $0x18c] sm:$0xff]
      %v362 = vld [vmem:[%s294 + $0x194] sm:$0xf]
      %v363 = vld [vmem:[%s294 + $0x198] sm:$0xff]
      %v364 = vld [vmem:[%s294 + $0x1a0] sm:$0xf]
      %v365 = vld [vmem:[%s294 + $0x1a4] sm:$0xff]
      %v366 = vld [vmem:[%s294 + $0x1ac] sm:$0xf]
      %v367 = vld [vmem:[%s294 + $0x1b0] sm:$0xff]
      %v368 = vld [vmem:[%s294 + $0x1b8] sm:$0xf]
      %v369 = vld [vmem:[%s294 + $0x1bc] sm:$0xff]
      %v370 = vld [vmem:[%s294 + $0x1c4] sm:$0xf]
      %v371 = vld [vmem:[%s294 + $0x1c8] sm:$0xff]
      %v372 = vld [vmem:[%s294 + $0x1d0] sm:$0xf]
      %v373 = vld [vmem:[%s294 + $0x1d4] sm:$0xff]
      %v374 = vld [vmem:[%s294 + $0x1dc] sm:$0xf]
      %v375 = vld [vmem:[%s294 + $0x1e0] sm:$0xff]
      %v376 = vld [vmem:[%s294 + $0x1e8] sm:$0xf]
      %v377 = vld [vmem:[%s294 + $0x1ec] sm:$0xff]
      %v378 = vld [vmem:[%s294 + $0x1f4] sm:$0xf]
      %v379 = vld [vmem:[%s294 + $0x1f8] sm:$0xff]
      %v380 = vld [vmem:[%s294 + $0x200] sm:$0xf]
      %v381 = vld [vmem:[%s294 + $0x204] sm:$0xff]
      %v382 = vld [vmem:[%s294 + $0x20c] sm:$0xf]
      %v383 = vld [vmem:[%s294 + $0x210] sm:$0xff]
      %v384 = vld [vmem:[%s294 + $0x218] sm:$0xf]
      %v385 = vld [vmem:[%s294 + $0x21c] sm:$0xff]
      %v386 = vld [vmem:[%s294 + $0x224] sm:$0xf]
      %v387 = vld [vmem:[%s294 + $0x228] sm:$0xff]
      %v388 = vld [vmem:[%s294 + $0x230] sm:$0xf]
      %v389 = vld [vmem:[%s294 + $0x234] sm:$0xff]
      %v390 = vld [vmem:[%s294 + $0x23c] sm:$0xf]
      %v391 = vld [vmem:[%s294 + $0x240] sm:$0xff]
      %v392 = vld [vmem:[%s294 + $0x248] sm:$0xf]
      %v393 = vld [vmem:[%s294 + $0x24c] sm:$0xff]
      %v394 = vld [vmem:[%s294 + $0x254] sm:$0xf]
      %v395 = vld [vmem:[%s294 + $0x258] sm:$0xff]
      %v396 = vld [vmem:[%s294 + $0x260] sm:$0xf]
      %v397 = vld [vmem:[%s294 + $0x264] sm:$0xff]
      %v398 = vld [vmem:[%s294 + $0x26c] sm:$0xf]
      %v399 = vld [vmem:[%s294 + $0x270] sm:$0xff]
      %v400 = vld [vmem:[%s294 + $0x278] sm:$0xf]
      %v401 = vld [vmem:[%s294 + $0x27c] sm:$0xff]
      %v402 = vld [vmem:[%s294 + $0x284] sm:$0xf]
      %v403 = vld [vmem:[%s294 + $0x288] sm:$0xff]
      %v404 = vld [vmem:[%s294 + $0x290] sm:$0xf]
      %v405 = vld [vmem:[%s294 + $0x294] sm:$0xff]
      %v406 = vld [vmem:[%s294 + $0x29c] sm:$0xf]
      %v407 = vld [vmem:[%s294 + $0x2a0] sm:$0xff]
      %v408 = vld [vmem:[%s294 + $0x2a8] sm:$0xf]
      %v409 = vld [vmem:[%s294 + $0x2ac] sm:$0xff]
      %v410 = vld [vmem:[%s294 + $0x2b4] sm:$0xf]
      %v411 = vld [vmem:[%s294 + $0x2b8] sm:$0xff]
      %v412 = vld [vmem:[%s294 + $0x2c0] sm:$0xf]
      %v413 = vld [vmem:[%s294 + $0x2c4] sm:$0xff]
      %v414 = vld [vmem:[%s294 + $0x2cc] sm:$0xf]
      %v417 = vunpack.c.l.b16 %v172
      %v418 = vunpack.c.h.b16 %v172
      %v419 = vunpack.c.l.b16 %v173
      %v420 = vunpack.c.h.b16 %v173
      %v421 = vpack.c.b16 %v417, %v417
      %v422 = vpack.c.b16 %v418, %v418
      %v423 = vpack.c.b16 %v419, %v419
      %v424 = vpack.c.b16 %v420, %v420
      %v426 = vshrl.u32 %v421, 16
      %v428 = vshll.u32 %v421, 16
      %v430 = vrot.slane %v428, 1
      %v431 = vor.u32 %v426, %v430
      %v433 = vshrl.u32 %v422, 16
      %v435 = vshll.u32 %v422, 16
      %v437 = vrot.slane %v435, 1
      %v438 = vor.u32 %v433, %v437
      %v440 = vshrl.u32 %v423, 16
      %v442 = vshll.u32 %v423, 16
      %v444 = vrot.slane %v442, 1
      %v445 = vor.u32 %v440, %v444
      %v447 = vshrl.u32 %v424, 16
      %v449 = vshll.u32 %v424, 16
      %v451 = vrot.slane %v449, 1
      %v452 = vor.u32 %v447, %v451
      %v576 = vunpack.c.l.b16 %v295
      %v577 = vunpack.c.h.b16 %v295
      %v578 = vunpack.c.l.b16 %v296
      %v579 = vunpack.c.l.b16 %v297
      %v580 = vunpack.c.h.b16 %v297
      %v581 = vunpack.c.l.b16 %v298
      %v582 = vunpack.c.l.b16 %v299
      %v583 = vunpack.c.h.b16 %v299
      %v584 = vunpack.c.l.b16 %v300
      %v585 = vunpack.c.l.b16 %v301
      %v586 = vunpack.c.h.b16 %v301
      %v587 = vunpack.c.l.b16 %v302
      %v588 = vunpack.c.l.b16 %v303
      %v589 = vunpack.c.h.b16 %v303
      %v590 = vunpack.c.l.b16 %v304
      %v591 = vunpack.c.l.b16 %v305
      %v592 = vunpack.c.h.b16 %v305
      %v593 = vunpack.c.l.b16 %v306
      %v594 = vunpack.c.l.b16 %v307
      %v595 = vunpack.c.h.b16 %v307
      %v596 = vunpack.c.l.b16 %v308
      %v597 = vunpack.c.l.b16 %v309
      %v598 = vunpack.c.h.b16 %v309
      %v599 = vunpack.c.l.b16 %v310
      %v600 = vunpack.c.l.b16 %v311
      %v601 = vunpack.c.h.b16 %v311
      %v602 = vunpack.c.l.b16 %v312
      %v603 = vunpack.c.l.b16 %v313
      %v604 = vunpack.c.h.b16 %v313
      %v605 = vunpack.c.l.b16 %v314
      %v606 = vunpack.c.l.b16 %v315
      %v607 = vunpack.c.h.b16 %v315
      %v608 = vunpack.c.l.b16 %v316
      %v609 = vunpack.c.l.b16 %v317
      %v610 = vunpack.c.h.b16 %v317
      %v611 = vunpack.c.l.b16 %v318
      %v612 = vunpack.c.l.b16 %v319
      %v613 = vunpack.c.h.b16 %v319
      %v614 = vunpack.c.l.b16 %v320
      %v615 = vunpack.c.l.b16 %v321
      %v616 = vunpack.c.h.b16 %v321
      %v617 = vunpack.c.l.b16 %v322
      %v618 = vunpack.c.l.b16 %v323
      %v619 = vunpack.c.h.b16 %v323
      %v620 = vunpack.c.l.b16 %v324
      %v621 = vunpack.c.l.b16 %v325
      %v622 = vunpack.c.h.b16 %v325
      %v623 = vunpack.c.l.b16 %v326
      %v624 = vunpack.c.l.b16 %v327
      %v625 = vunpack.c.h.b16 %v327
      %v626 = vunpack.c.l.b16 %v328
      %v627 = vunpack.c.l.b16 %v329
      %v628 = vunpack.c.h.b16 %v329
      %v629 = vunpack.c.l.b16 %v330
      %v630 = vunpack.c.l.b16 %v331
      %v631 = vunpack.c.h.b16 %v331
      %v632 = vunpack.c.l.b16 %v332
      %v633 = vunpack.c.l.b16 %v333
      %v634 = vunpack.c.h.b16 %v333
      %v635 = vunpack.c.l.b16 %v334
      %v636 = vunpack.c.l.b16 %v335
      %v637 = vunpack.c.h.b16 %v335
      %v638 = vunpack.c.l.b16 %v336
      %v639 = vunpack.c.l.b16 %v337
      %v640 = vunpack.c.h.b16 %v337
      %v641 = vunpack.c.l.b16 %v338
      %v642 = vunpack.c.l.b16 %v339
      %v643 = vunpack.c.h.b16 %v339
      %v644 = vunpack.c.l.b16 %v340
      %v645 = vunpack.c.l.b16 %v341
      %v646 = vunpack.c.h.b16 %v341
      %v647 = vunpack.c.l.b16 %v342
      %v648 = vunpack.c.l.b16 %v343
      %v649 = vunpack.c.h.b16 %v343
      %v650 = vunpack.c.l.b16 %v344
      %v651 = vunpack.c.l.b16 %v345
      %v652 = vunpack.c.h.b16 %v345
      %v653 = vunpack.c.l.b16 %v346
      %v654 = vunpack.c.l.b16 %v347
      %v655 = vunpack.c.h.b16 %v347
      %v656 = vunpack.c.l.b16 %v348
      %v657 = vunpack.c.l.b16 %v349
      %v658 = vunpack.c.h.b16 %v349
      %v659 = vunpack.c.l.b16 %v350
      %v660 = vunpack.c.l.b16 %v351
      %v661 = vunpack.c.h.b16 %v351
      %v662 = vunpack.c.l.b16 %v352
      %v663 = vunpack.c.l.b16 %v353
      %v664 = vunpack.c.h.b16 %v353
      %v665 = vunpack.c.l.b16 %v354
      %v666 = vunpack.c.l.b16 %v355
      %v667 = vunpack.c.h.b16 %v355
      %v668 = vunpack.c.l.b16 %v356
      %v669 = vunpack.c.l.b16 %v357
      %v670 = vunpack.c.h.b16 %v357
      %v671 = vunpack.c.l.b16 %v358
      %v672 = vunpack.c.l.b16 %v359
      %v673 = vunpack.c.h.b16 %v359
      %v674 = vunpack.c.l.b16 %v360
      %v675 = vunpack.c.l.b16 %v361
      %v676 = vunpack.c.h.b16 %v361
      %v677 = vunpack.c.l.b16 %v362
      %v678 = vunpack.c.l.b16 %v363
      %v679 = vunpack.c.h.b16 %v363
      %v680 = vunpack.c.l.b16 %v364
      %v681 = vunpack.c.l.b16 %v365
      %v682 = vunpack.c.h.b16 %v365
      %v683 = vunpack.c.l.b16 %v366
      %v684 = vunpack.c.l.b16 %v367
      %v685 = vunpack.c.h.b16 %v367
      %v686 = vunpack.c.l.b16 %v368
      %v687 = vunpack.c.l.b16 %v369
      %v688 = vunpack.c.h.b16 %v369
      %v689 = vunpack.c.l.b16 %v370
      %v690 = vunpack.c.l.b16 %v371
      %v691 = vunpack.c.h.b16 %v371
      %v692 = vunpack.c.l.b16 %v372
      %v693 = vunpack.c.l.b16 %v373
      %v694 = vunpack.c.h.b16 %v373
      %v695 = vunpack.c.l.b16 %v374
      %v696 = vunpack.c.l.b16 %v375
      %v697 = vunpack.c.h.b16 %v375
      %v698 = vunpack.c.l.b16 %v376
      %v699 = vunpack.c.l.b16 %v377
      %v700 = vunpack.c.h.b16 %v377
      %v701 = vunpack.c.l.b16 %v378
      %v702 = vunpack.c.l.b16 %v379
      %v703 = vunpack.c.h.b16 %v379
      %v704 = vunpack.c.l.b16 %v380
      %v705 = vunpack.c.l.b16 %v381
      %v706 = vunpack.c.h.b16 %v381
      %v707 = vunpack.c.l.b16 %v382
      %v708 = vunpack.c.l.b16 %v383
      %v709 = vunpack.c.h.b16 %v383
      %v710 = vunpack.c.l.b16 %v384
      %v711 = vunpack.c.l.b16 %v385
      %v712 = vunpack.c.h.b16 %v385
      %v713 = vunpack.c.l.b16 %v386
      %v714 = vunpack.c.l.b16 %v387
      %v715 = vunpack.c.h.b16 %v387
      %v716 = vunpack.c.l.b16 %v388
      %v717 = vunpack.c.l.b16 %v389
      %v718 = vunpack.c.h.b16 %v389
      %v719 = vunpack.c.l.b16 %v390
      %v720 = vunpack.c.l.b16 %v391
      %v721 = vunpack.c.h.b16 %v391
      %v722 = vunpack.c.l.b16 %v392
      %v723 = vunpack.c.l.b16 %v393
      %v724 = vunpack.c.h.b16 %v393
      %v725 = vunpack.c.l.b16 %v394
      %v726 = vunpack.c.l.b16 %v395
      %v727 = vunpack.c.h.b16 %v395
      %v728 = vunpack.c.l.b16 %v396
      %v729 = vunpack.c.l.b16 %v397
      %v730 = vunpack.c.h.b16 %v397
      %v731 = vunpack.c.l.b16 %v398
      %v732 = vunpack.c.l.b16 %v399
      %v733 = vunpack.c.h.b16 %v399
      %v734 = vunpack.c.l.b16 %v400
      %v735 = vunpack.c.l.b16 %v401
      %v736 = vunpack.c.h.b16 %v401
      %v737 = vunpack.c.l.b16 %v402
      %v738 = vunpack.c.l.b16 %v403
      %v739 = vunpack.c.h.b16 %v403
      %v740 = vunpack.c.l.b16 %v404
      %v741 = vunpack.c.l.b16 %v405
      %v742 = vunpack.c.h.b16 %v405
      %v743 = vunpack.c.l.b16 %v406
      %v744 = vunpack.c.l.b16 %v407
      %v745 = vunpack.c.h.b16 %v407
      %v746 = vunpack.c.l.b16 %v408
      %v747 = vunpack.c.l.b16 %v409
      %v748 = vunpack.c.h.b16 %v409
      %v749 = vunpack.c.l.b16 %v410
      %v750 = vunpack.c.l.b16 %v411
      %v751 = vunpack.c.h.b16 %v411
      %v752 = vunpack.c.l.b16 %v412
      %v753 = vunpack.c.l.b16 %v413
      %v754 = vunpack.c.h.b16 %v413
      %v755 = vunpack.c.l.b16 %v414
      %v756 = vpack.c.b16 %v579, %v576
      %v757 = vpack.c.b16 %v580, %v577
      %v758 = vpack.c.b16 %v581, %v578
      %v759 = vpack.c.b16 %v585, %v582
      %v760 = vpack.c.b16 %v586, %v583
      %v761 = vpack.c.b16 %v587, %v584
      %v762 = vpack.c.b16 %v591, %v588
      %v763 = vpack.c.b16 %v592, %v589
      %v764 = vpack.c.b16 %v593, %v590
      %v765 = vpack.c.b16 %v597, %v594
      %v766 = vpack.c.b16 %v598, %v595
      %v767 = vpack.c.b16 %v599, %v596
      %v768 = vpack.c.b16 %v603, %v600
      %v769 = vpack.c.b16 %v604, %v601
      %v770 = vpack.c.b16 %v605, %v602
      %v771 = vpack.c.b16 %v609, %v606
      %v772 = vpack.c.b16 %v610, %v607
      %v773 = vpack.c.b16 %v611, %v608
      %v774 = vpack.c.b16 %v615, %v612
      %v775 = vpack.c.b16 %v616, %v613
      %v776 = vpack.c.b16 %v617, %v614
      %v777 = vpack.c.b16 %v621, %v618
      %v778 = vpack.c.b16 %v622, %v619
      %v779 = vpack.c.b16 %v623, %v620
      %v780 = vpack.c.b16 %v627, %v624
      %v781 = vpack.c.b16 %v628, %v625
      %v782 = vpack.c.b16 %v629, %v626
      %v783 = vpack.c.b16 %v633, %v630
      %v784 = vpack.c.b16 %v634, %v631
      %v785 = vpack.c.b16 %v635, %v632
      %v786 = vpack.c.b16 %v639, %v636
      %v787 = vpack.c.b16 %v640, %v637
      %v788 = vpack.c.b16 %v641, %v638
      %v789 = vpack.c.b16 %v645, %v642
      %v790 = vpack.c.b16 %v646, %v643
      %v791 = vpack.c.b16 %v647, %v644
      %v792 = vpack.c.b16 %v651, %v648
      %v793 = vpack.c.b16 %v652, %v649
      %v794 = vpack.c.b16 %v653, %v650
      %v795 = vpack.c.b16 %v657, %v654
      %v796 = vpack.c.b16 %v658, %v655
      %v797 = vpack.c.b16 %v659, %v656
      %v798 = vpack.c.b16 %v663, %v660
      %v799 = vpack.c.b16 %v664, %v661
      %v800 = vpack.c.b16 %v665, %v662
      %v801 = vpack.c.b16 %v669, %v666
      %v802 = vpack.c.b16 %v670, %v667
      %v803 = vpack.c.b16 %v671, %v668
      %v804 = vpack.c.b16 %v675, %v672
      %v805 = vpack.c.b16 %v676, %v673
      %v806 = vpack.c.b16 %v677, %v674
      %v807 = vpack.c.b16 %v681, %v678
      %v808 = vpack.c.b16 %v682, %v679
      %v809 = vpack.c.b16 %v683, %v680
      %v810 = vpack.c.b16 %v687, %v684
      %v811 = vpack.c.b16 %v688, %v685
      %v812 = vpack.c.b16 %v689, %v686
      %v813 = vpack.c.b16 %v693, %v690
      %v814 = vpack.c.b16 %v694, %v691
      %v815 = vpack.c.b16 %v695, %v692
      %v816 = vpack.c.b16 %v699, %v696
      %v817 = vpack.c.b16 %v700, %v697
      %v818 = vpack.c.b16 %v701, %v698
      %v819 = vpack.c.b16 %v705, %v702
      %v820 = vpack.c.b16 %v706, %v703
      %v821 = vpack.c.b16 %v707, %v704
      %v822 = vpack.c.b16 %v711, %v708
      %v823 = vpack.c.b16 %v712, %v709
      %v824 = vpack.c.b16 %v713, %v710
      %v825 = vpack.c.b16 %v717, %v714
      %v826 = vpack.c.b16 %v718, %v715
      %v827 = vpack.c.b16 %v719, %v716
      %v828 = vpack.c.b16 %v723, %v720
      %v829 = vpack.c.b16 %v724, %v721
      %v830 = vpack.c.b16 %v725, %v722
      %v831 = vpack.c.b16 %v729, %v726
      %v832 = vpack.c.b16 %v730, %v727
      %v833 = vpack.c.b16 %v731, %v728
      %v834 = vpack.c.b16 %v735, %v732
      %v835 = vpack.c.b16 %v736, %v733
      %v836 = vpack.c.b16 %v737, %v734
      %v837 = vpack.c.b16 %v741, %v738
      %v838 = vpack.c.b16 %v742, %v739
      %v839 = vpack.c.b16 %v743, %v740
      %v840 = vpack.c.b16 %v747, %v744
      %v841 = vpack.c.b16 %v748, %v745
      %v842 = vpack.c.b16 %v749, %v746
      %v843 = vpack.c.b16 %v753, %v750
      %v844 = vpack.c.b16 %v754, %v751
      %v845 = vpack.c.b16 %v755, %v752
      %vm936 = vcmask 785408
      %v938 = vsel %vm936, %v452, 0
      %940 = vmatpush.bf16.msra.mxu0 %v777
      %941 = vmatpush.bf16.msra.mxu0 %v774
      %942 = vmatpush.bf16.msra.mxu0 %v771
      %943 = vmatpush.bf16.msra.mxu0 %v768
      %944 = vmatpush.bf16.msra.mxu0 %v765
      %945 = vmatpush.bf16.msra.mxu0 %v762
      %946 = vmatpush.bf16.msra.mxu0 %v759
      %947 = vmatpush.bf16.msra.mxu0 %v756
      %948 = vmatmul.bf16.gmra.mxu0 %v431
      %v949 = vpop.f32.mrf.mxu0
      %v950 = vadd.f32 0.0, %v949
      %v951 = vpop.f32.mrf.mxu0
      %952 = vdwg.mxu0
      %953 = vmatpush.bf16.msra.mxu0 %v801
      %954 = vmatpush.bf16.msra.mxu0 %v798
      %955 = vmatpush.bf16.msra.mxu0 %v795
      %956 = vmatpush.bf16.msra.mxu0 %v792
      %957 = vmatpush.bf16.msra.mxu0 %v789
      %958 = vmatpush.bf16.msra.mxu0 %v786
      %959 = vmatpush.bf16.msra.mxu0 %v783
      %960 = vmatpush.bf16.msra.mxu0 %v780
      %961 = vmatmul.bf16.gmra.mxu0 %v438
      %v962 = vpop.f32.mrf.mxu0
      %v963 = vadd.f32 %v950, %v962
      %v964 = vpop.f32.mrf.mxu0
      %965 = vdwg.mxu0
      %966 = vmatpush.bf16.msra.mxu0 %v825
      %967 = vmatpush.bf16.msra.mxu0 %v822
      %968 = vmatpush.bf16.msra.mxu0 %v819
      %969 = vmatpush.bf16.msra.mxu0 %v816
      %970 = vmatpush.bf16.msra.mxu0 %v813
      %971 = vmatpush.bf16.msra.mxu0 %v810
      %972 = vmatpush.bf16.msra.mxu0 %v807
      %973 = vmatpush.bf16.msra.mxu0 %v804
      %974 = vmatmul.bf16.gmra.mxu0 %v445
      %v975 = vpop.f32.mrf.mxu0
      %v976 = vadd.f32 %v963, %v975
      %v977 = vpop.f32.mrf.mxu0
      %978 = vdwg.mxu0
      %979 = vmatpush.bf16.msra.mxu0 0
      %980 = vmatpush.bf16.msra.mxu0 0
      %981 = vmatpush.bf16.msra.mxu0 %v843
      %982 = vmatpush.bf16.msra.mxu0 %v840
      %983 = vmatpush.bf16.msra.mxu0 %v837
      %984 = vmatpush.bf16.msra.mxu0 %v834
      %985 = vmatpush.bf16.msra.mxu0 %v831
      %986 = vmatpush.bf16.msra.mxu0 %v828
      %987 = vmatmul.bf16.gmra.mxu0 %v938
      %v988 = vpop.f32.mrf.mxu0
      %v989 = vadd.f32 %v976, %v988
      %v990 = vpop.f32.mrf.mxu0
      %991 = vdwg.mxu0
      %992 = vmatpush.bf16.msra.mxu0 %v778
      %993 = vmatpush.bf16.msra.mxu0 %v775
      %994 = vmatpush.bf16.msra.mxu0 %v772
      %995 = vmatpush.bf16.msra.mxu0 %v769
      %996 = vmatpush.bf16.msra.mxu0 %v766
      %997 = vmatpush.bf16.msra.mxu0 %v763
      %998 = vmatpush.bf16.msra.mxu0 %v760
      %999 = vmatpush.bf16.msra.mxu0 %v757
      %1000 = vmatmul.bf16.gmra.mxu0 %v431
      %v1001 = vpop.f32.mrf.mxu0
      %v1002 = vadd.f32 0.0, %v1001
      %v1003 = vpop.f32.mrf.mxu0
      %1004 = vdwg.mxu0
      %1005 = vmatpush.bf16.msra.mxu0 %v802
      %1006 = vmatpush.bf16.msra.mxu0 %v799
      %1007 = vmatpush.bf16.msra.mxu0 %v796
      %1008 = vmatpush.bf16.msra.mxu0 %v793
      %1009 = vmatpush.bf16.msra.mxu0 %v790
      %1010 = vmatpush.bf16.msra.mxu0 %v787
      %1011 = vmatpush.bf16.msra.mxu0 %v784
      %1012 = vmatpush.bf16.msra.mxu0 %v781
      %1013 = vmatmul.bf16.gmra.mxu0 %v438
      %v1014 = vpop.f32.mrf.mxu0
      %v1015 = vadd.f32 %v1002, %v1014
      %v1016 = vpop.f32.mrf.mxu0
      %1017 = vdwg.mxu0
      %1018 = vmatpush.bf16.msra.mxu0 %v826
      %1019 = vmatpush.bf16.msra.mxu0 %v823
      %1020 = vmatpush.bf16.msra.mxu0 %v820
      %1021 = vmatpush.bf16.msra.mxu0 %v817
      %1022 = vmatpush.bf16.msra.mxu0 %v814
      %1023 = vmatpush.bf16.msra.mxu0 %v811
      %1024 = vmatpush.bf16.msra.mxu0 %v808
      %1025 = vmatpush.bf16.msra.mxu0 %v805
      %1026 = vmatmul.bf16.gmra.mxu0 %v445
      %v1027 = vpop.f32.mrf.mxu0
      %v1028 = vadd.f32 %v1015, %v1027
      %v1029 = vpop.f32.mrf.mxu0
      %1030 = vdwg.mxu0
      %1031 = vmatpush.bf16.msra.mxu0 0
      %1032 = vmatpush.bf16.msra.mxu0 0
      %1033 = vmatpush.bf16.msra.mxu0 %v844
      %1034 = vmatpush.bf16.msra.mxu0 %v841
      %1035 = vmatpush.bf16.msra.mxu0 %v838
      %1036 = vmatpush.bf16.msra.mxu0 %v835
      %1037 = vmatpush.bf16.msra.mxu0 %v832
      %1038 = vmatpush.bf16.msra.mxu0 %v829
      %1039 = vmatmul.bf16.gmra.mxu0 %v938
      %v1040 = vpop.f32.mrf.mxu0
      %v1041 = vadd.f32 %v1028, %v1040
      %v1042 = vpop.f32.mrf.mxu0
      %1043 = vdwg.mxu0
      %1044 = vmatpush.bf16.msra.mxu0 %v779
      %1045 = vmatpush.bf16.msra.mxu0 %v776
      %1046 = vmatpush.bf16.msra.mxu0 %v773
      %1047 = vmatpush.bf16.msra.mxu0 %v770
      %1048 = vmatpush.bf16.msra.mxu0 %v767
      %1049 = vmatpush.bf16.msra.mxu0 %v764
      %1050 = vmatpush.bf16.msra.mxu0 %v761
      %1051 = vmatpush.bf16.msra.mxu0 %v758
      %1052 = vmatmul.bf16.gmra.mxu0 %v431
      %v1053 = vpop.f32.mrf.mxu0
      %v1054 = vadd.f32 0.0, %v1053
      %v1055 = vpop.f32.mrf.mxu0
      %1056 = vdwg.mxu0
      %1057 = vmatpush.bf16.msra.mxu0 %v803
      %1058 = vmatpush.bf16.msra.mxu0 %v800
      %1059 = vmatpush.bf16.msra.mxu0 %v797
      %1060 = vmatpush.bf16.msra.mxu0 %v794
      %1061 = vmatpush.bf16.msra.mxu0 %v791
      %1062 = vmatpush.bf16.msra.mxu0 %v788
      %1063 = vmatpush.bf16.msra.mxu0 %v785
      %1064 = vmatpush.bf16.msra.mxu0 %v782
      %1065 = vmatmul.bf16.gmra.mxu0 %v438
      %v1066 = vpop.f32.mrf.mxu0
      %v1067 = vadd.f32 %v1054, %v1066
      %v1068 = vpop.f32.mrf.mxu0
      %1069 = vdwg.mxu0
      %1070 = vmatpush.bf16.msra.mxu0 %v827
      %1071 = vmatpush.bf16.msra.mxu0 %v824
      %1072 = vmatpush.bf16.msra.mxu0 %v821
      %1073 = vmatpush.bf16.msra.mxu0 %v818
      %1074 = vmatpush.bf16.msra.mxu0 %v815
      %1075 = vmatpush.bf16.msra.mxu0 %v812
      %1076 = vmatpush.bf16.msra.mxu0 %v809
      %1077 = vmatpush.bf16.msra.mxu0 %v806
      %1078 = vmatmul.bf16.gmra.mxu0 %v445
      %v1079 = vpop.f32.mrf.mxu0
      %v1080 = vadd.f32 %v1067, %v1079
      %v1081 = vpop.f32.mrf.mxu0
      %1082 = vdwg.mxu0
      %1083 = vmatpush.bf16.msra.mxu0 0
      %1084 = vmatpush.bf16.msra.mxu0 0
      %1085 = vmatpush.bf16.msra.mxu0 %v845
      %1086 = vmatpush.bf16.msra.mxu0 %v842
      %1087 = vmatpush.bf16.msra.mxu0 %v839
      %1088 = vmatpush.bf16.msra.mxu0 %v836
      %1089 = vmatpush.bf16.msra.mxu0 %v833
      %1090 = vmatpush.bf16.msra.mxu0 %v830
      %1091 = vmatmul.bf16.gmra.mxu0 %v938
      %v1092 = vpop.f32.mrf.mxu0
      %v1093 = vadd.f32 %v1080, %v1092
      %v1094 = vpop.f32.mrf.mxu0
      %1095 = vdwg.mxu0
      %v1219 = vunpack.c.l.b16 %v174
      %v1220 = vunpack.c.h.b16 %v174
      %v1221 = vunpack.c.l.b16 %v175
      %v1222 = vunpack.c.l.b16 %v176
      %v1223 = vunpack.c.h.b16 %v176
      %v1224 = vunpack.c.l.b16 %v177
      %v1225 = vunpack.c.l.b16 %v178
      %v1226 = vunpack.c.h.b16 %v178
      %v1227 = vunpack.c.l.b16 %v179
      %v1228 = vunpack.c.l.b16 %v180
      %v1229 = vunpack.c.h.b16 %v180
      %v1230 = vunpack.c.l.b16 %v181
      %v1231 = vunpack.c.l.b16 %v182
      %v1232 = vunpack.c.h.b16 %v182
      %v1233 = vunpack.c.l.b16 %v183
      %v1234 = vunpack.c.l.b16 %v184
      %v1235 = vunpack.c.h.b16 %v184
      %v1236 = vunpack.c.l.b16 %v185
      %v1237 = vunpack.c.l.b16 %v186
      %v1238 = vunpack.c.h.b16 %v186
      %v1239 = vunpack.c.l.b16 %v187
      %v1240 = vunpack.c.l.b16 %v188
      %v1241 = vunpack.c.h.b16 %v188
      %v1242 = vunpack.c.l.b16 %v189
      %v1243 = vunpack.c.l.b16 %v190
      %v1244 = vunpack.c.h.b16 %v190
      %v1245 = vunpack.c.l.b16 %v191
      %v1246 = vunpack.c.l.b16 %v192
      %v1247 = vunpack.c.h.b16 %v192
      %v1248 = vunpack.c.l.b16 %v193
      %v1249 = vunpack.c.l.b16 %v194
      %v1250 = vunpack.c.h.b16 %v194
      %v1251 = vunpack.c.l.b16 %v195
      %v1252 = vunpack.c.l.b16 %v196
      %v1253 = vunpack.c.h.b16 %v196
      %v1254 = vunpack.c.l.b16 %v197
      %v1255 = vunpack.c.l.b16 %v198
      %v1256 = vunpack.c.h.b16 %v198
      %v1257 = vunpack.c.l.b16 %v199
      %v1258 = vunpack.c.l.b16 %v200
      %v1259 = vunpack.c.h.b16 %v200
      %v1260 = vunpack.c.l.b16 %v201
      %v1261 = vunpack.c.l.b16 %v202
      %v1262 = vunpack.c.h.b16 %v202
      %v1263 = vunpack.c.l.b16 %v203
      %v1264 = vunpack.c.l.b16 %v204
      %v1265 = vunpack.c.h.b16 %v204
      %v1266 = vunpack.c.l.b16 %v205
      %v1267 = vunpack.c.l.b16 %v206
      %v1268 = vunpack.c.h.b16 %v206
      %v1269 = vunpack.c.l.b16 %v207
      %v1270 = vunpack.c.l.b16 %v208
      %v1271 = vunpack.c.h.b16 %v208
      %v1272 = vunpack.c.l.b16 %v209
      %v1273 = vunpack.c.l.b16 %v210
      %v1274 = vunpack.c.h.b16 %v210
      %v1275 = vunpack.c.l.b16 %v211
      %v1276 = vunpack.c.l.b16 %v212
      %v1277 = vunpack.c.h.b16 %v212
      %v1278 = vunpack.c.l.b16 %v213
      %v1279 = vunpack.c.l.b16 %v214
      %v1280 = vunpack.c.h.b16 %v214
      %v1281 = vunpack.c.l.b16 %v215
      %v1282 = vunpack.c.l.b16 %v216
      %v1283 = vunpack.c.h.b16 %v216
      %v1284 = vunpack.c.l.b16 %v217
      %v1285 = vunpack.c.l.b16 %v218
      %v1286 = vunpack.c.h.b16 %v218
      %v1287 = vunpack.c.l.b16 %v219
      %v1288 = vunpack.c.l.b16 %v220
      %v1289 = vunpack.c.h.b16 %v220
      %v1290 = vunpack.c.l.b16 %v221
      %v1291 = vunpack.c.l.b16 %v222
      %v1292 = vunpack.c.h.b16 %v222
      %v1293 = vunpack.c.l.b16 %v223
      %v1294 = vunpack.c.l.b16 %v224
      %v1295 = vunpack.c.h.b16 %v224
      %v1296 = vunpack.c.l.b16 %v225
      %v1297 = vunpack.c.l.b16 %v226
      %v1298 = vunpack.c.h.b16 %v226
      %v1299 = vunpack.c.l.b16 %v227
      %v1300 = vunpack.c.l.b16 %v228
      %v1301 = vunpack.c.h.b16 %v228
      %v1302 = vunpack.c.l.b16 %v229
      %v1303 = vunpack.c.l.b16 %v230
      %v1304 = vunpack.c.h.b16 %v230
      %v1305 = vunpack.c.l.b16 %v231
      %v1306 = vunpack.c.l.b16 %v232
      %v1307 = vunpack.c.h.b16 %v232
      %v1308 = vunpack.c.l.b16 %v233
      %v1309 = vunpack.c.l.b16 %v234
      %v1310 = vunpack.c.h.b16 %v234
      %v1311 = vunpack.c.l.b16 %v235
      %v1312 = vunpack.c.l.b16 %v236
      %v1313 = vunpack.c.h.b16 %v236
      %v1314 = vunpack.c.l.b16 %v237
      %v1315 = vunpack.c.l.b16 %v238
      %v1316 = vunpack.c.h.b16 %v238
      %v1317 = vunpack.c.l.b16 %v239
      %v1318 = vunpack.c.l.b16 %v240
      %v1319 = vunpack.c.h.b16 %v240
      %v1320 = vunpack.c.l.b16 %v241
      %v1321 = vunpack.c.l.b16 %v242
      %v1322 = vunpack.c.h.b16 %v242
      %v1323 = vunpack.c.l.b16 %v243
      %v1324 = vunpack.c.l.b16 %v244
      %v1325 = vunpack.c.h.b16 %v244
      %v1326 = vunpack.c.l.b16 %v245
      %v1327 = vunpack.c.l.b16 %v246
      %v1328 = vunpack.c.h.b16 %v246
      %v1329 = vunpack.c.l.b16 %v247
      %v1330 = vunpack.c.l.b16 %v248
      %v1331 = vunpack.c.h.b16 %v248
      %v1332 = vunpack.c.l.b16 %v249
      %v1333 = vunpack.c.l.b16 %v250
      %v1334 = vunpack.c.h.b16 %v250
      %v1335 = vunpack.c.l.b16 %v251
      %v1336 = vunpack.c.l.b16 %v252
      %v1337 = vunpack.c.h.b16 %v252
      %v1338 = vunpack.c.l.b16 %v253
      %v1339 = vunpack.c.l.b16 %v254
      %v1340 = vunpack.c.h.b16 %v254
      %v1341 = vunpack.c.l.b16 %v255
      %v1342 = vunpack.c.l.b16 %v256
      %v1343 = vunpack.c.h.b16 %v256
      %v1344 = vunpack.c.l.b16 %v257
      %v1345 = vunpack.c.l.b16 %v258
      %v1346 = vunpack.c.h.b16 %v258
      %v1347 = vunpack.c.l.b16 %v259
      %v1348 = vunpack.c.l.b16 %v260
      %v1349 = vunpack.c.h.b16 %v260
      %v1350 = vunpack.c.l.b16 %v261
      %v1351 = vunpack.c.l.b16 %v262
      %v1352 = vunpack.c.h.b16 %v262
      %v1353 = vunpack.c.l.b16 %v263
      %v1354 = vunpack.c.l.b16 %v264
      %v1355 = vunpack.c.h.b16 %v264
      %v1356 = vunpack.c.l.b16 %v265
      %v1357 = vunpack.c.l.b16 %v266
      %v1358 = vunpack.c.h.b16 %v266
      %v1359 = vunpack.c.l.b16 %v267
      %v1360 = vunpack.c.l.b16 %v268
      %v1361 = vunpack.c.h.b16 %v268
      %v1362 = vunpack.c.l.b16 %v269
      %v1363 = vunpack.c.l.b16 %v270
      %v1364 = vunpack.c.h.b16 %v270
      %v1365 = vunpack.c.l.b16 %v271
      %v1366 = vunpack.c.l.b16 %v272
      %v1367 = vunpack.c.h.b16 %v272
      %v1368 = vunpack.c.l.b16 %v273
      %v1369 = vunpack.c.l.b16 %v274
      %v1370 = vunpack.c.h.b16 %v274
      %v1371 = vunpack.c.l.b16 %v275
      %v1372 = vunpack.c.l.b16 %v276
      %v1373 = vunpack.c.h.b16 %v276
      %v1374 = vunpack.c.l.b16 %v277
      %v1375 = vunpack.c.l.b16 %v278
      %v1376 = vunpack.c.h.b16 %v278
      %v1377 = vunpack.c.l.b16 %v279
      %v1378 = vunpack.c.l.b16 %v280
      %v1379 = vunpack.c.h.b16 %v280
      %v1380 = vunpack.c.l.b16 %v281
      %v1381 = vunpack.c.l.b16 %v282
      %v1382 = vunpack.c.h.b16 %v282
      %v1383 = vunpack.c.l.b16 %v283
      %v1384 = vunpack.c.l.b16 %v284
      %v1385 = vunpack.c.h.b16 %v284
      %v1386 = vunpack.c.l.b16 %v285
      %v1387 = vunpack.c.l.b16 %v286
      %v1388 = vunpack.c.h.b16 %v286
      %v1389 = vunpack.c.l.b16 %v287
      %v1390 = vunpack.c.l.b16 %v288
      %v1391 = vunpack.c.h.b16 %v288
      %v1392 = vunpack.c.l.b16 %v289
      %v1393 = vunpack.c.l.b16 %v290
      %v1394 = vunpack.c.h.b16 %v290
      %v1395 = vunpack.c.l.b16 %v291
      %v1396 = vunpack.c.l.b16 %v292
      %v1397 = vunpack.c.h.b16 %v292
      %v1398 = vunpack.c.l.b16 %v293
      %v1399 = vpack.c.b16 %v1222, %v1219
      %v1400 = vpack.c.b16 %v1223, %v1220
      %v1401 = vpack.c.b16 %v1224, %v1221
      %v1402 = vpack.c.b16 %v1228, %v1225
      %v1403 = vpack.c.b16 %v1229, %v1226
      %v1404 = vpack.c.b16 %v1230, %v1227
      %v1405 = vpack.c.b16 %v1234, %v1231
      %v1406 = vpack.c.b16 %v1235, %v1232
      %v1407 = vpack.c.b16 %v1236, %v1233
      %v1408 = vpack.c.b16 %v1240, %v1237
      %v1409 = vpack.c.b16 %v1241, %v1238
      %v1410 = vpack.c.b16 %v1242, %v1239
      %v1411 = vpack.c.b16 %v1246, %v1243
      %v1412 = vpack.c.b16 %v1247, %v1244
      %v1413 = vpack.c.b16 %v1248, %v1245
      %v1414 = vpack.c.b16 %v1252, %v1249
      %v1415 = vpack.c.b16 %v1253, %v1250
      %v1416 = vpack.c.b16 %v1254, %v1251
      %v1417 = vpack.c.b16 %v1258, %v1255
      %v1418 = vpack.c.b16 %v1259, %v1256
      %v1419 = vpack.c.b16 %v1260, %v1257
      %v1420 = vpack.c.b16 %v1264, %v1261
      %v1421 = vpack.c.b16 %v1265, %v1262
      %v1422 = vpack.c.b16 %v1266, %v1263
      %v1423 = vpack.c.b16 %v1270, %v1267
      %v1424 = vpack.c.b16 %v1271, %v1268
      %v1425 = vpack.c.b16 %v1272, %v1269
      %v1426 = vpack.c.b16 %v1276, %v1273
      %v1427 = vpack.c.b16 %v1277, %v1274
      %v1428 = vpack.c.b16 %v1278, %v1275
      %v1429 = vpack.c.b16 %v1282, %v1279
      %v1430 = vpack.c.b16 %v1283, %v1280
      %v1431 = vpack.c.b16 %v1284, %v1281
      %v1432 = vpack.c.b16 %v1288, %v1285
      %v1433 = vpack.c.b16 %v1289, %v1286
      %v1434 = vpack.c.b16 %v1290, %v1287
      %v1435 = vpack.c.b16 %v1294, %v1291
      %v1436 = vpack.c.b16 %v1295, %v1292
      %v1437 = vpack.c.b16 %v1296, %v1293
      %v1438 = vpack.c.b16 %v1300, %v1297
      %v1439 = vpack.c.b16 %v1301, %v1298
      %v1440 = vpack.c.b16 %v1302, %v1299
      %v1441 = vpack.c.b16 %v1306, %v1303
      %v1442 = vpack.c.b16 %v1307, %v1304
      %v1443 = vpack.c.b16 %v1308, %v1305
      %v1444 = vpack.c.b16 %v1312, %v1309
      %v1445 = vpack.c.b16 %v1313, %v1310
      %v1446 = vpack.c.b16 %v1314, %v1311
      %v1447 = vpack.c.b16 %v1318, %v1315
      %v1448 = vpack.c.b16 %v1319, %v1316
      %v1449 = vpack.c.b16 %v1320, %v1317
      %v1450 = vpack.c.b16 %v1324, %v1321
      %v1451 = vpack.c.b16 %v1325, %v1322
      %v1452 = vpack.c.b16 %v1326, %v1323
      %v1453 = vpack.c.b16 %v1330, %v1327
      %v1454 = vpack.c.b16 %v1331, %v1328
      %v1455 = vpack.c.b16 %v1332, %v1329
      %v1456 = vpack.c.b16 %v1336, %v1333
      %v1457 = vpack.c.b16 %v1337, %v1334
      %v1458 = vpack.c.b16 %v1338, %v1335
      %v1459 = vpack.c.b16 %v1342, %v1339
      %v1460 = vpack.c.b16 %v1343, %v1340
      %v1461 = vpack.c.b16 %v1344, %v1341
      %v1462 = vpack.c.b16 %v1348, %v1345
      %v1463 = vpack.c.b16 %v1349, %v1346
      %v1464 = vpack.c.b16 %v1350, %v1347
      %v1465 = vpack.c.b16 %v1354, %v1351
      %v1466 = vpack.c.b16 %v1355, %v1352
      %v1467 = vpack.c.b16 %v1356, %v1353
      %v1468 = vpack.c.b16 %v1360, %v1357
      %v1469 = vpack.c.b16 %v1361, %v1358
      %v1470 = vpack.c.b16 %v1362, %v1359
      %v1471 = vpack.c.b16 %v1366, %v1363
      %v1472 = vpack.c.b16 %v1367, %v1364
      %v1473 = vpack.c.b16 %v1368, %v1365
      %v1474 = vpack.c.b16 %v1372, %v1369
      %v1475 = vpack.c.b16 %v1373, %v1370
      %v1476 = vpack.c.b16 %v1374, %v1371
      %v1477 = vpack.c.b16 %v1378, %v1375
      %v1478 = vpack.c.b16 %v1379, %v1376
      %v1479 = vpack.c.b16 %v1380, %v1377
      %v1480 = vpack.c.b16 %v1384, %v1381
      %v1481 = vpack.c.b16 %v1385, %v1382
      %v1482 = vpack.c.b16 %v1386, %v1383
      %v1483 = vpack.c.b16 %v1390, %v1387
      %v1484 = vpack.c.b16 %v1391, %v1388
      %v1485 = vpack.c.b16 %v1392, %v1389
      %v1486 = vpack.c.b16 %v1396, %v1393
      %v1487 = vpack.c.b16 %v1397, %v1394
      %v1488 = vpack.c.b16 %v1398, %v1395
      %v1579 = vsel %vm936, %v424, 0
      %1581 = vmatpush.bf16.msra.mxu0 %v1420
      %1582 = vmatpush.bf16.msra.mxu0 %v1417
      %1583 = vmatpush.bf16.msra.mxu0 %v1414
      %1584 = vmatpush.bf16.msra.mxu0 %v1411
      %1585 = vmatpush.bf16.msra.mxu0 %v1408
      %1586 = vmatpush.bf16.msra.mxu0 %v1405
      %1587 = vmatpush.bf16.msra.mxu0 %v1402
      %1588 = vmatpush.bf16.msra.mxu0 %v1399
      %1589 = vmatmul.bf16.gmra.mxu0 %v421
      %v1590 = vpop.f32.mrf.mxu0
      %v1591 = vadd.f32 %v989, %v1590
      %v1592 = vpop.f32.mrf.mxu0
      %1593 = vdwg.mxu0
      %1594 = vmatpush.bf16.msra.mxu0 %v1444
      %1595 = vmatpush.bf16.msra.mxu0 %v1441
      %1596 = vmatpush.bf16.msra.mxu0 %v1438
      %1597 = vmatpush.bf16.msra.mxu0 %v1435
      %1598 = vmatpush.bf16.msra.mxu0 %v1432
      %1599 = vmatpush.bf16.msra.mxu0 %v1429
      %1600 = vmatpush.bf16.msra.mxu0 %v1426
      %1601 = vmatpush.bf16.msra.mxu0 %v1423
      %1602 = vmatmul.bf16.gmra.mxu0 %v422
      %v1603 = vpop.f32.mrf.mxu0
      %v1604 = vadd.f32 %v1591, %v1603
      %v1605 = vpop.f32.mrf.mxu0
      %1606 = vdwg.mxu0
      %1607 = vmatpush.bf16.msra.mxu0 %v1468
      %1608 = vmatpush.bf16.msra.mxu0 %v1465
      %1609 = vmatpush.bf16.msra.mxu0 %v1462
      %1610 = vmatpush.bf16.msra.mxu0 %v1459
      %1611 = vmatpush.bf16.msra.mxu0 %v1456
      %1612 = vmatpush.bf16.msra.mxu0 %v1453
      %1613 = vmatpush.bf16.msra.mxu0 %v1450
      %1614 = vmatpush.bf16.msra.mxu0 %v1447
      %1615 = vmatmul.bf16.gmra.mxu0 %v423
      %v1616 = vpop.f32.mrf.mxu0
      %v1617 = vadd.f32 %v1604, %v1616
      %v1618 = vpop.f32.mrf.mxu0
      %1619 = vdwg.mxu0
      %1620 = vmatpush.bf16.msra.mxu0 0
      %1621 = vmatpush.bf16.msra.mxu0 0
      %1622 = vmatpush.bf16.msra.mxu0 %v1486
      %1623 = vmatpush.bf16.msra.mxu0 %v1483
      %1624 = vmatpush.bf16.msra.mxu0 %v1480
      %1625 = vmatpush.bf16.msra.mxu0 %v1477
      %1626 = vmatpush.bf16.msra.mxu0 %v1474
      %1627 = vmatpush.bf16.msra.mxu0 %v1471
      %1628 = vmatmul.bf16.gmra.mxu0 %v1579
      %v1629 = vpop.f32.mrf.mxu0
      %v1630 = vadd.f32 %v1617, %v1629
      %v1631 = vpop.f32.mrf.mxu0
      %1632 = vdwg.mxu0
      %1633 = vmatpush.bf16.msra.mxu0 %v1421
      %1634 = vmatpush.bf16.msra.mxu0 %v1418
      %1635 = vmatpush.bf16.msra.mxu0 %v1415
      %1636 = vmatpush.bf16.msra.mxu0 %v1412
      %1637 = vmatpush.bf16.msra.mxu0 %v1409
      %1638 = vmatpush.bf16.msra.mxu0 %v1406
      %1639 = vmatpush.bf16.msra.mxu0 %v1403
      %1640 = vmatpush.bf16.msra.mxu0 %v1400
      %1641 = vmatmul.bf16.gmra.mxu0 %v421
      %v1642 = vpop.f32.mrf.mxu0
      %v1643 = vadd.f32 %v1041, %v1642
      %v1644 = vpop.f32.mrf.mxu0
      %1645 = vdwg.mxu0
      %1646 = vmatpush.bf16.msra.mxu0 %v1445
      %1647 = vmatpush.bf16.msra.mxu0 %v1442
      %1648 = vmatpush.bf16.msra.mxu0 %v1439
      %1649 = vmatpush.bf16.msra.mxu0 %v1436
      %1650 = vmatpush.bf16.msra.mxu0 %v1433
      %1651 = vmatpush.bf16.msra.mxu0 %v1430
      %1652 = vmatpush.bf16.msra.mxu0 %v1427
      %1653 = vmatpush.bf16.msra.mxu0 %v1424
      %1654 = vmatmul.bf16.gmra.mxu0 %v422
      %v1655 = vpop.f32.mrf.mxu0
      %v1656 = vadd.f32 %v1643, %v1655
      %v1657 = vpop.f32.mrf.mxu0
      %1658 = vdwg.mxu0
      %1659 = vmatpush.bf16.msra.mxu0 %v1469
      %1660 = vmatpush.bf16.msra.mxu0 %v1466
      %1661 = vmatpush.bf16.msra.mxu0 %v1463
      %1662 = vmatpush.bf16.msra.mxu0 %v1460
      %1663 = vmatpush.bf16.msra.mxu0 %v1457
      %1664 = vmatpush.bf16.msra.mxu0 %v1454
      %1665 = vmatpush.bf16.msra.mxu0 %v1451
      %1666 = vmatpush.bf16.msra.mxu0 %v1448
      %1667 = vmatmul.bf16.gmra.mxu0 %v423
      %v1668 = vpop.f32.mrf.mxu0
      %v1669 = vadd.f32 %v1656, %v1668
      %v1670 = vpop.f32.mrf.mxu0
      %1671 = vdwg.mxu0
      %1672 = vmatpush.bf16.msra.mxu0 0
      %1673 = vmatpush.bf16.msra.mxu0 0
      %1674 = vmatpush.bf16.msra.mxu0 %v1487
      %1675 = vmatpush.bf16.msra.mxu0 %v1484
      %1676 = vmatpush.bf16.msra.mxu0 %v1481
      %1677 = vmatpush.bf16.msra.mxu0 %v1478
      %1678 = vmatpush.bf16.msra.mxu0 %v1475
      %1679 = vmatpush.bf16.msra.mxu0 %v1472
      %1680 = vmatmul.bf16.gmra.mxu0 %v1579
      %v1681 = vpop.f32.mrf.mxu0
      %v1682 = vadd.f32 %v1669, %v1681
      %v1683 = vpop.f32.mrf.mxu0
      %1684 = vdwg.mxu0
      %1685 = vmatpush.bf16.msra.mxu0 %v1422
      %1686 = vmatpush.bf16.msra.mxu0 %v1419
      %1687 = vmatpush.bf16.msra.mxu0 %v1416
      %1688 = vmatpush.bf16.msra.mxu0 %v1413
      %1689 = vmatpush.bf16.msra.mxu0 %v1410
      %1690 = vmatpush.bf16.msra.mxu0 %v1407
      %1691 = vmatpush.bf16.msra.mxu0 %v1404
      %1692 = vmatpush.bf16.msra.mxu0 %v1401
      %1693 = vmatmul.bf16.gmra.mxu0 %v421
      %v1694 = vpop.f32.mrf.mxu0
      %v1695 = vadd.f32 %v1093, %v1694
      %v1696 = vpop.f32.mrf.mxu0
      %1697 = vdwg.mxu0
      %1698 = vmatpush.bf16.msra.mxu0 %v1446
      %1699 = vmatpush.bf16.msra.mxu0 %v1443
      %1700 = vmatpush.bf16.msra.mxu0 %v1440
      %1701 = vmatpush.bf16.msra.mxu0 %v1437
      %1702 = vmatpush.bf16.msra.mxu0 %v1434
      %1703 = vmatpush.bf16.msra.mxu0 %v1431
      %1704 = vmatpush.bf16.msra.mxu0 %v1428
      %1705 = vmatpush.bf16.msra.mxu0 %v1425
      %1706 = vmatmul.bf16.gmra.mxu0 %v422
      %v1707 = vpop.f32.mrf.mxu0
      %v1708 = vadd.f32 %v1695, %v1707
      %v1709 = vpop.f32.mrf.mxu0
      %1710 = vdwg.mxu0
      %1711 = vmatpush.bf16.msra.mxu0 %v1470
      %1712 = vmatpush.bf16.msra.mxu0 %v1467
      %1713 = vmatpush.bf16.msra.mxu0 %v1464
      %1714 = vmatpush.bf16.msra.mxu0 %v1461
      %1715 = vmatpush.bf16.msra.mxu0 %v1458
      %1716 = vmatpush.bf16.msra.mxu0 %v1455
      %1717 = vmatpush.bf16.msra.mxu0 %v1452
      %1718 = vmatpush.bf16.msra.mxu0 %v1449
      %1719 = vmatmul.bf16.gmra.mxu0 %v423
      %v1720 = vpop.f32.mrf.mxu0
      %v1721 = vadd.f32 %v1708, %v1720
      %v1722 = vpop.f32.mrf.mxu0
      %1723 = vdwg.mxu0
      %1724 = vmatpush.bf16.msra.mxu0 0
      %1725 = vmatpush.bf16.msra.mxu0 0
      %1726 = vmatpush.bf16.msra.mxu0 %v1488
      %1727 = vmatpush.bf16.msra.mxu0 %v1485
      %1728 = vmatpush.bf16.msra.mxu0 %v1482
      %1729 = vmatpush.bf16.msra.mxu0 %v1479
      %1730 = vmatpush.bf16.msra.mxu0 %v1476
      %1731 = vmatpush.bf16.msra.mxu0 %v1473
      %1732 = vmatmul.bf16.gmra.mxu0 %v1579
      %v1733 = vpop.f32.mrf.mxu0
      %v1734 = vadd.f32 %v1721, %v1733
      %v1735 = vpop.f32.mrf.mxu0
      %1736 = vdwg.mxu0
      %s1737 = scalar_lea.vmem %s165, 16
      %v1738 = vld [vmem:[%s1737] sm:$0xff]
      %v1739 = vld [vmem:[%s1737 + $0x8] sm:$0xff]
      %s1740 = scalar_lea.vmem %s1, 720
      %v1741 = vld [vmem:[%s1740] sm:$0xff]
      %v1742 = vld [vmem:[%s1740 + $0x8] sm:$0xf]
      %v1743 = vld [vmem:[%s1740 + $0xc] sm:$0xff]
      %v1744 = vld [vmem:[%s1740 + $0x14] sm:$0xf]
      %v1745 = vld [vmem:[%s1740 + $0x18] sm:$0xff]
      %v1746 = vld [vmem:[%s1740 + $0x20] sm:$0xf]
      %v1747 = vld [vmem:[%s1740 + $0x24] sm:$0xff]
      %v1748 = vld [vmem:[%s1740 + $0x2c] sm:$0xf]
      %v1749 = vld [vmem:[%s1740 + $0x30] sm:$0xff]
      %v1750 = vld [vmem:[%s1740 + $0x38] sm:$0xf]
      %v1751 = vld [vmem:[%s1740 + $0x3c] sm:$0xff]
      %v1752 = vld [vmem:[%s1740 + $0x44] sm:$0xf]
      %v1753 = vld [vmem:[%s1740 + $0x48] sm:$0xff]
      %v1754 = vld [vmem:[%s1740 + $0x50] sm:$0xf]
      %v1755 = vld [vmem:[%s1740 + $0x54] sm:$0xff]
      %v1756 = vld [vmem:[%s1740 + $0x5c] sm:$0xf]
      %v1757 = vld [vmem:[%s1740 + $0x60] sm:$0xff]
      %v1758 = vld [vmem:[%s1740 + $0x68] sm:$0xf]
      %v1759 = vld [vmem:[%s1740 + $0x6c] sm:$0xff]
      %v1760 = vld [vmem:[%s1740 + $0x74] sm:$0xf]
      %v1761 = vld [vmem:[%s1740 + $0x78] sm:$0xff]
      %v1762 = vld [vmem:[%s1740 + $0x80] sm:$0xf]
      %v1763 = vld [vmem:[%s1740 + $0x84] sm:$0xff]
      %v1764 = vld [vmem:[%s1740 + $0x8c] sm:$0xf]
      %v1765 = vld [vmem:[%s1740 + $0x90] sm:$0xff]
      %v1766 = vld [vmem:[%s1740 + $0x98] sm:$0xf]
      %v1767 = vld [vmem:[%s1740 + $0x9c] sm:$0xff]
      %v1768 = vld [vmem:[%s1740 + $0xa4] sm:$0xf]
      %v1769 = vld [vmem:[%s1740 + $0xa8] sm:$0xff]
      %v1770 = vld [vmem:[%s1740 + $0xb0] sm:$0xf]
      %v1771 = vld [vmem:[%s1740 + $0xb4] sm:$0xff]
      %v1772 = vld [vmem:[%s1740 + $0xbc] sm:$0xf]
      %v1773 = vld [vmem:[%s1740 + $0xc0] sm:$0xff]
      %v1774 = vld [vmem:[%s1740 + $0xc8] sm:$0xf]
      %v1775 = vld [vmem:[%s1740 + $0xcc] sm:$0xff]
      %v1776 = vld [vmem:[%s1740 + $0xd4] sm:$0xf]
      %v1777 = vld [vmem:[%s1740 + $0xd8] sm:$0xff]
      %v1778 = vld [vmem:[%s1740 + $0xe0] sm:$0xf]
      %v1779 = vld [vmem:[%s1740 + $0xe4] sm:$0xff]
      %v1780 = vld [vmem:[%s1740 + $0xec] sm:$0xf]
      %v1781 = vld [vmem:[%s1740 + $0xf0] sm:$0xff]
      %v1782 = vld [vmem:[%s1740 + $0xf8] sm:$0xf]
      %v1783 = vld [vmem:[%s1740 + $0xfc] sm:$0xff]
      %v1784 = vld [vmem:[%s1740 + $0x104] sm:$0xf]
      %v1785 = vld [vmem:[%s1740 + $0x108] sm:$0xff]
      %v1786 = vld [vmem:[%s1740 + $0x110] sm:$0xf]
      %v1787 = vld [vmem:[%s1740 + $0x114] sm:$0xff]
      %v1788 = vld [vmem:[%s1740 + $0x11c] sm:$0xf]
      %v1789 = vld [vmem:[%s1740 + $0x120] sm:$0xff]
      %v1790 = vld [vmem:[%s1740 + $0x128] sm:$0xf]
      %v1791 = vld [vmem:[%s1740 + $0x12c] sm:$0xff]
      %v1792 = vld [vmem:[%s1740 + $0x134] sm:$0xf]
      %v1793 = vld [vmem:[%s1740 + $0x138] sm:$0xff]
      %v1794 = vld [vmem:[%s1740 + $0x140] sm:$0xf]
      %v1795 = vld [vmem:[%s1740 + $0x144] sm:$0xff]
      %v1796 = vld [vmem:[%s1740 + $0x14c] sm:$0xf]
      %v1797 = vld [vmem:[%s1740 + $0x150] sm:$0xff]
      %v1798 = vld [vmem:[%s1740 + $0x158] sm:$0xf]
      %v1799 = vld [vmem:[%s1740 + $0x15c] sm:$0xff]
      %v1800 = vld [vmem:[%s1740 + $0x164] sm:$0xf]
      %v1801 = vld [vmem:[%s1740 + $0x168] sm:$0xff]
      %v1802 = vld [vmem:[%s1740 + $0x170] sm:$0xf]
      %v1803 = vld [vmem:[%s1740 + $0x174] sm:$0xff]
      %v1804 = vld [vmem:[%s1740 + $0x17c] sm:$0xf]
      %v1805 = vld [vmem:[%s1740 + $0x180] sm:$0xff]
      %v1806 = vld [vmem:[%s1740 + $0x188] sm:$0xf]
      %v1807 = vld [vmem:[%s1740 + $0x18c] sm:$0xff]
      %v1808 = vld [vmem:[%s1740 + $0x194] sm:$0xf]
      %v1809 = vld [vmem:[%s1740 + $0x198] sm:$0xff]
      %v1810 = vld [vmem:[%s1740 + $0x1a0] sm:$0xf]
      %v1811 = vld [vmem:[%s1740 + $0x1a4] sm:$0xff]
      %v1812 = vld [vmem:[%s1740 + $0x1ac] sm:$0xf]
      %v1813 = vld [vmem:[%s1740 + $0x1b0] sm:$0xff]
      %v1814 = vld [vmem:[%s1740 + $0x1b8] sm:$0xf]
      %v1815 = vld [vmem:[%s1740 + $0x1bc] sm:$0xff]
      %v1816 = vld [vmem:[%s1740 + $0x1c4] sm:$0xf]
      %v1817 = vld [vmem:[%s1740 + $0x1c8] sm:$0xff]
      %v1818 = vld [vmem:[%s1740 + $0x1d0] sm:$0xf]
      %v1819 = vld [vmem:[%s1740 + $0x1d4] sm:$0xff]
      %v1820 = vld [vmem:[%s1740 + $0x1dc] sm:$0xf]
      %v1821 = vld [vmem:[%s1740 + $0x1e0] sm:$0xff]
      %v1822 = vld [vmem:[%s1740 + $0x1e8] sm:$0xf]
      %v1823 = vld [vmem:[%s1740 + $0x1ec] sm:$0xff]
      %v1824 = vld [vmem:[%s1740 + $0x1f4] sm:$0xf]
      %v1825 = vld [vmem:[%s1740 + $0x1f8] sm:$0xff]
      %v1826 = vld [vmem:[%s1740 + $0x200] sm:$0xf]
      %v1827 = vld [vmem:[%s1740 + $0x204] sm:$0xff]
      %v1828 = vld [vmem:[%s1740 + $0x20c] sm:$0xf]
      %v1829 = vld [vmem:[%s1740 + $0x210] sm:$0xff]
      %v1830 = vld [vmem:[%s1740 + $0x218] sm:$0xf]
      %v1831 = vld [vmem:[%s1740 + $0x21c] sm:$0xff]
      %v1832 = vld [vmem:[%s1740 + $0x224] sm:$0xf]
      %v1833 = vld [vmem:[%s1740 + $0x228] sm:$0xff]
      %v1834 = vld [vmem:[%s1740 + $0x230] sm:$0xf]
      %v1835 = vld [vmem:[%s1740 + $0x234] sm:$0xff]
      %v1836 = vld [vmem:[%s1740 + $0x23c] sm:$0xf]
      %v1837 = vld [vmem:[%s1740 + $0x240] sm:$0xff]
      %v1838 = vld [vmem:[%s1740 + $0x248] sm:$0xf]
      %v1839 = vld [vmem:[%s1740 + $0x24c] sm:$0xff]
      %v1840 = vld [vmem:[%s1740 + $0x254] sm:$0xf]
      %v1841 = vld [vmem:[%s1740 + $0x258] sm:$0xff]
      %v1842 = vld [vmem:[%s1740 + $0x260] sm:$0xf]
      %v1843 = vld [vmem:[%s1740 + $0x264] sm:$0xff]
      %v1844 = vld [vmem:[%s1740 + $0x26c] sm:$0xf]
      %v1845 = vld [vmem:[%s1740 + $0x270] sm:$0xff]
      %v1846 = vld [vmem:[%s1740 + $0x278] sm:$0xf]
      %v1847 = vld [vmem:[%s1740 + $0x27c] sm:$0xff]
      %v1848 = vld [vmem:[%s1740 + $0x284] sm:$0xf]
      %v1849 = vld [vmem:[%s1740 + $0x288] sm:$0xff]
      %v1850 = vld [vmem:[%s1740 + $0x290] sm:$0xf]
      %v1851 = vld [vmem:[%s1740 + $0x294] sm:$0xff]
      %v1852 = vld [vmem:[%s1740 + $0x29c] sm:$0xf]
      %v1853 = vld [vmem:[%s1740 + $0x2a0] sm:$0xff]
      %v1854 = vld [vmem:[%s1740 + $0x2a8] sm:$0xf]
      %v1855 = vld [vmem:[%s1740 + $0x2ac] sm:$0xff]
      %v1856 = vld [vmem:[%s1740 + $0x2b4] sm:$0xf]
      %v1857 = vld [vmem:[%s1740 + $0x2b8] sm:$0xff]
      %v1858 = vld [vmem:[%s1740 + $0x2c0] sm:$0xf]
      %v1859 = vld [vmem:[%s1740 + $0x2c4] sm:$0xff]
      %v1860 = vld [vmem:[%s1740 + $0x2cc] sm:$0xf]
      %v1863 = vunpack.c.l.b16 %v1738
      %v1864 = vunpack.c.h.b16 %v1738
      %v1865 = vunpack.c.l.b16 %v1739
      %v1866 = vunpack.c.h.b16 %v1739
      %v1867 = vpack.c.b16 %v1863, %v1863
      %v1868 = vpack.c.b16 %v1864, %v1864
      %v1869 = vpack.c.b16 %v1865, %v1865
      %v1870 = vpack.c.b16 %v1866, %v1866
      %v1994 = vunpack.c.l.b16 %v1741
      %v1995 = vunpack.c.h.b16 %v1741
      %v1996 = vunpack.c.l.b16 %v1742
      %v1997 = vunpack.c.l.b16 %v1743
      %v1998 = vunpack.c.h.b16 %v1743
      %v1999 = vunpack.c.l.b16 %v1744
      %v2000 = vunpack.c.l.b16 %v1745
      %v2001 = vunpack.c.h.b16 %v1745
      %v2002 = vunpack.c.l.b16 %v1746
      %v2003 = vunpack.c.l.b16 %v1747
      %v2004 = vunpack.c.h.b16 %v1747
      %v2005 = vunpack.c.l.b16 %v1748
      %v2006 = vunpack.c.l.b16 %v1749
      %v2007 = vunpack.c.h.b16 %v1749
      %v2008 = vunpack.c.l.b16 %v1750
      %v2009 = vunpack.c.l.b16 %v1751
      %v2010 = vunpack.c.h.b16 %v1751
      %v2011 = vunpack.c.l.b16 %v1752
      %v2012 = vunpack.c.l.b16 %v1753
      %v2013 = vunpack.c.h.b16 %v1753
      %v2014 = vunpack.c.l.b16 %v1754
      %v2015 = vunpack.c.l.b16 %v1755
      %v2016 = vunpack.c.h.b16 %v1755
      %v2017 = vunpack.c.l.b16 %v1756
      %v2018 = vunpack.c.l.b16 %v1757
      %v2019 = vunpack.c.h.b16 %v1757
      %v2020 = vunpack.c.l.b16 %v1758
      %v2021 = vunpack.c.l.b16 %v1759
      %v2022 = vunpack.c.h.b16 %v1759
      %v2023 = vunpack.c.l.b16 %v1760
      %v2024 = vunpack.c.l.b16 %v1761
      %v2025 = vunpack.c.h.b16 %v1761
      %v2026 = vunpack.c.l.b16 %v1762
      %v2027 = vunpack.c.l.b16 %v1763
      %v2028 = vunpack.c.h.b16 %v1763
      %v2029 = vunpack.c.l.b16 %v1764
      %v2030 = vunpack.c.l.b16 %v1765
      %v2031 = vunpack.c.h.b16 %v1765
      %v2032 = vunpack.c.l.b16 %v1766
      %v2033 = vunpack.c.l.b16 %v1767
      %v2034 = vunpack.c.h.b16 %v1767
      %v2035 = vunpack.c.l.b16 %v1768
      %v2036 = vunpack.c.l.b16 %v1769
      %v2037 = vunpack.c.h.b16 %v1769
      %v2038 = vunpack.c.l.b16 %v1770
      %v2039 = vunpack.c.l.b16 %v1771
      %v2040 = vunpack.c.h.b16 %v1771
      %v2041 = vunpack.c.l.b16 %v1772
      %v2042 = vunpack.c.l.b16 %v1773
      %v2043 = vunpack.c.h.b16 %v1773
      %v2044 = vunpack.c.l.b16 %v1774
      %v2045 = vunpack.c.l.b16 %v1775
      %v2046 = vunpack.c.h.b16 %v1775
      %v2047 = vunpack.c.l.b16 %v1776
      %v2048 = vunpack.c.l.b16 %v1777
      %v2049 = vunpack.c.h.b16 %v1777
      %v2050 = vunpack.c.l.b16 %v1778
      %v2051 = vunpack.c.l.b16 %v1779
      %v2052 = vunpack.c.h.b16 %v1779
      %v2053 = vunpack.c.l.b16 %v1780
      %v2054 = vunpack.c.l.b16 %v1781
      %v2055 = vunpack.c.h.b16 %v1781
      %v2056 = vunpack.c.l.b16 %v1782
      %v2057 = vunpack.c.l.b16 %v1783
      %v2058 = vunpack.c.h.b16 %v1783
      %v2059 = vunpack.c.l.b16 %v1784
      %v2060 = vunpack.c.l.b16 %v1785
      %v2061 = vunpack.c.h.b16 %v1785
      %v2062 = vunpack.c.l.b16 %v1786
      %v2063 = vunpack.c.l.b16 %v1787
      %v2064 = vunpack.c.h.b16 %v1787
      %v2065 = vunpack.c.l.b16 %v1788
      %v2066 = vunpack.c.l.b16 %v1789
      %v2067 = vunpack.c.h.b16 %v1789
      %v2068 = vunpack.c.l.b16 %v1790
      %v2069 = vunpack.c.l.b16 %v1791
      %v2070 = vunpack.c.h.b16 %v1791
      %v2071 = vunpack.c.l.b16 %v1792
      %v2072 = vunpack.c.l.b16 %v1793
      %v2073 = vunpack.c.h.b16 %v1793
      %v2074 = vunpack.c.l.b16 %v1794
      %v2075 = vunpack.c.l.b16 %v1795
      %v2076 = vunpack.c.h.b16 %v1795
      %v2077 = vunpack.c.l.b16 %v1796
      %v2078 = vunpack.c.l.b16 %v1797
      %v2079 = vunpack.c.h.b16 %v1797
      %v2080 = vunpack.c.l.b16 %v1798
      %v2081 = vunpack.c.l.b16 %v1799
      %v2082 = vunpack.c.h.b16 %v1799
      %v2083 = vunpack.c.l.b16 %v1800
      %v2084 = vunpack.c.l.b16 %v1801
      %v2085 = vunpack.c.h.b16 %v1801
      %v2086 = vunpack.c.l.b16 %v1802
      %v2087 = vunpack.c.l.b16 %v1803
      %v2088 = vunpack.c.h.b16 %v1803
      %v2089 = vunpack.c.l.b16 %v1804
      %v2090 = vunpack.c.l.b16 %v1805
      %v2091 = vunpack.c.h.b16 %v1805
      %v2092 = vunpack.c.l.b16 %v1806
      %v2093 = vunpack.c.l.b16 %v1807
      %v2094 = vunpack.c.h.b16 %v1807
      %v2095 = vunpack.c.l.b16 %v1808
      %v2096 = vunpack.c.l.b16 %v1809
      %v2097 = vunpack.c.h.b16 %v1809
      %v2098 = vunpack.c.l.b16 %v1810
      %v2099 = vunpack.c.l.b16 %v1811
      %v2100 = vunpack.c.h.b16 %v1811
      %v2101 = vunpack.c.l.b16 %v1812
      %v2102 = vunpack.c.l.b16 %v1813
      %v2103 = vunpack.c.h.b16 %v1813
      %v2104 = vunpack.c.l.b16 %v1814
      %v2105 = vunpack.c.l.b16 %v1815
      %v2106 = vunpack.c.h.b16 %v1815
      %v2107 = vunpack.c.l.b16 %v1816
      %v2108 = vunpack.c.l.b16 %v1817
      %v2109 = vunpack.c.h.b16 %v1817
      %v2110 = vunpack.c.l.b16 %v1818
      %v2111 = vunpack.c.l.b16 %v1819
      %v2112 = vunpack.c.h.b16 %v1819
      %v2113 = vunpack.c.l.b16 %v1820
      %v2114 = vunpack.c.l.b16 %v1821
      %v2115 = vunpack.c.h.b16 %v1821
      %v2116 = vunpack.c.l.b16 %v1822
      %v2117 = vunpack.c.l.b16 %v1823
      %v2118 = vunpack.c.h.b16 %v1823
      %v2119 = vunpack.c.l.b16 %v1824
      %v2120 = vunpack.c.l.b16 %v1825
      %v2121 = vunpack.c.h.b16 %v1825
      %v2122 = vunpack.c.l.b16 %v1826
      %v2123 = vunpack.c.l.b16 %v1827
      %v2124 = vunpack.c.h.b16 %v1827
      %v2125 = vunpack.c.l.b16 %v1828
      %v2126 = vunpack.c.l.b16 %v1829
      %v2127 = vunpack.c.h.b16 %v1829
      %v2128 = vunpack.c.l.b16 %v1830
      %v2129 = vunpack.c.l.b16 %v1831
      %v2130 = vunpack.c.h.b16 %v1831
      %v2131 = vunpack.c.l.b16 %v1832
      %v2132 = vunpack.c.l.b16 %v1833
      %v2133 = vunpack.c.h.b16 %v1833
      %v2134 = vunpack.c.l.b16 %v1834
      %v2135 = vunpack.c.l.b16 %v1835
      %v2136 = vunpack.c.h.b16 %v1835
      %v2137 = vunpack.c.l.b16 %v1836
      %v2138 = vunpack.c.l.b16 %v1837
      %v2139 = vunpack.c.h.b16 %v1837
      %v2140 = vunpack.c.l.b16 %v1838
      %v2141 = vunpack.c.l.b16 %v1839
      %v2142 = vunpack.c.h.b16 %v1839
      %v2143 = vunpack.c.l.b16 %v1840
      %v2144 = vunpack.c.l.b16 %v1841
      %v2145 = vunpack.c.h.b16 %v1841
      %v2146 = vunpack.c.l.b16 %v1842
      %v2147 = vunpack.c.l.b16 %v1843
      %v2148 = vunpack.c.h.b16 %v1843
      %v2149 = vunpack.c.l.b16 %v1844
      %v2150 = vunpack.c.l.b16 %v1845
      %v2151 = vunpack.c.h.b16 %v1845
      %v2152 = vunpack.c.l.b16 %v1846
      %v2153 = vunpack.c.l.b16 %v1847
      %v2154 = vunpack.c.h.b16 %v1847
      %v2155 = vunpack.c.l.b16 %v1848
      %v2156 = vunpack.c.l.b16 %v1849
      %v2157 = vunpack.c.h.b16 %v1849
      %v2158 = vunpack.c.l.b16 %v1850
      %v2159 = vunpack.c.l.b16 %v1851
      %v2160 = vunpack.c.h.b16 %v1851
      %v2161 = vunpack.c.l.b16 %v1852
      %v2162 = vunpack.c.l.b16 %v1853
      %v2163 = vunpack.c.h.b16 %v1853
      %v2164 = vunpack.c.l.b16 %v1854
      %v2165 = vunpack.c.l.b16 %v1855
      %v2166 = vunpack.c.h.b16 %v1855
      %v2167 = vunpack.c.l.b16 %v1856
      %v2168 = vunpack.c.l.b16 %v1857
      %v2169 = vunpack.c.h.b16 %v1857
      %v2170 = vunpack.c.l.b16 %v1858
      %v2171 = vunpack.c.l.b16 %v1859
      %v2172 = vunpack.c.h.b16 %v1859
      %v2173 = vunpack.c.l.b16 %v1860
      %v2174 = vpack.c.b16 %v1997, %v1994
      %v2175 = vpack.c.b16 %v1998, %v1995
      %v2176 = vpack.c.b16 %v1999, %v1996
      %v2177 = vpack.c.b16 %v2003, %v2000
      %v2178 = vpack.c.b16 %v2004, %v2001
      %v2179 = vpack.c.b16 %v2005, %v2002
      %v2180 = vpack.c.b16 %v2009, %v2006
      %v2181 = vpack.c.b16 %v2010, %v2007
      %v2182 = vpack.c.b16 %v2011, %v2008
      %v2183 = vpack.c.b16 %v2015, %v2012
      %v2184 = vpack.c.b16 %v2016, %v2013
      %v2185 = vpack.c.b16 %v2017, %v2014
      %v2186 = vpack.c.b16 %v2021, %v2018
      %v2187 = vpack.c.b16 %v2022, %v2019
      %v2188 = vpack.c.b16 %v2023, %v2020
      %v2189 = vpack.c.b16 %v2027, %v2024
      %v2190 = vpack.c.b16 %v2028, %v2025
      %v2191 = vpack.c.b16 %v2029, %v2026
      %v2192 = vpack.c.b16 %v2033, %v2030
      %v2193 = vpack.c.b16 %v2034, %v2031
      %v2194 = vpack.c.b16 %v2035, %v2032
      %v2195 = vpack.c.b16 %v2039, %v2036
      %v2196 = vpack.c.b16 %v2040, %v2037
      %v2197 = vpack.c.b16 %v2041, %v2038
      %v2198 = vpack.c.b16 %v2045, %v2042
      %v2199 = vpack.c.b16 %v2046, %v2043
      %v2200 = vpack.c.b16 %v2047, %v2044
      %v2201 = vpack.c.b16 %v2051, %v2048
      %v2202 = vpack.c.b16 %v2052, %v2049
      %v2203 = vpack.c.b16 %v2053, %v2050
      %v2204 = vpack.c.b16 %v2057, %v2054
      %v2205 = vpack.c.b16 %v2058, %v2055
      %v2206 = vpack.c.b16 %v2059, %v2056
      %v2207 = vpack.c.b16 %v2063, %v2060
      %v2208 = vpack.c.b16 %v2064, %v2061
      %v2209 = vpack.c.b16 %v2065, %v2062
      %v2210 = vpack.c.b16 %v2069, %v2066
      %v2211 = vpack.c.b16 %v2070, %v2067
      %v2212 = vpack.c.b16 %v2071, %v2068
      %v2213 = vpack.c.b16 %v2075, %v2072
      %v2214 = vpack.c.b16 %v2076, %v2073
      %v2215 = vpack.c.b16 %v2077, %v2074
      %v2216 = vpack.c.b16 %v2081, %v2078
      %v2217 = vpack.c.b16 %v2082, %v2079
      %v2218 = vpack.c.b16 %v2083, %v2080
      %v2219 = vpack.c.b16 %v2087, %v2084
      %v2220 = vpack.c.b16 %v2088, %v2085
      %v2221 = vpack.c.b16 %v2089, %v2086
      %v2222 = vpack.c.b16 %v2093, %v2090
      %v2223 = vpack.c.b16 %v2094, %v2091
      %v2224 = vpack.c.b16 %v2095, %v2092
      %v2225 = vpack.c.b16 %v2099, %v2096
      %v2226 = vpack.c.b16 %v2100, %v2097
      %v2227 = vpack.c.b16 %v2101, %v2098
      %v2228 = vpack.c.b16 %v2105, %v2102
      %v2229 = vpack.c.b16 %v2106, %v2103
      %v2230 = vpack.c.b16 %v2107, %v2104
      %v2231 = vpack.c.b16 %v2111, %v2108
      %v2232 = vpack.c.b16 %v2112, %v2109
      %v2233 = vpack.c.b16 %v2113, %v2110
      %v2234 = vpack.c.b16 %v2117, %v2114
      %v2235 = vpack.c.b16 %v2118, %v2115
      %v2236 = vpack.c.b16 %v2119, %v2116
      %v2237 = vpack.c.b16 %v2123, %v2120
      %v2238 = vpack.c.b16 %v2124, %v2121
      %v2239 = vpack.c.b16 %v2125, %v2122
      %v2240 = vpack.c.b16 %v2129, %v2126
      %v2241 = vpack.c.b16 %v2130, %v2127
      %v2242 = vpack.c.b16 %v2131, %v2128
      %v2243 = vpack.c.b16 %v2135, %v2132
      %v2244 = vpack.c.b16 %v2136, %v2133
      %v2245 = vpack.c.b16 %v2137, %v2134
      %v2246 = vpack.c.b16 %v2141, %v2138
      %v2247 = vpack.c.b16 %v2142, %v2139
      %v2248 = vpack.c.b16 %v2143, %v2140
      %v2249 = vpack.c.b16 %v2147, %v2144
      %v2250 = vpack.c.b16 %v2148, %v2145
      %v2251 = vpack.c.b16 %v2149, %v2146
      %v2252 = vpack.c.b16 %v2153, %v2150
      %v2253 = vpack.c.b16 %v2154, %v2151
      %v2254 = vpack.c.b16 %v2155, %v2152
      %v2255 = vpack.c.b16 %v2159, %v2156
      %v2256 = vpack.c.b16 %v2160, %v2157
      %v2257 = vpack.c.b16 %v2161, %v2158
      %v2258 = vpack.c.b16 %v2165, %v2162
      %v2259 = vpack.c.b16 %v2166, %v2163
      %v2260 = vpack.c.b16 %v2167, %v2164
      %v2261 = vpack.c.b16 %v2171, %v2168
      %v2262 = vpack.c.b16 %v2172, %v2169
      %v2263 = vpack.c.b16 %v2173, %v2170
      %v2355 = vsel %vm936, %v1870, 0
      %2357 = vmatpush.bf16.msra.mxu0 %v2195
      %2358 = vmatpush.bf16.msra.mxu0 %v2192
      %2359 = vmatpush.bf16.msra.mxu0 %v2189
      %2360 = vmatpush.bf16.msra.mxu0 %v2186
      %2361 = vmatpush.bf16.msra.mxu0 %v2183
      %2362 = vmatpush.bf16.msra.mxu0 %v2180
      %2363 = vmatpush.bf16.msra.mxu0 %v2177
      %2364 = vmatpush.bf16.msra.mxu0 %v2174
      %2365 = vmatmul.bf16.gmra.mxu0 %v1867
      %v2366 = vpop.f32.mrf.mxu0
      %v2367 = vadd.f32 0.0, %v2366
      %v2368 = vpop.f32.mrf.mxu0
      %2369 = vdwg.mxu0
      %2370 = vmatpush.bf16.msra.mxu0 %v2219
      %2371 = vmatpush.bf16.msra.mxu0 %v2216
      %2372 = vmatpush.bf16.msra.mxu0 %v2213
      %2373 = vmatpush.bf16.msra.mxu0 %v2210
      %2374 = vmatpush.bf16.msra.mxu0 %v2207
      %2375 = vmatpush.bf16.msra.mxu0 %v2204
      %2376 = vmatpush.bf16.msra.mxu0 %v2201
      %2377 = vmatpush.bf16.msra.mxu0 %v2198
      %2378 = vmatmul.bf16.gmra.mxu0 %v1868
      %v2379 = vpop.f32.mrf.mxu0
      %v2380 = vadd.f32 %v2367, %v2379
      %v2381 = vpop.f32.mrf.mxu0
      %2382 = vdwg.mxu0
      %2383 = vmatpush.bf16.msra.mxu0 %v2243
      %2384 = vmatpush.bf16.msra.mxu0 %v2240
      %2385 = vmatpush.bf16.msra.mxu0 %v2237
      %2386 = vmatpush.bf16.msra.mxu0 %v2234
      %2387 = vmatpush.bf16.msra.mxu0 %v2231
      %2388 = vmatpush.bf16.msra.mxu0 %v2228
      %2389 = vmatpush.bf16.msra.mxu0 %v2225
      %2390 = vmatpush.bf16.msra.mxu0 %v2222
      %2391 = vmatmul.bf16.gmra.mxu0 %v1869
      %v2392 = vpop.f32.mrf.mxu0
      %v2393 = vadd.f32 %v2380, %v2392
      %v2394 = vpop.f32.mrf.mxu0
      %2395 = vdwg.mxu0
      %2396 = vmatpush.bf16.msra.mxu0 0
      %2397 = vmatpush.bf16.msra.mxu0 0
      %2398 = vmatpush.bf16.msra.mxu0 %v2261
      %2399 = vmatpush.bf16.msra.mxu0 %v2258
      %2400 = vmatpush.bf16.msra.mxu0 %v2255
      %2401 = vmatpush.bf16.msra.mxu0 %v2252
      %2402 = vmatpush.bf16.msra.mxu0 %v2249
      %2403 = vmatpush.bf16.msra.mxu0 %v2246
      %2404 = vmatmul.bf16.gmra.mxu0 %v2355
      %v2405 = vpop.f32.mrf.mxu0
      %v2406 = vadd.f32 %v2393, %v2405
      %v2407 = vpop.f32.mrf.mxu0
      %2408 = vdwg.mxu0
      %2409 = vmatpush.bf16.msra.mxu0 %v2196
      %2410 = vmatpush.bf16.msra.mxu0 %v2193
      %2411 = vmatpush.bf16.msra.mxu0 %v2190
      %2412 = vmatpush.bf16.msra.mxu0 %v2187
      %2413 = vmatpush.bf16.msra.mxu0 %v2184
      %2414 = vmatpush.bf16.msra.mxu0 %v2181
      %2415 = vmatpush.bf16.msra.mxu0 %v2178
      %2416 = vmatpush.bf16.msra.mxu0 %v2175
      %2417 = vmatmul.bf16.gmra.mxu0 %v1867
      %v2418 = vpop.f32.mrf.mxu0
      %v2419 = vadd.f32 0.0, %v2418
      %v2420 = vpop.f32.mrf.mxu0
      %2421 = vdwg.mxu0
      %2422 = vmatpush.bf16.msra.mxu0 %v2220
      %2423 = vmatpush.bf16.msra.mxu0 %v2217
      %2424 = vmatpush.bf16.msra.mxu0 %v2214
      %2425 = vmatpush.bf16.msra.mxu0 %v2211
      %2426 = vmatpush.bf16.msra.mxu0 %v2208
      %2427 = vmatpush.bf16.msra.mxu0 %v2205
      %2428 = vmatpush.bf16.msra.mxu0 %v2202
      %2429 = vmatpush.bf16.msra.mxu0 %v2199
      %2430 = vmatmul.bf16.gmra.mxu0 %v1868
      %v2431 = vpop.f32.mrf.mxu0
      %v2432 = vadd.f32 %v2419, %v2431
      %v2433 = vpop.f32.mrf.mxu0
      %2434 = vdwg.mxu0
      %2435 = vmatpush.bf16.msra.mxu0 %v2244
      %2436 = vmatpush.bf16.msra.mxu0 %v2241
      %2437 = vmatpush.bf16.msra.mxu0 %v2238
      %2438 = vmatpush.bf16.msra.mxu0 %v2235
      %2439 = vmatpush.bf16.msra.mxu0 %v2232
      %2440 = vmatpush.bf16.msra.mxu0 %v2229
      %2441 = vmatpush.bf16.msra.mxu0 %v2226
      %2442 = vmatpush.bf16.msra.mxu0 %v2223
      %2443 = vmatmul.bf16.gmra.mxu0 %v1869
      %v2444 = vpop.f32.mrf.mxu0
      %v2445 = vadd.f32 %v2432, %v2444
      %v2446 = vpop.f32.mrf.mxu0
      %2447 = vdwg.mxu0
      %2448 = vmatpush.bf16.msra.mxu0 0
      %2449 = vmatpush.bf16.msra.mxu0 0
      %2450 = vmatpush.bf16.msra.mxu0 %v2262
      %2451 = vmatpush.bf16.msra.mxu0 %v2259
      %2452 = vmatpush.bf16.msra.mxu0 %v2256
      %2453 = vmatpush.bf16.msra.mxu0 %v2253
      %2454 = vmatpush.bf16.msra.mxu0 %v2250
      %2455 = vmatpush.bf16.msra.mxu0 %v2247
      %2456 = vmatmul.bf16.gmra.mxu0 %v2355
      %v2457 = vpop.f32.mrf.mxu0
      %v2458 = vadd.f32 %v2445, %v2457
      %v2459 = vpop.f32.mrf.mxu0
      %2460 = vdwg.mxu0
      %2461 = vmatpush.bf16.msra.mxu0 %v2197
      %2462 = vmatpush.bf16.msra.mxu0 %v2194
      %2463 = vmatpush.bf16.msra.mxu0 %v2191
      %2464 = vmatpush.bf16.msra.mxu0 %v2188
      %2465 = vmatpush.bf16.msra.mxu0 %v2185
      %2466 = vmatpush.bf16.msra.mxu0 %v2182
      %2467 = vmatpush.bf16.msra.mxu0 %v2179
      %2468 = vmatpush.bf16.msra.mxu0 %v2176
      %2469 = vmatmul.bf16.gmra.mxu0 %v1867
      %v2470 = vpop.f32.mrf.mxu0
      %v2471 = vadd.f32 0.0, %v2470
      %v2472 = vpop.f32.mrf.mxu0
      %2473 = vdwg.mxu0
      %2474 = vmatpush.bf16.msra.mxu0 %v2221
      %2475 = vmatpush.bf16.msra.mxu0 %v2218
      %2476 = vmatpush.bf16.msra.mxu0 %v2215
      %2477 = vmatpush.bf16.msra.mxu0 %v2212
      %2478 = vmatpush.bf16.msra.mxu0 %v2209
      %2479 = vmatpush.bf16.msra.mxu0 %v2206
      %2480 = vmatpush.bf16.msra.mxu0 %v2203
      %2481 = vmatpush.bf16.msra.mxu0 %v2200
      %2482 = vmatmul.bf16.gmra.mxu0 %v1868
      %v2483 = vpop.f32.mrf.mxu0
      %v2484 = vadd.f32 %v2471, %v2483
      %v2485 = vpop.f32.mrf.mxu0
      %2486 = vdwg.mxu0
      %2487 = vmatpush.bf16.msra.mxu0 %v2245
      %2488 = vmatpush.bf16.msra.mxu0 %v2242
      %2489 = vmatpush.bf16.msra.mxu0 %v2239
      %2490 = vmatpush.bf16.msra.mxu0 %v2236
      %2491 = vmatpush.bf16.msra.mxu0 %v2233
      %2492 = vmatpush.bf16.msra.mxu0 %v2230
      %2493 = vmatpush.bf16.msra.mxu0 %v2227
      %2494 = vmatpush.bf16.msra.mxu0 %v2224
      %2495 = vmatmul.bf16.gmra.mxu0 %v1869
      %v2496 = vpop.f32.mrf.mxu0
      %v2497 = vadd.f32 %v2484, %v2496
      %v2498 = vpop.f32.mrf.mxu0
      %2499 = vdwg.mxu0
      %2500 = vmatpush.bf16.msra.mxu0 0
      %2501 = vmatpush.bf16.msra.mxu0 0
      %2502 = vmatpush.bf16.msra.mxu0 %v2263
      %2503 = vmatpush.bf16.msra.mxu0 %v2260
      %2504 = vmatpush.bf16.msra.mxu0 %v2257
      %2505 = vmatpush.bf16.msra.mxu0 %v2254
      %2506 = vmatpush.bf16.msra.mxu0 %v2251
      %2507 = vmatpush.bf16.msra.mxu0 %v2248
      %2508 = vmatmul.bf16.gmra.mxu0 %v2355
      %v2509 = vpop.f32.mrf.mxu0
      %v2510 = vadd.f32 %v2497, %v2509
      %v2511 = vpop.f32.mrf.mxu0
      %2512 = vdwg.mxu0
      %v2513 = vadd.f32 %v1630, %v2406
      %v2514 = vadd.f32 %v1682, %v2458
      %v2515 = vadd.f32 %v1734, %v2510
      %s2516 = scalar_lea.vmem %s1, 2160
      %v2517 = vld [vmem:[%s2516] sm:$0xff]
      %v2518 = vld [vmem:[%s2516 + $0x8] sm:$0xf]
      %v2519 = vld [vmem:[%s2516 + $0xc] sm:$0xff]
      %v2520 = vld [vmem:[%s2516 + $0x14] sm:$0xf]
      %v2521 = vld [vmem:[%s2516 + $0x18] sm:$0xff]
      %v2522 = vld [vmem:[%s2516 + $0x20] sm:$0xf]
      %v2523 = vld [vmem:[%s2516 + $0x24] sm:$0xff]
      %v2524 = vld [vmem:[%s2516 + $0x2c] sm:$0xf]
      %v2525 = vld [vmem:[%s2516 + $0x30] sm:$0xff]
      %v2526 = vld [vmem:[%s2516 + $0x38] sm:$0xf]
      %v2527 = vld [vmem:[%s2516 + $0x3c] sm:$0xff]
      %v2528 = vld [vmem:[%s2516 + $0x44] sm:$0xf]
      %v2529 = vld [vmem:[%s2516 + $0x48] sm:$0xff]
      %v2530 = vld [vmem:[%s2516 + $0x50] sm:$0xf]
      %v2531 = vld [vmem:[%s2516 + $0x54] sm:$0xff]
      %v2532 = vld [vmem:[%s2516 + $0x5c] sm:$0xf]
      %v2533 = vld [vmem:[%s2516 + $0x60] sm:$0xff]
      %v2534 = vld [vmem:[%s2516 + $0x68] sm:$0xf]
      %v2535 = vld [vmem:[%s2516 + $0x6c] sm:$0xff]
      %v2536 = vld [vmem:[%s2516 + $0x74] sm:$0xf]
      %v2537 = vld [vmem:[%s2516 + $0x78] sm:$0xff]
      %v2538 = vld [vmem:[%s2516 + $0x80] sm:$0xf]
      %v2539 = vld [vmem:[%s2516 + $0x84] sm:$0xff]
      %v2540 = vld [vmem:[%s2516 + $0x8c] sm:$0xf]
      %v2541 = vld [vmem:[%s2516 + $0x90] sm:$0xff]
      %v2542 = vld [vmem:[%s2516 + $0x98] sm:$0xf]
      %v2543 = vld [vmem:[%s2516 + $0x9c] sm:$0xff]
      %v2544 = vld [vmem:[%s2516 + $0xa4] sm:$0xf]
      %v2545 = vld [vmem:[%s2516 + $0xa8] sm:$0xff]
      %v2546 = vld [vmem:[%s2516 + $0xb0] sm:$0xf]
      %v2547 = vld [vmem:[%s2516 + $0xb4] sm:$0xff]
      %v2548 = vld [vmem:[%s2516 + $0xbc] sm:$0xf]
      %v2549 = vld [vmem:[%s2516 + $0xc0] sm:$0xff]
      %v2550 = vld [vmem:[%s2516 + $0xc8] sm:$0xf]
      %v2551 = vld [vmem:[%s2516 + $0xcc] sm:$0xff]
      %v2552 = vld [vmem:[%s2516 + $0xd4] sm:$0xf]
      %v2553 = vld [vmem:[%s2516 + $0xd8] sm:$0xff]
      %v2554 = vld [vmem:[%s2516 + $0xe0] sm:$0xf]
      %v2555 = vld [vmem:[%s2516 + $0xe4] sm:$0xff]
      %v2556 = vld [vmem:[%s2516 + $0xec] sm:$0xf]
      %v2557 = vld [vmem:[%s2516 + $0xf0] sm:$0xff]
      %v2558 = vld [vmem:[%s2516 + $0xf8] sm:$0xf]
      %v2559 = vld [vmem:[%s2516 + $0xfc] sm:$0xff]
      %v2560 = vld [vmem:[%s2516 + $0x104] sm:$0xf]
      %v2561 = vld [vmem:[%s2516 + $0x108] sm:$0xff]
      %v2562 = vld [vmem:[%s2516 + $0x110] sm:$0xf]
      %v2563 = vld [vmem:[%s2516 + $0x114] sm:$0xff]
      %v2564 = vld [vmem:[%s2516 + $0x11c] sm:$0xf]
      %v2565 = vld [vmem:[%s2516 + $0x120] sm:$0xff]
      %v2566 = vld [vmem:[%s2516 + $0x128] sm:$0xf]
      %v2567 = vld [vmem:[%s2516 + $0x12c] sm:$0xff]
      %v2568 = vld [vmem:[%s2516 + $0x134] sm:$0xf]
      %v2569 = vld [vmem:[%s2516 + $0x138] sm:$0xff]
      %v2570 = vld [vmem:[%s2516 + $0x140] sm:$0xf]
      %v2571 = vld [vmem:[%s2516 + $0x144] sm:$0xff]
      %v2572 = vld [vmem:[%s2516 + $0x14c] sm:$0xf]
      %v2573 = vld [vmem:[%s2516 + $0x150] sm:$0xff]
      %v2574 = vld [vmem:[%s2516 + $0x158] sm:$0xf]
      %v2575 = vld [vmem:[%s2516 + $0x15c] sm:$0xff]
      %v2576 = vld [vmem:[%s2516 + $0x164] sm:$0xf]
      %v2577 = vld [vmem:[%s2516 + $0x168] sm:$0xff]
      %v2578 = vld [vmem:[%s2516 + $0x170] sm:$0xf]
      %v2579 = vld [vmem:[%s2516 + $0x174] sm:$0xff]
      %v2580 = vld [vmem:[%s2516 + $0x17c] sm:$0xf]
      %v2581 = vld [vmem:[%s2516 + $0x180] sm:$0xff]
      %v2582 = vld [vmem:[%s2516 + $0x188] sm:$0xf]
      %v2583 = vld [vmem:[%s2516 + $0x18c] sm:$0xff]
      %v2584 = vld [vmem:[%s2516 + $0x194] sm:$0xf]
      %v2585 = vld [vmem:[%s2516 + $0x198] sm:$0xff]
      %v2586 = vld [vmem:[%s2516 + $0x1a0] sm:$0xf]
      %v2587 = vld [vmem:[%s2516 + $0x1a4] sm:$0xff]
      %v2588 = vld [vmem:[%s2516 + $0x1ac] sm:$0xf]
      %v2589 = vld [vmem:[%s2516 + $0x1b0] sm:$0xff]
      %v2590 = vld [vmem:[%s2516 + $0x1b8] sm:$0xf]
      %v2591 = vld [vmem:[%s2516 + $0x1bc] sm:$0xff]
      %v2592 = vld [vmem:[%s2516 + $0x1c4] sm:$0xf]
      %v2593 = vld [vmem:[%s2516 + $0x1c8] sm:$0xff]
      %v2594 = vld [vmem:[%s2516 + $0x1d0] sm:$0xf]
      %v2595 = vld [vmem:[%s2516 + $0x1d4] sm:$0xff]
      %v2596 = vld [vmem:[%s2516 + $0x1dc] sm:$0xf]
      %v2597 = vld [vmem:[%s2516 + $0x1e0] sm:$0xff]
      %v2598 = vld [vmem:[%s2516 + $0x1e8] sm:$0xf]
      %v2599 = vld [vmem:[%s2516 + $0x1ec] sm:$0xff]
      %v2600 = vld [vmem:[%s2516 + $0x1f4] sm:$0xf]
      %v2601 = vld [vmem:[%s2516 + $0x1f8] sm:$0xff]
      %v2602 = vld [vmem:[%s2516 + $0x200] sm:$0xf]
      %v2603 = vld [vmem:[%s2516 + $0x204] sm:$0xff]
      %v2604 = vld [vmem:[%s2516 + $0x20c] sm:$0xf]
      %v2605 = vld [vmem:[%s2516 + $0x210] sm:$0xff]
      %v2606 = vld [vmem:[%s2516 + $0x218] sm:$0xf]
      %v2607 = vld [vmem:[%s2516 + $0x21c] sm:$0xff]
      %v2608 = vld [vmem:[%s2516 + $0x224] sm:$0xf]
      %v2609 = vld [vmem:[%s2516 + $0x228] sm:$0xff]
      %v2610 = vld [vmem:[%s2516 + $0x230] sm:$0xf]
      %v2611 = vld [vmem:[%s2516 + $0x234] sm:$0xff]
      %v2612 = vld [vmem:[%s2516 + $0x23c] sm:$0xf]
      %v2613 = vld [vmem:[%s2516 + $0x240] sm:$0xff]
      %v2614 = vld [vmem:[%s2516 + $0x248] sm:$0xf]
      %v2615 = vld [vmem:[%s2516 + $0x24c] sm:$0xff]
      %v2616 = vld [vmem:[%s2516 + $0x254] sm:$0xf]
      %v2617 = vld [vmem:[%s2516 + $0x258] sm:$0xff]
      %v2618 = vld [vmem:[%s2516 + $0x260] sm:$0xf]
      %v2619 = vld [vmem:[%s2516 + $0x264] sm:$0xff]
      %v2620 = vld [vmem:[%s2516 + $0x26c] sm:$0xf]
      %v2621 = vld [vmem:[%s2516 + $0x270] sm:$0xff]
      %v2622 = vld [vmem:[%s2516 + $0x278] sm:$0xf]
      %v2623 = vld [vmem:[%s2516 + $0x27c] sm:$0xff]
      %v2624 = vld [vmem:[%s2516 + $0x284] sm:$0xf]
      %v2625 = vld [vmem:[%s2516 + $0x288] sm:$0xff]
      %v2626 = vld [vmem:[%s2516 + $0x290] sm:$0xf]
      %v2627 = vld [vmem:[%s2516 + $0x294] sm:$0xff]
      %v2628 = vld [vmem:[%s2516 + $0x29c] sm:$0xf]
      %v2629 = vld [vmem:[%s2516 + $0x2a0] sm:$0xff]
      %v2630 = vld [vmem:[%s2516 + $0x2a8] sm:$0xf]
      %v2631 = vld [vmem:[%s2516 + $0x2ac] sm:$0xff]
      %v2632 = vld [vmem:[%s2516 + $0x2b4] sm:$0xf]
      %v2633 = vld [vmem:[%s2516 + $0x2b8] sm:$0xff]
      %v2634 = vld [vmem:[%s2516 + $0x2c0] sm:$0xf]
      %v2635 = vld [vmem:[%s2516 + $0x2c4] sm:$0xff]
      %v2636 = vld [vmem:[%s2516 + $0x2cc] sm:$0xf]
      %v2638 = vshrl.u32 %v1867, 16
      %v2640 = vshll.u32 %v1867, 16
      %v2642 = vrot.slane %v2640, 1
      %v2643 = vor.u32 %v2638, %v2642
      %v2645 = vshrl.u32 %v1868, 16
      %v2647 = vshll.u32 %v1868, 16
      %v2649 = vrot.slane %v2647, 1
      %v2650 = vor.u32 %v2645, %v2649
      %v2652 = vshrl.u32 %v1869, 16
      %v2654 = vshll.u32 %v1869, 16
      %v2656 = vrot.slane %v2654, 1
      %v2657 = vor.u32 %v2652, %v2656
      %v2658 = vshrl.u32 %v1870, 16
      %v2660 = vshll.u32 %v1870, 16
      %v2662 = vrot.slane %v2660, 1
      %v2663 = vor.u32 %v2658, %v2662
      %v2787 = vunpack.c.l.b16 %v2517
      %v2788 = vunpack.c.h.b16 %v2517
      %v2789 = vunpack.c.l.b16 %v2518
      %v2790 = vunpack.c.l.b16 %v2519
      %v2791 = vunpack.c.h.b16 %v2519
      %v2792 = vunpack.c.l.b16 %v2520
      %v2793 = vunpack.c.l.b16 %v2521
      %v2794 = vunpack.c.h.b16 %v2521
      %v2795 = vunpack.c.l.b16 %v2522
      %v2796 = vunpack.c.l.b16 %v2523
      %v2797 = vunpack.c.h.b16 %v2523
      %v2798 = vunpack.c.l.b16 %v2524
      %v2799 = vunpack.c.l.b16 %v2525
      %v2800 = vunpack.c.h.b16 %v2525
      %v2801 = vunpack.c.l.b16 %v2526
      %v2802 = vunpack.c.l.b16 %v2527
      %v2803 = vunpack.c.h.b16 %v2527
      %v2804 = vunpack.c.l.b16 %v2528
      %v2805 = vunpack.c.l.b16 %v2529
      %v2806 = vunpack.c.h.b16 %v2529
      %v2807 = vunpack.c.l.b16 %v2530
      %v2808 = vunpack.c.l.b16 %v2531
      %v2809 = vunpack.c.h.b16 %v2531
      %v2810 = vunpack.c.l.b16 %v2532
      %v2811 = vunpack.c.l.b16 %v2533
      %v2812 = vunpack.c.h.b16 %v2533
      %v2813 = vunpack.c.l.b16 %v2534
      %v2814 = vunpack.c.l.b16 %v2535
      %v2815 = vunpack.c.h.b16 %v2535
      %v2816 = vunpack.c.l.b16 %v2536
      %v2817 = vunpack.c.l.b16 %v2537
      %v2818 = vunpack.c.h.b16 %v2537
      %v2819 = vunpack.c.l.b16 %v2538
      %v2820 = vunpack.c.l.b16 %v2539
      %v2821 = vunpack.c.h.b16 %v2539
      %v2822 = vunpack.c.l.b16 %v2540
      %v2823 = vunpack.c.l.b16 %v2541
      %v2824 = vunpack.c.h.b16 %v2541
      %v2825 = vunpack.c.l.b16 %v2542
      %v2826 = vunpack.c.l.b16 %v2543
      %v2827 = vunpack.c.h.b16 %v2543
      %v2828 = vunpack.c.l.b16 %v2544
      %v2829 = vunpack.c.l.b16 %v2545
      %v2830 = vunpack.c.h.b16 %v2545
      %v2831 = vunpack.c.l.b16 %v2546
      %v2832 = vunpack.c.l.b16 %v2547
      %v2833 = vunpack.c.h.b16 %v2547
      %v2834 = vunpack.c.l.b16 %v2548
      %v2835 = vunpack.c.l.b16 %v2549
      %v2836 = vunpack.c.h.b16 %v2549
      %v2837 = vunpack.c.l.b16 %v2550
      %v2838 = vunpack.c.l.b16 %v2551
      %v2839 = vunpack.c.h.b16 %v2551
      %v2840 = vunpack.c.l.b16 %v2552
      %v2841 = vunpack.c.l.b16 %v2553
      %v2842 = vunpack.c.h.b16 %v2553
      %v2843 = vunpack.c.l.b16 %v2554
      %v2844 = vunpack.c.l.b16 %v2555
      %v2845 = vunpack.c.h.b16 %v2555
      %v2846 = vunpack.c.l.b16 %v2556
      %v2847 = vunpack.c.l.b16 %v2557
      %v2848 = vunpack.c.h.b16 %v2557
      %v2849 = vunpack.c.l.b16 %v2558
      %v2850 = vunpack.c.l.b16 %v2559
      %v2851 = vunpack.c.h.b16 %v2559
      %v2852 = vunpack.c.l.b16 %v2560
      %v2853 = vunpack.c.l.b16 %v2561
      %v2854 = vunpack.c.h.b16 %v2561
      %v2855 = vunpack.c.l.b16 %v2562
      %v2856 = vunpack.c.l.b16 %v2563
      %v2857 = vunpack.c.h.b16 %v2563
      %v2858 = vunpack.c.l.b16 %v2564
      %v2859 = vunpack.c.l.b16 %v2565
      %v2860 = vunpack.c.h.b16 %v2565
      %v2861 = vunpack.c.l.b16 %v2566
      %v2862 = vunpack.c.l.b16 %v2567
      %v2863 = vunpack.c.h.b16 %v2567
      %v2864 = vunpack.c.l.b16 %v2568
      %v2865 = vunpack.c.l.b16 %v2569
      %v2866 = vunpack.c.h.b16 %v2569
      %v2867 = vunpack.c.l.b16 %v2570
      %v2868 = vunpack.c.l.b16 %v2571
      %v2869 = vunpack.c.h.b16 %v2571
      %v2870 = vunpack.c.l.b16 %v2572
      %v2871 = vunpack.c.l.b16 %v2573
      %v2872 = vunpack.c.h.b16 %v2573
      %v2873 = vunpack.c.l.b16 %v2574
      %v2874 = vunpack.c.l.b16 %v2575
      %v2875 = vunpack.c.h.b16 %v2575
      %v2876 = vunpack.c.l.b16 %v2576
      %v2877 = vunpack.c.l.b16 %v2577
      %v2878 = vunpack.c.h.b16 %v2577
      %v2879 = vunpack.c.l.b16 %v2578
      %v2880 = vunpack.c.l.b16 %v2579
      %v2881 = vunpack.c.h.b16 %v2579
      %v2882 = vunpack.c.l.b16 %v2580
      %v2883 = vunpack.c.l.b16 %v2581
      %v2884 = vunpack.c.h.b16 %v2581
      %v2885 = vunpack.c.l.b16 %v2582
      %v2886 = vunpack.c.l.b16 %v2583
      %v2887 = vunpack.c.h.b16 %v2583
      %v2888 = vunpack.c.l.b16 %v2584
      %v2889 = vunpack.c.l.b16 %v2585
      %v2890 = vunpack.c.h.b16 %v2585
      %v2891 = vunpack.c.l.b16 %v2586
      %v2892 = vunpack.c.l.b16 %v2587
      %v2893 = vunpack.c.h.b16 %v2587
      %v2894 = vunpack.c.l.b16 %v2588
      %v2895 = vunpack.c.l.b16 %v2589
      %v2896 = vunpack.c.h.b16 %v2589
      %v2897 = vunpack.c.l.b16 %v2590
      %v2898 = vunpack.c.l.b16 %v2591
      %v2899 = vunpack.c.h.b16 %v2591
      %v2900 = vunpack.c.l.b16 %v2592
      %v2901 = vunpack.c.l.b16 %v2593
      %v2902 = vunpack.c.h.b16 %v2593
      %v2903 = vunpack.c.l.b16 %v2594
      %v2904 = vunpack.c.l.b16 %v2595
      %v2905 = vunpack.c.h.b16 %v2595
      %v2906 = vunpack.c.l.b16 %v2596
      %v2907 = vunpack.c.l.b16 %v2597
      %v2908 = vunpack.c.h.b16 %v2597
      %v2909 = vunpack.c.l.b16 %v2598
      %v2910 = vunpack.c.l.b16 %v2599
      %v2911 = vunpack.c.h.b16 %v2599
      %v2912 = vunpack.c.l.b16 %v2600
      %v2913 = vunpack.c.l.b16 %v2601
      %v2914 = vunpack.c.h.b16 %v2601
      %v2915 = vunpack.c.l.b16 %v2602
      %v2916 = vunpack.c.l.b16 %v2603
      %v2917 = vunpack.c.h.b16 %v2603
      %v2918 = vunpack.c.l.b16 %v2604
      %v2919 = vunpack.c.l.b16 %v2605
      %v2920 = vunpack.c.h.b16 %v2605
      %v2921 = vunpack.c.l.b16 %v2606
      %v2922 = vunpack.c.l.b16 %v2607
      %v2923 = vunpack.c.h.b16 %v2607
      %v2924 = vunpack.c.l.b16 %v2608
      %v2925 = vunpack.c.l.b16 %v2609
      %v2926 = vunpack.c.h.b16 %v2609
      %v2927 = vunpack.c.l.b16 %v2610
      %v2928 = vunpack.c.l.b16 %v2611
      %v2929 = vunpack.c.h.b16 %v2611
      %v2930 = vunpack.c.l.b16 %v2612
      %v2931 = vunpack.c.l.b16 %v2613
      %v2932 = vunpack.c.h.b16 %v2613
      %v2933 = vunpack.c.l.b16 %v2614
      %v2934 = vunpack.c.l.b16 %v2615
      %v2935 = vunpack.c.h.b16 %v2615
      %v2936 = vunpack.c.l.b16 %v2616
      %v2937 = vunpack.c.l.b16 %v2617
      %v2938 = vunpack.c.h.b16 %v2617
      %v2939 = vunpack.c.l.b16 %v2618
      %v2940 = vunpack.c.l.b16 %v2619
      %v2941 = vunpack.c.h.b16 %v2619
      %v2942 = vunpack.c.l.b16 %v2620
      %v2943 = vunpack.c.l.b16 %v2621
      %v2944 = vunpack.c.h.b16 %v2621
      %v2945 = vunpack.c.l.b16 %v2622
      %v2946 = vunpack.c.l.b16 %v2623
      %v2947 = vunpack.c.h.b16 %v2623
      %v2948 = vunpack.c.l.b16 %v2624
      %v2949 = vunpack.c.l.b16 %v2625
      %v2950 = vunpack.c.h.b16 %v2625
      %v2951 = vunpack.c.l.b16 %v2626
      %v2952 = vunpack.c.l.b16 %v2627
      %v2953 = vunpack.c.h.b16 %v2627
      %v2954 = vunpack.c.l.b16 %v2628
      %v2955 = vunpack.c.l.b16 %v2629
      %v2956 = vunpack.c.h.b16 %v2629
      %v2957 = vunpack.c.l.b16 %v2630
      %v2958 = vunpack.c.l.b16 %v2631
      %v2959 = vunpack.c.h.b16 %v2631
      %v2960 = vunpack.c.l.b16 %v2632
      %v2961 = vunpack.c.l.b16 %v2633
      %v2962 = vunpack.c.h.b16 %v2633
      %v2963 = vunpack.c.l.b16 %v2634
      %v2964 = vunpack.c.l.b16 %v2635
      %v2965 = vunpack.c.h.b16 %v2635
      %v2966 = vunpack.c.l.b16 %v2636
      %v2967 = vpack.c.b16 %v2790, %v2787
      %v2968 = vpack.c.b16 %v2791, %v2788
      %v2969 = vpack.c.b16 %v2792, %v2789
      %v2970 = vpack.c.b16 %v2796, %v2793
      %v2971 = vpack.c.b16 %v2797, %v2794
      %v2972 = vpack.c.b16 %v2798, %v2795
      %v2973 = vpack.c.b16 %v2802, %v2799
      %v2974 = vpack.c.b16 %v2803, %v2800
      %v2975 = vpack.c.b16 %v2804, %v2801
      %v2976 = vpack.c.b16 %v2808, %v2805
      %v2977 = vpack.c.b16 %v2809, %v2806
      %v2978 = vpack.c.b16 %v2810, %v2807
      %v2979 = vpack.c.b16 %v2814, %v2811
      %v2980 = vpack.c.b16 %v2815, %v2812
      %v2981 = vpack.c.b16 %v2816, %v2813
      %v2982 = vpack.c.b16 %v2820, %v2817
      %v2983 = vpack.c.b16 %v2821, %v2818
      %v2984 = vpack.c.b16 %v2822, %v2819
      %v2985 = vpack.c.b16 %v2826, %v2823
      %v2986 = vpack.c.b16 %v2827, %v2824
      %v2987 = vpack.c.b16 %v2828, %v2825
      %v2988 = vpack.c.b16 %v2832, %v2829
      %v2989 = vpack.c.b16 %v2833, %v2830
      %v2990 = vpack.c.b16 %v2834, %v2831
      %v2991 = vpack.c.b16 %v2838, %v2835
      %v2992 = vpack.c.b16 %v2839, %v2836
      %v2993 = vpack.c.b16 %v2840, %v2837
      %v2994 = vpack.c.b16 %v2844, %v2841
      %v2995 = vpack.c.b16 %v2845, %v2842
      %v2996 = vpack.c.b16 %v2846, %v2843
      %v2997 = vpack.c.b16 %v2850, %v2847
      %v2998 = vpack.c.b16 %v2851, %v2848
      %v2999 = vpack.c.b16 %v2852, %v2849
      %v3000 = vpack.c.b16 %v2856, %v2853
      %v3001 = vpack.c.b16 %v2857, %v2854
      %v3002 = vpack.c.b16 %v2858, %v2855
      %v3003 = vpack.c.b16 %v2862, %v2859
      %v3004 = vpack.c.b16 %v2863, %v2860
      %v3005 = vpack.c.b16 %v2864, %v2861
      %v3006 = vpack.c.b16 %v2868, %v2865
      %v3007 = vpack.c.b16 %v2869, %v2866
      %v3008 = vpack.c.b16 %v2870, %v2867
      %v3009 = vpack.c.b16 %v2874, %v2871
      %v3010 = vpack.c.b16 %v2875, %v2872
      %v3011 = vpack.c.b16 %v2876, %v2873
      %v3012 = vpack.c.b16 %v2880, %v2877
      %v3013 = vpack.c.b16 %v2881, %v2878
      %v3014 = vpack.c.b16 %v2882, %v2879
      %v3015 = vpack.c.b16 %v2886, %v2883
      %v3016 = vpack.c.b16 %v2887, %v2884
      %v3017 = vpack.c.b16 %v2888, %v2885
      %v3018 = vpack.c.b16 %v2892, %v2889
      %v3019 = vpack.c.b16 %v2893, %v2890
      %v3020 = vpack.c.b16 %v2894, %v2891
      %v3021 = vpack.c.b16 %v2898, %v2895
      %v3022 = vpack.c.b16 %v2899, %v2896
      %v3023 = vpack.c.b16 %v2900, %v2897
      %v3024 = vpack.c.b16 %v2904, %v2901
      %v3025 = vpack.c.b16 %v2905, %v2902
      %v3026 = vpack.c.b16 %v2906, %v2903
      %v3027 = vpack.c.b16 %v2910, %v2907
      %v3028 = vpack.c.b16 %v2911, %v2908
      %v3029 = vpack.c.b16 %v2912, %v2909
      %v3030 = vpack.c.b16 %v2916, %v2913
      %v3031 = vpack.c.b16 %v2917, %v2914
      %v3032 = vpack.c.b16 %v2918, %v2915
      %v3033 = vpack.c.b16 %v2922, %v2919
      %v3034 = vpack.c.b16 %v2923, %v2920
      %v3035 = vpack.c.b16 %v2924, %v2921
      %v3036 = vpack.c.b16 %v2928, %v2925
      %v3037 = vpack.c.b16 %v2929, %v2926
      %v3038 = vpack.c.b16 %v2930, %v2927
      %v3039 = vpack.c.b16 %v2934, %v2931
      %v3040 = vpack.c.b16 %v2935, %v2932
      %v3041 = vpack.c.b16 %v2936, %v2933
      %v3042 = vpack.c.b16 %v2940, %v2937
      %v3043 = vpack.c.b16 %v2941, %v2938
      %v3044 = vpack.c.b16 %v2942, %v2939
      %v3045 = vpack.c.b16 %v2946, %v2943
      %v3046 = vpack.c.b16 %v2947, %v2944
      %v3047 = vpack.c.b16 %v2948, %v2945
      %v3048 = vpack.c.b16 %v2952, %v2949
      %v3049 = vpack.c.b16 %v2953, %v2950
      %v3050 = vpack.c.b16 %v2954, %v2951
      %v3051 = vpack.c.b16 %v2958, %v2955
      %v3052 = vpack.c.b16 %v2959, %v2956
      %v3053 = vpack.c.b16 %v2960, %v2957
      %v3054 = vpack.c.b16 %v2964, %v2961
      %v3055 = vpack.c.b16 %v2965, %v2962
      %v3056 = vpack.c.b16 %v2966, %v2963
      %v3148 = vsel %vm936, %v2663, 0
      %3150 = vmatpush.bf16.msra.mxu0 %v2988
      %3151 = vmatpush.bf16.msra.mxu0 %v2985
      %3152 = vmatpush.bf16.msra.mxu0 %v2982
      %3153 = vmatpush.bf16.msra.mxu0 %v2979
      %3154 = vmatpush.bf16.msra.mxu0 %v2976
      %3155 = vmatpush.bf16.msra.mxu0 %v2973
      %3156 = vmatpush.bf16.msra.mxu0 %v2970
      %3157 = vmatpush.bf16.msra.mxu0 %v2967
      %3158 = vmatmul.bf16.gmra.mxu0 %v2643
      %v3159 = vpop.f32.mrf.mxu0
      %v3160 = vadd.f32 0.0, %v3159
      %v3161 = vpop.f32.mrf.mxu0
      %3162 = vdwg.mxu0
      %3163 = vmatpush.bf16.msra.mxu0 %v3012
      %3164 = vmatpush.bf16.msra.mxu0 %v3009
      %3165 = vmatpush.bf16.msra.mxu0 %v3006
      %3166 = vmatpush.bf16.msra.mxu0 %v3003
      %3167 = vmatpush.bf16.msra.mxu0 %v3000
      %3168 = vmatpush.bf16.msra.mxu0 %v2997
      %3169 = vmatpush.bf16.msra.mxu0 %v2994
      %3170 = vmatpush.bf16.msra.mxu0 %v2991
      %3171 = vmatmul.bf16.gmra.mxu0 %v2650
      %v3172 = vpop.f32.mrf.mxu0
      %v3173 = vadd.f32 %v3160, %v3172
      %v3174 = vpop.f32.mrf.mxu0
      %3175 = vdwg.mxu0
      %3176 = vmatpush.bf16.msra.mxu0 %v3036
      %3177 = vmatpush.bf16.msra.mxu0 %v3033
      %3178 = vmatpush.bf16.msra.mxu0 %v3030
      %3179 = vmatpush.bf16.msra.mxu0 %v3027
      %3180 = vmatpush.bf16.msra.mxu0 %v3024
      %3181 = vmatpush.bf16.msra.mxu0 %v3021
      %3182 = vmatpush.bf16.msra.mxu0 %v3018
      %3183 = vmatpush.bf16.msra.mxu0 %v3015
      %3184 = vmatmul.bf16.gmra.mxu0 %v2657
      %v3185 = vpop.f32.mrf.mxu0
      %v3186 = vadd.f32 %v3173, %v3185
      %v3187 = vpop.f32.mrf.mxu0
      %3188 = vdwg.mxu0
      %3189 = vmatpush.bf16.msra.mxu0 0
      %3190 = vmatpush.bf16.msra.mxu0 0
      %3191 = vmatpush.bf16.msra.mxu0 %v3054
      %3192 = vmatpush.bf16.msra.mxu0 %v3051
      %3193 = vmatpush.bf16.msra.mxu0 %v3048
      %3194 = vmatpush.bf16.msra.mxu0 %v3045
      %3195 = vmatpush.bf16.msra.mxu0 %v3042
      %3196 = vmatpush.bf16.msra.mxu0 %v3039
      %3197 = vmatmul.bf16.gmra.mxu0 %v3148
      %v3198 = vpop.f32.mrf.mxu0
      %v3199 = vadd.f32 %v3186, %v3198
      %v3200 = vpop.f32.mrf.mxu0
      %3201 = vdwg.mxu0
      %3202 = vmatpush.bf16.msra.mxu0 %v2989
      %3203 = vmatpush.bf16.msra.mxu0 %v2986
      %3204 = vmatpush.bf16.msra.mxu0 %v2983
      %3205 = vmatpush.bf16.msra.mxu0 %v2980
      %3206 = vmatpush.bf16.msra.mxu0 %v2977
      %3207 = vmatpush.bf16.msra.mxu0 %v2974
      %3208 = vmatpush.bf16.msra.mxu0 %v2971
      %3209 = vmatpush.bf16.msra.mxu0 %v2968
      %3210 = vmatmul.bf16.gmra.mxu0 %v2643
      %v3211 = vpop.f32.mrf.mxu0
      %v3212 = vadd.f32 0.0, %v3211
      %v3213 = vpop.f32.mrf.mxu0
      %3214 = vdwg.mxu0
      %3215 = vmatpush.bf16.msra.mxu0 %v3013
      %3216 = vmatpush.bf16.msra.mxu0 %v3010
      %3217 = vmatpush.bf16.msra.mxu0 %v3007
      %3218 = vmatpush.bf16.msra.mxu0 %v3004
      %3219 = vmatpush.bf16.msra.mxu0 %v3001
      %3220 = vmatpush.bf16.msra.mxu0 %v2998
      %3221 = vmatpush.bf16.msra.mxu0 %v2995
      %3222 = vmatpush.bf16.msra.mxu0 %v2992
      %3223 = vmatmul.bf16.gmra.mxu0 %v2650
      %v3224 = vpop.f32.mrf.mxu0
      %v3225 = vadd.f32 %v3212, %v3224
      %v3226 = vpop.f32.mrf.mxu0
      %3227 = vdwg.mxu0
      %3228 = vmatpush.bf16.msra.mxu0 %v3037
      %3229 = vmatpush.bf16.msra.mxu0 %v3034
      %3230 = vmatpush.bf16.msra.mxu0 %v3031
      %3231 = vmatpush.bf16.msra.mxu0 %v3028
      %3232 = vmatpush.bf16.msra.mxu0 %v3025
      %3233 = vmatpush.bf16.msra.mxu0 %v3022
      %3234 = vmatpush.bf16.msra.mxu0 %v3019
      %3235 = vmatpush.bf16.msra.mxu0 %v3016
      %3236 = vmatmul.bf16.gmra.mxu0 %v2657
      %v3237 = vpop.f32.mrf.mxu0
      %v3238 = vadd.f32 %v3225, %v3237
      %v3239 = vpop.f32.mrf.mxu0
      %3240 = vdwg.mxu0
      %3241 = vmatpush.bf16.msra.mxu0 0
      %3242 = vmatpush.bf16.msra.mxu0 0
      %3243 = vmatpush.bf16.msra.mxu0 %v3055
      %3244 = vmatpush.bf16.msra.mxu0 %v3052
      %3245 = vmatpush.bf16.msra.mxu0 %v3049
      %3246 = vmatpush.bf16.msra.mxu0 %v3046
      %3247 = vmatpush.bf16.msra.mxu0 %v3043
      %3248 = vmatpush.bf16.msra.mxu0 %v3040
      %3249 = vmatmul.bf16.gmra.mxu0 %v3148
      %v3250 = vpop.f32.mrf.mxu0
      %v3251 = vadd.f32 %v3238, %v3250
      %v3252 = vpop.f32.mrf.mxu0
      %3253 = vdwg.mxu0
      %3254 = vmatpush.bf16.msra.mxu0 %v2990
      %3255 = vmatpush.bf16.msra.mxu0 %v2987
      %3256 = vmatpush.bf16.msra.mxu0 %v2984
      %3257 = vmatpush.bf16.msra.mxu0 %v2981
      %3258 = vmatpush.bf16.msra.mxu0 %v2978
      %3259 = vmatpush.bf16.msra.mxu0 %v2975
      %3260 = vmatpush.bf16.msra.mxu0 %v2972
      %3261 = vmatpush.bf16.msra.mxu0 %v2969
      %3262 = vmatmul.bf16.gmra.mxu0 %v2643
      %v3263 = vpop.f32.mrf.mxu0
      %v3264 = vadd.f32 0.0, %v3263
      %v3265 = vpop.f32.mrf.mxu0
      %3266 = vdwg.mxu0
      %3267 = vmatpush.bf16.msra.mxu0 %v3014
      %3268 = vmatpush.bf16.msra.mxu0 %v3011
      %3269 = vmatpush.bf16.msra.mxu0 %v3008
      %3270 = vmatpush.bf16.msra.mxu0 %v3005
      %3271 = vmatpush.bf16.msra.mxu0 %v3002
      %3272 = vmatpush.bf16.msra.mxu0 %v2999
      %3273 = vmatpush.bf16.msra.mxu0 %v2996
      %3274 = vmatpush.bf16.msra.mxu0 %v2993
      %3275 = vmatmul.bf16.gmra.mxu0 %v2650
      %v3276 = vpop.f32.mrf.mxu0
      %v3277 = vadd.f32 %v3264, %v3276
      %v3278 = vpop.f32.mrf.mxu0
      %3279 = vdwg.mxu0
      %3280 = vmatpush.bf16.msra.mxu0 %v3038
      %3281 = vmatpush.bf16.msra.mxu0 %v3035
      %3282 = vmatpush.bf16.msra.mxu0 %v3032
      %3283 = vmatpush.bf16.msra.mxu0 %v3029
      %3284 = vmatpush.bf16.msra.mxu0 %v3026
      %3285 = vmatpush.bf16.msra.mxu0 %v3023
      %3286 = vmatpush.bf16.msra.mxu0 %v3020
      %3287 = vmatpush.bf16.msra.mxu0 %v3017
      %3288 = vmatmul.bf16.gmra.mxu0 %v2657
      %v3289 = vpop.f32.mrf.mxu0
      %v3290 = vadd.f32 %v3277, %v3289
      %v3291 = vpop.f32.mrf.mxu0
      %3292 = vdwg.mxu0
      %3293 = vmatpush.bf16.msra.mxu0 0
      %3294 = vmatpush.bf16.msra.mxu0 0
      %3295 = vmatpush.bf16.msra.mxu0 %v3056
      %3296 = vmatpush.bf16.msra.mxu0 %v3053
      %3297 = vmatpush.bf16.msra.mxu0 %v3050
      %3298 = vmatpush.bf16.msra.mxu0 %v3047
      %3299 = vmatpush.bf16.msra.mxu0 %v3044
      %3300 = vmatpush.bf16.msra.mxu0 %v3041
      %3301 = vmatmul.bf16.gmra.mxu0 %v3148
      %v3302 = vpop.f32.mrf.mxu0
      %v3303 = vadd.f32 %v3290, %v3302
      %v3304 = vpop.f32.mrf.mxu0
      %3305 = vdwg.mxu0
      %v3306 = vadd.f32 %v2513, %v3199
      %v3307 = vadd.f32 %v2514, %v3251
      %v3308 = vadd.f32 %v2515, %v3303
      %v3309 = vld [vmem:[%s2] sm:$0x7]
      %v3311 = vperm.slane %v3309, 0
      %v3312 = vperm.slane %v3309, 1
      %v3313 = vperm.slane %v3309, 2
      %v3317 = vadd.f32 %v3306, %v3311
      %v3318 = vadd.f32 %v3307, %v3312
      %v3319 = vadd.f32 %v3308, %v3313
      %v3320 = vmax.f32 %v3317, 0.0
      %v3321 = vmax.f32 %v3318, 0.0
      %v3322 = vmax.f32 %v3319, 0.0
      %v3323 = vpack.c.bf16 %v3321, %v3320
      %v3324 = vpack.c.bf16 %v3322, %v3322
      %3325 = vst [vmem:[%s170] sm:$0x77] %v3323
      %3326 = vst [vmem:[%s170 + $0x8] sm:$0x7] %v3324
      %p3327 = scmp.lt.s32.totalorder %s14, 1
      %s3328 = scalar_select %p3327, %s14, 1
      %s3329 = smul.addr %s3328, 3
      %s3330 = smul.addr %s3329, 4
      %s3331 = scalar_lea.vmem %s3, %s3330
      // Predicated region
      $region33: #{dqn_forward_pallas.4} parent=31 // pred_check
        %p3332 = pneg %p100
      $region34: #{dqn_forward_pallas.4} parent=31 // pred_check_branch
        %3334 = sbr.rel (%p3332) target = $region36
      $region35: #{dqn_forward_pallas.4} parent=31 // pred_region
        _
      $region36: #{dqn_forward_pallas.4} parent=31 // pred_fallthru
        _
    $region32: #{dqn_forward_pallas.4} parent=5 // pred_fallthru
      _
    %p3335 = scmp.le.s32.totalorder 2, %s9
    // Predicated region
    $region37: #{dqn_forward_pallas.4} parent=5 // pred_check
      %p3336 = pneg %p3335
    $region38: #{dqn_forward_pallas.4} parent=5 // pred_check_branch
      %3338 = sbr.rel (%p3336) target = $region40
    $region39: #{dqn_forward_pallas.4} parent=5 // pred_region
      %s3339 = ssub.s32 %s9, 2
      // Predicated region
      $region41: #{dqn_forward_pallas.4} parent=39 // pred_check
        %p3340 = pneg %p106
      $region42: #{dqn_forward_pallas.4} parent=39 // pred_check_branch
        %3342 = sbr.rel (%p3340) target = $region44
      $region43: #{dqn_forward_pallas.4} parent=39 // pred_region
        %p3343 = scmp.lt.s32.totalorder %s15, 1
        %s3344 = scalar_select %p3343, %s15, 1
        %s3345 = smul.addr %s3344, 3
        %s3346 = smul.addr %s3345, 4
        %s3347 = scalar_lea.vmem %s3, %s3346
      $region44: #{dqn_forward_pallas.4} parent=39 // pred_fallthru
        _
    $region40: #{dqn_forward_pallas.4} parent=5 // pred_fallthru
      _
  $region6: #{dqn_forward_pallas.4} parent=0 // loop_footer
    %s13 = sadd.s32 1, %s9
  $region7: #{dqn_forward_pallas.4} parent=0 // loop_footer_branch
    %8 = sbr.rel target = $region3
  $region8: #{dqn_forward_pallas.4} parent=0 // loop_exit
    _

// kernel: dqn_forward_pallas.5
$region0: #{dqn_forward_pallas.5}
  #allocation0 [shape = 'u32[]', space=smem, size = 0x4, offset = 0x4, fixed_abs, tag = 'smem constant byte address 0x4 - core index']
  #allocation1 [shape = 'u32[72,128]{1,0:T(1,128)}', space=vmem, size = 0x9000, scoped, tag = 'internal scratch']
  %s0 = inlined_call_operand.vmem [shape: bf16[2,2304], index: 0, kind: input, shape index: {}]
  %s1 = inlined_call_operand.vmem [shape: bf16[2304,256], index: 1, kind: input, shape index: {}]
  %s2 = inlined_call_operand.vmem [shape: f32[1,256], index: 2, kind: input, shape index: {}]
  %s3 = inlined_call_operand.vmem [shape: bf16[256,1024], index: 3, kind: input, shape index: {}]
  %s4 = inlined_call_operand.vmem [shape: f32[1,1024], index: 4, kind: input, shape index: {}]
  %s5 = inlined_call_operand.vmem [shape: bf16[1024,7], index: 5, kind: input, shape index: {}]
  %s6 = inlined_call_operand.vmem [shape: f32[1,7], index: 6, kind: input, shape index: {}]
  %s7 = inlined_call_operand.hbm [shape: f32[2,6], index: 7, kind: output, shape index: {}]
  %s8 = sld [smem:[#allocation0]]
  $region38: #{dqn_forward_pallas.5} parent=0
    _
  %s10 = ssub.s32 1, %s8
  %s11 = scalar_select 0, %s10, %s8
  $region1: #{dqn_forward_pallas.5} parent=0
    #allocation2 [shape = 'u8[1024]{0}', space=vmem, size = 0x400, scoped, tag = 'output window, operand 0, single buffered']
    #allocation3 [shape = 's32[1]{0}', space=sflag, size = 0x4, scoped, tag = 'scoped memory for dqn_forward_pallas.5']
    %12 = vsyncpa [#allocation3], 0
    // Predicated region
    $region2: #{dqn_forward_pallas.5} parent=1 // pred_check
      _
    $region3: #{dqn_forward_pallas.5} parent=1 // pred_check_branch
      %14 = sbr.rel (0) target = $region5
    $region4: #{dqn_forward_pallas.5} parent=1 // pred_region
      _
    $region5: #{dqn_forward_pallas.5} parent=1 // pred_fallthru
      _
    // Predicated region
    $region6: #{dqn_forward_pallas.5} parent=1 // pred_check
      _
    $region7: #{dqn_forward_pallas.5} parent=1 // pred_check_branch
      %16 = sbr.rel (0) target = $region9
    $region8: #{dqn_forward_pallas.5} parent=1 // pred_region
      _
    $region9: #{dqn_forward_pallas.5} parent=1 // pred_fallthru
      _
    // Predicated region
    $region10: #{dqn_forward_pallas.5} parent=1 // pred_check
      _
    $region11: #{dqn_forward_pallas.5} parent=1 // pred_check_branch
      %18 = sbr.rel (0) target = $region13
    $region12: #{dqn_forward_pallas.5} parent=1 // pred_region
      _
    $region13: #{dqn_forward_pallas.5} parent=1 // pred_fallthru
      _
    // Predicated region
    $region14: #{dqn_forward_pallas.5} parent=1 // pred_check
      _
    $region15: #{dqn_forward_pallas.5} parent=1 // pred_check_branch
      %20 = sbr.rel (0) target = $region17
    $region16: #{dqn_forward_pallas.5} parent=1 // pred_region
      _
    $region17: #{dqn_forward_pallas.5} parent=1 // pred_fallthru
      _
    // Predicated region
    $region18: #{dqn_forward_pallas.5} parent=1 // pred_check
      _
    $region19: #{dqn_forward_pallas.5} parent=1 // pred_check_branch
      %22 = sbr.rel (0) target = $region21
    $region20: #{dqn_forward_pallas.5} parent=1 // pred_region
      _
    $region21: #{dqn_forward_pallas.5} parent=1 // pred_fallthru
      _
    // Predicated region
    $region22: #{dqn_forward_pallas.5} parent=1 // pred_check
      _
    $region23: #{dqn_forward_pallas.5} parent=1 // pred_check_branch
      %24 = sbr.rel (0) target = $region25
    $region24: #{dqn_forward_pallas.5} parent=1 // pred_region
      _
    $region25: #{dqn_forward_pallas.5} parent=1 // pred_fallthru
      _
    // Predicated region
    $region26: #{dqn_forward_pallas.5} parent=1 // pred_check
      _
    $region27: #{dqn_forward_pallas.5} parent=1 // pred_check_branch
      %26 = sbr.rel (0) target = $region29
    $region28: #{dqn_forward_pallas.5} parent=1 // pred_region
      _
    $region29: #{dqn_forward_pallas.5} parent=1 // pred_fallthru
      _
    %v27 = vld [vmem:[%s0] sm:$0xff]
    %v28 = vld [vmem:[%s0 + $0x8] sm:$0xff]
    %v29 = vld [vmem:[%s0 + $0x10] sm:$0x3]
    %v30 = vld [vmem:[%s1] sm:$0xff]
    %v31 = vld [vmem:[%s1 + $0x8] sm:$0xff]
    %v32 = vld [vmem:[%s1 + $0x10] sm:$0xff]
    %v33 = vld [vmem:[%s1 + $0x18] sm:$0xff]
    %v34 = vld [vmem:[%s1 + $0x20] sm:$0xff]
    %v35 = vld [vmem:[%s1 + $0x28] sm:$0xff]
    %v36 = vld [vmem:[%s1 + $0x30] sm:$0xff]
    %v37 = vld [vmem:[%s1 + $0x38] sm:$0xff]
    %v38 = vld [vmem:[%s1 + $0x40] sm:$0xff]
    %v39 = vld [vmem:[%s1 + $0x48] sm:$0xff]
    %v40 = vld [vmem:[%s1 + $0x50] sm:$0xff]
    %v41 = vld [vmem:[%s1 + $0x58] sm:$0xff]
    %v42 = vld [vmem:[%s1 + $0x60] sm:$0xff]
    %v43 = vld [vmem:[%s1 + $0x68] sm:$0xff]
    %v44 = vld [vmem:[%s1 + $0x70] sm:$0xff]
    %v45 = vld [vmem:[%s1 + $0x78] sm:$0xff]
    %v46 = vld [vmem:[%s1 + $0x80] sm:$0xff]
    %v47 = vld [vmem:[%s1 + $0x88] sm:$0xff]
    %v48 = vld [vmem:[%s1 + $0x90] sm:$0xff]
    %v49 = vld [vmem:[%s1 + $0x98] sm:$0xff]
    %v50 = vld [vmem:[%s1 + $0xa0] sm:$0xff]
    %v51 = vld [vmem:[%s1 + $0xa8] sm:$0xff]
    %v52 = vld [vmem:[%s1 + $0xb0] sm:$0xff]
    %v53 = vld [vmem:[%s1 + $0xb8] sm:$0xff]
    %v54 = vld [vmem:[%s1 + $0xc0] sm:$0xff]
    %v55 = vld [vmem:[%s1 + $0xc8] sm:$0xff]
    %v56 = vld [vmem:[%s1 + $0xd0] sm:$0xff]
    %v57 = vld [vmem:[%s1 + $0xd8] sm:$0xff]
    %v58 = vld [vmem:[%s1 + $0xe0] sm:$0xff]
    %v59 = vld [vmem:[%s1 + $0xe8] sm:$0xff]
    %v60 = vld [vmem:[%s1 + $0xf0] sm:$0xff]
    %v61 = vld [vmem:[%s1 + $0xf8] sm:$0xff]
    %v62 = vld [vmem:[%s1 + $0x100] sm:$0xff]
    %v63 = vld [vmem:[%s1 + $0x108] sm:$0xff]
    %v64 = vld [vmem:[%s1 + $0x110] sm:$0xff]
    %v65 = vld [vmem:[%s1 + $0x118] sm:$0xff]
    %v66 = vld [vmem:[%s1 + $0x120] sm:$0xff]
    %v67 = vld [vmem:[%s1 + $0x128] sm:$0xff]
    %v68 = vld [vmem:[%s1 + $0x130] sm:$0xff]
    %v69 = vld [vmem:[%s1 + $0x138] sm:$0xff]
    %v70 = vld [vmem:[%s1 + $0x140] sm:$0xff]
    %v71 = vld [vmem:[%s1 + $0x148] sm:$0xff]
    %v72 = vld [vmem:[%s1 + $0x150] sm:$0xff]
    %v73 = vld [vmem:[%s1 + $0x158] sm:$0xff]
    %v74 = vld [vmem:[%s1 + $0x160] sm:$0xff]
    %v75 = vld [vmem:[%s1 + $0x168] sm:$0xff]
    %v76 = vld [vmem:[%s1 + $0x170] sm:$0xff]
    %v77 = vld [vmem:[%s1 + $0x178] sm:$0xff]
    %v78 = vld [vmem:[%s1 + $0x180] sm:$0xff]
    %v79 = vld [vmem:[%s1 + $0x188] sm:$0xff]
    %v80 = vld [vmem:[%s1 + $0x190] sm:$0xff]
    %v81 = vld [vmem:[%s1 + $0x198] sm:$0xff]
    %v82 = vld [vmem:[%s1 + $0x1a0] sm:$0xff]
    %v83 = vld [vmem:[%s1 + $0x1a8] sm:$0xff]
    %v84 = vld [vmem:[%s1 + $0x1b0] sm:$0xff]
    %v85 = vld [vmem:[%s1 + $0x1b8] sm:$0xff]
    %v86 = vld [vmem:[%s1 + $0x1c0] sm:$0xff]
    %v87 = vld [vmem:[%s1 + $0x1c8] sm:$0xff]
    %v88 = vld [vmem:[%s1 + $0x1d0] sm:$0xff]
    %v89 = vld [vmem:[%s1 + $0x1d8] sm:$0xff]
    %v90 = vld [vmem:[%s1 + $0x1e0] sm:$0xff]
    %v91 = vld [vmem:[%s1 + $0x1e8] sm:$0xff]
    %v92 = vld [vmem:[%s1 + $0x1f0] sm:$0xff]
    %v93 = vld [vmem:[%s1 + $0x1f8] sm:$0xff]
    %v94 = vld [vmem:[%s1 + $0x200] sm:$0xff]
    %v95 = vld [vmem:[%s1 + $0x208] sm:$0xff]
    %v96 = vld [vmem:[%s1 + $0x210] sm:$0xff]
    %v97 = vld [vmem:[%s1 + $0x218] sm:$0xff]
    %v98 = vld [vmem:[%s1 + $0x220] sm:$0xff]
    %v99 = vld [vmem:[%s1 + $0x228] sm:$0xff]
    %v100 = vld [vmem:[%s1 + $0x230] sm:$0xff]
    %v101 = vld [vmem:[%s1 + $0x238] sm:$0xff]
    %v102 = vld [vmem:[%s1 + $0x240] sm:$0xff]
    %v103 = vld [vmem:[%s1 + $0x248] sm:$0xff]
    %v104 = vld [vmem:[%s1 + $0x250] sm:$0xff]
    %v105 = vld [vmem:[%s1 + $0x258] sm:$0xff]
    %v106 = vld [vmem:[%s1 + $0x260] sm:$0xff]
    %v107 = vld [vmem:[%s1 + $0x268] sm:$0xff]
    %v108 = vld [vmem:[%s1 + $0x270] sm:$0xff]
    %v109 = vld [vmem:[%s1 + $0x278] sm:$0xff]
    %v110 = vld [vmem:[%s1 + $0x280] sm:$0xff]
    %v111 = vld [vmem:[%s1 + $0x288] sm:$0xff]
    %v112 = vld [vmem:[%s1 + $0x290] sm:$0xff]
    %v113 = vld [vmem:[%s1 + $0x298] sm:$0xff]
    %v114 = vld [vmem:[%s1 + $0x2a0] sm:$0xff]
    %v115 = vld [vmem:[%s1 + $0x2a8] sm:$0xff]
    %v116 = vld [vmem:[%s1 + $0x2b0] sm:$0xff]
    %v117 = vld [vmem:[%s1 + $0x2b8] sm:$0xff]
    %v118 = vld [vmem:[%s1 + $0x2c0] sm:$0xff]
    %v119 = vld [vmem:[%s1 + $0x2c8] sm:$0xff]
    %v120 = vld [vmem:[%s1 + $0x2d0] sm:$0xff]
    %v121 = vld [vmem:[%s1 + $0x2d8] sm:$0xff]
    %v122 = vld [vmem:[%s1 + $0x2e0] sm:$0xff]
    %v123 = vld [vmem:[%s1 + $0x2e8] sm:$0xff]
    %v124 = vld [vmem:[%s1 + $0x2f0] sm:$0xff]
    %v125 = vld [vmem:[%s1 + $0x2f8] sm:$0xff]
    %v126 = vld [vmem:[%s1 + $0x300] sm:$0xff]
    %v127 = vld [vmem:[%s1 + $0x308] sm:$0xff]
    %v128 = vld [vmem:[%s1 + $0x310] sm:$0xff]
    %v129 = vld [vmem:[%s1 + $0x318] sm:$0xff]
    %v130 = vld [vmem:[%s1 + $0x320] sm:$0xff]
    %v131 = vld [vmem:[%s1 + $0x328] sm:$0xff]
    %v132 = vld [vmem:[%s1 + $0x330] sm:$0xff]
    %v133 = vld [vmem:[%s1 + $0x338] sm:$0xff]
    %v134 = vld [vmem:[%s1 + $0x340] sm:$0xff]
    %v135 = vld [vmem:[%s1 + $0x348] sm:$0xff]
    %v136 = vld [vmem:[%s1 + $0x350] sm:$0xff]
    %v137 = vld [vmem:[%s1 + $0x358] sm:$0xff]
    %v138 = vld [vmem:[%s1 + $0x360] sm:$0xff]
    %v139 = vld [vmem:[%s1 + $0x368] sm:$0xff]
    %v140 = vld [vmem:[%s1 + $0x370] sm:$0xff]
    %v141 = vld [vmem:[%s1 + $0x378] sm:$0xff]
    %v142 = vld [vmem:[%s1 + $0x380] sm:$0xff]
    %v143 = vld [vmem:[%s1 + $0x388] sm:$0xff]
    %v144 = vld [vmem:[%s1 + $0x390] sm:$0xff]
    %v145 = vld [vmem:[%s1 + $0x398] sm:$0xff]
    %v146 = vld [vmem:[%s1 + $0x3a0] sm:$0xff]
    %v147 = vld [vmem:[%s1 + $0x3a8] sm:$0xff]
    %v148 = vld [vmem:[%s1 + $0x3b0] sm:$0xff]
    %v149 = vld [vmem:[%s1 + $0x3b8] sm:$0xff]
    %v150 = vld [vmem:[%s1 + $0x3c0] sm:$0xff]
    %v151 = vld [vmem:[%s1 + $0x3c8] sm:$0xff]
    %v152 = vld [vmem:[%s1 + $0x3d0] sm:$0xff]
    %v153 = vld [vmem:[%s1 + $0x3d8] sm:$0xff]
    %v154 = vld [vmem:[%s1 + $0x3e0] sm:$0xff]
    %v155 = vld [vmem:[%s1 + $0x3e8] sm:$0xff]
    %v156 = vld [vmem:[%s1 + $0x3f0] sm:$0xff]
    %v157 = vld [vmem:[%s1 + $0x3f8] sm:$0xff]
    %v158 = vld [vmem:[%s1 + $0x400] sm:$0xff]
    %v159 = vld [vmem:[%s1 + $0x408] sm:$0xff]
    %v160 = vld [vmem:[%s1 + $0x410] sm:$0xff]
    %v161 = vld [vmem:[%s1 + $0x418] sm:$0xff]
    %v162 = vld [vmem:[%s1 + $0x420] sm:$0xff]
    %v163 = vld [vmem:[%s1 + $0x428] sm:$0xff]
    %v164 = vld [vmem:[%s1 + $0x430] sm:$0xff]
    %v165 = vld [vmem:[%s1 + $0x438] sm:$0xff]
    %v166 = vld [vmem:[%s1 + $0x440] sm:$0xff]
    %v167 = vld [vmem:[%s1 + $0x448] sm:$0xff]
    %v168 = vld [vmem:[%s1 + $0x450] sm:$0xff]
    %v169 = vld [vmem:[%s1 + $0x458] sm:$0xff]
    %v170 = vld [vmem:[%s1 + $0x460] sm:$0xff]
    %v171 = vld [vmem:[%s1 + $0x468] sm:$0xff]
    %v172 = vld [vmem:[%s1 + $0x470] sm:$0xff]
    %v173 = vld [vmem:[%s1 + $0x478] sm:$0xff]
    %v174 = vld [vmem:[%s1 + $0x480] sm:$0xff]
    %v175 = vld [vmem:[%s1 + $0x488] sm:$0xff]
    %v176 = vld [vmem:[%s1 + $0x490] sm:$0xff]
    %v177 = vld [vmem:[%s1 + $0x498] sm:$0xff]
    %v178 = vld [vmem:[%s1 + $0x4a0] sm:$0xff]
    %v179 = vld [vmem:[%s1 + $0x4a8] sm:$0xff]
    %v180 = vld [vmem:[%s1 + $0x4b0] sm:$0xff]
    %v181 = vld [vmem:[%s1 + $0x4b8] sm:$0xff]
    %v182 = vld [vmem:[%s1 + $0x4c0] sm:$0xff]
    %v183 = vld [vmem:[%s1 + $0x4c8] sm:$0xff]
    %v184 = vld [vmem:[%s1 + $0x4d0] sm:$0xff]
    %v185 = vld [vmem:[%s1 + $0x4d8] sm:$0xff]
    %v186 = vld [vmem:[%s1 + $0x4e0] sm:$0xff]
    %v187 = vld [vmem:[%s1 + $0x4e8] sm:$0xff]
    %v188 = vld [vmem:[%s1 + $0x4f0] sm:$0xff]
    %v189 = vld [vmem:[%s1 + $0x4f8] sm:$0xff]
    %v190 = vld [vmem:[%s1 + $0x500] sm:$0xff]
    %v191 = vld [vmem:[%s1 + $0x508] sm:$0xff]
    %v192 = vld [vmem:[%s1 + $0x510] sm:$0xff]
    %v193 = vld [vmem:[%s1 + $0x518] sm:$0xff]
    %v194 = vld [vmem:[%s1 + $0x520] sm:$0xff]
    %v195 = vld [vmem:[%s1 + $0x528] sm:$0xff]
    %v196 = vld [vmem:[%s1 + $0x530] sm:$0xff]
    %v197 = vld [vmem:[%s1 + $0x538] sm:$0xff]
    %v198 = vld [vmem:[%s1 + $0x540] sm:$0xff]
    %v199 = vld [vmem:[%s1 + $0x548] sm:$0xff]
    %v200 = vld [vmem:[%s1 + $0x550] sm:$0xff]
    %v201 = vld [vmem:[%s1 + $0x558] sm:$0xff]
    %v202 = vld [vmem:[%s1 + $0x560] sm:$0xff]
    %v203 = vld [vmem:[%s1 + $0x568] sm:$0xff]
    %v204 = vld [vmem:[%s1 + $0x570] sm:$0xff]
    %v205 = vld [vmem:[%s1 + $0x578] sm:$0xff]
    %v206 = vld [vmem:[%s1 + $0x580] sm:$0xff]
    %v207 = vld [vmem:[%s1 + $0x588] sm:$0xff]
    %v208 = vld [vmem:[%s1 + $0x590] sm:$0xff]
    %v209 = vld [vmem:[%s1 + $0x598] sm:$0xff]
    %v210 = vld [vmem:[%s1 + $0x5a0] sm:$0xff]
    %v211 = vld [vmem:[%s1 + $0x5a8] sm:$0xff]
    %v212 = vld [vmem:[%s1 + $0x5b0] sm:$0xff]
    %v213 = vld [vmem:[%s1 + $0x5b8] sm:$0xff]
    %v214 = vld [vmem:[%s1 + $0x5c0] sm:$0xff]
    %v215 = vld [vmem:[%s1 + $0x5c8] sm:$0xff]
    %v216 = vld [vmem:[%s1 + $0x5d0] sm:$0xff]
    %v217 = vld [vmem:[%s1 + $0x5d8] sm:$0xff]
    %v218 = vld [vmem:[%s1 + $0x5e0] sm:$0xff]
    %v219 = vld [vmem:[%s1 + $0x5e8] sm:$0xff]
    %v220 = vld [vmem:[%s1 + $0x5f0] sm:$0xff]
    %v221 = vld [vmem:[%s1 + $0x5f8] sm:$0xff]
    %v222 = vld [vmem:[%s1 + $0x600] sm:$0xff]
    %v223 = vld [vmem:[%s1 + $0x608] sm:$0xff]
    %v224 = vld [vmem:[%s1 + $0x610] sm:$0xff]
    %v225 = vld [vmem:[%s1 + $0x618] sm:$0xff]
    %v226 = vld [vmem:[%s1 + $0x620] sm:$0xff]
    %v227 = vld [vmem:[%s1 + $0x628] sm:$0xff]
    %v228 = vld [vmem:[%s1 + $0x630] sm:$0xff]
    %v229 = vld [vmem:[%s1 + $0x638] sm:$0xff]
    %v230 = vld [vmem:[%s1 + $0x640] sm:$0xff]
    %v231 = vld [vmem:[%s1 + $0x648] sm:$0xff]
    %v232 = vld [vmem:[%s1 + $0x650] sm:$0xff]
    %v233 = vld [vmem:[%s1 + $0x658] sm:$0xff]
    %v234 = vld [vmem:[%s1 + $0x660] sm:$0xff]
    %v235 = vld [vmem:[%s1 + $0x668] sm:$0xff]
    %v236 = vld [vmem:[%s1 + $0x670] sm:$0xff]
    %v237 = vld [vmem:[%s1 + $0x678] sm:$0xff]
    %v238 = vld [vmem:[%s1 + $0x680] sm:$0xff]
    %v239 = vld [vmem:[%s1 + $0x688] sm:$0xff]
    %v240 = vld [vmem:[%s1 + $0x690] sm:$0xff]
    %v241 = vld [vmem:[%s1 + $0x698] sm:$0xff]
    %v242 = vld [vmem:[%s1 + $0x6a0] sm:$0xff]
    %v243 = vld [vmem:[%s1 + $0x6a8] sm:$0xff]
    %v244 = vld [vmem:[%s1 + $0x6b0] sm:$0xff]
    %v245 = vld [vmem:[%s1 + $0x6b8] sm:$0xff]
    %v246 = vld [vmem:[%s1 + $0x6c0] sm:$0xff]
    %v247 = vld [vmem:[%s1 + $0x6c8] sm:$0xff]
    %v248 = vld [vmem:[%s1 + $0x6d0] sm:$0xff]
    %v249 = vld [vmem:[%s1 + $0x6d8] sm:$0xff]
    %v250 = vld [vmem:[%s1 + $0x6e0] sm:$0xff]
    %v251 = vld [vmem:[%s1 + $0x6e8] sm:$0xff]
    %v252 = vld [vmem:[%s1 + $0x6f0] sm:$0xff]
    %v253 = vld [vmem:[%s1 + $0x6f8] sm:$0xff]
    %v254 = vld [vmem:[%s1 + $0x700] sm:$0xff]
    %v255 = vld [vmem:[%s1 + $0x708] sm:$0xff]
    %v256 = vld [vmem:[%s1 + $0x710] sm:$0xff]
    %v257 = vld [vmem:[%s1 + $0x718] sm:$0xff]
    %v258 = vld [vmem:[%s1 + $0x720] sm:$0xff]
    %v259 = vld [vmem:[%s1 + $0x728] sm:$0xff]
    %v260 = vld [vmem:[%s1 + $0x730] sm:$0xff]
    %v261 = vld [vmem:[%s1 + $0x738] sm:$0xff]
    %v262 = vld [vmem:[%s1 + $0x740] sm:$0xff]
    %v263 = vld [vmem:[%s1 + $0x748] sm:$0xff]
    %v264 = vld [vmem:[%s1 + $0x750] sm:$0xff]
    %v265 = vld [vmem:[%s1 + $0x758] sm:$0xff]
    %v266 = vld [vmem:[%s1 + $0x760] sm:$0xff]
    %v267 = vld [vmem:[%s1 + $0x768] sm:$0xff]
    %v268 = vld [vmem:[%s1 + $0x770] sm:$0xff]
    %v269 = vld [vmem:[%s1 + $0x778] sm:$0xff]
    %v270 = vld [vmem:[%s1 + $0x780] sm:$0xff]
    %v271 = vld [vmem:[%s1 + $0x788] sm:$0xff]
    %v272 = vld [vmem:[%s1 + $0x790] sm:$0xff]
    %v273 = vld [vmem:[%s1 + $0x798] sm:$0xff]
    %v274 = vld [vmem:[%s1 + $0x7a0] sm:$0xff]
    %v275 = vld [vmem:[%s1 + $0x7a8] sm:$0xff]
    %v276 = vld [vmem:[%s1 + $0x7b0] sm:$0xff]
    %v277 = vld [vmem:[%s1 + $0x7b8] sm:$0xff]
    %v278 = vld [vmem:[%s1 + $0x7c0] sm:$0xff]
    %v279 = vld [vmem:[%s1 + $0x7c8] sm:$0xff]
    %v280 = vld [vmem:[%s1 + $0x7d0] sm:$0xff]
    %v281 = vld [vmem:[%s1 + $0x7d8] sm:$0xff]
    %v282 = vld [vmem:[%s1 + $0x7e0] sm:$0xff]
    %v283 = vld [vmem:[%s1 + $0x7e8] sm:$0xff]
    %v284 = vld [vmem:[%s1 + $0x7f0] sm:$0xff]
    %v285 = vld [vmem:[%s1 + $0x7f8] sm:$0xff]
    %v286 = vld [vmem:[%s1 + $0x800] sm:$0xff]
    %v287 = vld [vmem:[%s1 + $0x808] sm:$0xff]
    %v288 = vld [vmem:[%s1 + $0x810] sm:$0xff]
    %v289 = vld [vmem:[%s1 + $0x818] sm:$0xff]
    %v290 = vld [vmem:[%s1 + $0x820] sm:$0xff]
    %v291 = vld [vmem:[%s1 + $0x828] sm:$0xff]
    %v292 = vld [vmem:[%s1 + $0x830] sm:$0xff]
    %v293 = vld [vmem:[%s1 + $0x838] sm:$0xff]
    %v294 = vld [vmem:[%s1 + $0x840] sm:$0xff]
    %v295 = vld [vmem:[%s1 + $0x848] sm:$0xff]
    %v296 = vld [vmem:[%s1 + $0x850] sm:$0xff]
    %v297 = vld [vmem:[%s1 + $0x858] sm:$0xff]
    %v298 = vld [vmem:[%s1 + $0x860] sm:$0xff]
    %v299 = vld [vmem:[%s1 + $0x868] sm:$0xff]
    %v300 = vld [vmem:[%s1 + $0x870] sm:$0xff]
    %v301 = vld [vmem:[%s1 + $0x878] sm:$0xff]
    %v302 = vld [vmem:[%s1 + $0x880] sm:$0xff]
    %v303 = vld [vmem:[%s1 + $0x888] sm:$0xff]
    %v304 = vld [vmem:[%s1 + $0x890] sm:$0xff]
    %v305 = vld [vmem:[%s1 + $0x898] sm:$0xff]
    %v306 = vld [vmem:[%s1 + $0x8a0] sm:$0xff]
    %v307 = vld [vmem:[%s1 + $0x8a8] sm:$0xff]
    %v308 = vld [vmem:[%s1 + $0x8b0] sm:$0xff]
    %v309 = vld [vmem:[%s1 + $0x8b8] sm:$0xff]
    %v310 = vld [vmem:[%s1 + $0x8c0] sm:$0xff]
    %v311 = vld [vmem:[%s1 + $0x8c8] sm:$0xff]
    %v312 = vld [vmem:[%s1 + $0x8d0] sm:$0xff]
    %v313 = vld [vmem:[%s1 + $0x8d8] sm:$0xff]
    %v314 = vld [vmem:[%s1 + $0x8e0] sm:$0xff]
    %v315 = vld [vmem:[%s1 + $0x8e8] sm:$0xff]
    %v316 = vld [vmem:[%s1 + $0x8f0] sm:$0xff]
    %v317 = vld [vmem:[%s1 + $0x8f8] sm:$0xff]
    %v318 = vld [vmem:[%s2] sm:$0x3]
    %v320 = vperm.slane %v318, 0
    %v321 = vperm.slane %v318, 1
    %325 = vst [vmem:[#allocation1] ss:$9 sm:$0xff] %v27
    %v326 = vld [vmem:[#allocation1] sm:$0xff]
    %v327 = vld [vmem:[#allocation1 + $0x9] sm:$0xff]
    %v328 = vld [vmem:[#allocation1 + $0x12] sm:$0xff]
    %v329 = vld [vmem:[#allocation1 + $0x1b] sm:$0xff]
    %v330 = vld [vmem:[#allocation1 + $0x24] sm:$0xff]
    %v331 = vld [vmem:[#allocation1 + $0x2d] sm:$0xff]
    %v332 = vld [vmem:[#allocation1 + $0x36] sm:$0xff]
    %v333 = vld [vmem:[#allocation1 + $0x3f] sm:$0xff]
    %335 = vst [vmem:[#allocation1] ss:$9 sm:$0xff] %v28
    %v336 = vld [vmem:[#allocation1] sm:$0xff]
    %v337 = vld [vmem:[#allocation1 + $0x9] sm:$0xff]
    %v338 = vld [vmem:[#allocation1 + $0x12] sm:$0xff]
    %v339 = vld [vmem:[#allocation1 + $0x1b] sm:$0xff]
    %v340 = vld [vmem:[#allocation1 + $0x24] sm:$0xff]
    %v341 = vld [vmem:[#allocation1 + $0x2d] sm:$0xff]
    %v342 = vld [vmem:[#allocation1 + $0x36] sm:$0xff]
    %v343 = vld [vmem:[#allocation1 + $0x3f] sm:$0xff]
    %345 = vst [vmem:[#allocation1] ss:$9 sm:$0xff] %v29
    %v346 = vld [vmem:[#allocation1] sm:$0xff]
    %v347 = vld [vmem:[#allocation1 + $0x9] sm:$0xff]
    %v654 = vunpack.c.l.b16 %v30
    %v655 = vunpack.c.h.b16 %v30
    %v656 = vunpack.c.l.b16 %v31
    %v657 = vunpack.c.h.b16 %v31
    %v658 = vunpack.c.l.b16 %v32
    %v659 = vunpack.c.h.b16 %v32
    %v660 = vunpack.c.l.b16 %v33
    %v661 = vunpack.c.h.b16 %v33
    %v662 = vunpack.c.l.b16 %v34
    %v663 = vunpack.c.h.b16 %v34
    %v664 = vunpack.c.l.b16 %v35
    %v665 = vunpack.c.h.b16 %v35
    %v666 = vunpack.c.l.b16 %v36
    %v667 = vunpack.c.h.b16 %v36
    %v668 = vunpack.c.l.b16 %v37
    %v669 = vunpack.c.h.b16 %v37
    %v670 = vunpack.c.l.b16 %v38
    %v671 = vunpack.c.h.b16 %v38
    %v672 = vunpack.c.l.b16 %v39
    %v673 = vunpack.c.h.b16 %v39
    %v674 = vunpack.c.l.b16 %v40
    %v675 = vunpack.c.h.b16 %v40
    %v676 = vunpack.c.l.b16 %v41
    %v677 = vunpack.c.h.b16 %v41
    %v678 = vunpack.c.l.b16 %v42
    %v679 = vunpack.c.h.b16 %v42
    %v680 = vunpack.c.l.b16 %v43
    %v681 = vunpack.c.h.b16 %v43
    %v682 = vunpack.c.l.b16 %v44
    %v683 = vunpack.c.h.b16 %v44
    %v684 = vunpack.c.l.b16 %v45
    %v685 = vunpack.c.h.b16 %v45
    %v686 = vunpack.c.l.b16 %v46
    %v687 = vunpack.c.h.b16 %v46
    %v688 = vunpack.c.l.b16 %v47
    %v689 = vunpack.c.h.b16 %v47
    %v690 = vunpack.c.l.b16 %v48
    %v691 = vunpack.c.h.b16 %v48
    %v692 = vunpack.c.l.b16 %v49
    %v693 = vunpack.c.h.b16 %v49
    %v694 = vunpack.c.l.b16 %v50
    %v695 = vunpack.c.h.b16 %v50
    %v696 = vunpack.c.l.b16 %v51
    %v697 = vunpack.c.h.b16 %v51
    %v698 = vunpack.c.l.b16 %v52
    %v699 = vunpack.c.h.b16 %v52
    %v700 = vunpack.c.l.b16 %v53
    %v701 = vunpack.c.h.b16 %v53
    %v702 = vunpack.c.l.b16 %v54
    %v703 = vunpack.c.h.b16 %v54
    %v704 = vunpack.c.l.b16 %v55
    %v705 = vunpack.c.h.b16 %v55
    %v706 = vunpack.c.l.b16 %v56
    %v707 = vunpack.c.h.b16 %v56
    %v708 = vunpack.c.l.b16 %v57
    %v709 = vunpack.c.h.b16 %v57
    %v710 = vunpack.c.l.b16 %v58
    %v711 = vunpack.c.h.b16 %v58
    %v712 = vunpack.c.l.b16 %v59
    %v713 = vunpack.c.h.b16 %v59
    %v714 = vunpack.c.l.b16 %v60
    %v715 = vunpack.c.h.b16 %v60
    %v716 = vunpack.c.l.b16 %v61
    %v717 = vunpack.c.h.b16 %v61
    %v718 = vunpack.c.l.b16 %v62
    %v719 = vunpack.c.h.b16 %v62
    %v720 = vunpack.c.l.b16 %v63
    %v721 = vunpack.c.h.b16 %v63
    %v722 = vunpack.c.l.b16 %v64
    %v723 = vunpack.c.h.b16 %v64
    %v724 = vunpack.c.l.b16 %v65
    %v725 = vunpack.c.h.b16 %v65
    %v726 = vunpack.c.l.b16 %v66
    %v727 = vunpack.c.h.b16 %v66
    %v728 = vunpack.c.l.b16 %v67
    %v729 = vunpack.c.h.b16 %v67
    %v730 = vunpack.c.l.b16 %v68
    %v731 = vunpack.c.h.b16 %v68
    %v732 = vunpack.c.l.b16 %v69
    %v733 = vunpack.c.h.b16 %v69
    %v734 = vunpack.c.l.b16 %v70
    %v735 = vunpack.c.h.b16 %v70
    %v736 = vunpack.c.l.b16 %v71
    %v737 = vunpack.c.h.b16 %v71
    %v738 = vunpack.c.l.b16 %v72
    %v739 = vunpack.c.h.b16 %v72
    %v740 = vunpack.c.l.b16 %v73
    %v741 = vunpack.c.h.b16 %v73
    %v742 = vunpack.c.l.b16 %v74
    %v743 = vunpack.c.h.b16 %v74
    %v744 = vunpack.c.l.b16 %v75
    %v745 = vunpack.c.h.b16 %v75
    %v746 = vunpack.c.l.b16 %v76
    %v747 = vunpack.c.h.b16 %v76
    %v748 = vunpack.c.l.b16 %v77
    %v749 = vunpack.c.h.b16 %v77
    %v750 = vunpack.c.l.b16 %v78
    %v751 = vunpack.c.h.b16 %v78
    %v752 = vunpack.c.l.b16 %v79
    %v753 = vunpack.c.h.b16 %v79
    %v754 = vunpack.c.l.b16 %v80
    %v755 = vunpack.c.h.b16 %v80
    %v756 = vunpack.c.l.b16 %v81
    %v757 = vunpack.c.h.b16 %v81
    %v758 = vunpack.c.l.b16 %v82
    %v759 = vunpack.c.h.b16 %v82
    %v760 = vunpack.c.l.b16 %v83
    %v761 = vunpack.c.h.b16 %v83
    %v762 = vunpack.c.l.b16 %v84
    %v763 = vunpack.c.h.b16 %v84
    %v764 = vunpack.c.l.b16 %v85
    %v765 = vunpack.c.h.b16 %v85
    %v766 = vunpack.c.l.b16 %v86
    %v767 = vunpack.c.h.b16 %v86
    %v768 = vunpack.c.l.b16 %v87
    %v769 = vunpack.c.h.b16 %v87
    %v770 = vunpack.c.l.b16 %v88
    %v771 = vunpack.c.h.b16 %v88
    %v772 = vunpack.c.l.b16 %v89
    %v773 = vunpack.c.h.b16 %v89
    %v774 = vunpack.c.l.b16 %v90
    %v775 = vunpack.c.h.b16 %v90
    %v776 = vunpack.c.l.b16 %v91
    %v777 = vunpack.c.h.b16 %v91
    %v778 = vunpack.c.l.b16 %v92
    %v779 = vunpack.c.h.b16 %v92
    %v780 = vunpack.c.l.b16 %v93
    %v781 = vunpack.c.h.b16 %v93
    %v782 = vunpack.c.l.b16 %v94
    %v783 = vunpack.c.h.b16 %v94
    %v784 = vunpack.c.l.b16 %v95
    %v785 = vunpack.c.h.b16 %v95
    %v786 = vunpack.c.l.b16 %v96
    %v787 = vunpack.c.h.b16 %v96
    %v788 = vunpack.c.l.b16 %v97
    %v789 = vunpack.c.h.b16 %v97
    %v790 = vunpack.c.l.b16 %v98
    %v791 = vunpack.c.h.b16 %v98
    %v792 = vunpack.c.l.b16 %v99
    %v793 = vunpack.c.h.b16 %v99
    %v794 = vunpack.c.l.b16 %v100
    %v795 = vunpack.c.h.b16 %v100
    %v796 = vunpack.c.l.b16 %v101
    %v797 = vunpack.c.h.b16 %v101
    %v798 = vunpack.c.l.b16 %v102
    %v799 = vunpack.c.h.b16 %v102
    %v800 = vunpack.c.l.b16 %v103
    %v801 = vunpack.c.h.b16 %v103
    %v802 = vunpack.c.l.b16 %v104
    %v803 = vunpack.c.h.b16 %v104
    %v804 = vunpack.c.l.b16 %v105
    %v805 = vunpack.c.h.b16 %v105
    %v806 = vunpack.c.l.b16 %v106
    %v807 = vunpack.c.h.b16 %v106
    %v808 = vunpack.c.l.b16 %v107
    %v809 = vunpack.c.h.b16 %v107
    %v810 = vunpack.c.l.b16 %v108
    %v811 = vunpack.c.h.b16 %v108
    %v812 = vunpack.c.l.b16 %v109
    %v813 = vunpack.c.h.b16 %v109
    %v814 = vunpack.c.l.b16 %v110
    %v815 = vunpack.c.h.b16 %v110
    %v816 = vunpack.c.l.b16 %v111
    %v817 = vunpack.c.h.b16 %v111
    %v818 = vunpack.c.l.b16 %v112
    %v819 = vunpack.c.h.b16 %v112
    %v820 = vunpack.c.l.b16 %v113
    %v821 = vunpack.c.h.b16 %v113
    %v822 = vunpack.c.l.b16 %v114
    %v823 = vunpack.c.h.b16 %v114
    %v824 = vunpack.c.l.b16 %v115
    %v825 = vunpack.c.h.b16 %v115
    %v826 = vunpack.c.l.b16 %v116
    %v827 = vunpack.c.h.b16 %v116
    %v828 = vunpack.c.l.b16 %v117
    %v829 = vunpack.c.h.b16 %v117
    %v830 = vunpack.c.l.b16 %v118
    %v831 = vunpack.c.h.b16 %v118
    %v832 = vunpack.c.l.b16 %v119
    %v833 = vunpack.c.h.b16 %v119
    %v834 = vunpack.c.l.b16 %v120
    %v835 = vunpack.c.h.b16 %v120
    %v836 = vunpack.c.l.b16 %v121
    %v837 = vunpack.c.h.b16 %v121
    %v838 = vunpack.c.l.b16 %v122
    %v839 = vunpack.c.h.b16 %v122
    %v840 = vunpack.c.l.b16 %v123
    %v841 = vunpack.c.h.b16 %v123
    %v842 = vunpack.c.l.b16 %v124
    %v843 = vunpack.c.h.b16 %v124
    %v844 = vunpack.c.l.b16 %v125
    %v845 = vunpack.c.h.b16 %v125
    %v846 = vunpack.c.l.b16 %v126
    %v847 = vunpack.c.h.b16 %v126
    %v848 = vunpack.c.l.b16 %v127
    %v849 = vunpack.c.h.b16 %v127
    %v850 = vunpack.c.l.b16 %v128
    %v851 = vunpack.c.h.b16 %v128
    %v852 = vunpack.c.l.b16 %v129
    %v853 = vunpack.c.h.b16 %v129
    %v854 = vunpack.c.l.b16 %v130
    %v855 = vunpack.c.h.b16 %v130
    %v856 = vunpack.c.l.b16 %v131
    %v857 = vunpack.c.h.b16 %v131
    %v858 = vunpack.c.l.b16 %v132
    %v859 = vunpack.c.h.b16 %v132
    %v860 = vunpack.c.l.b16 %v133
    %v861 = vunpack.c.h.b16 %v133
    %v862 = vunpack.c.l.b16 %v134
    %v863 = vunpack.c.h.b16 %v134
    %v864 = vunpack.c.l.b16 %v135
    %v865 = vunpack.c.h.b16 %v135
    %v866 = vunpack.c.l.b16 %v136
    %v867 = vunpack.c.h.b16 %v136
    %v868 = vunpack.c.l.b16 %v137
    %v869 = vunpack.c.h.b16 %v137
    %v870 = vunpack.c.l.b16 %v138
    %v871 = vunpack.c.h.b16 %v138
    %v872 = vunpack.c.l.b16 %v139
    %v873 = vunpack.c.h.b16 %v139
    %v874 = vunpack.c.l.b16 %v140
    %v875 = vunpack.c.h.b16 %v140
    %v876 = vunpack.c.l.b16 %v141
    %v877 = vunpack.c.h.b16 %v141
    %v878 = vunpack.c.l.b16 %v142
    %v879 = vunpack.c.h.b16 %v142
    %v880 = vunpack.c.l.b16 %v143
    %v881 = vunpack.c.h.b16 %v143
    %v882 = vunpack.c.l.b16 %v144
    %v883 = vunpack.c.h.b16 %v144
    %v884 = vunpack.c.l.b16 %v145
    %v885 = vunpack.c.h.b16 %v145
    %v886 = vunpack.c.l.b16 %v146
    %v887 = vunpack.c.h.b16 %v146
    %v888 = vunpack.c.l.b16 %v147
    %v889 = vunpack.c.h.b16 %v147
    %v890 = vunpack.c.l.b16 %v148
    %v891 = vunpack.c.h.b16 %v148
    %v892 = vunpack.c.l.b16 %v149
    %v893 = vunpack.c.h.b16 %v149
    %v894 = vunpack.c.l.b16 %v150
    %v895 = vunpack.c.h.b16 %v150
    %v896 = vunpack.c.l.b16 %v151
    %v897 = vunpack.c.h.b16 %v151
    %v898 = vunpack.c.l.b16 %v152
    %v899 = vunpack.c.h.b16 %v152
    %v900 = vunpack.c.l.b16 %v153
    %v901 = vunpack.c.h.b16 %v153
    %v902 = vunpack.c.l.b16 %v154
    %v903 = vunpack.c.h.b16 %v154
    %v904 = vunpack.c.l.b16 %v155
    %v905 = vunpack.c.h.b16 %v155
    %v906 = vunpack.c.l.b16 %v156
    %v907 = vunpack.c.h.b16 %v156
    %v908 = vunpack.c.l.b16 %v157
    %v909 = vunpack.c.h.b16 %v157
    %v910 = vunpack.c.l.b16 %v158
    %v911 = vunpack.c.h.b16 %v158
    %v912 = vunpack.c.l.b16 %v159
    %v913 = vunpack.c.h.b16 %v159
    %v914 = vunpack.c.l.b16 %v160
    %v915 = vunpack.c.h.b16 %v160
    %v916 = vunpack.c.l.b16 %v161
    %v917 = vunpack.c.h.b16 %v161
    %v918 = vunpack.c.l.b16 %v162
    %v919 = vunpack.c.h.b16 %v162
    %v920 = vunpack.c.l.b16 %v163
    %v921 = vunpack.c.h.b16 %v163
    %v922 = vunpack.c.l.b16 %v164
    %v923 = vunpack.c.h.b16 %v164
    %v924 = vunpack.c.l.b16 %v165
    %v925 = vunpack.c.h.b16 %v165
    %v926 = vunpack.c.l.b16 %v166
    %v927 = vunpack.c.h.b16 %v166
    %v928 = vunpack.c.l.b16 %v167
    %v929 = vunpack.c.h.b16 %v167
    %v930 = vunpack.c.l.b16 %v168
    %v931 = vunpack.c.h.b16 %v168
    %v932 = vunpack.c.l.b16 %v169
    %v933 = vunpack.c.h.b16 %v169
    %v934 = vunpack.c.l.b16 %v170
    %v935 = vunpack.c.h.b16 %v170
    %v936 = vunpack.c.l.b16 %v171
    %v937 = vunpack.c.h.b16 %v171
    %v938 = vunpack.c.l.b16 %v172
    %v939 = vunpack.c.h.b16 %v172
    %v940 = vunpack.c.l.b16 %v173
    %v941 = vunpack.c.h.b16 %v173
    %v942 = vunpack.c.l.b16 %v174
    %v943 = vunpack.c.h.b16 %v174
    %v944 = vunpack.c.l.b16 %v175
    %v945 = vunpack.c.h.b16 %v175
    %v946 = vunpack.c.l.b16 %v176
    %v947 = vunpack.c.h.b16 %v176
    %v948 = vunpack.c.l.b16 %v177
    %v949 = vunpack.c.h.b16 %v177
    %v950 = vunpack.c.l.b16 %v178
    %v951 = vunpack.c.h.b16 %v178
    %v952 = vunpack.c.l.b16 %v179
    %v953 = vunpack.c.h.b16 %v179
    %v954 = vunpack.c.l.b16 %v180
    %v955 = vunpack.c.h.b16 %v180
    %v956 = vunpack.c.l.b16 %v181
    %v957 = vunpack.c.h.b16 %v181
    %v958 = vunpack.c.l.b16 %v182
    %v959 = vunpack.c.h.b16 %v182
    %v960 = vunpack.c.l.b16 %v183
    %v961 = vunpack.c.h.b16 %v183
    %v962 = vunpack.c.l.b16 %v184
    %v963 = vunpack.c.h.b16 %v184
    %v964 = vunpack.c.l.b16 %v185
    %v965 = vunpack.c.h.b16 %v185
    %v966 = vunpack.c.l.b16 %v186
    %v967 = vunpack.c.h.b16 %v186
    %v968 = vunpack.c.l.b16 %v187
    %v969 = vunpack.c.h.b16 %v187
    %v970 = vunpack.c.l.b16 %v188
    %v971 = vunpack.c.h.b16 %v188
    %v972 = vunpack.c.l.b16 %v189
    %v973 = vunpack.c.h.b16 %v189
    %v974 = vunpack.c.l.b16 %v190
    %v975 = vunpack.c.h.b16 %v190
    %v976 = vunpack.c.l.b16 %v191
    %v977 = vunpack.c.h.b16 %v191
    %v978 = vunpack.c.l.b16 %v192
    %v979 = vunpack.c.h.b16 %v192
    %v980 = vunpack.c.l.b16 %v193
    %v981 = vunpack.c.h.b16 %v193
    %v982 = vunpack.c.l.b16 %v194
    %v983 = vunpack.c.h.b16 %v194
    %v984 = vunpack.c.l.b16 %v195
    %v985 = vunpack.c.h.b16 %v195
    %v986 = vunpack.c.l.b16 %v196
    %v987 = vunpack.c.h.b16 %v196
    %v988 = vunpack.c.l.b16 %v197
    %v989 = vunpack.c.h.b16 %v197
    %v990 = vunpack.c.l.b16 %v198
    %v991 = vunpack.c.h.b16 %v198
    %v992 = vunpack.c.l.b16 %v199
    %v993 = vunpack.c.h.b16 %v199
    %v994 = vunpack.c.l.b16 %v200
    %v995 = vunpack.c.h.b16 %v200
    %v996 = vunpack.c.l.b16 %v201
    %v997 = vunpack.c.h.b16 %v201
    %v998 = vunpack.c.l.b16 %v202
    %v999 = vunpack.c.h.b16 %v202
    %v1000 = vunpack.c.l.b16 %v203
    %v1001 = vunpack.c.h.b16 %v203
    %v1002 = vunpack.c.l.b16 %v204
    %v1003 = vunpack.c.h.b16 %v204
    %v1004 = vunpack.c.l.b16 %v205
    %v1005 = vunpack.c.h.b16 %v205
    %v1006 = vunpack.c.l.b16 %v206
    %v1007 = vunpack.c.h.b16 %v206
    %v1008 = vunpack.c.l.b16 %v207
    %v1009 = vunpack.c.h.b16 %v207
    %v1010 = vunpack.c.l.b16 %v208
    %v1011 = vunpack.c.h.b16 %v208
    %v1012 = vunpack.c.l.b16 %v209
    %v1013 = vunpack.c.h.b16 %v209
    %v1014 = vunpack.c.l.b16 %v210
    %v1015 = vunpack.c.h.b16 %v210
    %v1016 = vunpack.c.l.b16 %v211
    %v1017 = vunpack.c.h.b16 %v211
    %v1018 = vunpack.c.l.b16 %v212
    %v1019 = vunpack.c.h.b16 %v212
    %v1020 = vunpack.c.l.b16 %v213
    %v1021 = vunpack.c.h.b16 %v213
    %v1022 = vunpack.c.l.b16 %v214
    %v1023 = vunpack.c.h.b16 %v214
    %v1024 = vunpack.c.l.b16 %v215
    %v1025 = vunpack.c.h.b16 %v215
    %v1026 = vunpack.c.l.b16 %v216
    %v1027 = vunpack.c.h.b16 %v216
    %v1028 = vunpack.c.l.b16 %v217
    %v1029 = vunpack.c.h.b16 %v217
    %v1030 = vunpack.c.l.b16 %v218
    %v1031 = vunpack.c.h.b16 %v218
    %v1032 = vunpack.c.l.b16 %v219
    %v1033 = vunpack.c.h.b16 %v219
    %v1034 = vunpack.c.l.b16 %v220
    %v1035 = vunpack.c.h.b16 %v220
    %v1036 = vunpack.c.l.b16 %v221
    %v1037 = vunpack.c.h.b16 %v221
    %v1038 = vunpack.c.l.b16 %v222
    %v1039 = vunpack.c.h.b16 %v222
    %v1040 = vunpack.c.l.b16 %v223
    %v1041 = vunpack.c.h.b16 %v223
    %v1042 = vunpack.c.l.b16 %v224
    %v1043 = vunpack.c.h.b16 %v224
    %v1044 = vunpack.c.l.b16 %v225
    %v1045 = vunpack.c.h.b16 %v225
    %v1046 = vunpack.c.l.b16 %v226
    %v1047 = vunpack.c.h.b16 %v226
    %v1048 = vunpack.c.l.b16 %v227
    %v1049 = vunpack.c.h.b16 %v227
    %v1050 = vunpack.c.l.b16 %v228
    %v1051 = vunpack.c.h.b16 %v228
    %v1052 = vunpack.c.l.b16 %v229
    %v1053 = vunpack.c.h.b16 %v229
    %v1054 = vunpack.c.l.b16 %v230
    %v1055 = vunpack.c.h.b16 %v230
    %v1056 = vunpack.c.l.b16 %v231
    %v1057 = vunpack.c.h.b16 %v231
    %v1058 = vunpack.c.l.b16 %v232
    %v1059 = vunpack.c.h.b16 %v232
    %v1060 = vunpack.c.l.b16 %v233
    %v1061 = vunpack.c.h.b16 %v233
    %v1062 = vunpack.c.l.b16 %v234
    %v1063 = vunpack.c.h.b16 %v234
    %v1064 = vunpack.c.l.b16 %v235
    %v1065 = vunpack.c.h.b16 %v235
    %v1066 = vunpack.c.l.b16 %v236
    %v1067 = vunpack.c.h.b16 %v236
    %v1068 = vunpack.c.l.b16 %v237
    %v1069 = vunpack.c.h.b16 %v237
    %v1070 = vunpack.c.l.b16 %v238
    %v1071 = vunpack.c.h.b16 %v238
    %v1072 = vunpack.c.l.b16 %v239
    %v1073 = vunpack.c.h.b16 %v239
    %v1074 = vunpack.c.l.b16 %v240
    %v1075 = vunpack.c.h.b16 %v240
    %v1076 = vunpack.c.l.b16 %v241
    %v1077 = vunpack.c.h.b16 %v241
    %v1078 = vunpack.c.l.b16 %v242
    %v1079 = vunpack.c.h.b16 %v242
    %v1080 = vunpack.c.l.b16 %v243
    %v1081 = vunpack.c.h.b16 %v243
    %v1082 = vunpack.c.l.b16 %v244
    %v1083 = vunpack.c.h.b16 %v244
    %v1084 = vunpack.c.l.b16 %v245
    %v1085 = vunpack.c.h.b16 %v245
    %v1086 = vunpack.c.l.b16 %v246
    %v1087 = vunpack.c.h.b16 %v246
    %v1088 = vunpack.c.l.b16 %v247
    %v1089 = vunpack.c.h.b16 %v247
    %v1090 = vunpack.c.l.b16 %v248
    %v1091 = vunpack.c.h.b16 %v248
    %v1092 = vunpack.c.l.b16 %v249
    %v1093 = vunpack.c.h.b16 %v249
    %v1094 = vunpack.c.l.b16 %v250
    %v1095 = vunpack.c.h.b16 %v250
    %v1096 = vunpack.c.l.b16 %v251
    %v1097 = vunpack.c.h.b16 %v251
    %v1098 = vunpack.c.l.b16 %v252
    %v1099 = vunpack.c.h.b16 %v252
    %v1100 = vunpack.c.l.b16 %v253
    %v1101 = vunpack.c.h.b16 %v253
    %v1102 = vunpack.c.l.b16 %v254
    %v1103 = vunpack.c.h.b16 %v254
    %v1104 = vunpack.c.l.b16 %v255
    %v1105 = vunpack.c.h.b16 %v255
    %v1106 = vunpack.c.l.b16 %v256
    %v1107 = vunpack.c.h.b16 %v256
    %v1108 = vunpack.c.l.b16 %v257
    %v1109 = vunpack.c.h.b16 %v257
    %v1110 = vunpack.c.l.b16 %v258
    %v1111 = vunpack.c.h.b16 %v258
    %v1112 = vunpack.c.l.b16 %v259
    %v1113 = vunpack.c.h.b16 %v259
    %v1114 = vunpack.c.l.b16 %v260
    %v1115 = vunpack.c.h.b16 %v260
    %v1116 = vunpack.c.l.b16 %v261
    %v1117 = vunpack.c.h.b16 %v261
    %v1118 = vunpack.c.l.b16 %v262
    %v1119 = vunpack.c.h.b16 %v262
    %v1120 = vunpack.c.l.b16 %v263
    %v1121 = vunpack.c.h.b16 %v263
    %v1122 = vunpack.c.l.b16 %v264
    %v1123 = vunpack.c.h.b16 %v264
    %v1124 = vunpack.c.l.b16 %v265
    %v1125 = vunpack.c.h.b16 %v265
    %v1126 = vunpack.c.l.b16 %v266
    %v1127 = vunpack.c.h.b16 %v266
    %v1128 = vunpack.c.l.b16 %v267
    %v1129 = vunpack.c.h.b16 %v267
    %v1130 = vunpack.c.l.b16 %v268
    %v1131 = vunpack.c.h.b16 %v268
    %v1132 = vunpack.c.l.b16 %v269
    %v1133 = vunpack.c.h.b16 %v269
    %v1134 = vunpack.c.l.b16 %v270
    %v1135 = vunpack.c.h.b16 %v270
    %v1136 = vunpack.c.l.b16 %v271
    %v1137 = vunpack.c.h.b16 %v271
    %v1138 = vunpack.c.l.b16 %v272
    %v1139 = vunpack.c.h.b16 %v272
    %v1140 = vunpack.c.l.b16 %v273
    %v1141 = vunpack.c.h.b16 %v273
    %v1142 = vunpack.c.l.b16 %v274
    %v1143 = vunpack.c.h.b16 %v274
    %v1144 = vunpack.c.l.b16 %v275
    %v1145 = vunpack.c.h.b16 %v275
    %v1146 = vunpack.c.l.b16 %v276
    %v1147 = vunpack.c.h.b16 %v276
    %v1148 = vunpack.c.l.b16 %v277
    %v1149 = vunpack.c.h.b16 %v277
    %v1150 = vunpack.c.l.b16 %v278
    %v1151 = vunpack.c.h.b16 %v278
    %v1152 = vunpack.c.l.b16 %v279
    %v1153 = vunpack.c.h.b16 %v279
    %v1154 = vunpack.c.l.b16 %v280
    %v1155 = vunpack.c.h.b16 %v280
    %v1156 = vunpack.c.l.b16 %v281
    %v1157 = vunpack.c.h.b16 %v281
    %v1158 = vunpack.c.l.b16 %v282
    %v1159 = vunpack.c.h.b16 %v282
    %v1160 = vunpack.c.l.b16 %v283
    %v1161 = vunpack.c.h.b16 %v283
    %v1162 = vunpack.c.l.b16 %v284
    %v1163 = vunpack.c.h.b16 %v284
    %v1164 = vunpack.c.l.b16 %v285
    %v1165 = vunpack.c.h.b16 %v285
    %v1166 = vunpack.c.l.b16 %v286
    %v1167 = vunpack.c.h.b16 %v286
    %v1168 = vunpack.c.l.b16 %v287
    %v1169 = vunpack.c.h.b16 %v287
    %v1170 = vunpack.c.l.b16 %v288
    %v1171 = vunpack.c.h.b16 %v288
    %v1172 = vunpack.c.l.b16 %v289
    %v1173 = vunpack.c.h.b16 %v289
    %v1174 = vunpack.c.l.b16 %v290
    %v1175 = vunpack.c.h.b16 %v290
    %v1176 = vunpack.c.l.b16 %v291
    %v1177 = vunpack.c.h.b16 %v291
    %v1178 = vunpack.c.l.b16 %v292
    %v1179 = vunpack.c.h.b16 %v292
    %v1180 = vunpack.c.l.b16 %v293
    %v1181 = vunpack.c.h.b16 %v293
    %v1182 = vunpack.c.l.b16 %v294
    %v1183 = vunpack.c.h.b16 %v294
    %v1184 = vunpack.c.l.b16 %v295
    %v1185 = vunpack.c.h.b16 %v295
    %v1186 = vunpack.c.l.b16 %v296
    %v1187 = vunpack.c.h.b16 %v296
    %v1188 = vunpack.c.l.b16 %v297
    %v1189 = vunpack.c.h.b16 %v297
    %v1190 = vunpack.c.l.b16 %v298
    %v1191 = vunpack.c.h.b16 %v298
    %v1192 = vunpack.c.l.b16 %v299
    %v1193 = vunpack.c.h.b16 %v299
    %v1194 = vunpack.c.l.b16 %v300
    %v1195 = vunpack.c.h.b16 %v300
    %v1196 = vunpack.c.l.b16 %v301
    %v1197 = vunpack.c.h.b16 %v301
    %v1198 = vunpack.c.l.b16 %v302
    %v1199 = vunpack.c.h.b16 %v302
    %v1200 = vunpack.c.l.b16 %v303
    %v1201 = vunpack.c.h.b16 %v303
    %v1202 = vunpack.c.l.b16 %v304
    %v1203 = vunpack.c.h.b16 %v304
    %v1204 = vunpack.c.l.b16 %v305
    %v1205 = vunpack.c.h.b16 %v305
    %v1206 = vunpack.c.l.b16 %v306
    %v1207 = vunpack.c.h.b16 %v306
    %v1208 = vunpack.c.l.b16 %v307
    %v1209 = vunpack.c.h.b16 %v307
    %v1210 = vunpack.c.l.b16 %v308
    %v1211 = vunpack.c.h.b16 %v308
    %v1212 = vunpack.c.l.b16 %v309
    %v1213 = vunpack.c.h.b16 %v309
    %v1214 = vunpack.c.l.b16 %v310
    %v1215 = vunpack.c.h.b16 %v310
    %v1216 = vunpack.c.l.b16 %v311
    %v1217 = vunpack.c.h.b16 %v311
    %v1218 = vunpack.c.l.b16 %v312
    %v1219 = vunpack.c.h.b16 %v312
    %v1220 = vunpack.c.l.b16 %v313
    %v1221 = vunpack.c.h.b16 %v313
    %v1222 = vunpack.c.l.b16 %v314
    %v1223 = vunpack.c.h.b16 %v314
    %v1224 = vunpack.c.l.b16 %v315
    %v1225 = vunpack.c.h.b16 %v315
    %v1226 = vunpack.c.l.b16 %v316
    %v1227 = vunpack.c.h.b16 %v316
    %v1228 = vunpack.c.l.b16 %v317
    %v1229 = vunpack.c.h.b16 %v317
    %v1230 = vpack.c.b16 %v656, %v654
    %v1231 = vpack.c.b16 %v657, %v655
    %v1232 = vpack.c.b16 %v660, %v658
    %v1233 = vpack.c.b16 %v661, %v659
    %v1234 = vpack.c.b16 %v664, %v662
    %v1235 = vpack.c.b16 %v665, %v663
    %v1236 = vpack.c.b16 %v668, %v666
    %v1237 = vpack.c.b16 %v669, %v667
    %v1238 = vpack.c.b16 %v672, %v670
    %v1239 = vpack.c.b16 %v673, %v671
    %v1240 = vpack.c.b16 %v676, %v674
    %v1241 = vpack.c.b16 %v677, %v675
    %v1242 = vpack.c.b16 %v680, %v678
    %v1243 = vpack.c.b16 %v681, %v679
    %v1244 = vpack.c.b16 %v684, %v682
    %v1245 = vpack.c.b16 %v685, %v683
    %v1246 = vpack.c.b16 %v688, %v686
    %v1247 = vpack.c.b16 %v689, %v687
    %v1248 = vpack.c.b16 %v692, %v690
    %v1249 = vpack.c.b16 %v693, %v691
    %v1250 = vpack.c.b16 %v696, %v694
    %v1251 = vpack.c.b16 %v697, %v695
    %v1252 = vpack.c.b16 %v700, %v698
    %v1253 = vpack.c.b16 %v701, %v699
    %v1254 = vpack.c.b16 %v704, %v702
    %v1255 = vpack.c.b16 %v705, %v703
    %v1256 = vpack.c.b16 %v708, %v706
    %v1257 = vpack.c.b16 %v709, %v707
    %v1258 = vpack.c.b16 %v712, %v710
    %v1259 = vpack.c.b16 %v713, %v711
    %v1260 = vpack.c.b16 %v716, %v714
    %v1261 = vpack.c.b16 %v717, %v715
    %v1262 = vpack.c.b16 %v720, %v718
    %v1263 = vpack.c.b16 %v721, %v719
    %v1264 = vpack.c.b16 %v724, %v722
    %v1265 = vpack.c.b16 %v725, %v723
    %v1266 = vpack.c.b16 %v728, %v726
    %v1267 = vpack.c.b16 %v729, %v727
    %v1268 = vpack.c.b16 %v732, %v730
    %v1269 = vpack.c.b16 %v733, %v731
    %v1270 = vpack.c.b16 %v736, %v734
    %v1271 = vpack.c.b16 %v737, %v735
    %v1272 = vpack.c.b16 %v740, %v738
    %v1273 = vpack.c.b16 %v741, %v739
    %v1274 = vpack.c.b16 %v744, %v742
    %v1275 = vpack.c.b16 %v745, %v743
    %v1276 = vpack.c.b16 %v748, %v746
    %v1277 = vpack.c.b16 %v749, %v747
    %v1278 = vpack.c.b16 %v752, %v750
    %v1279 = vpack.c.b16 %v753, %v751
    %v1280 = vpack.c.b16 %v756, %v754
    %v1281 = vpack.c.b16 %v757, %v755
    %v1282 = vpack.c.b16 %v760, %v758
    %v1283 = vpack.c.b16 %v761, %v759
    %v1284 = vpack.c.b16 %v764, %v762
    %v1285 = vpack.c.b16 %v765, %v763
    %v1286 = vpack.c.b16 %v768, %v766
    %v1287 = vpack.c.b16 %v769, %v767
    %v1288 = vpack.c.b16 %v772, %v770
    %v1289 = vpack.c.b16 %v773, %v771
    %v1290 = vpack.c.b16 %v776, %v774
    %v1291 = vpack.c.b16 %v777, %v775
    %v1292 = vpack.c.b16 %v780, %v778
    %v1293 = vpack.c.b16 %v781, %v779
    %v1294 = vpack.c.b16 %v784, %v782
    %v1295 = vpack.c.b16 %v785, %v783
    %v1296 = vpack.c.b16 %v788, %v786
    %v1297 = vpack.c.b16 %v789, %v787
    %v1298 = vpack.c.b16 %v792, %v790
    %v1299 = vpack.c.b16 %v793, %v791
    %v1300 = vpack.c.b16 %v796, %v794
    %v1301 = vpack.c.b16 %v797, %v795
    %v1302 = vpack.c.b16 %v800, %v798
    %v1303 = vpack.c.b16 %v801, %v799
    %v1304 = vpack.c.b16 %v804, %v802
    %v1305 = vpack.c.b16 %v805, %v803
    %v1306 = vpack.c.b16 %v808, %v806
    %v1307 = vpack.c.b16 %v809, %v807
    %v1308 = vpack.c.b16 %v812, %v810
    %v1309 = vpack.c.b16 %v813, %v811
    %v1310 = vpack.c.b16 %v816, %v814
    %v1311 = vpack.c.b16 %v817, %v815
    %v1312 = vpack.c.b16 %v820, %v818
    %v1313 = vpack.c.b16 %v821, %v819
    %v1314 = vpack.c.b16 %v824, %v822
    %v1315 = vpack.c.b16 %v825, %v823
    %v1316 = vpack.c.b16 %v828, %v826
    %v1317 = vpack.c.b16 %v829, %v827
    %v1318 = vpack.c.b16 %v832, %v830
    %v1319 = vpack.c.b16 %v833, %v831
    %v1320 = vpack.c.b16 %v836, %v834
    %v1321 = vpack.c.b16 %v837, %v835
    %v1322 = vpack.c.b16 %v840, %v838
    %v1323 = vpack.c.b16 %v841, %v839
    %v1324 = vpack.c.b16 %v844, %v842
    %v1325 = vpack.c.b16 %v845, %v843
    %v1326 = vpack.c.b16 %v848, %v846
    %v1327 = vpack.c.b16 %v849, %v847
    %v1328 = vpack.c.b16 %v852, %v850
    %v1329 = vpack.c.b16 %v853, %v851
    %v1330 = vpack.c.b16 %v856, %v854
    %v1331 = vpack.c.b16 %v857, %v855
    %v1332 = vpack.c.b16 %v860, %v858
    %v1333 = vpack.c.b16 %v861, %v859
    %v1334 = vpack.c.b16 %v864, %v862
    %v1335 = vpack.c.b16 %v865, %v863
    %v1336 = vpack.c.b16 %v868, %v866
    %v1337 = vpack.c.b16 %v869, %v867
    %v1338 = vpack.c.b16 %v872, %v870
    %v1339 = vpack.c.b16 %v873, %v871
    %v1340 = vpack.c.b16 %v876, %v874
    %v1341 = vpack.c.b16 %v877, %v875
    %v1342 = vpack.c.b16 %v880, %v878
    %v1343 = vpack.c.b16 %v881, %v879
    %v1344 = vpack.c.b16 %v884, %v882
    %v1345 = vpack.c.b16 %v885, %v883
    %v1346 = vpack.c.b16 %v888, %v886
    %v1347 = vpack.c.b16 %v889, %v887
    %v1348 = vpack.c.b16 %v892, %v890
    %v1349 = vpack.c.b16 %v893, %v891
    %v1350 = vpack.c.b16 %v896, %v894
    %v1351 = vpack.c.b16 %v897, %v895
    %v1352 = vpack.c.b16 %v900, %v898
    %v1353 = vpack.c.b16 %v901, %v899
    %v1354 = vpack.c.b16 %v904, %v902
    %v1355 = vpack.c.b16 %v905, %v903
    %v1356 = vpack.c.b16 %v908, %v906
    %v1357 = vpack.c.b16 %v909, %v907
    %v1358 = vpack.c.b16 %v912, %v910
    %v1359 = vpack.c.b16 %v913, %v911
    %v1360 = vpack.c.b16 %v916, %v914
    %v1361 = vpack.c.b16 %v917, %v915
    %v1362 = vpack.c.b16 %v920, %v918
    %v1363 = vpack.c.b16 %v921, %v919
    %v1364 = vpack.c.b16 %v924, %v922
    %v1365 = vpack.c.b16 %v925, %v923
    %v1366 = vpack.c.b16 %v928, %v926
    %v1367 = vpack.c.b16 %v929, %v927
    %v1368 = vpack.c.b16 %v932, %v930
    %v1369 = vpack.c.b16 %v933, %v931
    %v1370 = vpack.c.b16 %v936, %v934
    %v1371 = vpack.c.b16 %v937, %v935
    %v1372 = vpack.c.b16 %v940, %v938
    %v1373 = vpack.c.b16 %v941, %v939
    %v1374 = vpack.c.b16 %v944, %v942
    %v1375 = vpack.c.b16 %v945, %v943
    %v1376 = vpack.c.b16 %v948, %v946
    %v1377 = vpack.c.b16 %v949, %v947
    %v1378 = vpack.c.b16 %v952, %v950
    %v1379 = vpack.c.b16 %v953, %v951
    %v1380 = vpack.c.b16 %v956, %v954
    %v1381 = vpack.c.b16 %v957, %v955
    %v1382 = vpack.c.b16 %v960, %v958
    %v1383 = vpack.c.b16 %v961, %v959
    %v1384 = vpack.c.b16 %v964, %v962
    %v1385 = vpack.c.b16 %v965, %v963
    %v1386 = vpack.c.b16 %v968, %v966
    %v1387 = vpack.c.b16 %v969, %v967
    %v1388 = vpack.c.b16 %v972, %v970
    %v1389 = vpack.c.b16 %v973, %v971
    %v1390 = vpack.c.b16 %v976, %v974
    %v1391 = vpack.c.b16 %v977, %v975
    %v1392 = vpack.c.b16 %v980, %v978
    %v1393 = vpack.c.b16 %v981, %v979
    %v1394 = vpack.c.b16 %v984, %v982
    %v1395 = vpack.c.b16 %v985, %v983
    %v1396 = vpack.c.b16 %v988, %v986
    %v1397 = vpack.c.b16 %v989, %v987
    %v1398 = vpack.c.b16 %v992, %v990
    %v1399 = vpack.c.b16 %v993, %v991
    %v1400 = vpack.c.b16 %v996, %v994
    %v1401 = vpack.c.b16 %v997, %v995
    %v1402 = vpack.c.b16 %v1000, %v998
    %v1403 = vpack.c.b16 %v1001, %v999
    %v1404 = vpack.c.b16 %v1004, %v1002
    %v1405 = vpack.c.b16 %v1005, %v1003
    %v1406 = vpack.c.b16 %v1008, %v1006
    %v1407 = vpack.c.b16 %v1009, %v1007
    %v1408 = vpack.c.b16 %v1012, %v1010
    %v1409 = vpack.c.b16 %v1013, %v1011
    %v1410 = vpack.c.b16 %v1016, %v1014
    %v1411 = vpack.c.b16 %v1017, %v1015
    %v1412 = vpack.c.b16 %v1020, %v1018
    %v1413 = vpack.c.b16 %v1021, %v1019
    %v1414 = vpack.c.b16 %v1024, %v1022
    %v1415 = vpack.c.b16 %v1025, %v1023
    %v1416 = vpack.c.b16 %v1028, %v1026
    %v1417 = vpack.c.b16 %v1029, %v1027
    %v1418 = vpack.c.b16 %v1032, %v1030
    %v1419 = vpack.c.b16 %v1033, %v1031
    %v1420 = vpack.c.b16 %v1036, %v1034
    %v1421 = vpack.c.b16 %v1037, %v1035
    %v1422 = vpack.c.b16 %v1040, %v1038
    %v1423 = vpack.c.b16 %v1041, %v1039
    %v1424 = vpack.c.b16 %v1044, %v1042
    %v1425 = vpack.c.b16 %v1045, %v1043
    %v1426 = vpack.c.b16 %v1048, %v1046
    %v1427 = vpack.c.b16 %v1049, %v1047
    %v1428 = vpack.c.b16 %v1052, %v1050
    %v1429 = vpack.c.b16 %v1053, %v1051
    %v1430 = vpack.c.b16 %v1056, %v1054
    %v1431 = vpack.c.b16 %v1057, %v1055
    %v1432 = vpack.c.b16 %v1060, %v1058
    %v1433 = vpack.c.b16 %v1061, %v1059
    %v1434 = vpack.c.b16 %v1064, %v1062
    %v1435 = vpack.c.b16 %v1065, %v1063
    %v1436 = vpack.c.b16 %v1068, %v1066
    %v1437 = vpack.c.b16 %v1069, %v1067
    %v1438 = vpack.c.b16 %v1072, %v1070
    %v1439 = vpack.c.b16 %v1073, %v1071
    %v1440 = vpack.c.b16 %v1076, %v1074
    %v1441 = vpack.c.b16 %v1077, %v1075
    %v1442 = vpack.c.b16 %v1080, %v1078
    %v1443 = vpack.c.b16 %v1081, %v1079
    %v1444 = vpack.c.b16 %v1084, %v1082
    %v1445 = vpack.c.b16 %v1085, %v1083
    %v1446 = vpack.c.b16 %v1088, %v1086
    %v1447 = vpack.c.b16 %v1089, %v1087
    %v1448 = vpack.c.b16 %v1092, %v1090
    %v1449 = vpack.c.b16 %v1093, %v1091
    %v1450 = vpack.c.b16 %v1096, %v1094
    %v1451 = vpack.c.b16 %v1097, %v1095
    %v1452 = vpack.c.b16 %v1100, %v1098
    %v1453 = vpack.c.b16 %v1101, %v1099
    %v1454 = vpack.c.b16 %v1104, %v1102
    %v1455 = vpack.c.b16 %v1105, %v1103
    %v1456 = vpack.c.b16 %v1108, %v1106
    %v1457 = vpack.c.b16 %v1109, %v1107
    %v1458 = vpack.c.b16 %v1112, %v1110
    %v1459 = vpack.c.b16 %v1113, %v1111
    %v1460 = vpack.c.b16 %v1116, %v1114
    %v1461 = vpack.c.b16 %v1117, %v1115
    %v1462 = vpack.c.b16 %v1120, %v1118
    %v1463 = vpack.c.b16 %v1121, %v1119
    %v1464 = vpack.c.b16 %v1124, %v1122
    %v1465 = vpack.c.b16 %v1125, %v1123
    %v1466 = vpack.c.b16 %v1128, %v1126
    %v1467 = vpack.c.b16 %v1129, %v1127
    %v1468 = vpack.c.b16 %v1132, %v1130
    %v1469 = vpack.c.b16 %v1133, %v1131
    %v1470 = vpack.c.b16 %v1136, %v1134
    %v1471 = vpack.c.b16 %v1137, %v1135
    %v1472 = vpack.c.b16 %v1140, %v1138
    %v1473 = vpack.c.b16 %v1141, %v1139
    %v1474 = vpack.c.b16 %v1144, %v1142
    %v1475 = vpack.c.b16 %v1145, %v1143
    %v1476 = vpack.c.b16 %v1148, %v1146
    %v1477 = vpack.c.b16 %v1149, %v1147
    %v1478 = vpack.c.b16 %v1152, %v1150
    %v1479 = vpack.c.b16 %v1153, %v1151
    %v1480 = vpack.c.b16 %v1156, %v1154
    %v1481 = vpack.c.b16 %v1157, %v1155
    %v1482 = vpack.c.b16 %v1160, %v1158
    %v1483 = vpack.c.b16 %v1161, %v1159
    %v1484 = vpack.c.b16 %v1164, %v1162
    %v1485 = vpack.c.b16 %v1165, %v1163
    %v1486 = vpack.c.b16 %v1168, %v1166
    %v1487 = vpack.c.b16 %v1169, %v1167
    %v1488 = vpack.c.b16 %v1172, %v1170
    %v1489 = vpack.c.b16 %v1173, %v1171
    %v1490 = vpack.c.b16 %v1176, %v1174
    %v1491 = vpack.c.b16 %v1177, %v1175
    %v1492 = vpack.c.b16 %v1180, %v1178
    %v1493 = vpack.c.b16 %v1181, %v1179
    %v1494 = vpack.c.b16 %v1184, %v1182
    %v1495 = vpack.c.b16 %v1185, %v1183
    %v1496 = vpack.c.b16 %v1188, %v1186
    %v1497 = vpack.c.b16 %v1189, %v1187
    %v1498 = vpack.c.b16 %v1192, %v1190
    %v1499 = vpack.c.b16 %v1193, %v1191
    %v1500 = vpack.c.b16 %v1196, %v1194
    %v1501 = vpack.c.b16 %v1197, %v1195
    %v1502 = vpack.c.b16 %v1200, %v1198
    %v1503 = vpack.c.b16 %v1201, %v1199
    %v1504 = vpack.c.b16 %v1204, %v1202
    %v1505 = vpack.c.b16 %v1205, %v1203
    %v1506 = vpack.c.b16 %v1208, %v1206
    %v1507 = vpack.c.b16 %v1209, %v1207
    %v1508 = vpack.c.b16 %v1212, %v1210
    %v1509 = vpack.c.b16 %v1213, %v1211
    %v1510 = vpack.c.b16 %v1216, %v1214
    %v1511 = vpack.c.b16 %v1217, %v1215
    %v1512 = vpack.c.b16 %v1220, %v1218
    %v1513 = vpack.c.b16 %v1221, %v1219
    %v1514 = vpack.c.b16 %v1224, %v1222
    %v1515 = vpack.c.b16 %v1225, %v1223
    %v1516 = vpack.c.b16 %v1228, %v1226
    %v1517 = vpack.c.b16 %v1229, %v1227
    %1806 = vmatpush.bf16.msra.mxu0 %v1244
    %1807 = vmatpush.bf16.msra.mxu0 %v1242
    %1808 = vmatpush.bf16.msra.mxu0 %v1240
    %1809 = vmatpush.bf16.msra.mxu0 %v1238
    %1810 = vmatpush.bf16.msra.mxu0 %v1236
    %1811 = vmatpush.bf16.msra.mxu0 %v1234
    %1812 = vmatpush.bf16.msra.mxu0 %v1232
    %1813 = vmatpush.bf16.msra.mxu0 %v1230
    %1814 = vmatmul.bf16.gmra.mxu0 %v326
    %v1815 = vpop.f32.mrf.mxu0
    %v1816 = vadd.f32 %v320, %v1815
    %v1817 = vpop.f32.mrf.mxu0
    %1818 = vdwg.mxu0
    %1819 = vmatpush.bf16.msra.mxu0 %v1260
    %1820 = vmatpush.bf16.msra.mxu0 %v1258
    %1821 = vmatpush.bf16.msra.mxu0 %v1256
    %1822 = vmatpush.bf16.msra.mxu0 %v1254
    %1823 = vmatpush.bf16.msra.mxu0 %v1252
    %1824 = vmatpush.bf16.msra.mxu0 %v1250
    %1825 = vmatpush.bf16.msra.mxu0 %v1248
    %1826 = vmatpush.bf16.msra.mxu0 %v1246
    %1827 = vmatmul.bf16.gmra.mxu0 %v327
    %v1828 = vpop.f32.mrf.mxu0
    %v1829 = vadd.f32 %v1816, %v1828
    %v1830 = vpop.f32.mrf.mxu0
    %1831 = vdwg.mxu0
    %1832 = vmatpush.bf16.msra.mxu0 %v1276
    %1833 = vmatpush.bf16.msra.mxu0 %v1274
    %1834 = vmatpush.bf16.msra.mxu0 %v1272
    %1835 = vmatpush.bf16.msra.mxu0 %v1270
    %1836 = vmatpush.bf16.msra.mxu0 %v1268
    %1837 = vmatpush.bf16.msra.mxu0 %v1266
    %1838 = vmatpush.bf16.msra.mxu0 %v1264
    %1839 = vmatpush.bf16.msra.mxu0 %v1262
    %1840 = vmatmul.bf16.gmra.mxu0 %v328
    %v1841 = vpop.f32.mrf.mxu0
    %v1842 = vadd.f32 %v1829, %v1841
    %v1843 = vpop.f32.mrf.mxu0
    %1844 = vdwg.mxu0
    %1845 = vmatpush.bf16.msra.mxu0 %v1292
    %1846 = vmatpush.bf16.msra.mxu0 %v1290
    %1847 = vmatpush.bf16.msra.mxu0 %v1288
    %1848 = vmatpush.bf16.msra.mxu0 %v1286
    %1849 = vmatpush.bf16.msra.mxu0 %v1284
    %1850 = vmatpush.bf16.msra.mxu0 %v1282
    %1851 = vmatpush.bf16.msra.mxu0 %v1280
    %1852 = vmatpush.bf16.msra.mxu0 %v1278
    %1853 = vmatmul.bf16.gmra.mxu0 %v329
    %v1854 = vpop.f32.mrf.mxu0
    %v1855 = vadd.f32 %v1842, %v1854
    %v1856 = vpop.f32.mrf.mxu0
    %1857 = vdwg.mxu0
    %1858 = vmatpush.bf16.msra.mxu0 %v1308
    %1859 = vmatpush.bf16.msra.mxu0 %v1306
    %1860 = vmatpush.bf16.msra.mxu0 %v1304
    %1861 = vmatpush.bf16.msra.mxu0 %v1302
    %1862 = vmatpush.bf16.msra.mxu0 %v1300
    %1863 = vmatpush.bf16.msra.mxu0 %v1298
    %1864 = vmatpush.bf16.msra.mxu0 %v1296
    %1865 = vmatpush.bf16.msra.mxu0 %v1294
    %1866 = vmatmul.bf16.gmra.mxu0 %v330
    %v1867 = vpop.f32.mrf.mxu0
    %v1868 = vadd.f32 %v1855, %v1867
    %v1869 = vpop.f32.mrf.mxu0
    %1870 = vdwg.mxu0
    %1871 = vmatpush.bf16.msra.mxu0 %v1324
    %1872 = vmatpush.bf16.msra.mxu0 %v1322
    %1873 = vmatpush.bf16.msra.mxu0 %v1320
    %1874 = vmatpush.bf16.msra.mxu0 %v1318
    %1875 = vmatpush.bf16.msra.mxu0 %v1316
    %1876 = vmatpush.bf16.msra.mxu0 %v1314
    %1877 = vmatpush.bf16.msra.mxu0 %v1312
    %1878 = vmatpush.bf16.msra.mxu0 %v1310
    %1879 = vmatmul.bf16.gmra.mxu0 %v331
    %v1880 = vpop.f32.mrf.mxu0
    %v1881 = vadd.f32 %v1868, %v1880
    %v1882 = vpop.f32.mrf.mxu0
    %1883 = vdwg.mxu0
    %1884 = vmatpush.bf16.msra.mxu0 %v1340
    %1885 = vmatpush.bf16.msra.mxu0 %v1338
    %1886 = vmatpush.bf16.msra.mxu0 %v1336
    %1887 = vmatpush.bf16.msra.mxu0 %v1334
    %1888 = vmatpush.bf16.msra.mxu0 %v1332
    %1889 = vmatpush.bf16.msra.mxu0 %v1330
    %1890 = vmatpush.bf16.msra.mxu0 %v1328
    %1891 = vmatpush.bf16.msra.mxu0 %v1326
    %1892 = vmatmul.bf16.gmra.mxu0 %v332
    %v1893 = vpop.f32.mrf.mxu0
    %v1894 = vadd.f32 %v1881, %v1893
    %v1895 = vpop.f32.mrf.mxu0
    %1896 = vdwg.mxu0
    %1897 = vmatpush.bf16.msra.mxu0 %v1356
    %1898 = vmatpush.bf16.msra.mxu0 %v1354
    %1899 = vmatpush.bf16.msra.mxu0 %v1352
    %1900 = vmatpush.bf16.msra.mxu0 %v1350
    %1901 = vmatpush.bf16.msra.mxu0 %v1348
    %1902 = vmatpush.bf16.msra.mxu0 %v1346
    %1903 = vmatpush.bf16.msra.mxu0 %v1344
    %1904 = vmatpush.bf16.msra.mxu0 %v1342
    %1905 = vmatmul.bf16.gmra.mxu0 %v333
    %v1906 = vpop.f32.mrf.mxu0
    %v1907 = vadd.f32 %v1894, %v1906
    %v1908 = vpop.f32.mrf.mxu0
    %1909 = vdwg.mxu0
    %1910 = vmatpush.bf16.msra.mxu0 %v1372
    %1911 = vmatpush.bf16.msra.mxu0 %v1370
    %1912 = vmatpush.bf16.msra.mxu0 %v1368
    %1913 = vmatpush.bf16.msra.mxu0 %v1366
    %1914 = vmatpush.bf16.msra.mxu0 %v1364
    %1915 = vmatpush.bf16.msra.mxu0 %v1362
    %1916 = vmatpush.bf16.msra.mxu0 %v1360
    %1917 = vmatpush.bf16.msra.mxu0 %v1358
    %1918 = vmatmul.bf16.gmra.mxu0 %v336
    %v1919 = vpop.f32.mrf.mxu0
    %v1920 = vadd.f32 %v1907, %v1919
    %v1921 = vpop.f32.mrf.mxu0
    %1922 = vdwg.mxu0
    %1923 = vmatpush.bf16.msra.mxu0 %v1388
    %1924 = vmatpush.bf16.msra.mxu0 %v1386
    %1925 = vmatpush.bf16.msra.mxu0 %v1384
    %1926 = vmatpush.bf16.msra.mxu0 %v1382
    %1927 = vmatpush.bf16.msra.mxu0 %v1380
    %1928 = vmatpush.bf16.msra.mxu0 %v1378
    %1929 = vmatpush.bf16.msra.mxu0 %v1376
    %1930 = vmatpush.bf16.msra.mxu0 %v1374
    %1931 = vmatmul.bf16.gmra.mxu0 %v337
    %v1932 = vpop.f32.mrf.mxu0
    %v1933 = vadd.f32 %v1920, %v1932
    %v1934 = vpop.f32.mrf.mxu0
    %1935 = vdwg.mxu0
    %1936 = vmatpush.bf16.msra.mxu0 %v1404
    %1937 = vmatpush.bf16.msra.mxu0 %v1402
    %1938 = vmatpush.bf16.msra.mxu0 %v1400
    %1939 = vmatpush.bf16.msra.mxu0 %v1398
    %1940 = vmatpush.bf16.msra.mxu0 %v1396
    %1941 = vmatpush.bf16.msra.mxu0 %v1394
    %1942 = vmatpush.bf16.msra.mxu0 %v1392
    %1943 = vmatpush.bf16.msra.mxu0 %v1390
    %1944 = vmatmul.bf16.gmra.mxu0 %v338
    %v1945 = vpop.f32.mrf.mxu0
    %v1946 = vadd.f32 %v1933, %v1945
    %v1947 = vpop.f32.mrf.mxu0
    %1948 = vdwg.mxu0
    %1949 = vmatpush.bf16.msra.mxu0 %v1420
    %1950 = vmatpush.bf16.msra.mxu0 %v1418
    %1951 = vmatpush.bf16.msra.mxu0 %v1416
    %1952 = vmatpush.bf16.msra.mxu0 %v1414
    %1953 = vmatpush.bf16.msra.mxu0 %v1412
    %1954 = vmatpush.bf16.msra.mxu0 %v1410
    %1955 = vmatpush.bf16.msra.mxu0 %v1408
    %1956 = vmatpush.bf16.msra.mxu0 %v1406
    %1957 = vmatmul.bf16.gmra.mxu0 %v339
    %v1958 = vpop.f32.mrf.mxu0
    %v1959 = vadd.f32 %v1946, %v1958
    %v1960 = vpop.f32.mrf.mxu0
    %1961 = vdwg.mxu0
    %1962 = vmatpush.bf16.msra.mxu0 %v1436
    %1963 = vmatpush.bf16.msra.mxu0 %v1434
    %1964 = vmatpush.bf16.msra.mxu0 %v1432
    %1965 = vmatpush.bf16.msra.mxu0 %v1430
    %1966 = vmatpush.bf16.msra.mxu0 %v1428
    %1967 = vmatpush.bf16.msra.mxu0 %v1426
    %1968 = vmatpush.bf16.msra.mxu0 %v1424
    %1969 = vmatpush.bf16.msra.mxu0 %v1422
    %1970 = vmatmul.bf16.gmra.mxu0 %v340
    %v1971 = vpop.f32.mrf.mxu0
    %v1972 = vadd.f32 %v1959, %v1971
    %v1973 = vpop.f32.mrf.mxu0
    %1974 = vdwg.mxu0
    %1975 = vmatpush.bf16.msra.mxu0 %v1452
    %1976 = vmatpush.bf16.msra.mxu0 %v1450
    %1977 = vmatpush.bf16.msra.mxu0 %v1448
    %1978 = vmatpush.bf16.msra.mxu0 %v1446
    %1979 = vmatpush.bf16.msra.mxu0 %v1444
    %1980 = vmatpush.bf16.msra.mxu0 %v1442
    %1981 = vmatpush.bf16.msra.mxu0 %v1440
    %1982 = vmatpush.bf16.msra.mxu0 %v1438
    %1983 = vmatmul.bf16.gmra.mxu0 %v341
    %v1984 = vpop.f32.mrf.mxu0
    %v1985 = vadd.f32 %v1972, %v1984
    %v1986 = vpop.f32.mrf.mxu0
    %1987 = vdwg.mxu0
    %1988 = vmatpush.bf16.msra.mxu0 %v1468
    %1989 = vmatpush.bf16.msra.mxu0 %v1466
    %1990 = vmatpush.bf16.msra.mxu0 %v1464
    %1991 = vmatpush.bf16.msra.mxu0 %v1462
    %1992 = vmatpush.bf16.msra.mxu0 %v1460
    %1993 = vmatpush.bf16.msra.mxu0 %v1458
    %1994 = vmatpush.bf16.msra.mxu0 %v1456
    %1995 = vmatpush.bf16.msra.mxu0 %v1454
    %1996 = vmatmul.bf16.gmra.mxu0 %v342
    %v1997 = vpop.f32.mrf.mxu0
    %v1998 = vadd.f32 %v1985, %v1997
    %v1999 = vpop.f32.mrf.mxu0
    %2000 = vdwg.mxu0
    %2001 = vmatpush.bf16.msra.mxu0 %v1484
    %2002 = vmatpush.bf16.msra.mxu0 %v1482
    %2003 = vmatpush.bf16.msra.mxu0 %v1480
    %2004 = vmatpush.bf16.msra.mxu0 %v1478
    %2005 = vmatpush.bf16.msra.mxu0 %v1476
    %2006 = vmatpush.bf16.msra.mxu0 %v1474
    %2007 = vmatpush.bf16.msra.mxu0 %v1472
    %2008 = vmatpush.bf16.msra.mxu0 %v1470
    %2009 = vmatmul.bf16.gmra.mxu0 %v343
    %v2010 = vpop.f32.mrf.mxu0
    %v2011 = vadd.f32 %v1998, %v2010
    %v2012 = vpop.f32.mrf.mxu0
    %2013 = vdwg.mxu0
    %2014 = vmatpush.bf16.msra.mxu0 %v1500
    %2015 = vmatpush.bf16.msra.mxu0 %v1498
    %2016 = vmatpush.bf16.msra.mxu0 %v1496
    %2017 = vmatpush.bf16.msra.mxu0 %v1494
    %2018 = vmatpush.bf16.msra.mxu0 %v1492
    %2019 = vmatpush.bf16.msra.mxu0 %v1490
    %2020 = vmatpush.bf16.msra.mxu0 %v1488
    %2021 = vmatpush.bf16.msra.mxu0 %v1486
    %2022 = vmatmul.bf16.gmra.mxu0 %v346
    %v2023 = vpop.f32.mrf.mxu0
    %v2024 = vadd.f32 %v2011, %v2023
    %v2025 = vpop.f32.mrf.mxu0
    %2026 = vdwg.mxu0
    %2027 = vmatpush.bf16.msra.mxu0 %v1516
    %2028 = vmatpush.bf16.msra.mxu0 %v1514
    %2029 = vmatpush.bf16.msra.mxu0 %v1512
    %2030 = vmatpush.bf16.msra.mxu0 %v1510
    %2031 = vmatpush.bf16.msra.mxu0 %v1508
    %2032 = vmatpush.bf16.msra.mxu0 %v1506
    %2033 = vmatpush.bf16.msra.mxu0 %v1504
    %2034 = vmatpush.bf16.msra.mxu0 %v1502
    %2035 = vmatmul.bf16.gmra.mxu0 %v347
    %v2036 = vpop.f32.mrf.mxu0
    %v2037 = vadd.f32 %v2024, %v2036
    %v2038 = vpop.f32.mrf.mxu0
    %2039 = vdwg.mxu0
    %2040 = vmatpush.bf16.msra.mxu0 %v1245
    %2041 = vmatpush.bf16.msra.mxu0 %v1243
    %2042 = vmatpush.bf16.msra.mxu0 %v1241
    %2043 = vmatpush.bf16.msra.mxu0 %v1239
    %2044 = vmatpush.bf16.msra.mxu0 %v1237
    %2045 = vmatpush.bf16.msra.mxu0 %v1235
    %2046 = vmatpush.bf16.msra.mxu0 %v1233
    %2047 = vmatpush.bf16.msra.mxu0 %v1231
    %2048 = vmatmul.bf16.gmra.mxu0 %v326
    %v2049 = vpop.f32.mrf.mxu0
    %v2050 = vadd.f32 %v321, %v2049
    %v2051 = vpop.f32.mrf.mxu0
    %2052 = vdwg.mxu0
    %2053 = vmatpush.bf16.msra.mxu0 %v1261
    %2054 = vmatpush.bf16.msra.mxu0 %v1259
    %2055 = vmatpush.bf16.msra.mxu0 %v1257
    %2056 = vmatpush.bf16.msra.mxu0 %v1255
    %2057 = vmatpush.bf16.msra.mxu0 %v1253
    %2058 = vmatpush.bf16.msra.mxu0 %v1251
    %2059 = vmatpush.bf16.msra.mxu0 %v1249
    %2060 = vmatpush.bf16.msra.mxu0 %v1247
    %2061 = vmatmul.bf16.gmra.mxu0 %v327
    %v2062 = vpop.f32.mrf.mxu0
    %v2063 = vadd.f32 %v2050, %v2062
    %v2064 = vpop.f32.mrf.mxu0
    %2065 = vdwg.mxu0
    %2066 = vmatpush.bf16.msra.mxu0 %v1277
    %2067 = vmatpush.bf16.msra.mxu0 %v1275
    %2068 = vmatpush.bf16.msra.mxu0 %v1273
    %2069 = vmatpush.bf16.msra.mxu0 %v1271
    %2070 = vmatpush.bf16.msra.mxu0 %v1269
    %2071 = vmatpush.bf16.msra.mxu0 %v1267
    %2072 = vmatpush.bf16.msra.mxu0 %v1265
    %2073 = vmatpush.bf16.msra.mxu0 %v1263
    %2074 = vmatmul.bf16.gmra.mxu0 %v328
    %v2075 = vpop.f32.mrf.mxu0
    %v2076 = vadd.f32 %v2063, %v2075
    %v2077 = vpop.f32.mrf.mxu0
    %2078 = vdwg.mxu0
    %2079 = vmatpush.bf16.msra.mxu0 %v1293
    %2080 = vmatpush.bf16.msra.mxu0 %v1291
    %2081 = vmatpush.bf16.msra.mxu0 %v1289
    %2082 = vmatpush.bf16.msra.mxu0 %v1287
    %2083 = vmatpush.bf16.msra.mxu0 %v1285
    %2084 = vmatpush.bf16.msra.mxu0 %v1283
    %2085 = vmatpush.bf16.msra.mxu0 %v1281
    %2086 = vmatpush.bf16.msra.mxu0 %v1279
    %2087 = vmatmul.bf16.gmra.mxu0 %v329
    %v2088 = vpop.f32.mrf.mxu0
    %v2089 = vadd.f32 %v2076, %v2088
    %v2090 = vpop.f32.mrf.mxu0
    %2091 = vdwg.mxu0
    %2092 = vmatpush.bf16.msra.mxu0 %v1309
    %2093 = vmatpush.bf16.msra.mxu0 %v1307
    %2094 = vmatpush.bf16.msra.mxu0 %v1305
    %2095 = vmatpush.bf16.msra.mxu0 %v1303
    %2096 = vmatpush.bf16.msra.mxu0 %v1301
    %2097 = vmatpush.bf16.msra.mxu0 %v1299
    %2098 = vmatpush.bf16.msra.mxu0 %v1297
    %2099 = vmatpush.bf16.msra.mxu0 %v1295
    %2100 = vmatmul.bf16.gmra.mxu0 %v330
    %v2101 = vpop.f32.mrf.mxu0
    %v2102 = vadd.f32 %v2089, %v2101
    %v2103 = vpop.f32.mrf.mxu0
    %2104 = vdwg.mxu0
    %2105 = vmatpush.bf16.msra.mxu0 %v1325
    %2106 = vmatpush.bf16.msra.mxu0 %v1323
    %2107 = vmatpush.bf16.msra.mxu0 %v1321
    %2108 = vmatpush.bf16.msra.mxu0 %v1319
    %2109 = vmatpush.bf16.msra.mxu0 %v1317
    %2110 = vmatpush.bf16.msra.mxu0 %v1315
    %2111 = vmatpush.bf16.msra.mxu0 %v1313
    %2112 = vmatpush.bf16.msra.mxu0 %v1311
    %2113 = vmatmul.bf16.gmra.mxu0 %v331
    %v2114 = vpop.f32.mrf.mxu0
    %v2115 = vadd.f32 %v2102, %v2114
    %v2116 = vpop.f32.mrf.mxu0
    %2117 = vdwg.mxu0
    %2118 = vmatpush.bf16.msra.mxu0 %v1341
    %2119 = vmatpush.bf16.msra.mxu0 %v1339
    %2120 = vmatpush.bf16.msra.mxu0 %v1337
    %2121 = vmatpush.bf16.msra.mxu0 %v1335
    %2122 = vmatpush.bf16.msra.mxu0 %v1333
    %2123 = vmatpush.bf16.msra.mxu0 %v1331
    %2124 = vmatpush.bf16.msra.mxu0 %v1329
    %2125 = vmatpush.bf16.msra.mxu0 %v1327
    %2126 = vmatmul.bf16.gmra.mxu0 %v332
    %v2127 = vpop.f32.mrf.mxu0
    %v2128 = vadd.f32 %v2115, %v2127
    %v2129 = vpop.f32.mrf.mxu0
    %2130 = vdwg.mxu0
    %2131 = vmatpush.bf16.msra.mxu0 %v1357
    %2132 = vmatpush.bf16.msra.mxu0 %v1355
    %2133 = vmatpush.bf16.msra.mxu0 %v1353
    %2134 = vmatpush.bf16.msra.mxu0 %v1351
    %2135 = vmatpush.bf16.msra.mxu0 %v1349
    %2136 = vmatpush.bf16.msra.mxu0 %v1347
    %2137 = vmatpush.bf16.msra.mxu0 %v1345
    %2138 = vmatpush.bf16.msra.mxu0 %v1343
    %2139 = vmatmul.bf16.gmra.mxu0 %v333
    %v2140 = vpop.f32.mrf.mxu0
    %v2141 = vadd.f32 %v2128, %v2140
    %v2142 = vpop.f32.mrf.mxu0
    %2143 = vdwg.mxu0
    %2144 = vmatpush.bf16.msra.mxu0 %v1373
    %2145 = vmatpush.bf16.msra.mxu0 %v1371
    %2146 = vmatpush.bf16.msra.mxu0 %v1369
    %2147 = vmatpush.bf16.msra.mxu0 %v1367
    %2148 = vmatpush.bf16.msra.mxu0 %v1365
    %2149 = vmatpush.bf16.msra.mxu0 %v1363
    %2150 = vmatpush.bf16.msra.mxu0 %v1361
    %2151 = vmatpush.bf16.msra.mxu0 %v1359
    %2152 = vmatmul.bf16.gmra.mxu0 %v336
    %v2153 = vpop.f32.mrf.mxu0
    %v2154 = vadd.f32 %v2141, %v2153
    %v2155 = vpop.f32.mrf.mxu0
    %2156 = vdwg.mxu0
    %2157 = vmatpush.bf16.msra.mxu0 %v1389
    %2158 = vmatpush.bf16.msra.mxu0 %v1387
    %2159 = vmatpush.bf16.msra.mxu0 %v1385
    %2160 = vmatpush.bf16.msra.mxu0 %v1383
    %2161 = vmatpush.bf16.msra.mxu0 %v1381
    %2162 = vmatpush.bf16.msra.mxu0 %v1379
    %2163 = vmatpush.bf16.msra.mxu0 %v1377
    %2164 = vmatpush.bf16.msra.mxu0 %v1375
    %2165 = vmatmul.bf16.gmra.mxu0 %v337
    %v2166 = vpop.f32.mrf.mxu0
    %v2167 = vadd.f32 %v2154, %v2166
    %v2168 = vpop.f32.mrf.mxu0
    %2169 = vdwg.mxu0
    %2170 = vmatpush.bf16.msra.mxu0 %v1405
    %2171 = vmatpush.bf16.msra.mxu0 %v1403
    %2172 = vmatpush.bf16.msra.mxu0 %v1401
    %2173 = vmatpush.bf16.msra.mxu0 %v1399
    %2174 = vmatpush.bf16.msra.mxu0 %v1397
    %2175 = vmatpush.bf16.msra.mxu0 %v1395
    %2176 = vmatpush.bf16.msra.mxu0 %v1393
    %2177 = vmatpush.bf16.msra.mxu0 %v1391
    %2178 = vmatmul.bf16.gmra.mxu0 %v338
    %v2179 = vpop.f32.mrf.mxu0
    %v2180 = vadd.f32 %v2167, %v2179
    %v2181 = vpop.f32.mrf.mxu0
    %2182 = vdwg.mxu0
    %2183 = vmatpush.bf16.msra.mxu0 %v1421
    %2184 = vmatpush.bf16.msra.mxu0 %v1419
    %2185 = vmatpush.bf16.msra.mxu0 %v1417
    %2186 = vmatpush.bf16.msra.mxu0 %v1415
    %2187 = vmatpush.bf16.msra.mxu0 %v1413
    %2188 = vmatpush.bf16.msra.mxu0 %v1411
    %2189 = vmatpush.bf16.msra.mxu0 %v1409
    %2190 = vmatpush.bf16.msra.mxu0 %v1407
    %2191 = vmatmul.bf16.gmra.mxu0 %v339
    %v2192 = vpop.f32.mrf.mxu0
    %v2193 = vadd.f32 %v2180, %v2192
    %v2194 = vpop.f32.mrf.mxu0
    %2195 = vdwg.mxu0
    %2196 = vmatpush.bf16.msra.mxu0 %v1437
    %2197 = vmatpush.bf16.msra.mxu0 %v1435
    %2198 = vmatpush.bf16.msra.mxu0 %v1433
    %2199 = vmatpush.bf16.msra.mxu0 %v1431
    %2200 = vmatpush.bf16.msra.mxu0 %v1429
    %2201 = vmatpush.bf16.msra.mxu0 %v1427
    %2202 = vmatpush.bf16.msra.mxu0 %v1425
    %2203 = vmatpush.bf16.msra.mxu0 %v1423
    %2204 = vmatmul.bf16.gmra.mxu0 %v340
    %v2205 = vpop.f32.mrf.mxu0
    %v2206 = vadd.f32 %v2193, %v2205
    %v2207 = vpop.f32.mrf.mxu0
    %2208 = vdwg.mxu0
    %2209 = vmatpush.bf16.msra.mxu0 %v1453
    %2210 = vmatpush.bf16.msra.mxu0 %v1451
    %2211 = vmatpush.bf16.msra.mxu0 %v1449
    %2212 = vmatpush.bf16.msra.mxu0 %v1447
    %2213 = vmatpush.bf16.msra.mxu0 %v1445
    %2214 = vmatpush.bf16.msra.mxu0 %v1443
    %2215 = vmatpush.bf16.msra.mxu0 %v1441
    %2216 = vmatpush.bf16.msra.mxu0 %v1439
    %2217 = vmatmul.bf16.gmra.mxu0 %v341
    %v2218 = vpop.f32.mrf.mxu0
    %v2219 = vadd.f32 %v2206, %v2218
    %v2220 = vpop.f32.mrf.mxu0
    %2221 = vdwg.mxu0
    %2222 = vmatpush.bf16.msra.mxu0 %v1469
    %2223 = vmatpush.bf16.msra.mxu0 %v1467
    %2224 = vmatpush.bf16.msra.mxu0 %v1465
    %2225 = vmatpush.bf16.msra.mxu0 %v1463
    %2226 = vmatpush.bf16.msra.mxu0 %v1461
    %2227 = vmatpush.bf16.msra.mxu0 %v1459
    %2228 = vmatpush.bf16.msra.mxu0 %v1457
    %2229 = vmatpush.bf16.msra.mxu0 %v1455
    %2230 = vmatmul.bf16.gmra.mxu0 %v342
    %v2231 = vpop.f32.mrf.mxu0
    %v2232 = vadd.f32 %v2219, %v2231
    %v2233 = vpop.f32.mrf.mxu0
    %2234 = vdwg.mxu0
    %2235 = vmatpush.bf16.msra.mxu0 %v1485
    %2236 = vmatpush.bf16.msra.mxu0 %v1483
    %2237 = vmatpush.bf16.msra.mxu0 %v1481
    %2238 = vmatpush.bf16.msra.mxu0 %v1479
    %2239 = vmatpush.bf16.msra.mxu0 %v1477
    %2240 = vmatpush.bf16.msra.mxu0 %v1475
    %2241 = vmatpush.bf16.msra.mxu0 %v1473
    %2242 = vmatpush.bf16.msra.mxu0 %v1471
    %2243 = vmatmul.bf16.gmra.mxu0 %v343
    %v2244 = vpop.f32.mrf.mxu0
    %v2245 = vadd.f32 %v2232, %v2244
    %v2246 = vpop.f32.mrf.mxu0
    %2247 = vdwg.mxu0
    %2248 = vmatpush.bf16.msra.mxu0 %v1501
    %2249 = vmatpush.bf16.msra.mxu0 %v1499
    %2250 = vmatpush.bf16.msra.mxu0 %v1497
    %2251 = vmatpush.bf16.msra.mxu0 %v1495
    %2252 = vmatpush.bf16.msra.mxu0 %v1493
    %2253 = vmatpush.bf16.msra.mxu0 %v1491
    %2254 = vmatpush.bf16.msra.mxu0 %v1489
    %2255 = vmatpush.bf16.msra.mxu0 %v1487
    %2256 = vmatmul.bf16.gmra.mxu0 %v346
    %v2257 = vpop.f32.mrf.mxu0
    %v2258 = vadd.f32 %v2245, %v2257
    %v2259 = vpop.f32.mrf.mxu0
    %2260 = vdwg.mxu0
    %2261 = vmatpush.bf16.msra.mxu0 %v1517
    %2262 = vmatpush.bf16.msra.mxu0 %v1515
    %2263 = vmatpush.bf16.msra.mxu0 %v1513
    %2264 = vmatpush.bf16.msra.mxu0 %v1511
    %2265 = vmatpush.bf16.msra.mxu0 %v1509
    %2266 = vmatpush.bf16.msra.mxu0 %v1507
    %2267 = vmatpush.bf16.msra.mxu0 %v1505
    %2268 = vmatpush.bf16.msra.mxu0 %v1503
    %2269 = vmatmul.bf16.gmra.mxu0 %v347
    %v2270 = vpop.f32.mrf.mxu0
    %v2271 = vadd.f32 %v2258, %v2270
    %v2272 = vpop.f32.mrf.mxu0
    %2273 = vdwg.mxu0
    %v2274 = vmax.f32 %v2037, 0.0
    %v2275 = vmax.f32 %v2271, 0.0
    %v2276 = vpack.c.bf16 %v2274, %v2274
    %v2277 = vpack.c.bf16 %v2275, %v2275
    %v2278 = vld [vmem:[%s3] sm:$0xff]
    %v2279 = vld [vmem:[%s3 + $0x8] sm:$0xff]
    %v2280 = vld [vmem:[%s3 + $0x10] sm:$0xff]
    %v2281 = vld [vmem:[%s3 + $0x18] sm:$0xff]
    %v2282 = vld [vmem:[%s3 + $0x20] sm:$0xff]
    %v2283 = vld [vmem:[%s3 + $0x28] sm:$0xff]
    %v2284 = vld [vmem:[%s3 + $0x30] sm:$0xff]
    %v2285 = vld [vmem:[%s3 + $0x38] sm:$0xff]
    %v2286 = vld [vmem:[%s3 + $0x40] sm:$0xff]
    %v2287 = vld [vmem:[%s3 + $0x48] sm:$0xff]
    %v2288 = vld [vmem:[%s3 + $0x50] sm:$0xff]
    %v2289 = vld [vmem:[%s3 + $0x58] sm:$0xff]
    %v2290 = vld [vmem:[%s3 + $0x60] sm:$0xff]
    %v2291 = vld [vmem:[%s3 + $0x68] sm:$0xff]
    %v2292 = vld [vmem:[%s3 + $0x70] sm:$0xff]
    %v2293 = vld [vmem:[%s3 + $0x78] sm:$0xff]
    %v2294 = vld [vmem:[%s3 + $0x80] sm:$0xff]
    %v2295 = vld [vmem:[%s3 + $0x88] sm:$0xff]
    %v2296 = vld [vmem:[%s3 + $0x90] sm:$0xff]
    %v2297 = vld [vmem:[%s3 + $0x98] sm:$0xff]
    %v2298 = vld [vmem:[%s3 + $0xa0] sm:$0xff]
    %v2299 = vld [vmem:[%s3 + $0xa8] sm:$0xff]
    %v2300 = vld [vmem:[%s3 + $0xb0] sm:$0xff]
    %v2301 = vld [vmem:[%s3 + $0xb8] sm:$0xff]
    %v2302 = vld [vmem:[%s3 + $0xc0] sm:$0xff]
    %v2303 = vld [vmem:[%s3 + $0xc8] sm:$0xff]
    %v2304 = vld [vmem:[%s3 + $0xd0] sm:$0xff]
    %v2305 = vld [vmem:[%s3 + $0xd8] sm:$0xff]
    %v2306 = vld [vmem:[%s3 + $0xe0] sm:$0xff]
    %v2307 = vld [vmem:[%s3 + $0xe8] sm:$0xff]
    %v2308 = vld [vmem:[%s3 + $0xf0] sm:$0xff]
    %v2309 = vld [vmem:[%s3 + $0xf8] sm:$0xff]
    %v2310 = vld [vmem:[%s3 + $0x100] sm:$0xff]
    %v2311 = vld [vmem:[%s3 + $0x108] sm:$0xff]
    %v2312 = vld [vmem:[%s3 + $0x110] sm:$0xff]
    %v2313 = vld [vmem:[%s3 + $0x118] sm:$0xff]
    %v2314 = vld [vmem:[%s3 + $0x120] sm:$0xff]
    %v2315 = vld [vmem:[%s3 + $0x128] sm:$0xff]
    %v2316 = vld [vmem:[%s3 + $0x130] sm:$0xff]
    %v2317 = vld [vmem:[%s3 + $0x138] sm:$0xff]
    %v2318 = vld [vmem:[%s3 + $0x140] sm:$0xff]
    %v2319 = vld [vmem:[%s3 + $0x148] sm:$0xff]
    %v2320 = vld [vmem:[%s3 + $0x150] sm:$0xff]
    %v2321 = vld [vmem:[%s3 + $0x158] sm:$0xff]
    %v2322 = vld [vmem:[%s3 + $0x160] sm:$0xff]
    %v2323 = vld [vmem:[%s3 + $0x168] sm:$0xff]
    %v2324 = vld [vmem:[%s3 + $0x170] sm:$0xff]
    %v2325 = vld [vmem:[%s3 + $0x178] sm:$0xff]
    %v2326 = vld [vmem:[%s3 + $0x180] sm:$0xff]
    %v2327 = vld [vmem:[%s3 + $0x188] sm:$0xff]
    %v2328 = vld [vmem:[%s3 + $0x190] sm:$0xff]
    %v2329 = vld [vmem:[%s3 + $0x198] sm:$0xff]
    %v2330 = vld [vmem:[%s3 + $0x1a0] sm:$0xff]
    %v2331 = vld [vmem:[%s3 + $0x1a8] sm:$0xff]
    %v2332 = vld [vmem:[%s3 + $0x1b0] sm:$0xff]
    %v2333 = vld [vmem:[%s3 + $0x1b8] sm:$0xff]
    %v2334 = vld [vmem:[%s3 + $0x1c0] sm:$0xff]
    %v2335 = vld [vmem:[%s3 + $0x1c8] sm:$0xff]
    %v2336 = vld [vmem:[%s3 + $0x1d0] sm:$0xff]
    %v2337 = vld [vmem:[%s3 + $0x1d8] sm:$0xff]
    %v2338 = vld [vmem:[%s3 + $0x1e0] sm:$0xff]
    %v2339 = vld [vmem:[%s3 + $0x1e8] sm:$0xff]
    %v2340 = vld [vmem:[%s3 + $0x1f0] sm:$0xff]
    %v2341 = vld [vmem:[%s3 + $0x1f8] sm:$0xff]
    %v2342 = vld [vmem:[%s3 + $0x200] sm:$0xff]
    %v2343 = vld [vmem:[%s3 + $0x208] sm:$0xff]
    %v2344 = vld [vmem:[%s3 + $0x210] sm:$0xff]
    %v2345 = vld [vmem:[%s3 + $0x218] sm:$0xff]
    %v2346 = vld [vmem:[%s3 + $0x220] sm:$0xff]
    %v2347 = vld [vmem:[%s3 + $0x228] sm:$0xff]
    %v2348 = vld [vmem:[%s3 + $0x230] sm:$0xff]
    %v2349 = vld [vmem:[%s3 + $0x238] sm:$0xff]
    %v2350 = vld [vmem:[%s3 + $0x240] sm:$0xff]
    %v2351 = vld [vmem:[%s3 + $0x248] sm:$0xff]
    %v2352 = vld [vmem:[%s3 + $0x250] sm:$0xff]
    %v2353 = vld [vmem:[%s3 + $0x258] sm:$0xff]
    %v2354 = vld [vmem:[%s3 + $0x260] sm:$0xff]
    %v2355 = vld [vmem:[%s3 + $0x268] sm:$0xff]
    %v2356 = vld [vmem:[%s3 + $0x270] sm:$0xff]
    %v2357 = vld [vmem:[%s3 + $0x278] sm:$0xff]
    %v2358 = vld [vmem:[%s3 + $0x280] sm:$0xff]
    %v2359 = vld [vmem:[%s3 + $0x288] sm:$0xff]
    %v2360 = vld [vmem:[%s3 + $0x290] sm:$0xff]
    %v2361 = vld [vmem:[%s3 + $0x298] sm:$0xff]
    %v2362 = vld [vmem:[%s3 + $0x2a0] sm:$0xff]
    %v2363 = vld [vmem:[%s3 + $0x2a8] sm:$0xff]
    %v2364 = vld [vmem:[%s3 + $0x2b0] sm:$0xff]
    %v2365 = vld [vmem:[%s3 + $0x2b8] sm:$0xff]
    %v2366 = vld [vmem:[%s3 + $0x2c0] sm:$0xff]
    %v2367 = vld [vmem:[%s3 + $0x2c8] sm:$0xff]
    %v2368 = vld [vmem:[%s3 + $0x2d0] sm:$0xff]
    %v2369 = vld [vmem:[%s3 + $0x2d8] sm:$0xff]
    %v2370 = vld [vmem:[%s3 + $0x2e0] sm:$0xff]
    %v2371 = vld [vmem:[%s3 + $0x2e8] sm:$0xff]
    %v2372 = vld [vmem:[%s3 + $0x2f0] sm:$0xff]
    %v2373 = vld [vmem:[%s3 + $0x2f8] sm:$0xff]
    %v2374 = vld [vmem:[%s3 + $0x300] sm:$0xff]
    %v2375 = vld [vmem:[%s3 + $0x308] sm:$0xff]
    %v2376 = vld [vmem:[%s3 + $0x310] sm:$0xff]
    %v2377 = vld [vmem:[%s3 + $0x318] sm:$0xff]
    %v2378 = vld [vmem:[%s3 + $0x320] sm:$0xff]
    %v2379 = vld [vmem:[%s3 + $0x328] sm:$0xff]
    %v2380 = vld [vmem:[%s3 + $0x330] sm:$0xff]
    %v2381 = vld [vmem:[%s3 + $0x338] sm:$0xff]
    %v2382 = vld [vmem:[%s3 + $0x340] sm:$0xff]
    %v2383 = vld [vmem:[%s3 + $0x348] sm:$0xff]
    %v2384 = vld [vmem:[%s3 + $0x350] sm:$0xff]
    %v2385 = vld [vmem:[%s3 + $0x358] sm:$0xff]
    %v2386 = vld [vmem:[%s3 + $0x360] sm:$0xff]
    %v2387 = vld [vmem:[%s3 + $0x368] sm:$0xff]
    %v2388 = vld [vmem:[%s3 + $0x370] sm:$0xff]
    %v2389 = vld [vmem:[%s3 + $0x378] sm:$0xff]
    %v2390 = vld [vmem:[%s3 + $0x380] sm:$0xff]
    %v2391 = vld [vmem:[%s3 + $0x388] sm:$0xff]
    %v2392 = vld [vmem:[%s3 + $0x390] sm:$0xff]
    %v2393 = vld [vmem:[%s3 + $0x398] sm:$0xff]
    %v2394 = vld [vmem:[%s3 + $0x3a0] sm:$0xff]
    %v2395 = vld [vmem:[%s3 + $0x3a8] sm:$0xff]
    %v2396 = vld [vmem:[%s3 + $0x3b0] sm:$0xff]
    %v2397 = vld [vmem:[%s3 + $0x3b8] sm:$0xff]
    %v2398 = vld [vmem:[%s3 + $0x3c0] sm:$0xff]
    %v2399 = vld [vmem:[%s3 + $0x3c8] sm:$0xff]
    %v2400 = vld [vmem:[%s3 + $0x3d0] sm:$0xff]
    %v2401 = vld [vmem:[%s3 + $0x3d8] sm:$0xff]
    %v2402 = vld [vmem:[%s3 + $0x3e0] sm:$0xff]
    %v2403 = vld [vmem:[%s3 + $0x3e8] sm:$0xff]
    %v2404 = vld [vmem:[%s3 + $0x3f0] sm:$0xff]
    %v2405 = vld [vmem:[%s3 + $0x3f8] sm:$0xff]
    %v2406 = vld [vmem:[%s4] sm:$0xff]
    %v2408 = vperm.slane %v2406, 0
    %v2409 = vperm.slane %v2406, 1
    %v2410 = vperm.slane %v2406, 2
    %v2411 = vperm.slane %v2406, 3
    %v2412 = vperm.slane %v2406, 4
    %v2413 = vperm.slane %v2406, 5
    %v2414 = vperm.slane %v2406, 6
    %v2415 = vperm.slane %v2406, 7
    %v2552 = vunpack.c.l.b16 %v2278
    %v2553 = vunpack.c.h.b16 %v2278
    %v2554 = vunpack.c.l.b16 %v2279
    %v2555 = vunpack.c.h.b16 %v2279
    %v2556 = vunpack.c.l.b16 %v2280
    %v2557 = vunpack.c.h.b16 %v2280
    %v2558 = vunpack.c.l.b16 %v2281
    %v2559 = vunpack.c.h.b16 %v2281
    %v2560 = vunpack.c.l.b16 %v2282
    %v2561 = vunpack.c.h.b16 %v2282
    %v2562 = vunpack.c.l.b16 %v2283
    %v2563 = vunpack.c.h.b16 %v2283
    %v2564 = vunpack.c.l.b16 %v2284
    %v2565 = vunpack.c.h.b16 %v2284
    %v2566 = vunpack.c.l.b16 %v2285
    %v2567 = vunpack.c.h.b16 %v2285
    %v2568 = vunpack.c.l.b16 %v2286
    %v2569 = vunpack.c.h.b16 %v2286
    %v2570 = vunpack.c.l.b16 %v2287
    %v2571 = vunpack.c.h.b16 %v2287
    %v2572 = vunpack.c.l.b16 %v2288
    %v2573 = vunpack.c.h.b16 %v2288
    %v2574 = vunpack.c.l.b16 %v2289
    %v2575 = vunpack.c.h.b16 %v2289
    %v2576 = vunpack.c.l.b16 %v2290
    %v2577 = vunpack.c.h.b16 %v2290
    %v2578 = vunpack.c.l.b16 %v2291
    %v2579 = vunpack.c.h.b16 %v2291
    %v2580 = vunpack.c.l.b16 %v2292
    %v2581 = vunpack.c.h.b16 %v2292
    %v2582 = vunpack.c.l.b16 %v2293
    %v2583 = vunpack.c.h.b16 %v2293
    %v2584 = vunpack.c.l.b16 %v2294
    %v2585 = vunpack.c.h.b16 %v2294
    %v2586 = vunpack.c.l.b16 %v2295
    %v2587 = vunpack.c.h.b16 %v2295
    %v2588 = vunpack.c.l.b16 %v2296
    %v2589 = vunpack.c.h.b16 %v2296
    %v2590 = vunpack.c.l.b16 %v2297
    %v2591 = vunpack.c.h.b16 %v2297
    %v2592 = vunpack.c.l.b16 %v2298
    %v2593 = vunpack.c.h.b16 %v2298
    %v2594 = vunpack.c.l.b16 %v2299
    %v2595 = vunpack.c.h.b16 %v2299
    %v2596 = vunpack.c.l.b16 %v2300
    %v2597 = vunpack.c.h.b16 %v2300
    %v2598 = vunpack.c.l.b16 %v2301
    %v2599 = vunpack.c.h.b16 %v2301
    %v2600 = vunpack.c.l.b16 %v2302
    %v2601 = vunpack.c.h.b16 %v2302
    %v2602 = vunpack.c.l.b16 %v2303
    %v2603 = vunpack.c.h.b16 %v2303
    %v2604 = vunpack.c.l.b16 %v2304
    %v2605 = vunpack.c.h.b16 %v2304
    %v2606 = vunpack.c.l.b16 %v2305
    %v2607 = vunpack.c.h.b16 %v2305
    %v2608 = vunpack.c.l.b16 %v2306
    %v2609 = vunpack.c.h.b16 %v2306
    %v2610 = vunpack.c.l.b16 %v2307
    %v2611 = vunpack.c.h.b16 %v2307
    %v2612 = vunpack.c.l.b16 %v2308
    %v2613 = vunpack.c.h.b16 %v2308
    %v2614 = vunpack.c.l.b16 %v2309
    %v2615 = vunpack.c.h.b16 %v2309
    %v2616 = vunpack.c.l.b16 %v2310
    %v2617 = vunpack.c.h.b16 %v2310
    %v2618 = vunpack.c.l.b16 %v2311
    %v2619 = vunpack.c.h.b16 %v2311
    %v2620 = vunpack.c.l.b16 %v2312
    %v2621 = vunpack.c.h.b16 %v2312
    %v2622 = vunpack.c.l.b16 %v2313
    %v2623 = vunpack.c.h.b16 %v2313
    %v2624 = vunpack.c.l.b16 %v2314
    %v2625 = vunpack.c.h.b16 %v2314
    %v2626 = vunpack.c.l.b16 %v2315
    %v2627 = vunpack.c.h.b16 %v2315
    %v2628 = vunpack.c.l.b16 %v2316
    %v2629 = vunpack.c.h.b16 %v2316
    %v2630 = vunpack.c.l.b16 %v2317
    %v2631 = vunpack.c.h.b16 %v2317
    %v2632 = vunpack.c.l.b16 %v2318
    %v2633 = vunpack.c.h.b16 %v2318
    %v2634 = vunpack.c.l.b16 %v2319
    %v2635 = vunpack.c.h.b16 %v2319
    %v2636 = vunpack.c.l.b16 %v2320
    %v2637 = vunpack.c.h.b16 %v2320
    %v2638 = vunpack.c.l.b16 %v2321
    %v2639 = vunpack.c.h.b16 %v2321
    %v2640 = vunpack.c.l.b16 %v2322
    %v2641 = vunpack.c.h.b16 %v2322
    %v2642 = vunpack.c.l.b16 %v2323
    %v2643 = vunpack.c.h.b16 %v2323
    %v2644 = vunpack.c.l.b16 %v2324
    %v2645 = vunpack.c.h.b16 %v2324
    %v2646 = vunpack.c.l.b16 %v2325
    %v2647 = vunpack.c.h.b16 %v2325
    %v2648 = vunpack.c.l.b16 %v2326
    %v2649 = vunpack.c.h.b16 %v2326
    %v2650 = vunpack.c.l.b16 %v2327
    %v2651 = vunpack.c.h.b16 %v2327
    %v2652 = vunpack.c.l.b16 %v2328
    %v2653 = vunpack.c.h.b16 %v2328
    %v2654 = vunpack.c.l.b16 %v2329
    %v2655 = vunpack.c.h.b16 %v2329
    %v2656 = vunpack.c.l.b16 %v2330
    %v2657 = vunpack.c.h.b16 %v2330
    %v2658 = vunpack.c.l.b16 %v2331
    %v2659 = vunpack.c.h.b16 %v2331
    %v2660 = vunpack.c.l.b16 %v2332
    %v2661 = vunpack.c.h.b16 %v2332
    %v2662 = vunpack.c.l.b16 %v2333
    %v2663 = vunpack.c.h.b16 %v2333
    %v2664 = vunpack.c.l.b16 %v2334
    %v2665 = vunpack.c.h.b16 %v2334
    %v2666 = vunpack.c.l.b16 %v2335
    %v2667 = vunpack.c.h.b16 %v2335
    %v2668 = vunpack.c.l.b16 %v2336
    %v2669 = vunpack.c.h.b16 %v2336
    %v2670 = vunpack.c.l.b16 %v2337
    %v2671 = vunpack.c.h.b16 %v2337
    %v2672 = vunpack.c.l.b16 %v2338
    %v2673 = vunpack.c.h.b16 %v2338
    %v2674 = vunpack.c.l.b16 %v2339
    %v2675 = vunpack.c.h.b16 %v2339
    %v2676 = vunpack.c.l.b16 %v2340
    %v2677 = vunpack.c.h.b16 %v2340
    %v2678 = vunpack.c.l.b16 %v2341
    %v2679 = vunpack.c.h.b16 %v2341
    %v2680 = vunpack.c.l.b16 %v2342
    %v2681 = vunpack.c.h.b16 %v2342
    %v2682 = vunpack.c.l.b16 %v2343
    %v2683 = vunpack.c.h.b16 %v2343
    %v2684 = vunpack.c.l.b16 %v2344
    %v2685 = vunpack.c.h.b16 %v2344
    %v2686 = vunpack.c.l.b16 %v2345
    %v2687 = vunpack.c.h.b16 %v2345
    %v2688 = vunpack.c.l.b16 %v2346
    %v2689 = vunpack.c.h.b16 %v2346
    %v2690 = vunpack.c.l.b16 %v2347
    %v2691 = vunpack.c.h.b16 %v2347
    %v2692 = vunpack.c.l.b16 %v2348
    %v2693 = vunpack.c.h.b16 %v2348
    %v2694 = vunpack.c.l.b16 %v2349
    %v2695 = vunpack.c.h.b16 %v2349
    %v2696 = vunpack.c.l.b16 %v2350
    %v2697 = vunpack.c.h.b16 %v2350
    %v2698 = vunpack.c.l.b16 %v2351
    %v2699 = vunpack.c.h.b16 %v2351
    %v2700 = vunpack.c.l.b16 %v2352
    %v2701 = vunpack.c.h.b16 %v2352
    %v2702 = vunpack.c.l.b16 %v2353
    %v2703 = vunpack.c.h.b16 %v2353
    %v2704 = vunpack.c.l.b16 %v2354
    %v2705 = vunpack.c.h.b16 %v2354
    %v2706 = vunpack.c.l.b16 %v2355
    %v2707 = vunpack.c.h.b16 %v2355
    %v2708 = vunpack.c.l.b16 %v2356
    %v2709 = vunpack.c.h.b16 %v2356
    %v2710 = vunpack.c.l.b16 %v2357
    %v2711 = vunpack.c.h.b16 %v2357
    %v2712 = vunpack.c.l.b16 %v2358
    %v2713 = vunpack.c.h.b16 %v2358
    %v2714 = vunpack.c.l.b16 %v2359
    %v2715 = vunpack.c.h.b16 %v2359
    %v2716 = vunpack.c.l.b16 %v2360
    %v2717 = vunpack.c.h.b16 %v2360
    %v2718 = vunpack.c.l.b16 %v2361
    %v2719 = vunpack.c.h.b16 %v2361
    %v2720 = vunpack.c.l.b16 %v2362
    %v2721 = vunpack.c.h.b16 %v2362
    %v2722 = vunpack.c.l.b16 %v2363
    %v2723 = vunpack.c.h.b16 %v2363
    %v2724 = vunpack.c.l.b16 %v2364
    %v2725 = vunpack.c.h.b16 %v2364
    %v2726 = vunpack.c.l.b16 %v2365
    %v2727 = vunpack.c.h.b16 %v2365
    %v2728 = vunpack.c.l.b16 %v2366
    %v2729 = vunpack.c.h.b16 %v2366
    %v2730 = vunpack.c.l.b16 %v2367
    %v2731 = vunpack.c.h.b16 %v2367
    %v2732 = vunpack.c.l.b16 %v2368
    %v2733 = vunpack.c.h.b16 %v2368
    %v2734 = vunpack.c.l.b16 %v2369
    %v2735 = vunpack.c.h.b16 %v2369
    %v2736 = vunpack.c.l.b16 %v2370
    %v2737 = vunpack.c.h.b16 %v2370
    %v2738 = vunpack.c.l.b16 %v2371
    %v2739 = vunpack.c.h.b16 %v2371
    %v2740 = vunpack.c.l.b16 %v2372
    %v2741 = vunpack.c.h.b16 %v2372
    %v2742 = vunpack.c.l.b16 %v2373
    %v2743 = vunpack.c.h.b16 %v2373
    %v2744 = vunpack.c.l.b16 %v2374
    %v2745 = vunpack.c.h.b16 %v2374
    %v2746 = vunpack.c.l.b16 %v2375
    %v2747 = vunpack.c.h.b16 %v2375
    %v2748 = vunpack.c.l.b16 %v2376
    %v2749 = vunpack.c.h.b16 %v2376
    %v2750 = vunpack.c.l.b16 %v2377
    %v2751 = vunpack.c.h.b16 %v2377
    %v2752 = vunpack.c.l.b16 %v2378
    %v2753 = vunpack.c.h.b16 %v2378
    %v2754 = vunpack.c.l.b16 %v2379
    %v2755 = vunpack.c.h.b16 %v2379
    %v2756 = vunpack.c.l.b16 %v2380
    %v2757 = vunpack.c.h.b16 %v2380
    %v2758 = vunpack.c.l.b16 %v2381
    %v2759 = vunpack.c.h.b16 %v2381
    %v2760 = vunpack.c.l.b16 %v2382
    %v2761 = vunpack.c.h.b16 %v2382
    %v2762 = vunpack.c.l.b16 %v2383
    %v2763 = vunpack.c.h.b16 %v2383
    %v2764 = vunpack.c.l.b16 %v2384
    %v2765 = vunpack.c.h.b16 %v2384
    %v2766 = vunpack.c.l.b16 %v2385
    %v2767 = vunpack.c.h.b16 %v2385
    %v2768 = vunpack.c.l.b16 %v2386
    %v2769 = vunpack.c.h.b16 %v2386
    %v2770 = vunpack.c.l.b16 %v2387
    %v2771 = vunpack.c.h.b16 %v2387
    %v2772 = vunpack.c.l.b16 %v2388
    %v2773 = vunpack.c.h.b16 %v2388
    %v2774 = vunpack.c.l.b16 %v2389
    %v2775 = vunpack.c.h.b16 %v2389
    %v2776 = vunpack.c.l.b16 %v2390
    %v2777 = vunpack.c.h.b16 %v2390
    %v2778 = vunpack.c.l.b16 %v2391
    %v2779 = vunpack.c.h.b16 %v2391
    %v2780 = vunpack.c.l.b16 %v2392
    %v2781 = vunpack.c.h.b16 %v2392
    %v2782 = vunpack.c.l.b16 %v2393
    %v2783 = vunpack.c.h.b16 %v2393
    %v2784 = vunpack.c.l.b16 %v2394
    %v2785 = vunpack.c.h.b16 %v2394
    %v2786 = vunpack.c.l.b16 %v2395
    %v2787 = vunpack.c.h.b16 %v2395
    %v2788 = vunpack.c.l.b16 %v2396
    %v2789 = vunpack.c.h.b16 %v2396
    %v2790 = vunpack.c.l.b16 %v2397
    %v2791 = vunpack.c.h.b16 %v2397
    %v2792 = vunpack.c.l.b16 %v2398
    %v2793 = vunpack.c.h.b16 %v2398
    %v2794 = vunpack.c.l.b16 %v2399
    %v2795 = vunpack.c.h.b16 %v2399
    %v2796 = vunpack.c.l.b16 %v2400
    %v2797 = vunpack.c.h.b16 %v2400
    %v2798 = vunpack.c.l.b16 %v2401
    %v2799 = vunpack.c.h.b16 %v2401
    %v2800 = vunpack.c.l.b16 %v2402
    %v2801 = vunpack.c.h.b16 %v2402
    %v2802 = vunpack.c.l.b16 %v2403
    %v2803 = vunpack.c.h.b16 %v2403
    %v2804 = vunpack.c.l.b16 %v2404
    %v2805 = vunpack.c.h.b16 %v2404
    %v2806 = vunpack.c.l.b16 %v2405
    %v2807 = vunpack.c.h.b16 %v2405
    %v2808 = vpack.c.b16 %v2560, %v2552
    %v2809 = vpack.c.b16 %v2561, %v2553
    %v2810 = vpack.c.b16 %v2562, %v2554
    %v2811 = vpack.c.b16 %v2563, %v2555
    %v2812 = vpack.c.b16 %v2564, %v2556
    %v2813 = vpack.c.b16 %v2565, %v2557
    %v2814 = vpack.c.b16 %v2566, %v2558
    %v2815 = vpack.c.b16 %v2567, %v2559
    %v2816 = vpack.c.b16 %v2576, %v2568
    %v2817 = vpack.c.b16 %v2577, %v2569
    %v2818 = vpack.c.b16 %v2578, %v2570
    %v2819 = vpack.c.b16 %v2579, %v2571
    %v2820 = vpack.c.b16 %v2580, %v2572
    %v2821 = vpack.c.b16 %v2581, %v2573
    %v2822 = vpack.c.b16 %v2582, %v2574
    %v2823 = vpack.c.b16 %v2583, %v2575
    %v2824 = vpack.c.b16 %v2592, %v2584
    %v2825 = vpack.c.b16 %v2593, %v2585
    %v2826 = vpack.c.b16 %v2594, %v2586
    %v2827 = vpack.c.b16 %v2595, %v2587
    %v2828 = vpack.c.b16 %v2596, %v2588
    %v2829 = vpack.c.b16 %v2597, %v2589
    %v2830 = vpack.c.b16 %v2598, %v2590
    %v2831 = vpack.c.b16 %v2599, %v2591
    %v2832 = vpack.c.b16 %v2608, %v2600
    %v2833 = vpack.c.b16 %v2609, %v2601
    %v2834 = vpack.c.b16 %v2610, %v2602
    %v2835 = vpack.c.b16 %v2611, %v2603
    %v2836 = vpack.c.b16 %v2612, %v2604
    %v2837 = vpack.c.b16 %v2613, %v2605
    %v2838 = vpack.c.b16 %v2614, %v2606
    %v2839 = vpack.c.b16 %v2615, %v2607
    %v2840 = vpack.c.b16 %v2624, %v2616
    %v2841 = vpack.c.b16 %v2625, %v2617
    %v2842 = vpack.c.b16 %v2626, %v2618
    %v2843 = vpack.c.b16 %v2627, %v2619
    %v2844 = vpack.c.b16 %v2628, %v2620
    %v2845 = vpack.c.b16 %v2629, %v2621
    %v2846 = vpack.c.b16 %v2630, %v2622
    %v2847 = vpack.c.b16 %v2631, %v2623
    %v2848 = vpack.c.b16 %v2640, %v2632
    %v2849 = vpack.c.b16 %v2641, %v2633
    %v2850 = vpack.c.b16 %v2642, %v2634
    %v2851 = vpack.c.b16 %v2643, %v2635
    %v2852 = vpack.c.b16 %v2644, %v2636
    %v2853 = vpack.c.b16 %v2645, %v2637
    %v2854 = vpack.c.b16 %v2646, %v2638
    %v2855 = vpack.c.b16 %v2647, %v2639
    %v2856 = vpack.c.b16 %v2656, %v2648
    %v2857 = vpack.c.b16 %v2657, %v2649
    %v2858 = vpack.c.b16 %v2658, %v2650
    %v2859 = vpack.c.b16 %v2659, %v2651
    %v2860 = vpack.c.b16 %v2660, %v2652
    %v2861 = vpack.c.b16 %v2661, %v2653
    %v2862 = vpack.c.b16 %v2662, %v2654
    %v2863 = vpack.c.b16 %v2663, %v2655
    %v2864 = vpack.c.b16 %v2672, %v2664
    %v2865 = vpack.c.b16 %v2673, %v2665
    %v2866 = vpack.c.b16 %v2674, %v2666
    %v2867 = vpack.c.b16 %v2675, %v2667
    %v2868 = vpack.c.b16 %v2676, %v2668
    %v2869 = vpack.c.b16 %v2677, %v2669
    %v2870 = vpack.c.b16 %v2678, %v2670
    %v2871 = vpack.c.b16 %v2679, %v2671
    %v2872 = vpack.c.b16 %v2688, %v2680
    %v2873 = vpack.c.b16 %v2689, %v2681
    %v2874 = vpack.c.b16 %v2690, %v2682
    %v2875 = vpack.c.b16 %v2691, %v2683
    %v2876 = vpack.c.b16 %v2692, %v2684
    %v2877 = vpack.c.b16 %v2693, %v2685
    %v2878 = vpack.c.b16 %v2694, %v2686
    %v2879 = vpack.c.b16 %v2695, %v2687
    %v2880 = vpack.c.b16 %v2704, %v2696
    %v2881 = vpack.c.b16 %v2705, %v2697
    %v2882 = vpack.c.b16 %v2706, %v2698
    %v2883 = vpack.c.b16 %v2707, %v2699
    %v2884 = vpack.c.b16 %v2708, %v2700
    %v2885 = vpack.c.b16 %v2709, %v2701
    %v2886 = vpack.c.b16 %v2710, %v2702
    %v2887 = vpack.c.b16 %v2711, %v2703
    %v2888 = vpack.c.b16 %v2720, %v2712
    %v2889 = vpack.c.b16 %v2721, %v2713
    %v2890 = vpack.c.b16 %v2722, %v2714
    %v2891 = vpack.c.b16 %v2723, %v2715
    %v2892 = vpack.c.b16 %v2724, %v2716
    %v2893 = vpack.c.b16 %v2725, %v2717
    %v2894 = vpack.c.b16 %v2726, %v2718
    %v2895 = vpack.c.b16 %v2727, %v2719
    %v2896 = vpack.c.b16 %v2736, %v2728
    %v2897 = vpack.c.b16 %v2737, %v2729
    %v2898 = vpack.c.b16 %v2738, %v2730
    %v2899 = vpack.c.b16 %v2739, %v2731
    %v2900 = vpack.c.b16 %v2740, %v2732
    %v2901 = vpack.c.b16 %v2741, %v2733
    %v2902 = vpack.c.b16 %v2742, %v2734
    %v2903 = vpack.c.b16 %v2743, %v2735
    %v2904 = vpack.c.b16 %v2752, %v2744
    %v2905 = vpack.c.b16 %v2753, %v2745
    %v2906 = vpack.c.b16 %v2754, %v2746
    %v2907 = vpack.c.b16 %v2755, %v2747
    %v2908 = vpack.c.b16 %v2756, %v2748
    %v2909 = vpack.c.b16 %v2757, %v2749
    %v2910 = vpack.c.b16 %v2758, %v2750
    %v2911 = vpack.c.b16 %v2759, %v2751
    %v2912 = vpack.c.b16 %v2768, %v2760
    %v2913 = vpack.c.b16 %v2769, %v2761
    %v2914 = vpack.c.b16 %v2770, %v2762
    %v2915 = vpack.c.b16 %v2771, %v2763
    %v2916 = vpack.c.b16 %v2772, %v2764
    %v2917 = vpack.c.b16 %v2773, %v2765
    %v2918 = vpack.c.b16 %v2774, %v2766
    %v2919 = vpack.c.b16 %v2775, %v2767
    %v2920 = vpack.c.b16 %v2784, %v2776
    %v2921 = vpack.c.b16 %v2785, %v2777
    %v2922 = vpack.c.b16 %v2786, %v2778
    %v2923 = vpack.c.b16 %v2787, %v2779
    %v2924 = vpack.c.b16 %v2788, %v2780
    %v2925 = vpack.c.b16 %v2789, %v2781
    %v2926 = vpack.c.b16 %v2790, %v2782
    %v2927 = vpack.c.b16 %v2791, %v2783
    %v2928 = vpack.c.b16 %v2800, %v2792
    %v2929 = vpack.c.b16 %v2801, %v2793
    %v2930 = vpack.c.b16 %v2802, %v2794
    %v2931 = vpack.c.b16 %v2803, %v2795
    %v2932 = vpack.c.b16 %v2804, %v2796
    %v2933 = vpack.c.b16 %v2805, %v2797
    %v2934 = vpack.c.b16 %v2806, %v2798
    %v2935 = vpack.c.b16 %v2807, %v2799
    %3064 = vmatpush.bf16.msra.mxu0 %v2864
    %3065 = vmatpush.bf16.msra.mxu0 %v2856
    %3066 = vmatpush.bf16.msra.mxu0 %v2848
    %3067 = vmatpush.bf16.msra.mxu0 %v2840
    %3068 = vmatpush.bf16.msra.mxu0 %v2832
    %3069 = vmatpush.bf16.msra.mxu0 %v2824
    %3070 = vmatpush.bf16.msra.mxu0 %v2816
    %3071 = vmatpush.bf16.msra.mxu0 %v2808
    %3072 = vmatmul.bf16.gmra.mxu0 %v2276
    %v3073 = vpop.f32.mrf.mxu0
    %v3074 = vadd.f32 %v2408, %v3073
    %v3075 = vpop.f32.mrf.mxu0
    %3076 = vdwg.mxu0
    %3077 = vmatpush.bf16.msra.mxu0 %v2928
    %3078 = vmatpush.bf16.msra.mxu0 %v2920
    %3079 = vmatpush.bf16.msra.mxu0 %v2912
    %3080 = vmatpush.bf16.msra.mxu0 %v2904
    %3081 = vmatpush.bf16.msra.mxu0 %v2896
    %3082 = vmatpush.bf16.msra.mxu0 %v2888
    %3083 = vmatpush.bf16.msra.mxu0 %v2880
    %3084 = vmatpush.bf16.msra.mxu0 %v2872
    %3085 = vmatmul.bf16.gmra.mxu0 %v2277
    %v3086 = vpop.f32.mrf.mxu0
    %v3087 = vadd.f32 %v3074, %v3086
    %v3088 = vpop.f32.mrf.mxu0
    %3089 = vdwg.mxu0
    %3090 = vmatpush.bf16.msra.mxu0 %v2865
    %3091 = vmatpush.bf16.msra.mxu0 %v2857
    %3092 = vmatpush.bf16.msra.mxu0 %v2849
    %3093 = vmatpush.bf16.msra.mxu0 %v2841
    %3094 = vmatpush.bf16.msra.mxu0 %v2833
    %3095 = vmatpush.bf16.msra.mxu0 %v2825
    %3096 = vmatpush.bf16.msra.mxu0 %v2817
    %3097 = vmatpush.bf16.msra.mxu0 %v2809
    %3098 = vmatmul.bf16.gmra.mxu0 %v2276
    %v3099 = vpop.f32.mrf.mxu0
    %v3100 = vadd.f32 %v2409, %v3099
    %v3101 = vpop.f32.mrf.mxu0
    %3102 = vdwg.mxu0
    %3103 = vmatpush.bf16.msra.mxu0 %v2929
    %3104 = vmatpush.bf16.msra.mxu0 %v2921
    %3105 = vmatpush.bf16.msra.mxu0 %v2913
    %3106 = vmatpush.bf16.msra.mxu0 %v2905
    %3107 = vmatpush.bf16.msra.mxu0 %v2897
    %3108 = vmatpush.bf16.msra.mxu0 %v2889
    %3109 = vmatpush.bf16.msra.mxu0 %v2881
    %3110 = vmatpush.bf16.msra.mxu0 %v2873
    %3111 = vmatmul.bf16.gmra.mxu0 %v2277
    %v3112 = vpop.f32.mrf.mxu0
    %v3113 = vadd.f32 %v3100, %v3112
    %v3114 = vpop.f32.mrf.mxu0
    %3115 = vdwg.mxu0
    %3116 = vmatpush.bf16.msra.mxu0 %v2866
    %3117 = vmatpush.bf16.msra.mxu0 %v2858
    %3118 = vmatpush.bf16.msra.mxu0 %v2850
    %3119 = vmatpush.bf16.msra.mxu0 %v2842
    %3120 = vmatpush.bf16.msra.mxu0 %v2834
    %3121 = vmatpush.bf16.msra.mxu0 %v2826
    %3122 = vmatpush.bf16.msra.mxu0 %v2818
    %3123 = vmatpush.bf16.msra.mxu0 %v2810
    %3124 = vmatmul.bf16.gmra.mxu0 %v2276
    %v3125 = vpop.f32.mrf.mxu0
    %v3126 = vadd.f32 %v2410, %v3125
    %v3127 = vpop.f32.mrf.mxu0
    %3128 = vdwg.mxu0
    %3129 = vmatpush.bf16.msra.mxu0 %v2930
    %3130 = vmatpush.bf16.msra.mxu0 %v2922
    %3131 = vmatpush.bf16.msra.mxu0 %v2914
    %3132 = vmatpush.bf16.msra.mxu0 %v2906
    %3133 = vmatpush.bf16.msra.mxu0 %v2898
    %3134 = vmatpush.bf16.msra.mxu0 %v2890
    %3135 = vmatpush.bf16.msra.mxu0 %v2882
    %3136 = vmatpush.bf16.msra.mxu0 %v2874
    %3137 = vmatmul.bf16.gmra.mxu0 %v2277
    %v3138 = vpop.f32.mrf.mxu0
    %v3139 = vadd.f32 %v3126, %v3138
    %v3140 = vpop.f32.mrf.mxu0
    %3141 = vdwg.mxu0
    %3142 = vmatpush.bf16.msra.mxu0 %v2867
    %3143 = vmatpush.bf16.msra.mxu0 %v2859
    %3144 = vmatpush.bf16.msra.mxu0 %v2851
    %3145 = vmatpush.bf16.msra.mxu0 %v2843
    %3146 = vmatpush.bf16.msra.mxu0 %v2835
    %3147 = vmatpush.bf16.msra.mxu0 %v2827
    %3148 = vmatpush.bf16.msra.mxu0 %v2819
    %3149 = vmatpush.bf16.msra.mxu0 %v2811
    %3150 = vmatmul.bf16.gmra.mxu0 %v2276
    %v3151 = vpop.f32.mrf.mxu0
    %v3152 = vadd.f32 %v2411, %v3151
    %v3153 = vpop.f32.mrf.mxu0
    %3154 = vdwg.mxu0
    %3155 = vmatpush.bf16.msra.mxu0 %v2931
    %3156 = vmatpush.bf16.msra.mxu0 %v2923
    %3157 = vmatpush.bf16.msra.mxu0 %v2915
    %3158 = vmatpush.bf16.msra.mxu0 %v2907
    %3159 = vmatpush.bf16.msra.mxu0 %v2899
    %3160 = vmatpush.bf16.msra.mxu0 %v2891
    %3161 = vmatpush.bf16.msra.mxu0 %v2883
    %3162 = vmatpush.bf16.msra.mxu0 %v2875
    %3163 = vmatmul.bf16.gmra.mxu0 %v2277
    %v3164 = vpop.f32.mrf.mxu0
    %v3165 = vadd.f32 %v3152, %v3164
    %v3166 = vpop.f32.mrf.mxu0
    %3167 = vdwg.mxu0
    %3168 = vmatpush.bf16.msra.mxu0 %v2868
    %3169 = vmatpush.bf16.msra.mxu0 %v2860
    %3170 = vmatpush.bf16.msra.mxu0 %v2852
    %3171 = vmatpush.bf16.msra.mxu0 %v2844
    %3172 = vmatpush.bf16.msra.mxu0 %v2836
    %3173 = vmatpush.bf16.msra.mxu0 %v2828
    %3174 = vmatpush.bf16.msra.mxu0 %v2820
    %3175 = vmatpush.bf16.msra.mxu0 %v2812
    %3176 = vmatmul.bf16.gmra.mxu0 %v2276
    %v3177 = vpop.f32.mrf.mxu0
    %v3178 = vadd.f32 %v2412, %v3177
    %v3179 = vpop.f32.mrf.mxu0
    %3180 = vdwg.mxu0
    %3181 = vmatpush.bf16.msra.mxu0 %v2932
    %3182 = vmatpush.bf16.msra.mxu0 %v2924
    %3183 = vmatpush.bf16.msra.mxu0 %v2916
    %3184 = vmatpush.bf16.msra.mxu0 %v2908
    %3185 = vmatpush.bf16.msra.mxu0 %v2900
    %3186 = vmatpush.bf16.msra.mxu0 %v2892
    %3187 = vmatpush.bf16.msra.mxu0 %v2884
    %3188 = vmatpush.bf16.msra.mxu0 %v2876
    %3189 = vmatmul.bf16.gmra.mxu0 %v2277
    %v3190 = vpop.f32.mrf.mxu0
    %v3191 = vadd.f32 %v3178, %v3190
    %v3192 = vpop.f32.mrf.mxu0
    %3193 = vdwg.mxu0
    %3194 = vmatpush.bf16.msra.mxu0 %v2869
    %3195 = vmatpush.bf16.msra.mxu0 %v2861
    %3196 = vmatpush.bf16.msra.mxu0 %v2853
    %3197 = vmatpush.bf16.msra.mxu0 %v2845
    %3198 = vmatpush.bf16.msra.mxu0 %v2837
    %3199 = vmatpush.bf16.msra.mxu0 %v2829
    %3200 = vmatpush.bf16.msra.mxu0 %v2821
    %3201 = vmatpush.bf16.msra.mxu0 %v2813
    %3202 = vmatmul.bf16.gmra.mxu0 %v2276
    %v3203 = vpop.f32.mrf.mxu0
    %v3204 = vadd.f32 %v2413, %v3203
    %v3205 = vpop.f32.mrf.mxu0
    %3206 = vdwg.mxu0
    %3207 = vmatpush.bf16.msra.mxu0 %v2933
    %3208 = vmatpush.bf16.msra.mxu0 %v2925
    %3209 = vmatpush.bf16.msra.mxu0 %v2917
    %3210 = vmatpush.bf16.msra.mxu0 %v2909
    %3211 = vmatpush.bf16.msra.mxu0 %v2901
    %3212 = vmatpush.bf16.msra.mxu0 %v2893
    %3213 = vmatpush.bf16.msra.mxu0 %v2885
    %3214 = vmatpush.bf16.msra.mxu0 %v2877
    %3215 = vmatmul.bf16.gmra.mxu0 %v2277
    %v3216 = vpop.f32.mrf.mxu0
    %v3217 = vadd.f32 %v3204, %v3216
    %v3218 = vpop.f32.mrf.mxu0
    %3219 = vdwg.mxu0
    %3220 = vmatpush.bf16.msra.mxu0 %v2870
    %3221 = vmatpush.bf16.msra.mxu0 %v2862
    %3222 = vmatpush.bf16.msra.mxu0 %v2854
    %3223 = vmatpush.bf16.msra.mxu0 %v2846
    %3224 = vmatpush.bf16.msra.mxu0 %v2838
    %3225 = vmatpush.bf16.msra.mxu0 %v2830
    %3226 = vmatpush.bf16.msra.mxu0 %v2822
    %3227 = vmatpush.bf16.msra.mxu0 %v2814
    %3228 = vmatmul.bf16.gmra.mxu0 %v2276
    %v3229 = vpop.f32.mrf.mxu0
    %v3230 = vadd.f32 %v2414, %v3229
    %v3231 = vpop.f32.mrf.mxu0
    %3232 = vdwg.mxu0
    %3233 = vmatpush.bf16.msra.mxu0 %v2934
    %3234 = vmatpush.bf16.msra.mxu0 %v2926
    %3235 = vmatpush.bf16.msra.mxu0 %v2918
    %3236 = vmatpush.bf16.msra.mxu0 %v2910
    %3237 = vmatpush.bf16.msra.mxu0 %v2902
    %3238 = vmatpush.bf16.msra.mxu0 %v2894
    %3239 = vmatpush.bf16.msra.mxu0 %v2886
    %3240 = vmatpush.bf16.msra.mxu0 %v2878
    %3241 = vmatmul.bf16.gmra.mxu0 %v2277
    %v3242 = vpop.f32.mrf.mxu0
    %v3243 = vadd.f32 %v3230, %v3242
    %v3244 = vpop.f32.mrf.mxu0
    %3245 = vdwg.mxu0
    %3246 = vmatpush.bf16.msra.mxu0 %v2871
    %3247 = vmatpush.bf16.msra.mxu0 %v2863
    %3248 = vmatpush.bf16.msra.mxu0 %v2855
    %3249 = vmatpush.bf16.msra.mxu0 %v2847
    %3250 = vmatpush.bf16.msra.mxu0 %v2839
    %3251 = vmatpush.bf16.msra.mxu0 %v2831
    %3252 = vmatpush.bf16.msra.mxu0 %v2823
    %3253 = vmatpush.bf16.msra.mxu0 %v2815
    %3254 = vmatmul.bf16.gmra.mxu0 %v2276
    %v3255 = vpop.f32.mrf.mxu0
    %v3256 = vadd.f32 %v2415, %v3255
    %v3257 = vpop.f32.mrf.mxu0
    %3258 = vdwg.mxu0
    %3259 = vmatpush.bf16.msra.mxu0 %v2935
    %3260 = vmatpush.bf16.msra.mxu0 %v2927
    %3261 = vmatpush.bf16.msra.mxu0 %v2919
    %3262 = vmatpush.bf16.msra.mxu0 %v2911
    %3263 = vmatpush.bf16.msra.mxu0 %v2903
    %3264 = vmatpush.bf16.msra.mxu0 %v2895
    %3265 = vmatpush.bf16.msra.mxu0 %v2887
    %3266 = vmatpush.bf16.msra.mxu0 %v2879
    %3267 = vmatmul.bf16.gmra.mxu0 %v2277
    %v3268 = vpop.f32.mrf.mxu0
    %v3269 = vadd.f32 %v3256, %v3268
    %v3270 = vpop.f32.mrf.mxu0
    %3271 = vdwg.mxu0
    %v3272 = vmax.f32 %v3087, 0.0
    %v3273 = vmax.f32 %v3113, 0.0
    %v3274 = vmax.f32 %v3139, 0.0
    %v3275 = vmax.f32 %v3165, 0.0
    %v3276 = vmax.f32 %v3191, 0.0
    %v3277 = vmax.f32 %v3217, 0.0
    %v3278 = vmax.f32 %v3243, 0.0
    %v3279 = vmax.f32 %v3269, 0.0
    %v3280 = vpack.c.bf16 %v3272, %v3272
    %v3281 = vpack.c.bf16 %v3273, %v3273
    %v3282 = vpack.c.bf16 %v3274, %v3274
    %v3283 = vpack.c.bf16 %v3275, %v3275
    %v3284 = vpack.c.bf16 %v3276, %v3276
    %v3285 = vpack.c.bf16 %v3277, %v3277
    %v3286 = vpack.c.bf16 %v3278, %v3278
    %v3287 = vpack.c.bf16 %v3279, %v3279
    %v3288 = vld [vmem:[%s5] sm:$0xf]
    %v3289 = vld [vmem:[%s5 + $0x4] sm:$0xf]
    %v3290 = vld [vmem:[%s5 + $0x8] sm:$0xf]
    %v3291 = vld [vmem:[%s5 + $0xc] sm:$0xf]
    %v3292 = vld [vmem:[%s5 + $0x10] sm:$0xf]
    %v3293 = vld [vmem:[%s5 + $0x14] sm:$0xf]
    %v3294 = vld [vmem:[%s5 + $0x18] sm:$0xf]
    %v3295 = vld [vmem:[%s5 + $0x1c] sm:$0xf]
    %v3296 = vld [vmem:[%s5 + $0x20] sm:$0xf]
    %v3297 = vld [vmem:[%s5 + $0x24] sm:$0xf]
    %v3298 = vld [vmem:[%s5 + $0x28] sm:$0xf]
    %v3299 = vld [vmem:[%s5 + $0x2c] sm:$0xf]
    %v3300 = vld [vmem:[%s5 + $0x30] sm:$0xf]
    %v3301 = vld [vmem:[%s5 + $0x34] sm:$0xf]
    %v3302 = vld [vmem:[%s5 + $0x38] sm:$0xf]
    %v3303 = vld [vmem:[%s5 + $0x3c] sm:$0xf]
    %v3304 = vld [vmem:[%s5 + $0x40] sm:$0xf]
    %v3305 = vld [vmem:[%s5 + $0x44] sm:$0xf]
    %v3306 = vld [vmem:[%s5 + $0x48] sm:$0xf]
    %v3307 = vld [vmem:[%s5 + $0x4c] sm:$0xf]
    %v3308 = vld [vmem:[%s5 + $0x50] sm:$0xf]
    %v3309 = vld [vmem:[%s5 + $0x54] sm:$0xf]
    %v3310 = vld [vmem:[%s5 + $0x58] sm:$0xf]
    %v3311 = vld [vmem:[%s5 + $0x5c] sm:$0xf]
    %v3312 = vld [vmem:[%s5 + $0x60] sm:$0xf]
    %v3313 = vld [vmem:[%s5 + $0x64] sm:$0xf]
    %v3314 = vld [vmem:[%s5 + $0x68] sm:$0xf]
    %v3315 = vld [vmem:[%s5 + $0x6c] sm:$0xf]
    %v3316 = vld [vmem:[%s5 + $0x70] sm:$0xf]
    %v3317 = vld [vmem:[%s5 + $0x74] sm:$0xf]
    %v3318 = vld [vmem:[%s5 + $0x78] sm:$0xf]
    %v3319 = vld [vmem:[%s5 + $0x7c] sm:$0xf]
    %v3320 = vld [vmem:[%s5 + $0x80] sm:$0xf]
    %v3321 = vld [vmem:[%s5 + $0x84] sm:$0xf]
    %v3322 = vld [vmem:[%s5 + $0x88] sm:$0xf]
    %v3323 = vld [vmem:[%s5 + $0x8c] sm:$0xf]
    %v3324 = vld [vmem:[%s5 + $0x90] sm:$0xf]
    %v3325 = vld [vmem:[%s5 + $0x94] sm:$0xf]
    %v3326 = vld [vmem:[%s5 + $0x98] sm:$0xf]
    %v3327 = vld [vmem:[%s5 + $0x9c] sm:$0xf]
    %v3328 = vld [vmem:[%s5 + $0xa0] sm:$0xf]
    %v3329 = vld [vmem:[%s5 + $0xa4] sm:$0xf]
    %v3330 = vld [vmem:[%s5 + $0xa8] sm:$0xf]
    %v3331 = vld [vmem:[%s5 + $0xac] sm:$0xf]
    %v3332 = vld [vmem:[%s5 + $0xb0] sm:$0xf]
    %v3333 = vld [vmem:[%s5 + $0xb4] sm:$0xf]
    %v3334 = vld [vmem:[%s5 + $0xb8] sm:$0xf]
    %v3335 = vld [vmem:[%s5 + $0xbc] sm:$0xf]
    %v3336 = vld [vmem:[%s5 + $0xc0] sm:$0xf]
    %v3337 = vld [vmem:[%s5 + $0xc4] sm:$0xf]
    %v3338 = vld [vmem:[%s5 + $0xc8] sm:$0xf]
    %v3339 = vld [vmem:[%s5 + $0xcc] sm:$0xf]
    %v3340 = vld [vmem:[%s5 + $0xd0] sm:$0xf]
    %v3341 = vld [vmem:[%s5 + $0xd4] sm:$0xf]
    %v3342 = vld [vmem:[%s5 + $0xd8] sm:$0xf]
    %v3343 = vld [vmem:[%s5 + $0xdc] sm:$0xf]
    %v3344 = vld [vmem:[%s5 + $0xe0] sm:$0xf]
    %v3345 = vld [vmem:[%s5 + $0xe4] sm:$0xf]
    %v3346 = vld [vmem:[%s5 + $0xe8] sm:$0xf]
    %v3347 = vld [vmem:[%s5 + $0xec] sm:$0xf]
    %v3348 = vld [vmem:[%s5 + $0xf0] sm:$0xf]
    %v3349 = vld [vmem:[%s5 + $0xf4] sm:$0xf]
    %v3350 = vld [vmem:[%s5 + $0xf8] sm:$0xf]
    %v3351 = vld [vmem:[%s5 + $0xfc] sm:$0xf]
    %v3352 = vld [vmem:[%s5 + $0x100] sm:$0xf]
    %v3353 = vld [vmem:[%s5 + $0x104] sm:$0xf]
    %v3354 = vld [vmem:[%s5 + $0x108] sm:$0xf]
    %v3355 = vld [vmem:[%s5 + $0x10c] sm:$0xf]
    %v3356 = vld [vmem:[%s5 + $0x110] sm:$0xf]
    %v3357 = vld [vmem:[%s5 + $0x114] sm:$0xf]
    %v3358 = vld [vmem:[%s5 + $0x118] sm:$0xf]
    %v3359 = vld [vmem:[%s5 + $0x11c] sm:$0xf]
    %v3360 = vld [vmem:[%s5 + $0x120] sm:$0xf]
    %v3361 = vld [vmem:[%s5 + $0x124] sm:$0xf]
    %v3362 = vld [vmem:[%s5 + $0x128] sm:$0xf]
    %v3363 = vld [vmem:[%s5 + $0x12c] sm:$0xf]
    %v3364 = vld [vmem:[%s5 + $0x130] sm:$0xf]
    %v3365 = vld [vmem:[%s5 + $0x134] sm:$0xf]
    %v3366 = vld [vmem:[%s5 + $0x138] sm:$0xf]
    %v3367 = vld [vmem:[%s5 + $0x13c] sm:$0xf]
    %v3368 = vld [vmem:[%s5 + $0x140] sm:$0xf]
    %v3369 = vld [vmem:[%s5 + $0x144] sm:$0xf]
    %v3370 = vld [vmem:[%s5 + $0x148] sm:$0xf]
    %v3371 = vld [vmem:[%s5 + $0x14c] sm:$0xf]
    %v3372 = vld [vmem:[%s5 + $0x150] sm:$0xf]
    %v3373 = vld [vmem:[%s5 + $0x154] sm:$0xf]
    %v3374 = vld [vmem:[%s5 + $0x158] sm:$0xf]
    %v3375 = vld [vmem:[%s5 + $0x15c] sm:$0xf]
    %v3376 = vld [vmem:[%s5 + $0x160] sm:$0xf]
    %v3377 = vld [vmem:[%s5 + $0x164] sm:$0xf]
    %v3378 = vld [vmem:[%s5 + $0x168] sm:$0xf]
    %v3379 = vld [vmem:[%s5 + $0x16c] sm:$0xf]
    %v3380 = vld [vmem:[%s5 + $0x170] sm:$0xf]
    %v3381 = vld [vmem:[%s5 + $0x174] sm:$0xf]
    %v3382 = vld [vmem:[%s5 + $0x178] sm:$0xf]
    %v3383 = vld [vmem:[%s5 + $0x17c] sm:$0xf]
    %v3384 = vld [vmem:[%s5 + $0x180] sm:$0xf]
    %v3385 = vld [vmem:[%s5 + $0x184] sm:$0xf]
    %v3386 = vld [vmem:[%s5 + $0x188] sm:$0xf]
    %v3387 = vld [vmem:[%s5 + $0x18c] sm:$0xf]
    %v3388 = vld [vmem:[%s5 + $0x190] sm:$0xf]
    %v3389 = vld [vmem:[%s5 + $0x194] sm:$0xf]
    %v3390 = vld [vmem:[%s5 + $0x198] sm:$0xf]
    %v3391 = vld [vmem:[%s5 + $0x19c] sm:$0xf]
    %v3392 = vld [vmem:[%s5 + $0x1a0] sm:$0xf]
    %v3393 = vld [vmem:[%s5 + $0x1a4] sm:$0xf]
    %v3394 = vld [vmem:[%s5 + $0x1a8] sm:$0xf]
    %v3395 = vld [vmem:[%s5 + $0x1ac] sm:$0xf]
    %v3396 = vld [vmem:[%s5 + $0x1b0] sm:$0xf]
    %v3397 = vld [vmem:[%s5 + $0x1b4] sm:$0xf]
    %v3398 = vld [vmem:[%s5 + $0x1b8] sm:$0xf]
    %v3399 = vld [vmem:[%s5 + $0x1bc] sm:$0xf]
    %v3400 = vld [vmem:[%s5 + $0x1c0] sm:$0xf]
    %v3401 = vld [vmem:[%s5 + $0x1c4] sm:$0xf]
    %v3402 = vld [vmem:[%s5 + $0x1c8] sm:$0xf]
    %v3403 = vld [vmem:[%s5 + $0x1cc] sm:$0xf]
    %v3404 = vld [vmem:[%s5 + $0x1d0] sm:$0xf]
    %v3405 = vld [vmem:[%s5 + $0x1d4] sm:$0xf]
    %v3406 = vld [vmem:[%s5 + $0x1d8] sm:$0xf]
    %v3407 = vld [vmem:[%s5 + $0x1dc] sm:$0xf]
    %v3408 = vld [vmem:[%s5 + $0x1e0] sm:$0xf]
    %v3409 = vld [vmem:[%s5 + $0x1e4] sm:$0xf]
    %v3410 = vld [vmem:[%s5 + $0x1e8] sm:$0xf]
    %v3411 = vld [vmem:[%s5 + $0x1ec] sm:$0xf]
    %v3412 = vld [vmem:[%s5 + $0x1f0] sm:$0xf]
    %v3413 = vld [vmem:[%s5 + $0x1f4] sm:$0xf]
    %v3414 = vld [vmem:[%s5 + $0x1f8] sm:$0xf]
    %v3415 = vld [vmem:[%s5 + $0x1fc] sm:$0xf]
    %v3416 = vld [vmem:[%s6] sm:$0x1]
    %v3418 = vperm.slane %v3416, 0
    %v3548 = vunpack.c.l.b16 %v3288
    %v3549 = vunpack.c.l.b16 %v3289
    %v3550 = vunpack.c.l.b16 %v3290
    %v3551 = vunpack.c.l.b16 %v3291
    %v3552 = vunpack.c.l.b16 %v3292
    %v3553 = vunpack.c.l.b16 %v3293
    %v3554 = vunpack.c.l.b16 %v3294
    %v3555 = vunpack.c.l.b16 %v3295
    %v3556 = vunpack.c.l.b16 %v3296
    %v3557 = vunpack.c.l.b16 %v3297
    %v3558 = vunpack.c.l.b16 %v3298
    %v3559 = vunpack.c.l.b16 %v3299
    %v3560 = vunpack.c.l.b16 %v3300
    %v3561 = vunpack.c.l.b16 %v3301
    %v3562 = vunpack.c.l.b16 %v3302
    %v3563 = vunpack.c.l.b16 %v3303
    %v3564 = vunpack.c.l.b16 %v3304
    %v3565 = vunpack.c.l.b16 %v3305
    %v3566 = vunpack.c.l.b16 %v3306
    %v3567 = vunpack.c.l.b16 %v3307
    %v3568 = vunpack.c.l.b16 %v3308
    %v3569 = vunpack.c.l.b16 %v3309
    %v3570 = vunpack.c.l.b16 %v3310
    %v3571 = vunpack.c.l.b16 %v3311
    %v3572 = vunpack.c.l.b16 %v3312
    %v3573 = vunpack.c.l.b16 %v3313
    %v3574 = vunpack.c.l.b16 %v3314
    %v3575 = vunpack.c.l.b16 %v3315
    %v3576 = vunpack.c.l.b16 %v3316
    %v3577 = vunpack.c.l.b16 %v3317
    %v3578 = vunpack.c.l.b16 %v3318
    %v3579 = vunpack.c.l.b16 %v3319
    %v3580 = vunpack.c.l.b16 %v3320
    %v3581 = vunpack.c.l.b16 %v3321
    %v3582 = vunpack.c.l.b16 %v3322
    %v3583 = vunpack.c.l.b16 %v3323
    %v3584 = vunpack.c.l.b16 %v3324
    %v3585 = vunpack.c.l.b16 %v3325
    %v3586 = vunpack.c.l.b16 %v3326
    %v3587 = vunpack.c.l.b16 %v3327
    %v3588 = vunpack.c.l.b16 %v3328
    %v3589 = vunpack.c.l.b16 %v3329
    %v3590 = vunpack.c.l.b16 %v3330
    %v3591 = vunpack.c.l.b16 %v3331
    %v3592 = vunpack.c.l.b16 %v3332
    %v3593 = vunpack.c.l.b16 %v3333
    %v3594 = vunpack.c.l.b16 %v3334
    %v3595 = vunpack.c.l.b16 %v3335
    %v3596 = vunpack.c.l.b16 %v3336
    %v3597 = vunpack.c.l.b16 %v3337
    %v3598 = vunpack.c.l.b16 %v3338
    %v3599 = vunpack.c.l.b16 %v3339
    %v3600 = vunpack.c.l.b16 %v3340
    %v3601 = vunpack.c.l.b16 %v3341
    %v3602 = vunpack.c.l.b16 %v3342
    %v3603 = vunpack.c.l.b16 %v3343
    %v3604 = vunpack.c.l.b16 %v3344
    %v3605 = vunpack.c.l.b16 %v3345
    %v3606 = vunpack.c.l.b16 %v3346
    %v3607 = vunpack.c.l.b16 %v3347
    %v3608 = vunpack.c.l.b16 %v3348
    %v3609 = vunpack.c.l.b16 %v3349
    %v3610 = vunpack.c.l.b16 %v3350
    %v3611 = vunpack.c.l.b16 %v3351
    %v3612 = vunpack.c.l.b16 %v3352
    %v3613 = vunpack.c.l.b16 %v3353
    %v3614 = vunpack.c.l.b16 %v3354
    %v3615 = vunpack.c.l.b16 %v3355
    %v3616 = vunpack.c.l.b16 %v3356
    %v3617 = vunpack.c.l.b16 %v3357
    %v3618 = vunpack.c.l.b16 %v3358
    %v3619 = vunpack.c.l.b16 %v3359
    %v3620 = vunpack.c.l.b16 %v3360
    %v3621 = vunpack.c.l.b16 %v3361
    %v3622 = vunpack.c.l.b16 %v3362
    %v3623 = vunpack.c.l.b16 %v3363
    %v3624 = vunpack.c.l.b16 %v3364
    %v3625 = vunpack.c.l.b16 %v3365
    %v3626 = vunpack.c.l.b16 %v3366
    %v3627 = vunpack.c.l.b16 %v3367
    %v3628 = vunpack.c.l.b16 %v3368
    %v3629 = vunpack.c.l.b16 %v3369
    %v3630 = vunpack.c.l.b16 %v3370
    %v3631 = vunpack.c.l.b16 %v3371
    %v3632 = vunpack.c.l.b16 %v3372
    %v3633 = vunpack.c.l.b16 %v3373
    %v3634 = vunpack.c.l.b16 %v3374
    %v3635 = vunpack.c.l.b16 %v3375
    %v3636 = vunpack.c.l.b16 %v3376
    %v3637 = vunpack.c.l.b16 %v3377
    %v3638 = vunpack.c.l.b16 %v3378
    %v3639 = vunpack.c.l.b16 %v3379
    %v3640 = vunpack.c.l.b16 %v3380
    %v3641 = vunpack.c.l.b16 %v3381
    %v3642 = vunpack.c.l.b16 %v3382
    %v3643 = vunpack.c.l.b16 %v3383
    %v3644 = vunpack.c.l.b16 %v3384
    %v3645 = vunpack.c.l.b16 %v3385
    %v3646 = vunpack.c.l.b16 %v3386
    %v3647 = vunpack.c.l.b16 %v3387
    %v3648 = vunpack.c.l.b16 %v3388
    %v3649 = vunpack.c.l.b16 %v3389
    %v3650 = vunpack.c.l.b16 %v3390
    %v3651 = vunpack.c.l.b16 %v3391
    %v3652 = vunpack.c.l.b16 %v3392
    %v3653 = vunpack.c.l.b16 %v3393
    %v3654 = vunpack.c.l.b16 %v3394
    %v3655 = vunpack.c.l.b16 %v3395
    %v3656 = vunpack.c.l.b16 %v3396
    %v3657 = vunpack.c.l.b16 %v3397
    %v3658 = vunpack.c.l.b16 %v3398
    %v3659 = vunpack.c.l.b16 %v3399
    %v3660 = vunpack.c.l.b16 %v3400
    %v3661 = vunpack.c.l.b16 %v3401
    %v3662 = vunpack.c.l.b16 %v3402
    %v3663 = vunpack.c.l.b16 %v3403
    %v3664 = vunpack.c.l.b16 %v3404
    %v3665 = vunpack.c.l.b16 %v3405
    %v3666 = vunpack.c.l.b16 %v3406
    %v3667 = vunpack.c.l.b16 %v3407
    %v3668 = vunpack.c.l.b16 %v3408
    %v3669 = vunpack.c.l.b16 %v3409
    %v3670 = vunpack.c.l.b16 %v3410
    %v3671 = vunpack.c.l.b16 %v3411
    %v3672 = vunpack.c.l.b16 %v3412
    %v3673 = vunpack.c.l.b16 %v3413
    %v3674 = vunpack.c.l.b16 %v3414
    %v3675 = vunpack.c.l.b16 %v3415
    %v3676 = vpack.c.b16 %v3549, %v3548
    %v3677 = vpack.c.b16 %v3551, %v3550
    %v3678 = vpack.c.b16 %v3553, %v3552
    %v3679 = vpack.c.b16 %v3555, %v3554
    %v3680 = vpack.c.b16 %v3557, %v3556
    %v3681 = vpack.c.b16 %v3559, %v3558
    %v3682 = vpack.c.b16 %v3561, %v3560
    %v3683 = vpack.c.b16 %v3563, %v3562
    %v3684 = vpack.c.b16 %v3565, %v3564
    %v3685 = vpack.c.b16 %v3567, %v3566
    %v3686 = vpack.c.b16 %v3569, %v3568
    %v3687 = vpack.c.b16 %v3571, %v3570
    %v3688 = vpack.c.b16 %v3573, %v3572
    %v3689 = vpack.c.b16 %v3575, %v3574
    %v3690 = vpack.c.b16 %v3577, %v3576
    %v3691 = vpack.c.b16 %v3579, %v3578
    %v3692 = vpack.c.b16 %v3581, %v3580
    %v3693 = vpack.c.b16 %v3583, %v3582
    %v3694 = vpack.c.b16 %v3585, %v3584
    %v3695 = vpack.c.b16 %v3587, %v3586
    %v3696 = vpack.c.b16 %v3589, %v3588
    %v3697 = vpack.c.b16 %v3591, %v3590
    %v3698 = vpack.c.b16 %v3593, %v3592
    %v3699 = vpack.c.b16 %v3595, %v3594
    %v3700 = vpack.c.b16 %v3597, %v3596
    %v3701 = vpack.c.b16 %v3599, %v3598
    %v3702 = vpack.c.b16 %v3601, %v3600
    %v3703 = vpack.c.b16 %v3603, %v3602
    %v3704 = vpack.c.b16 %v3605, %v3604
    %v3705 = vpack.c.b16 %v3607, %v3606
    %v3706 = vpack.c.b16 %v3609, %v3608
    %v3707 = vpack.c.b16 %v3611, %v3610
    %v3708 = vpack.c.b16 %v3613, %v3612
    %v3709 = vpack.c.b16 %v3615, %v3614
    %v3710 = vpack.c.b16 %v3617, %v3616
    %v3711 = vpack.c.b16 %v3619, %v3618
    %v3712 = vpack.c.b16 %v3621, %v3620
    %v3713 = vpack.c.b16 %v3623, %v3622
    %v3714 = vpack.c.b16 %v3625, %v3624
    %v3715 = vpack.c.b16 %v3627, %v3626
    %v3716 = vpack.c.b16 %v3629, %v3628
    %v3717 = vpack.c.b16 %v3631, %v3630
    %v3718 = vpack.c.b16 %v3633, %v3632
    %v3719 = vpack.c.b16 %v3635, %v3634
    %v3720 = vpack.c.b16 %v3637, %v3636
    %v3721 = vpack.c.b16 %v3639, %v3638
    %v3722 = vpack.c.b16 %v3641, %v3640
    %v3723 = vpack.c.b16 %v3643, %v3642
    %v3724 = vpack.c.b16 %v3645, %v3644
    %v3725 = vpack.c.b16 %v3647, %v3646
    %v3726 = vpack.c.b16 %v3649, %v3648
    %v3727 = vpack.c.b16 %v3651, %v3650
    %v3728 = vpack.c.b16 %v3653, %v3652
    %v3729 = vpack.c.b16 %v3655, %v3654
    %v3730 = vpack.c.b16 %v3657, %v3656
    %v3731 = vpack.c.b16 %v3659, %v3658
    %v3732 = vpack.c.b16 %v3661, %v3660
    %v3733 = vpack.c.b16 %v3663, %v3662
    %v3734 = vpack.c.b16 %v3665, %v3664
    %v3735 = vpack.c.b16 %v3667, %v3666
    %v3736 = vpack.c.b16 %v3669, %v3668
    %v3737 = vpack.c.b16 %v3671, %v3670
    %v3738 = vpack.c.b16 %v3673, %v3672
    %v3739 = vpack.c.b16 %v3675, %v3674
    %3804 = vmatpush.bf16.msra.mxu0 %v3683
    %3805 = vmatpush.bf16.msra.mxu0 %v3682
    %3806 = vmatpush.bf16.msra.mxu0 %v3681
    %3807 = vmatpush.bf16.msra.mxu0 %v3680
    %3808 = vmatpush.bf16.msra.mxu0 %v3679
    %3809 = vmatpush.bf16.msra.mxu0 %v3678
    %3810 = vmatpush.bf16.msra.mxu0 %v3677
    %3811 = vmatpush.bf16.msra.mxu0 %v3676
    %3812 = vmatmul.bf16.gmra.mxu0 %v3280
    %v3813 = vpop.f32.mrf.mxu0
    %v3814 = vadd.f32 %v3418, %v3813
    %v3815 = vpop.f32.mrf.mxu0
    %3816 = vdwg.mxu0
    %3817 = vmatpush.bf16.msra.mxu0 %v3691
    %3818 = vmatpush.bf16.msra.mxu0 %v3690
    %3819 = vmatpush.bf16.msra.mxu0 %v3689
    %3820 = vmatpush.bf16.msra.mxu0 %v3688
    %3821 = vmatpush.bf16.msra.mxu0 %v3687
    %3822 = vmatpush.bf16.msra.mxu0 %v3686
    %3823 = vmatpush.bf16.msra.mxu0 %v3685
    %3824 = vmatpush.bf16.msra.mxu0 %v3684
    %3825 = vmatmul.bf16.gmra.mxu0 %v3281
    %v3826 = vpop.f32.mrf.mxu0
    %v3827 = vadd.f32 %v3814, %v3826
    %v3828 = vpop.f32.mrf.mxu0
    %3829 = vdwg.mxu0
    %3830 = vmatpush.bf16.msra.mxu0 %v3699
    %3831 = vmatpush.bf16.msra.mxu0 %v3698
    %3832 = vmatpush.bf16.msra.mxu0 %v3697
    %3833 = vmatpush.bf16.msra.mxu0 %v3696
    %3834 = vmatpush.bf16.msra.mxu0 %v3695
    %3835 = vmatpush.bf16.msra.mxu0 %v3694
    %3836 = vmatpush.bf16.msra.mxu0 %v3693
    %3837 = vmatpush.bf16.msra.mxu0 %v3692
    %3838 = vmatmul.bf16.gmra.mxu0 %v3282
    %v3839 = vpop.f32.mrf.mxu0
    %v3840 = vadd.f32 %v3827, %v3839
    %v3841 = vpop.f32.mrf.mxu0
    %3842 = vdwg.mxu0
    %3843 = vmatpush.bf16.msra.mxu0 %v3707
    %3844 = vmatpush.bf16.msra.mxu0 %v3706
    %3845 = vmatpush.bf16.msra.mxu0 %v3705
    %3846 = vmatpush.bf16.msra.mxu0 %v3704
    %3847 = vmatpush.bf16.msra.mxu0 %v3703
    %3848 = vmatpush.bf16.msra.mxu0 %v3702
    %3849 = vmatpush.bf16.msra.mxu0 %v3701
    %3850 = vmatpush.bf16.msra.mxu0 %v3700
    %3851 = vmatmul.bf16.gmra.mxu0 %v3283
    %v3852 = vpop.f32.mrf.mxu0
    %v3853 = vadd.f32 %v3840, %v3852
    %v3854 = vpop.f32.mrf.mxu0
    %3855 = vdwg.mxu0
    %3856 = vmatpush.bf16.msra.mxu0 %v3715
    %3857 = vmatpush.bf16.msra.mxu0 %v3714
    %3858 = vmatpush.bf16.msra.mxu0 %v3713
    %3859 = vmatpush.bf16.msra.mxu0 %v3712
    %3860 = vmatpush.bf16.msra.mxu0 %v3711
    %3861 = vmatpush.bf16.msra.mxu0 %v3710
    %3862 = vmatpush.bf16.msra.mxu0 %v3709
    %3863 = vmatpush.bf16.msra.mxu0 %v3708
    %3864 = vmatmul.bf16.gmra.mxu0 %v3284
    %v3865 = vpop.f32.mrf.mxu0
    %v3866 = vadd.f32 %v3853, %v3865
    %v3867 = vpop.f32.mrf.mxu0
    %3868 = vdwg.mxu0
    %3869 = vmatpush.bf16.msra.mxu0 %v3723
    %3870 = vmatpush.bf16.msra.mxu0 %v3722
    %3871 = vmatpush.bf16.msra.mxu0 %v3721
    %3872 = vmatpush.bf16.msra.mxu0 %v3720
    %3873 = vmatpush.bf16.msra.mxu0 %v3719
    %3874 = vmatpush.bf16.msra.mxu0 %v3718
    %3875 = vmatpush.bf16.msra.mxu0 %v3717
    %3876 = vmatpush.bf16.msra.mxu0 %v3716
    %3877 = vmatmul.bf16.gmra.mxu0 %v3285
    %v3878 = vpop.f32.mrf.mxu0
    %v3879 = vadd.f32 %v3866, %v3878
    %v3880 = vpop.f32.mrf.mxu0
    %3881 = vdwg.mxu0
    %3882 = vmatpush.bf16.msra.mxu0 %v3731
    %3883 = vmatpush.bf16.msra.mxu0 %v3730
    %3884 = vmatpush.bf16.msra.mxu0 %v3729
    %3885 = vmatpush.bf16.msra.mxu0 %v3728
    %3886 = vmatpush.bf16.msra.mxu0 %v3727
    %3887 = vmatpush.bf16.msra.mxu0 %v3726
    %3888 = vmatpush.bf16.msra.mxu0 %v3725
    %3889 = vmatpush.bf16.msra.mxu0 %v3724
    %3890 = vmatmul.bf16.gmra.mxu0 %v3286
    %v3891 = vpop.f32.mrf.mxu0
    %v3892 = vadd.f32 %v3879, %v3891
    %v3893 = vpop.f32.mrf.mxu0
    %3894 = vdwg.mxu0
    %3895 = vmatpush.bf16.msra.mxu0 %v3739
    %3896 = vmatpush.bf16.msra.mxu0 %v3738
    %3897 = vmatpush.bf16.msra.mxu0 %v3737
    %3898 = vmatpush.bf16.msra.mxu0 %v3736
    %3899 = vmatpush.bf16.msra.mxu0 %v3735
    %3900 = vmatpush.bf16.msra.mxu0 %v3734
    %3901 = vmatpush.bf16.msra.mxu0 %v3733
    %3902 = vmatpush.bf16.msra.mxu0 %v3732
    %3903 = vmatmul.bf16.gmra.mxu0 %v3287
    %v3904 = vpop.f32.mrf.mxu0
    %v3905 = vadd.f32 %v3892, %v3904
    %v3906 = vpop.f32.mrf.mxu0
    %3907 = vdwg.mxu0
    %3909 = vrot.lane.b32.xlu0 %v3905, 127
    %v3910 = vpop.permute.xlu0 %3909
    %vm3912 = vcmask 41984
    %v3913 = vsel %vm3912, %v3910, 0.0
    %3914 = vadd.xlane.f32.xlu0 %v3913
    %v3915 = vpop.xlane.xlu0 %3914
    %v3916 = vrcp.pop 6.0
    %v3917 = vmul.f32 6.0, %v3916
    %v3918 = vsub.f32 1.0, %v3917
    %v3919 = vmul.f32 %v3916, %v3918
    %v3920 = vadd.f32 %v3916, %v3919
    %vm3921 = vweird.f32 %v3916
    %v3922 = vsel %vm3921, %v3916, %v3920
    %v3923 = vmul.f32 %v3915, %v3922
    %v3924 = vsub.f32 %v3905, %v3923
    %3925 = vset.pattern.permute.xlu0 0
    %3926 = vperm.xlu0 %3925, %v3905
    %v3927 = vpop.permute.xlu0 %3926
    %v3929 = vadd.f32 %v3927, %v3924
    %3931 = vrot.lane.b32.xlu0 %v3929, 127
    %v3932 = vpop.permute.xlu0 %3931
    %3934 = vst.msk [vmem:[#allocation2] sm:$0x3] %vm3912, %v3932
    // Predicated region
    $region30: #{dqn_forward_pallas.5} parent=1 // pred_check
      _
    $region31: #{dqn_forward_pallas.5} parent=1 // pred_check_branch
      %3936 = sbr.rel (0) target = $region33
    $region32: #{dqn_forward_pallas.5} parent=1 // pred_region
      %3938 = vsyncadd [#allocation3], 0
      %s3940 = sshll.u32 [#allocation2], 4
      %s3941 = int_to_ptr.vmem [resolvable:$true] %s3940
      %s3942 = sshll.u32 %s7, 4
      %s3943 = int_to_ptr.hbm [resolvable:$true] %s3942
      %3945 = dma.vmem_to_hbm [thread:$0]  %s3941, 32, %s3943, [#allocation3]
    $region33: #{dqn_forward_pallas.5} parent=1 // pred_fallthru
      _
    // Predicated region
    $region34: #{dqn_forward_pallas.5} parent=1 // pred_check
      _
    $region35: #{dqn_forward_pallas.5} parent=1 // pred_check_branch
      %3947 = sbr.rel (0) target = $region37
    $region36: #{dqn_forward_pallas.5} parent=1 // pred_region
      %3949 = dma.done [#allocation3], 32
    $region37: #{dqn_forward_pallas.5} parent=1 // pred_fallthru
      _
    %3950 = vsyncpa [#allocation3], 1

</llo_original>
